<compile_context>
chip_gen: v7x
topology: tpu7x:2x2x1
jax: 0.10.0
libtpu: 0.0.40
codegen_flags: <defaults>
</compile_context>

<pallas_src>
import jax
import jax.numpy as jnp
from jax.experimental import pallas as pl
from jax.experimental.pallas import tpu as pltpu

# ----------------------------- configuration -------------------------------
PATCH = 8                 # patch size of the patch-embed "conv"
D = 128                   # hidden dim == lane width -> lane-dense feature stores
NUM_HEADS = 2
HD = D // NUM_HEADS
DEPTH = 2                 # number of transformer blocks (== returned feature levels)
MLP_HIDDEN = 2 * D
LN_EPS = 1e-5
SCALE = 1.0 / (HD ** 0.5)
TOKENS_PER_STEP = 512     # target token-slab rows per grid step (patch-embed / MLP M)
ATTN_SUB = 128            # attention sub-slab size (scores stay (128,128))
NEG_INF = -1e30


# ------------------------------- kernel ------------------------------------
def _ln(x, g, b):
    mu = jnp.mean(x, axis=-1, keepdims=True)
    var = jnp.mean(jnp.square(x - mu), axis=-1, keepdims=True)
    return (x - mu) * jax.lax.rsqrt(var + LN_EPS) * g + b


def _backbone_kernel(patches_ref, w_patch_ref, pos_bias_ref,
                     row_ids_ref, col_ids_ref, vecs_ref,
                     w_qkv_ref, b_qkv_ref, w_proj_ref,
                     w1_ref, b1_ref, w2_ref,
                     feats_ref):
    """One grid step = a slab of images (tok tokens) through DEPTH blocks."""
    tok = patches_ref.shape[0]
    sub = row_ids_ref.shape[0]          # attention sub-slab size (whole images)
    n_sub = tok // sub                  # static

    # Block-diagonal additive bias rebuilt in-kernel (no tok^2 HBM stream):
    # tokens only attend within their own image.
    attn_bias = jnp.where(row_ids_ref[...] == col_ids_ref[...],
                          0.0, NEG_INF).astype(jnp.float32)        # (sub, sub)

    # Patch embedding (== Conv2d(C, D, P, stride=P) on pre-flattened patches), bf16 MXU.
    x = jnp.dot(patches_ref[...], w_patch_ref[...],
                preferred_element_type=jnp.float32)
    x = x + pos_bias_ref[...]                                      # (tok, D) f32 residual

    for l in range(DEPTH):                                         # static unroll
        vl = vecs_ref[l]                                           # (6, D) f32
        ln1_g, ln1_b = vl[0:1], vl[1:2]
        ln2_g, ln2_b = vl[2:3], vl[3:4]
        b_proj, b_mlp2 = vl[4:5], vl[5:6]

        # ---- attention (pre-LN) ----
        h_bf = _ln(x, ln1_g, ln1_b).astype(jnp.bfloat16)
        # Fused QKV: one (tok,128)x(128,384) MXU pass (full MXU width, 1 weight push).
        qkv = jnp.dot(h_bf, w_qkv_ref[l],
                      preferred_element_type=jnp.float32) + b_qkv_ref[l]
        q_bf = (qkv[:, 0 * D:1 * D] * SCALE).astype(jnp.bfloat16)
        k_bf = qkv[:, 1 * D:2 * D].astype(jnp.bfloat16)
        v_bf = qkv[:, 2 * D:3 * D].astype(jnp.bfloat16)

        # Attention over 128-token sub-slabs; per-head 64-lane views only for
        # the score / PV dots (block-diag bias keeps images independent).
        sub_outs = []
        for sb in range(n_sub):
            r0 = sb * sub
            s_heads = []
            for hh in range(NUM_HEADS):
                c0 = hh * HD
                s = jax.lax.dot_general(                           # q @ k.T, no transpose
                    q_bf[r0:r0 + sub, c0:c0 + HD],
                    k_bf[r0:r0 + sub, c0:c0 + HD],
                    (((1,), (1,)), ((), ())),
                    preferred_element_type=jnp.float32)
                s_heads.append(s + attn_bias)
            # Sublane-stack both heads so softmax max/sum are one XLU reduce each.
            s_all = jnp.concatenate(s_heads, axis=0)               # (H*sub, sub) f32
            s_all = s_all - jnp.max(s_all, axis=-1, keepdims=True)
            p_all = jnp.exp(s_all)
            p_all = p_all * pl.reciprocal(
                jnp.sum(p_all, axis=-1, keepdims=True), approx=True)
            p_all = p_all.astype(jnp.bfloat16)
            o_heads = [
                jnp.dot(p_all[hh * sub:(hh + 1) * sub],
                        v_bf[r0:r0 + sub, hh * HD:(hh + 1) * HD],
                        preferred_element_type=jnp.float32)        # (sub, HD)
                for hh in range(NUM_HEADS)]
            sub_outs.append(jnp.concatenate(o_heads, axis=-1))     # (sub, D) lane concat
        attn = jnp.concatenate(sub_outs, axis=0)                   # (tok, D)

        # One full-width (tok,128)x(128,128) output projection.
        x = x + jnp.dot(attn.astype(jnp.bfloat16), w_proj_ref[l],
                        preferred_element_type=jnp.float32) + b_proj

        # ---- MLP (pre-LN) ----
        h2 = _ln(x, ln2_g, ln2_b).astype(jnp.bfloat16)
        m = jnp.dot(h2, w1_ref[l], preferred_element_type=jnp.float32) + b1_ref[l]
        # TODO(synk): PyTorch nn.GELU defaults to the exact erf form; tanh approx used here.
        m = jax.nn.gelu(m, approximate=True)
        m = jnp.dot(m.astype(jnp.bfloat16), w2_ref[l],
                    preferred_element_type=jnp.float32)
        x = x + m + b_mlp2

        # Per-block feature (get_features=True): lane-dense (tok, D=128) unmasked store.
        # TODO(synk): a bf16 feature variant would halve HBM writeback on v5e.
        feats_ref[l] = x.astype(feats_ref.dtype)


# ------------------------------- wrapper ------------------------------------
def _patchify(x_nchw, patch):
    """NCHW -> (BN, S, C*P*P), patches flattened in (C, ph, pw) order
    (matches nn.Conv2d weight flattening)."""
    bn, c, hgt, wid = x_nchw.shape
    hp, wp = hgt // patch, wid // patch
    x = x_nchw.reshape(bn, c, hp, patch, wp, patch)
    x = jnp.transpose(x, (0, 2, 4, 1, 3, 5))            # (BN, Hp, Wp, C, P, P)
    return x.reshape(bn, hp * wp, c * patch * patch)
    # TODO(synk): at large H/W this host-side transpose could be fused into the
    # kernel's input DMA to save one HBM round trip.


def _pack_params(p):
    """Pack the 16 parameter tensors into 8 lane-dense kernel operands."""
    vecs = jnp.concatenate([p["ln1_g"], p["ln1_b"], p["ln2_g"], p["ln2_b"],
                            p["b_proj"], p["b2"]], axis=1).astype(jnp.float32)
    return (p["w_patch"].astype(jnp.bfloat16),           # (PDIM, D)
            vecs,                                         # (DEPTH, 6, D)
            p["w_qkv"].astype(jnp.bfloat16),              # (DEPTH, D, 3D)  lane-dense
            p["b_qkv"].astype(jnp.float32),               # (DEPTH, 1, 3D)
            p["w_proj"].astype(jnp.bfloat16),             # (DEPTH, D, D)
            p["w1"].astype(jnp.bfloat16),                 # (DEPTH, D, MLP)
            p["b1"].astype(jnp.float32),                  # (DEPTH, 1, MLP)
            p["w2"].astype(jnp.bfloat16))                 # (DEPTH, MLP, D)


@jax.jit
def vtm_image_backbone_forward(x6d, params, t_idx=None):
    """x6d: (B, T, N, C, H, W) float32.  Returns list of DEPTH features, each
    (B, T, N, S, D) — the forward_6d_as_4d(get_features=True) behavior."""
    # TODO(synk): t_idx (task index) is accepted but unused — the synthetic
    # backbone has no task-conditioned bias parameters.
    B, T, N, C, H, W = x6d.shape
    BN = B * T * N
    S = (H // PATCH) * (W // PATCH)
    PDIM = C * PATCH * PATCH

    # ---- slab plan: whole images per ~128-token attention sub-block; slab =
    # several sub-blocks (target TOKENS_PER_STEP); shrink so the grid has >= 2
    # steps when the batch allows it (v7x has 2 TensorCores).
    imgs_per_sub = max(1, ATTN_SUB // S)
    while (imgs_per_sub * S) % 8 != 0:                   # keep sublane-tiled
        imgs_per_sub += 1
    sub_tok = imgs_per_sub * S
    subs_per_step = max(1, TOKENS_PER_STEP // sub_tok)
    while subs_per_step > 1 and -(-BN // (imgs_per_sub * subs_per_step)) < 2:
        subs_per_step //= 2
    img_per_step = imgs_per_sub * subs_per_step
    tok = img_per_step * S
    bn_pad = -(-BN // img_per_step) * img_per_step
    grid = bn_pad // img_per_step

    # ---------------- host-side (XLA) layout plumbing ----------------------
    x4d = x6d.reshape(BN, C, H, W)                       # '(B T N) C H W'
    patches = _patchify(x4d, PATCH)                      # (BN, S, PDIM) f32
    if bn_pad != BN:
        patches = jnp.pad(patches, ((0, bn_pad - BN), (0, 0), (0, 0)))
    patches = patches.reshape(bn_pad * S, PDIM).astype(jnp.bfloat16)

    # Positional embedding tiled over the per-step slab, fused with the patch bias.
    pos_bias = (jnp.tile(params["pos"], (img_per_step, 1))
                + params["b_patch"]).astype(jnp.float32)          # (tok, D)

    # Tiny image-id vectors (row/col form); the (sub_tok, sub_tok) block-diag
    # bias is rebuilt inside the kernel from these (no tok^2 HBM input).
    img_id = jnp.repeat(jnp.arange(imgs_per_sub, dtype=jnp.int32), S)
    row_ids = img_id.reshape(sub_tok, 1)
    col_ids = img_id.reshape(1, sub_tok)

    (w_patch, vecs, w_qkv, b_qkv, w_proj, w1, b1, w2) = _pack_params(params)

    def replicated(arr):                                 # full-array, grid-invariant block
        zeros = (0,) * arr.ndim
        return pl.BlockSpec(arr.shape, lambda i: zeros)
    # TODO(synk): single-buffering the grid-invariant params (pipeline_mode=
    # pl.Buffered(1)) would halve their VMEM; unnecessary at this footprint.

    feats = pl.pallas_call(
        _backbone_kernel,
        out_shape=jax.ShapeDtypeStruct((DEPTH, bn_pad * S, D), jnp.float32),
        grid=(grid,),
        in_specs=[
            pl.BlockSpec((tok, PDIM), lambda i: (i, 0)),          # patch slab
            replicated(w_patch),
            replicated(pos_bias),
            replicated(row_ids),
            replicated(col_ids),
            replicated(vecs),
            replicated(w_qkv),
            replicated(b_qkv),
            replicated(w_proj),
            replicated(w1),
            replicated(b1),
            replicated(w2),
        ],
        out_specs=pl.BlockSpec((DEPTH, tok, D), lambda i: (0, i, 0)),
        compiler_params=pltpu.CompilerParams(
            dimension_semantics=("parallel",)),
    )(patches, w_patch, pos_bias, row_ids, col_ids, vecs,
      w_qkv, b_qkv, w_proj, w1, b1, w2)

    # Drop image padding; '(B T N) S D -> B T N S D' per feature level (free reshape).
    feats = feats[:, :BN * S]
    return [feats[l].reshape(B, T, N, S, D) for l in range(DEPTH)]


# --------------------------- deterministic params ---------------------------
def init_params(key, in_chans, s_tokens):
    pdim = in_chans * PATCH * PATCH
    ks = jax.random.split(key, 6)
    n = lambda k, shape, s=0.02: (s * jax.random.normal(k, shape)).astype(jnp.float32)
    return {
        "w_patch": n(ks[0], (pdim, D)),
        "b_patch": jnp.zeros((1, D), jnp.float32),
        "pos":     n(ks[1], (s_tokens, D)),              # (S, D), derived from H/W
        "ln1_g":   jnp.ones((DEPTH, 1, D), jnp.float32),
        "ln1_b":   jnp.zeros((DEPTH, 1, D), jnp.float32),
        "w_qkv":   n(ks[2], (DEPTH, D, 3 * D)),
        "b_qkv":   jnp.zeros((DEPTH, 1, 3 * D), jnp.float32),
        "w_proj":  n(ks[3], (DEPTH, D, D)),
        "b_proj":  jnp.zeros((DEPTH, 1, D), jnp.float32),
        "ln2_g":   jnp.ones((DEPTH, 1, D), jnp.float32),
        "ln2_b":   jnp.zeros((DEPTH, 1, D), jnp.float32),
        "w1":      n(ks[4], (DEPTH, D, MLP_HIDDEN)),
        "b1":      jnp.zeros((DEPTH, 1, MLP_HIDDEN), jnp.float32),
        "w2":      n(ks[5], (DEPTH, MLP_HIDDEN, D)),
        "b2":      jnp.zeros((DEPTH, 1, D), jnp.float32),
    }


# --------------------------------- main --------------------------------------
if __name__ == "__main__":
    key = jax.random.PRNGKey(0)
    kx, kp = jax.random.split(key)

    # x: (B, T, N, C, H, W) — the 6-D input that forward_6d_as_4d expects.
    # BN = 64 images, S = 4 tokens/image -> the slab planner picks 32 images
    # (128 tokens) per step and a grid of 2 (both v7x TensorCores busy).
    B, T, N, C, H, W = 2, 2, 16, 3, 16, 16
    S = (H // PATCH) * (W // PATCH)
    x = jax.random.normal(kx, (B, T, N, C, H, W), dtype=jnp.float32)
    params = init_params(kp, C, S)

    feats = vtm_image_backbone_forward(x, params, t_idx=None)
    feats = jax.block_until_ready(feats)

    assert len(feats) == DEPTH
    for f in feats:
        assert f.shape == (B, T, N, S, D)
        assert f.dtype == jnp.float32
        assert bool(jnp.all(jnp.isfinite(f)))
    print("KERNEL_OK")
</pallas_src>

<mosaic_0001>
module attributes {stable_mosaic.version = 11 : i64} {
  func.func @_backbone_kernel(%arg0: i32, %arg1: memref<128x192xbf16, #tpu.memory_space<vmem>>, %arg2: memref<192x128xbf16, #tpu.memory_space<vmem>>, %arg3: memref<128x128xf32, #tpu.memory_space<vmem>>, %arg4: memref<128x1xi32, #tpu.memory_space<vmem>>, %arg5: memref<1x128xi32, #tpu.memory_space<vmem>>, %arg6: memref<2x6x128xf32, #tpu.memory_space<vmem>>, %arg7: memref<2x128x384xbf16, #tpu.memory_space<vmem>>, %arg8: memref<2x1x384xf32, #tpu.memory_space<vmem>>, %arg9: memref<2x128x128xbf16, #tpu.memory_space<vmem>>, %arg10: memref<2x128x256xbf16, #tpu.memory_space<vmem>>, %arg11: memref<2x1x256xf32, #tpu.memory_space<vmem>>, %arg12: memref<2x256x128xbf16, #tpu.memory_space<vmem>>, %arg13: memref<2x128x128xf32, #tpu.memory_space<vmem>>) attributes {dimension_semantics = [#tpu.dimension_semantics<parallel>], iteration_bounds = array<i64: 2>, scalar_prefetch = 0 : i64, scratch_operands = 0 : i64, tpu.core_type = #tpu.core_type<tc>, window_params = [{transform_indices = @transform_0, window_bounds = array<i64: 128, 192>}, {pipeline_mode = #tpu.pipeline_mode<synchronous>, transform_indices = @transform_1, window_bounds = array<i64: 192, 128>}, {pipeline_mode = #tpu.pipeline_mode<synchronous>, transform_indices = @transform_2, window_bounds = array<i64: 128, 128>}, {pipeline_mode = #tpu.pipeline_mode<synchronous>, transform_indices = @transform_3, window_bounds = array<i64: 128, 1>}, {pipeline_mode = #tpu.pipeline_mode<synchronous>, transform_indices = @transform_4, window_bounds = array<i64: 1, 128>}, {pipeline_mode = #tpu.pipeline_mode<synchronous>, transform_indices = @transform_5, window_bounds = array<i64: 2, 6, 128>}, {pipeline_mode = #tpu.pipeline_mode<synchronous>, transform_indices = @transform_6, window_bounds = array<i64: 2, 128, 384>}, {pipeline_mode = #tpu.pipeline_mode<synchronous>, transform_indices = @transform_7, window_bounds = array<i64: 2, 1, 384>}, {pipeline_mode = #tpu.pipeline_mode<synchronous>, transform_indices = @transform_8, window_bounds = array<i64: 2, 128, 128>}, {pipeline_mode = #tpu.pipeline_mode<synchronous>, transform_indices = @transform_9, window_bounds = array<i64: 2, 128, 256>}, {pipeline_mode = #tpu.pipeline_mode<synchronous>, transform_indices = @transform_10, window_bounds = array<i64: 2, 1, 256>}, {pipeline_mode = #tpu.pipeline_mode<synchronous>, transform_indices = @transform_11, window_bounds = array<i64: 2, 256, 128>}, {transform_indices = @transform_12, window_bounds = array<i64: 2, 128, 128>}]} {
    %c0 = arith.constant 0 : index
    %c0_0 = arith.constant 0 : index
    %0 = vector.load %arg4[%c0, %c0_0] : memref<128x1xi32, #tpu.memory_space<vmem>>, vector<128x1xi32>
    %c0_1 = arith.constant 0 : index
    %c0_2 = arith.constant 0 : index
    %1 = vector.load %arg5[%c0_1, %c0_2] : memref<1x128xi32, #tpu.memory_space<vmem>>, vector<1x128xi32>
    %2 = vector.broadcast %0 : vector<128x1xi32> to vector<128x128xi32>
    %3 = vector.broadcast %1 : vector<1x128xi32> to vector<128x128xi32>
    %4 = arith.cmpi eq, %2, %3 : vector<128x128xi32>
    %cst = arith.constant 0.000000e+00 : f32
    %cst_3 = arith.constant -1.000000e+30 : f32
    %5 = vector.broadcast %cst : f32 to vector<128x128xf32>
    %6 = vector.broadcast %cst_3 : f32 to vector<128x128xf32>
    %7 = arith.select %4, %5, %6 : vector<128x128xi1>, vector<128x128xf32>
    %c0_4 = arith.constant 0 : index
    %c0_5 = arith.constant 0 : index
    %8 = vector.load %arg1[%c0_4, %c0_5] : memref<128x192xbf16, #tpu.memory_space<vmem>>, vector<128x192xbf16>
    %c0_6 = arith.constant 0 : index
    %c0_7 = arith.constant 0 : index
    %9 = vector.load %arg2[%c0_6, %c0_7] : memref<192x128xbf16, #tpu.memory_space<vmem>>, vector<192x128xbf16>
    %cst_8 = arith.constant dense<0.000000e+00> : vector<128x128xf32>
    %10 = tpu.matmul %8, %9, %cst_8 {dimension_numbers = #tpu.dot_dimension_numbers<[1], [0], [0], [1], [0, 0, 1, 1], [], []>} : vector<128x192xbf16>, vector<192x128xbf16>, vector<128x128xf32> -> vector<128x128xf32>
    %c0_9 = arith.constant 0 : index
    %c0_10 = arith.constant 0 : index
    %11 = vector.load %arg3[%c0_9, %c0_10] : memref<128x128xf32, #tpu.memory_space<vmem>>, vector<128x128xf32>
    %12 = arith.addf %10, %11 : vector<128x128xf32>
    %c0_11 = arith.constant 0 : index
    %c0_12 = arith.constant 0 : index
    %c0_13 = arith.constant 0 : index
    %13 = vector.load %arg6[%c0_11, %c0_12, %c0_13] : memref<2x6x128xf32, #tpu.memory_space<vmem>>, vector<1x6x128xf32>
    %14 = vector.shape_cast %13 : vector<1x6x128xf32> to vector<6x128xf32>
    %15 = vector.extract_strided_slice %14 {offsets = [0, 0], sizes = [1, 128], strides = [1, 1]} : vector<6x128xf32> to vector<1x128xf32>
    %16 = vector.extract_strided_slice %14 {offsets = [1, 0], sizes = [1, 128], strides = [1, 1]} : vector<6x128xf32> to vector<1x128xf32>
    %17 = vector.extract_strided_slice %14 {offsets = [2, 0], sizes = [1, 128], strides = [1, 1]} : vector<6x128xf32> to vector<1x128xf32>
    %18 = vector.extract_strided_slice %14 {offsets = [3, 0], sizes = [1, 128], strides = [1, 1]} : vector<6x128xf32> to vector<1x128xf32>
    %19 = vector.extract_strided_slice %14 {offsets = [4, 0], sizes = [1, 128], strides = [1, 1]} : vector<6x128xf32> to vector<1x128xf32>
    %20 = vector.extract_strided_slice %14 {offsets = [5, 0], sizes = [1, 128], strides = [1, 1]} : vector<6x128xf32> to vector<1x128xf32>
    %cst_14 = arith.constant dense<0.000000e+00> : vector<128xf32>
    %21 = vector.multi_reduction <add>, %12, %cst_14 [1] : vector<128x128xf32> to vector<128xf32>
    %22 = vector.shape_cast %21 : vector<128xf32> to vector<128x1xf32>
    %cst_15 = arith.constant 1.280000e+02 : f32
    %23 = vector.broadcast %cst_15 : f32 to vector<128x1xf32>
    %24 = arith.divf %22, %23 : vector<128x1xf32>
    %25 = vector.broadcast %24 : vector<128x1xf32> to vector<128x128xf32>
    %26 = arith.subf %12, %25 : vector<128x128xf32>
    %27 = arith.mulf %26, %26 : vector<128x128xf32>
    %cst_16 = arith.constant dense<0.000000e+00> : vector<128xf32>
    %28 = vector.multi_reduction <add>, %27, %cst_16 [1] : vector<128x128xf32> to vector<128xf32>
    %29 = vector.shape_cast %28 : vector<128xf32> to vector<128x1xf32>
    %cst_17 = arith.constant 1.280000e+02 : f32
    %30 = vector.broadcast %cst_17 : f32 to vector<128x1xf32>
    %31 = arith.divf %29, %30 : vector<128x1xf32>
    %32 = vector.broadcast %24 : vector<128x1xf32> to vector<128x128xf32>
    %33 = arith.subf %12, %32 : vector<128x128xf32>
    %cst_18 = arith.constant 9.99999974E-6 : f32
    %34 = vector.broadcast %cst_18 : f32 to vector<128x1xf32>
    %35 = arith.addf %31, %34 : vector<128x1xf32>
    %36 = math.rsqrt %35 : vector<128x1xf32>
    %37 = vector.broadcast %36 : vector<128x1xf32> to vector<128x128xf32>
    %38 = arith.mulf %33, %37 : vector<128x128xf32>
    %39 = vector.broadcast %15 : vector<1x128xf32> to vector<128x128xf32>
    %40 = arith.mulf %38, %39 : vector<128x128xf32>
    %41 = vector.broadcast %16 : vector<1x128xf32> to vector<128x128xf32>
    %42 = arith.addf %40, %41 : vector<128x128xf32>
    %43 = arith.truncf %42 : vector<128x128xf32> to vector<128x128xbf16>
    %c0_19 = arith.constant 0 : index
    %c0_20 = arith.constant 0 : index
    %c0_21 = arith.constant 0 : index
    %44 = vector.load %arg7[%c0_19, %c0_20, %c0_21] : memref<2x128x384xbf16, #tpu.memory_space<vmem>>, vector<1x128x384xbf16>
    %45 = vector.shape_cast %44 : vector<1x128x384xbf16> to vector<128x384xbf16>
    %cst_22 = arith.constant dense<0.000000e+00> : vector<128x384xf32>
    %46 = tpu.matmul %43, %45, %cst_22 {dimension_numbers = #tpu.dot_dimension_numbers<[1], [0], [0], [1], [0, 0, 1, 1], [], []>} : vector<128x128xbf16>, vector<128x384xbf16>, vector<128x384xf32> -> vector<128x384xf32>
    %c0_23 = arith.constant 0 : index
    %c0_24 = arith.constant 0 : index
    %c0_25 = arith.constant 0 : index
    %47 = vector.load %arg8[%c0_23, %c0_24, %c0_25] : memref<2x1x384xf32, #tpu.memory_space<vmem>>, vector<1x1x384xf32>
    %48 = vector.shape_cast %47 : vector<1x1x384xf32> to vector<1x384xf32>
    %49 = vector.broadcast %48 : vector<1x384xf32> to vector<128x384xf32>
    %50 = arith.addf %46, %49 : vector<128x384xf32>
    %51 = vector.extract_strided_slice %50 {offsets = [0, 0], sizes = [128, 128], strides = [1, 1]} : vector<128x384xf32> to vector<128x128xf32>
    %cst_26 = arith.constant 1.250000e-01 : f32
    %52 = vector.broadcast %cst_26 : f32 to vector<128x128xf32>
    %53 = arith.mulf %51, %52 : vector<128x128xf32>
    %54 = arith.truncf %53 : vector<128x128xf32> to vector<128x128xbf16>
    %55 = vector.extract_strided_slice %50 {offsets = [0, 128], sizes = [128, 128], strides = [1, 1]} : vector<128x384xf32> to vector<128x128xf32>
    %56 = arith.truncf %55 : vector<128x128xf32> to vector<128x128xbf16>
    %57 = vector.extract_strided_slice %50 {offsets = [0, 256], sizes = [128, 128], strides = [1, 1]} : vector<128x384xf32> to vector<128x128xf32>
    %58 = arith.truncf %57 : vector<128x128xf32> to vector<128x128xbf16>
    %59 = vector.extract_strided_slice %54 {offsets = [0, 0], sizes = [128, 64], strides = [1, 1]} : vector<128x128xbf16> to vector<128x64xbf16>
    %60 = vector.extract_strided_slice %56 {offsets = [0, 0], sizes = [128, 64], strides = [1, 1]} : vector<128x128xbf16> to vector<128x64xbf16>
    %cst_27 = arith.constant dense<0.000000e+00> : vector<128x128xf32>
    %61 = tpu.matmul %59, %60, %cst_27 {dimension_numbers = #tpu.dot_dimension_numbers<[1], [1], [0], [0], [0, 0, 1, 0], [], []>} : vector<128x64xbf16>, vector<128x64xbf16>, vector<128x128xf32> -> vector<128x128xf32>
    %62 = arith.addf %61, %7 : vector<128x128xf32>
    %63 = vector.extract_strided_slice %54 {offsets = [0, 64], sizes = [128, 64], strides = [1, 1]} : vector<128x128xbf16> to vector<128x64xbf16>
    %64 = vector.extract_strided_slice %56 {offsets = [0, 64], sizes = [128, 64], strides = [1, 1]} : vector<128x128xbf16> to vector<128x64xbf16>
    %cst_28 = arith.constant dense<0.000000e+00> : vector<128x128xf32>
    %65 = tpu.matmul %63, %64, %cst_28 {dimension_numbers = #tpu.dot_dimension_numbers<[1], [1], [0], [0], [0, 0, 1, 0], [], []>} : vector<128x64xbf16>, vector<128x64xbf16>, vector<128x128xf32> -> vector<128x128xf32>
    %66 = arith.addf %65, %7 : vector<128x128xf32>
    %67 = tpu.concatenate %62, %66 in 0 : vector<128x128xf32>, vector<128x128xf32> -> vector<256x128xf32>
    %cst_29 = arith.constant dense<0xFF800000> : vector<256xf32>
    %68 = vector.multi_reduction <maximumf>, %67, %cst_29 [1] : vector<256x128xf32> to vector<256xf32>
    %69 = vector.shape_cast %68 : vector<256xf32> to vector<256x1xf32>
    %70 = vector.broadcast %69 : vector<256x1xf32> to vector<256x128xf32>
    %71 = arith.subf %67, %70 : vector<256x128xf32>
    %72 = math.exp %71 : vector<256x128xf32>
    %cst_30 = arith.constant dense<0.000000e+00> : vector<256xf32>
    %73 = vector.multi_reduction <add>, %72, %cst_30 [1] : vector<256x128xf32> to vector<256xf32>
    %74 = vector.shape_cast %73 : vector<256xf32> to vector<256x1xf32>
    %75 = tpu.reciprocal %74 {approx = true} : vector<256x1xf32> -> vector<256x1xf32>
    %76 = vector.broadcast %75 : vector<256x1xf32> to vector<256x128xf32>
    %77 = arith.mulf %72, %76 : vector<256x128xf32>
    %78 = arith.truncf %77 : vector<256x128xf32> to vector<256x128xbf16>
    %79 = vector.extract_strided_slice %78 {offsets = [0, 0], sizes = [128, 128], strides = [1, 1]} : vector<256x128xbf16> to vector<128x128xbf16>
    %80 = vector.extract_strided_slice %58 {offsets = [0, 0], sizes = [128, 64], strides = [1, 1]} : vector<128x128xbf16> to vector<128x64xbf16>
    %cst_31 = arith.constant dense<0.000000e+00> : vector<128x64xf32>
    %81 = tpu.matmul %79, %80, %cst_31 {dimension_numbers = #tpu.dot_dimension_numbers<[1], [0], [0], [1], [0, 0, 1, 1], [], []>} : vector<128x128xbf16>, vector<128x64xbf16>, vector<128x64xf32> -> vector<128x64xf32>
    %82 = vector.extract_strided_slice %78 {offsets = [128, 0], sizes = [128, 128], strides = [1, 1]} : vector<256x128xbf16> to vector<128x128xbf16>
    %83 = vector.extract_strided_slice %58 {offsets = [0, 64], sizes = [128, 64], strides = [1, 1]} : vector<128x128xbf16> to vector<128x64xbf16>
    %cst_32 = arith.constant dense<0.000000e+00> : vector<128x64xf32>
    %84 = tpu.matmul %82, %83, %cst_32 {dimension_numbers = #tpu.dot_dimension_numbers<[1], [0], [0], [1], [0, 0, 1, 1], [], []>} : vector<128x128xbf16>, vector<128x64xbf16>, vector<128x64xf32> -> vector<128x64xf32>
    %85 = tpu.concatenate %81, %84 in 1 : vector<128x64xf32>, vector<128x64xf32> -> vector<128x128xf32>
    %86 = arith.truncf %85 : vector<128x128xf32> to vector<128x128xbf16>
    %c0_33 = arith.constant 0 : index
    %c0_34 = arith.constant 0 : index
    %c0_35 = arith.constant 0 : index
    %87 = vector.load %arg9[%c0_33, %c0_34, %c0_35] : memref<2x128x128xbf16, #tpu.memory_space<vmem>>, vector<1x128x128xbf16>
    %88 = vector.shape_cast %87 : vector<1x128x128xbf16> to vector<128x128xbf16>
    %cst_36 = arith.constant dense<0.000000e+00> : vector<128x128xf32>
    %89 = tpu.matmul %86, %88, %cst_36 {dimension_numbers = #tpu.dot_dimension_numbers<[1], [0], [0], [1], [0, 0, 1, 1], [], []>} : vector<128x128xbf16>, vector<128x128xbf16>, vector<128x128xf32> -> vector<128x128xf32>
    %90 = arith.addf %12, %89 : vector<128x128xf32>
    %91 = vector.broadcast %19 : vector<1x128xf32> to vector<128x128xf32>
    %92 = arith.addf %90, %91 : vector<128x128xf32>
    %cst_37 = arith.constant dense<0.000000e+00> : vector<128xf32>
    %93 = vector.multi_reduction <add>, %92, %cst_37 [1] : vector<128x128xf32> to vector<128xf32>
    %94 = vector.shape_cast %93 : vector<128xf32> to vector<128x1xf32>
    %cst_38 = arith.constant 1.280000e+02 : f32
    %95 = vector.broadcast %cst_38 : f32 to vector<128x1xf32>
    %96 = arith.divf %94, %95 : vector<128x1xf32>
    %97 = vector.broadcast %96 : vector<128x1xf32> to vector<128x128xf32>
    %98 = arith.subf %92, %97 : vector<128x128xf32>
    %99 = arith.mulf %98, %98 : vector<128x128xf32>
    %cst_39 = arith.constant dense<0.000000e+00> : vector<128xf32>
    %100 = vector.multi_reduction <add>, %99, %cst_39 [1] : vector<128x128xf32> to vector<128xf32>
    %101 = vector.shape_cast %100 : vector<128xf32> to vector<128x1xf32>
    %cst_40 = arith.constant 1.280000e+02 : f32
    %102 = vector.broadcast %cst_40 : f32 to vector<128x1xf32>
    %103 = arith.divf %101, %102 : vector<128x1xf32>
    %104 = vector.broadcast %96 : vector<128x1xf32> to vector<128x128xf32>
    %105 = arith.subf %92, %104 : vector<128x128xf32>
    %cst_41 = arith.constant 9.99999974E-6 : f32
    %106 = vector.broadcast %cst_41 : f32 to vector<128x1xf32>
    %107 = arith.addf %103, %106 : vector<128x1xf32>
    %108 = math.rsqrt %107 : vector<128x1xf32>
    %109 = vector.broadcast %108 : vector<128x1xf32> to vector<128x128xf32>
    %110 = arith.mulf %105, %109 : vector<128x128xf32>
    %111 = vector.broadcast %17 : vector<1x128xf32> to vector<128x128xf32>
    %112 = arith.mulf %110, %111 : vector<128x128xf32>
    %113 = vector.broadcast %18 : vector<1x128xf32> to vector<128x128xf32>
    %114 = arith.addf %112, %113 : vector<128x128xf32>
    %115 = arith.truncf %114 : vector<128x128xf32> to vector<128x128xbf16>
    %c0_42 = arith.constant 0 : index
    %c0_43 = arith.constant 0 : index
    %c0_44 = arith.constant 0 : index
    %116 = vector.load %arg10[%c0_42, %c0_43, %c0_44] : memref<2x128x256xbf16, #tpu.memory_space<vmem>>, vector<1x128x256xbf16>
    %117 = vector.shape_cast %116 : vector<1x128x256xbf16> to vector<128x256xbf16>
    %cst_45 = arith.constant dense<0.000000e+00> : vector<128x256xf32>
    %118 = tpu.matmul %115, %117, %cst_45 {dimension_numbers = #tpu.dot_dimension_numbers<[1], [0], [0], [1], [0, 0, 1, 1], [], []>} : vector<128x128xbf16>, vector<128x256xbf16>, vector<128x256xf32> -> vector<128x256xf32>
    %c0_46 = arith.constant 0 : index
    %c0_47 = arith.constant 0 : index
    %c0_48 = arith.constant 0 : index
    %119 = vector.load %arg11[%c0_46, %c0_47, %c0_48] : memref<2x1x256xf32, #tpu.memory_space<vmem>>, vector<1x1x256xf32>
    %120 = vector.shape_cast %119 : vector<1x1x256xf32> to vector<1x256xf32>
    %121 = vector.broadcast %120 : vector<1x256xf32> to vector<128x256xf32>
    %122 = arith.addf %118, %121 : vector<128x256xf32>
    %123 = arith.mulf %122, %122 : vector<128x256xf32>
    %124 = arith.mulf %122, %123 : vector<128x256xf32>
    %cst_49 = arith.constant 4.471500e-02 : f32
    %125 = vector.broadcast %cst_49 : f32 to vector<128x256xf32>
    %126 = arith.mulf %125, %124 : vector<128x256xf32>
    %127 = arith.addf %122, %126 : vector<128x256xf32>
    %cst_50 = arith.constant 0.797884583 : f32
    %128 = vector.broadcast %cst_50 : f32 to vector<128x256xf32>
    %129 = arith.mulf %128, %127 : vector<128x256xf32>
    %130 = math.tanh %129 : vector<128x256xf32>
    %cst_51 = arith.constant 1.000000e+00 : f32
    %131 = vector.broadcast %cst_51 : f32 to vector<128x256xf32>
    %132 = arith.addf %131, %130 : vector<128x256xf32>
    %cst_52 = arith.constant 5.000000e-01 : f32
    %133 = vector.broadcast %cst_52 : f32 to vector<128x256xf32>
    %134 = arith.mulf %133, %132 : vector<128x256xf32>
    %135 = arith.mulf %122, %134 : vector<128x256xf32>
    %136 = arith.truncf %135 : vector<128x256xf32> to vector<128x256xbf16>
    %c0_53 = arith.constant 0 : index
    %c0_54 = arith.constant 0 : index
    %c0_55 = arith.constant 0 : index
    %137 = vector.load %arg12[%c0_53, %c0_54, %c0_55] : memref<2x256x128xbf16, #tpu.memory_space<vmem>>, vector<1x256x128xbf16>
    %138 = vector.shape_cast %137 : vector<1x256x128xbf16> to vector<256x128xbf16>
    %cst_56 = arith.constant dense<0.000000e+00> : vector<128x128xf32>
    %139 = tpu.matmul %136, %138, %cst_56 {dimension_numbers = #tpu.dot_dimension_numbers<[1], [0], [0], [1], [0, 0, 1, 1], [], []>} : vector<128x256xbf16>, vector<256x128xbf16>, vector<128x128xf32> -> vector<128x128xf32>
    %140 = arith.addf %92, %139 : vector<128x128xf32>
    %141 = vector.broadcast %20 : vector<1x128xf32> to vector<128x128xf32>
    %142 = arith.addf %140, %141 : vector<128x128xf32>
    %c0_57 = arith.constant 0 : index
    %c0_58 = arith.constant 0 : index
    %c0_59 = arith.constant 0 : index
    %143 = vector.load %arg13[%c0_57, %c0_58, %c0_59] : memref<2x128x128xf32, #tpu.memory_space<vmem>>, vector<1x128x128xf32>
    %144 = vector.shape_cast %143 : vector<1x128x128xf32> to vector<128x128xf32>
    %145 = vector.shape_cast %142 : vector<128x128xf32> to vector<1x128x128xf32>
    tpu.vector_store %arg13[%c0_57, %c0_58, %c0_59], %145 {strides = array<i32>} : memref<2x128x128xf32, #tpu.memory_space<vmem>>, vector<1x128x128xf32>,
    %c1 = arith.constant 1 : index
    %c0_60 = arith.constant 0 : index
    %c0_61 = arith.constant 0 : index
    %146 = vector.load %arg6[%c1, %c0_60, %c0_61] : memref<2x6x128xf32, #tpu.memory_space<vmem>>, vector<1x6x128xf32>
    %147 = vector.shape_cast %146 : vector<1x6x128xf32> to vector<6x128xf32>
    %148 = vector.extract_strided_slice %147 {offsets = [0, 0], sizes = [1, 128], strides = [1, 1]} : vector<6x128xf32> to vector<1x128xf32>
    %149 = vector.extract_strided_slice %147 {offsets = [1, 0], sizes = [1, 128], strides = [1, 1]} : vector<6x128xf32> to vector<1x128xf32>
    %150 = vector.extract_strided_slice %147 {offsets = [2, 0], sizes = [1, 128], strides = [1, 1]} : vector<6x128xf32> to vector<1x128xf32>
    %151 = vector.extract_strided_slice %147 {offsets = [3, 0], sizes = [1, 128], strides = [1, 1]} : vector<6x128xf32> to vector<1x128xf32>
    %152 = vector.extract_strided_slice %147 {offsets = [4, 0], sizes = [1, 128], strides = [1, 1]} : vector<6x128xf32> to vector<1x128xf32>
    %153 = vector.extract_strided_slice %147 {offsets = [5, 0], sizes = [1, 128], strides = [1, 1]} : vector<6x128xf32> to vector<1x128xf32>
    %cst_62 = arith.constant dense<0.000000e+00> : vector<128xf32>
    %154 = vector.multi_reduction <add>, %142, %cst_62 [1] : vector<128x128xf32> to vector<128xf32>
    %155 = vector.shape_cast %154 : vector<128xf32> to vector<128x1xf32>
    %cst_63 = arith.constant 1.280000e+02 : f32
    %156 = vector.broadcast %cst_63 : f32 to vector<128x1xf32>
    %157 = arith.divf %155, %156 : vector<128x1xf32>
    %158 = vector.broadcast %157 : vector<128x1xf32> to vector<128x128xf32>
    %159 = arith.subf %142, %158 : vector<128x128xf32>
    %160 = arith.mulf %159, %159 : vector<128x128xf32>
    %cst_64 = arith.constant dense<0.000000e+00> : vector<128xf32>
    %161 = vector.multi_reduction <add>, %160, %cst_64 [1] : vector<128x128xf32> to vector<128xf32>
    %162 = vector.shape_cast %161 : vector<128xf32> to vector<128x1xf32>
    %cst_65 = arith.constant 1.280000e+02 : f32
    %163 = vector.broadcast %cst_65 : f32 to vector<128x1xf32>
    %164 = arith.divf %162, %163 : vector<128x1xf32>
    %165 = vector.broadcast %157 : vector<128x1xf32> to vector<128x128xf32>
    %166 = arith.subf %142, %165 : vector<128x128xf32>
    %cst_66 = arith.constant 9.99999974E-6 : f32
    %167 = vector.broadcast %cst_66 : f32 to vector<128x1xf32>
    %168 = arith.addf %164, %167 : vector<128x1xf32>
    %169 = math.rsqrt %168 : vector<128x1xf32>
    %170 = vector.broadcast %169 : vector<128x1xf32> to vector<128x128xf32>
    %171 = arith.mulf %166, %170 : vector<128x128xf32>
    %172 = vector.broadcast %148 : vector<1x128xf32> to vector<128x128xf32>
    %173 = arith.mulf %171, %172 : vector<128x128xf32>
    %174 = vector.broadcast %149 : vector<1x128xf32> to vector<128x128xf32>
    %175 = arith.addf %173, %174 : vector<128x128xf32>
    %176 = arith.truncf %175 : vector<128x128xf32> to vector<128x128xbf16>
    %c1_67 = arith.constant 1 : index
    %c0_68 = arith.constant 0 : index
    %c0_69 = arith.constant 0 : index
    %177 = vector.load %arg7[%c1_67, %c0_68, %c0_69] : memref<2x128x384xbf16, #tpu.memory_space<vmem>>, vector<1x128x384xbf16>
    %178 = vector.shape_cast %177 : vector<1x128x384xbf16> to vector<128x384xbf16>
    %cst_70 = arith.constant dense<0.000000e+00> : vector<128x384xf32>
    %179 = tpu.matmul %176, %178, %cst_70 {dimension_numbers = #tpu.dot_dimension_numbers<[1], [0], [0], [1], [0, 0, 1, 1], [], []>} : vector<128x128xbf16>, vector<128x384xbf16>, vector<128x384xf32> -> vector<128x384xf32>
    %c1_71 = arith.constant 1 : index
    %c0_72 = arith.constant 0 : index
    %c0_73 = arith.constant 0 : index
    %180 = vector.load %arg8[%c1_71, %c0_72, %c0_73] : memref<2x1x384xf32, #tpu.memory_space<vmem>>, vector<1x1x384xf32>
    %181 = vector.shape_cast %180 : vector<1x1x384xf32> to vector<1x384xf32>
    %182 = vector.broadcast %181 : vector<1x384xf32> to vector<128x384xf32>
    %183 = arith.addf %179, %182 : vector<128x384xf32>
    %184 = vector.extract_strided_slice %183 {offsets = [0, 0], sizes = [128, 128], strides = [1, 1]} : vector<128x384xf32> to vector<128x128xf32>
    %cst_74 = arith.constant 1.250000e-01 : f32
    %185 = vector.broadcast %cst_74 : f32 to vector<128x128xf32>
    %186 = arith.mulf %184, %185 : vector<128x128xf32>
    %187 = arith.truncf %186 : vector<128x128xf32> to vector<128x128xbf16>
    %188 = vector.extract_strided_slice %183 {offsets = [0, 128], sizes = [128, 128], strides = [1, 1]} : vector<128x384xf32> to vector<128x128xf32>
    %189 = arith.truncf %188 : vector<128x128xf32> to vector<128x128xbf16>
    %190 = vector.extract_strided_slice %183 {offsets = [0, 256], sizes = [128, 128], strides = [1, 1]} : vector<128x384xf32> to vector<128x128xf32>
    %191 = arith.truncf %190 : vector<128x128xf32> to vector<128x128xbf16>
    %192 = vector.extract_strided_slice %187 {offsets = [0, 0], sizes = [128, 64], strides = [1, 1]} : vector<128x128xbf16> to vector<128x64xbf16>
    %193 = vector.extract_strided_slice %189 {offsets = [0, 0], sizes = [128, 64], strides = [1, 1]} : vector<128x128xbf16> to vector<128x64xbf16>
    %cst_75 = arith.constant dense<0.000000e+00> : vector<128x128xf32>
    %194 = tpu.matmul %192, %193, %cst_75 {dimension_numbers = #tpu.dot_dimension_numbers<[1], [1], [0], [0], [0, 0, 1, 0], [], []>} : vector<128x64xbf16>, vector<128x64xbf16>, vector<128x128xf32> -> vector<128x128xf32>
    %195 = arith.addf %194, %7 : vector<128x128xf32>
    %196 = vector.extract_strided_slice %187 {offsets = [0, 64], sizes = [128, 64], strides = [1, 1]} : vector<128x128xbf16> to vector<128x64xbf16>
    %197 = vector.extract_strided_slice %189 {offsets = [0, 64], sizes = [128, 64], strides = [1, 1]} : vector<128x128xbf16> to vector<128x64xbf16>
    %cst_76 = arith.constant dense<0.000000e+00> : vector<128x128xf32>
    %198 = tpu.matmul %196, %197, %cst_76 {dimension_numbers = #tpu.dot_dimension_numbers<[1], [1], [0], [0], [0, 0, 1, 0], [], []>} : vector<128x64xbf16>, vector<128x64xbf16>, vector<128x128xf32> -> vector<128x128xf32>
    %199 = arith.addf %198, %7 : vector<128x128xf32>
    %200 = tpu.concatenate %195, %199 in 0 : vector<128x128xf32>, vector<128x128xf32> -> vector<256x128xf32>
    %cst_77 = arith.constant dense<0xFF800000> : vector<256xf32>
    %201 = vector.multi_reduction <maximumf>, %200, %cst_77 [1] : vector<256x128xf32> to vector<256xf32>
    %202 = vector.shape_cast %201 : vector<256xf32> to vector<256x1xf32>
    %203 = vector.broadcast %202 : vector<256x1xf32> to vector<256x128xf32>
    %204 = arith.subf %200, %203 : vector<256x128xf32>
    %205 = math.exp %204 : vector<256x128xf32>
    %cst_78 = arith.constant dense<0.000000e+00> : vector<256xf32>
    %206 = vector.multi_reduction <add>, %205, %cst_78 [1] : vector<256x128xf32> to vector<256xf32>
    %207 = vector.shape_cast %206 : vector<256xf32> to vector<256x1xf32>
    %208 = tpu.reciprocal %207 {approx = true} : vector<256x1xf32> -> vector<256x1xf32>
    %209 = vector.broadcast %208 : vector<256x1xf32> to vector<256x128xf32>
    %210 = arith.mulf %205, %209 : vector<256x128xf32>
    %211 = arith.truncf %210 : vector<256x128xf32> to vector<256x128xbf16>
    %212 = vector.extract_strided_slice %211 {offsets = [0, 0], sizes = [128, 128], strides = [1, 1]} : vector<256x128xbf16> to vector<128x128xbf16>
    %213 = vector.extract_strided_slice %191 {offsets = [0, 0], sizes = [128, 64], strides = [1, 1]} : vector<128x128xbf16> to vector<128x64xbf16>
    %cst_79 = arith.constant dense<0.000000e+00> : vector<128x64xf32>
    %214 = tpu.matmul %212, %213, %cst_79 {dimension_numbers = #tpu.dot_dimension_numbers<[1], [0], [0], [1], [0, 0, 1, 1], [], []>} : vector<128x128xbf16>, vector<128x64xbf16>, vector<128x64xf32> -> vector<128x64xf32>
    %215 = vector.extract_strided_slice %211 {offsets = [128, 0], sizes = [128, 128], strides = [1, 1]} : vector<256x128xbf16> to vector<128x128xbf16>
    %216 = vector.extract_strided_slice %191 {offsets = [0, 64], sizes = [128, 64], strides = [1, 1]} : vector<128x128xbf16> to vector<128x64xbf16>
    %cst_80 = arith.constant dense<0.000000e+00> : vector<128x64xf32>
    %217 = tpu.matmul %215, %216, %cst_80 {dimension_numbers = #tpu.dot_dimension_numbers<[1], [0], [0], [1], [0, 0, 1, 1], [], []>} : vector<128x128xbf16>, vector<128x64xbf16>, vector<128x64xf32> -> vector<128x64xf32>
    %218 = tpu.concatenate %214, %217 in 1 : vector<128x64xf32>, vector<128x64xf32> -> vector<128x128xf32>
    %219 = arith.truncf %218 : vector<128x128xf32> to vector<128x128xbf16>
    %c1_81 = arith.constant 1 : index
    %c0_82 = arith.constant 0 : index
    %c0_83 = arith.constant 0 : index
    %220 = vector.load %arg9[%c1_81, %c0_82, %c0_83] : memref<2x128x128xbf16, #tpu.memory_space<vmem>>, vector<1x128x128xbf16>
    %221 = vector.shape_cast %220 : vector<1x128x128xbf16> to vector<128x128xbf16>
    %cst_84 = arith.constant dense<0.000000e+00> : vector<128x128xf32>
    %222 = tpu.matmul %219, %221, %cst_84 {dimension_numbers = #tpu.dot_dimension_numbers<[1], [0], [0], [1], [0, 0, 1, 1], [], []>} : vector<128x128xbf16>, vector<128x128xbf16>, vector<128x128xf32> -> vector<128x128xf32>
    %223 = arith.addf %142, %222 : vector<128x128xf32>
    %224 = vector.broadcast %152 : vector<1x128xf32> to vector<128x128xf32>
    %225 = arith.addf %223, %224 : vector<128x128xf32>
    %cst_85 = arith.constant dense<0.000000e+00> : vector<128xf32>
    %226 = vector.multi_reduction <add>, %225, %cst_85 [1] : vector<128x128xf32> to vector<128xf32>
    %227 = vector.shape_cast %226 : vector<128xf32> to vector<128x1xf32>
    %cst_86 = arith.constant 1.280000e+02 : f32
    %228 = vector.broadcast %cst_86 : f32 to vector<128x1xf32>
    %229 = arith.divf %227, %228 : vector<128x1xf32>
    %230 = vector.broadcast %229 : vector<128x1xf32> to vector<128x128xf32>
    %231 = arith.subf %225, %230 : vector<128x128xf32>
    %232 = arith.mulf %231, %231 : vector<128x128xf32>
    %cst_87 = arith.constant dense<0.000000e+00> : vector<128xf32>
    %233 = vector.multi_reduction <add>, %232, %cst_87 [1] : vector<128x128xf32> to vector<128xf32>
    %234 = vector.shape_cast %233 : vector<128xf32> to vector<128x1xf32>
    %cst_88 = arith.constant 1.280000e+02 : f32
    %235 = vector.broadcast %cst_88 : f32 to vector<128x1xf32>
    %236 = arith.divf %234, %235 : vector<128x1xf32>
    %237 = vector.broadcast %229 : vector<128x1xf32> to vector<128x128xf32>
    %238 = arith.subf %225, %237 : vector<128x128xf32>
    %cst_89 = arith.constant 9.99999974E-6 : f32
    %239 = vector.broadcast %cst_89 : f32 to vector<128x1xf32>
    %240 = arith.addf %236, %239 : vector<128x1xf32>
    %241 = math.rsqrt %240 : vector<128x1xf32>
    %242 = vector.broadcast %241 : vector<128x1xf32> to vector<128x128xf32>
    %243 = arith.mulf %238, %242 : vector<128x128xf32>
    %244 = vector.broadcast %150 : vector<1x128xf32> to vector<128x128xf32>
    %245 = arith.mulf %243, %244 : vector<128x128xf32>
    %246 = vector.broadcast %151 : vector<1x128xf32> to vector<128x128xf32>
    %247 = arith.addf %245, %246 : vector<128x128xf32>
    %248 = arith.truncf %247 : vector<128x128xf32> to vector<128x128xbf16>
    %c1_90 = arith.constant 1 : index
    %c0_91 = arith.constant 0 : index
    %c0_92 = arith.constant 0 : index
    %249 = vector.load %arg10[%c1_90, %c0_91, %c0_92] : memref<2x128x256xbf16, #tpu.memory_space<vmem>>, vector<1x128x256xbf16>
    %250 = vector.shape_cast %249 : vector<1x128x256xbf16> to vector<128x256xbf16>
    %cst_93 = arith.constant dense<0.000000e+00> : vector<128x256xf32>
    %251 = tpu.matmul %248, %250, %cst_93 {dimension_numbers = #tpu.dot_dimension_numbers<[1], [0], [0], [1], [0, 0, 1, 1], [], []>} : vector<128x128xbf16>, vector<128x256xbf16>, vector<128x256xf32> -> vector<128x256xf32>
    %c1_94 = arith.constant 1 : index
    %c0_95 = arith.constant 0 : index
    %c0_96 = arith.constant 0 : index
    %252 = vector.load %arg11[%c1_94, %c0_95, %c0_96] : memref<2x1x256xf32, #tpu.memory_space<vmem>>, vector<1x1x256xf32>
    %253 = vector.shape_cast %252 : vector<1x1x256xf32> to vector<1x256xf32>
    %254 = vector.broadcast %253 : vector<1x256xf32> to vector<128x256xf32>
    %255 = arith.addf %251, %254 : vector<128x256xf32>
    %256 = arith.mulf %255, %255 : vector<128x256xf32>
    %257 = arith.mulf %255, %256 : vector<128x256xf32>
    %cst_97 = arith.constant 4.471500e-02 : f32
    %258 = vector.broadcast %cst_97 : f32 to vector<128x256xf32>
    %259 = arith.mulf %258, %257 : vector<128x256xf32>
    %260 = arith.addf %255, %259 : vector<128x256xf32>
    %cst_98 = arith.constant 0.797884583 : f32
    %261 = vector.broadcast %cst_98 : f32 to vector<128x256xf32>
    %262 = arith.mulf %261, %260 : vector<128x256xf32>
    %263 = math.tanh %262 : vector<128x256xf32>
    %cst_99 = arith.constant 1.000000e+00 : f32
    %264 = vector.broadcast %cst_99 : f32 to vector<128x256xf32>
    %265 = arith.addf %264, %263 : vector<128x256xf32>
    %cst_100 = arith.constant 5.000000e-01 : f32
    %266 = vector.broadcast %cst_100 : f32 to vector<128x256xf32>
    %267 = arith.mulf %266, %265 : vector<128x256xf32>
    %268 = arith.mulf %255, %267 : vector<128x256xf32>
    %269 = arith.truncf %268 : vector<128x256xf32> to vector<128x256xbf16>
    %c1_101 = arith.constant 1 : index
    %c0_102 = arith.constant 0 : index
    %c0_103 = arith.constant 0 : index
    %270 = vector.load %arg12[%c1_101, %c0_102, %c0_103] : memref<2x256x128xbf16, #tpu.memory_space<vmem>>, vector<1x256x128xbf16>
    %271 = vector.shape_cast %270 : vector<1x256x128xbf16> to vector<256x128xbf16>
    %cst_104 = arith.constant dense<0.000000e+00> : vector<128x128xf32>
    %272 = tpu.matmul %269, %271, %cst_104 {dimension_numbers = #tpu.dot_dimension_numbers<[1], [0], [0], [1], [0, 0, 1, 1], [], []>} : vector<128x256xbf16>, vector<256x128xbf16>, vector<128x128xf32> -> vector<128x128xf32>
    %273 = arith.addf %225, %272 : vector<128x128xf32>
    %274 = vector.broadcast %153 : vector<1x128xf32> to vector<128x128xf32>
    %275 = arith.addf %273, %274 : vector<128x128xf32>
    %c1_105 = arith.constant 1 : index
    %c0_106 = arith.constant 0 : index
    %c0_107 = arith.constant 0 : index
    %276 = vector.load %arg13[%c1_105, %c0_106, %c0_107] : memref<2x128x128xf32, #tpu.memory_space<vmem>>, vector<1x128x128xf32>
    %277 = vector.shape_cast %276 : vector<1x128x128xf32> to vector<128x128xf32>
    %278 = vector.shape_cast %275 : vector<128x128xf32> to vector<1x128x128xf32>
    tpu.vector_store %arg13[%c1_105, %c0_106, %c0_107], %278 {strides = array<i32>} : memref<2x128x128xf32, #tpu.memory_space<vmem>>, vector<1x128x128xf32>,
    return
  }
  func.func @transform_0(%arg0: i32) -> (i32, i32) {
    %c0_i32 = arith.constant 0 : i32
    %c0_i32_0 = arith.constant 0 : i32
    return %arg0, %c0_i32 : i32, i32
  }
  func.func @transform_1(%arg0: i32) -> (i32, i32) {
    %c0_i32 = arith.constant 0 : i32
    %c0_i32_0 = arith.constant 0 : i32
    %c0_i32_1 = arith.constant 0 : i32
    return %c0_i32, %c0_i32_0 : i32, i32
  }
  func.func @transform_2(%arg0: i32) -> (i32, i32) {
    %c0_i32 = arith.constant 0 : i32
    %c0_i32_0 = arith.constant 0 : i32
    %c0_i32_1 = arith.constant 0 : i32
    return %c0_i32, %c0_i32_0 : i32, i32
  }
  func.func @transform_3(%arg0: i32) -> (i32, i32) {
    %c0_i32 = arith.constant 0 : i32
    %c0_i32_0 = arith.constant 0 : i32
    %c0_i32_1 = arith.constant 0 : i32
    return %c0_i32, %c0_i32_0 : i32, i32
  }
  func.func @transform_4(%arg0: i32) -> (i32, i32) {
    %c0_i32 = arith.constant 0 : i32
    %c0_i32_0 = arith.constant 0 : i32
    %c0_i32_1 = arith.constant 0 : i32
    return %c0_i32, %c0_i32_0 : i32, i32
  }
  func.func @transform_5(%arg0: i32) -> (i32, i32, i32) {
    %c0_i32 = arith.constant 0 : i32
    %c0_i32_0 = arith.constant 0 : i32
    %c0_i32_1 = arith.constant 0 : i32
    %c0_i32_2 = arith.constant 0 : i32
    return %c0_i32, %c0_i32_0, %c0_i32_1 : i32, i32, i32
  }
  func.func @transform_6(%arg0: i32) -> (i32, i32, i32) {
    %c0_i32 = arith.constant 0 : i32
    %c0_i32_0 = arith.constant 0 : i32
    %c0_i32_1 = arith.constant 0 : i32
    %c0_i32_2 = arith.constant 0 : i32
    return %c0_i32, %c0_i32_0, %c0_i32_1 : i32, i32, i32
  }
  func.func @transform_7(%arg0: i32) -> (i32, i32, i32) {
    %c0_i32 = arith.constant 0 : i32
    %c0_i32_0 = arith.constant 0 : i32
    %c0_i32_1 = arith.constant 0 : i32
    %c0_i32_2 = arith.constant 0 : i32
    return %c0_i32, %c0_i32_0, %c0_i32_1 : i32, i32, i32
  }
  func.func @transform_8(%arg0: i32) -> (i32, i32, i32) {
    %c0_i32 = arith.constant 0 : i32
    %c0_i32_0 = arith.constant 0 : i32
    %c0_i32_1 = arith.constant 0 : i32
    %c0_i32_2 = arith.constant 0 : i32
    return %c0_i32, %c0_i32_0, %c0_i32_1 : i32, i32, i32
  }
  func.func @transform_9(%arg0: i32) -> (i32, i32, i32) {
    %c0_i32 = arith.constant 0 : i32
    %c0_i32_0 = arith.constant 0 : i32
    %c0_i32_1 = arith.constant 0 : i32
    %c0_i32_2 = arith.constant 0 : i32
    return %c0_i32, %c0_i32_0, %c0_i32_1 : i32, i32, i32
  }
  func.func @transform_10(%arg0: i32) -> (i32, i32, i32) {
    %c0_i32 = arith.constant 0 : i32
    %c0_i32_0 = arith.constant 0 : i32
    %c0_i32_1 = arith.constant 0 : i32
    %c0_i32_2 = arith.constant 0 : i32
    return %c0_i32, %c0_i32_0, %c0_i32_1 : i32, i32, i32
  }
  func.func @transform_11(%arg0: i32) -> (i32, i32, i32) {
    %c0_i32 = arith.constant 0 : i32
    %c0_i32_0 = arith.constant 0 : i32
    %c0_i32_1 = arith.constant 0 : i32
    %c0_i32_2 = arith.constant 0 : i32
    return %c0_i32, %c0_i32_0, %c0_i32_1 : i32, i32, i32
  }
  func.func @transform_12(%arg0: i32) -> (i32, i32, i32) {
    %c0_i32 = arith.constant 0 : i32
    %c0_i32_0 = arith.constant 0 : i32
    %c0_i32_1 = arith.constant 0 : i32
    return %c0_i32, %arg0, %c0_i32_0 : i32, i32, i32
  }
}

</mosaic_0001>

<llo_original>
// kernel: vtm_image_backbone_forward.1
$region0: #{vtm_image_backbone_forward.1}
  #allocation0 [shape = 'u32[]', space=smem, size = 0x4, offset = 0x4, fixed_abs, tag = 'smem constant byte address 0x4 - core index']
  #allocation1 [shape = 'u32[144,128]{1,0:T(1,128)}', space=vmem, size = 0x12000, scoped, tag = 'internal scratch']
  %s0 = inlined_call_operand.vmem [shape: bf16[256,192], index: 0, kind: input, shape index: {}]
  %s1 = inlined_call_operand.vmem [shape: bf16[192,128], index: 1, kind: input, shape index: {}]
  %s2 = inlined_call_operand.vmem [shape: f32[128,128], index: 2, kind: input, shape index: {}]
  %s3 = inlined_call_operand.vmem [shape: s32[128,1], index: 3, kind: input, shape index: {}]
  %s4 = inlined_call_operand.vmem [shape: s32[1,128], index: 4, kind: input, shape index: {}]
  %s5 = inlined_call_operand.vmem [shape: f32[2,6,128], index: 5, kind: input, shape index: {}]
  %s6 = inlined_call_operand.vmem [shape: bf16[2,128,384], index: 6, kind: input, shape index: {}]
  %s7 = inlined_call_operand.vmem [shape: f32[2,1,384], index: 7, kind: input, shape index: {}]
  %s8 = inlined_call_operand.vmem [shape: bf16[2,128,128], index: 8, kind: input, shape index: {}]
  %s9 = inlined_call_operand.vmem [shape: bf16[2,128,256], index: 9, kind: input, shape index: {}]
  %s10 = inlined_call_operand.vmem [shape: f32[2,1,256], index: 10, kind: input, shape index: {}]
  %s11 = inlined_call_operand.vmem [shape: bf16[2,256,128], index: 11, kind: input, shape index: {}]
  %s12 = inlined_call_operand.vmem [shape: f32[2,256,128], index: 12, kind: output, shape index: {}]
  %s13 = sld [smem:[#allocation0]]
  $region115: #{vtm_image_backbone_forward.1} parent=0
    _
  %s15 = ssub.s32 1, %s13
  %s16 = scalar_select 0, %s15, %s13
  $region1: #{vtm_image_backbone_forward.1} parent=0
    #allocation2 [shape = 'u8[262144]{0}', space=vmem, size = 0x40000, scoped, tag = 'output window, operand 0']
    loop: start=0, step=1, limit=4
    $region2: #{vtm_image_backbone_forward.1} parent=1 // loop_pre_header
      _
    $region3: #{vtm_image_backbone_forward.1} parent=1 // loop_header
      %s18 = sphi 0, %s22
      %p19 = scmp.ge.s32.totalorder %s18, 4
      %s28 = sphi 0, %s30
      %s31 = sphi 0, %s28
      %s32 = sphi 0, %s31
      %s48 = sphi 0, %s32
      %s52 = sphi 0, %s52
      %s54 = sphi 0, %s52
      %s55 = sphi 0, %s54
      %s69 = sphi 0, %s55
      %s73 = sphi 0, %s73
      %s75 = sphi 0, %s73
      %s76 = sphi 0, %s75
      %s90 = sphi 0, %s76
      %s94 = sphi 0, %s94
      %s96 = sphi 0, %s94
      %s97 = sphi 0, %s96
      %s111 = sphi 0, %s97
      %s115 = sphi 0, %s115
      %s117 = sphi 0, %s115
      %s118 = sphi 0, %s117
      %s132 = sphi 0, %s118
      %s136 = sphi 0, %s136
      %s138 = sphi 0, %s136
      %s139 = sphi 0, %s138
      %s153 = sphi 0, %s139
      %s157 = sphi 0, %s157
      %s159 = sphi 0, %s157
      %s160 = sphi 0, %s159
      %s174 = sphi 0, %s160
      %s178 = sphi 0, %s178
      %s180 = sphi 0, %s178
      %s181 = sphi 0, %s180
      %s195 = sphi 0, %s181
      %s199 = sphi 0, %s199
      %s201 = sphi 0, %s199
      %s202 = sphi 0, %s201
      %s216 = sphi 0, %s202
      %s220 = sphi 0, %s220
      %s222 = sphi 0, %s220
      %s223 = sphi 0, %s222
      %s237 = sphi 0, %s223
      %s241 = sphi 0, %s241
      %s243 = sphi 0, %s241
      %s244 = sphi 0, %s243
      %s258 = sphi 0, %s244
      %s262 = sphi 0, %s262
      %s264 = sphi 0, %s262
      %s265 = sphi 0, %s264
      %s279 = sphi 0, %s265
      %s285 = sphi 0, %s287
      %s288 = sphi 0, %s285
      %s289 = sphi 0, %s288
      %s305 = sphi 0, %s289
    $region4: #{vtm_image_backbone_forward.1} parent=1 // loop_header_branch
      %21 = sbr.rel (%p19) target = $region8
    $region5: #{vtm_image_backbone_forward.1} parent=1 // loop_body
      %s23 = ssub.s32 %s18, 1
      %s24 = ssub.s32 %s18, 2
      %s25 = sadd.s32 %s18, 1
      %s26 = ssub.s32 %s18, %s25
      %p27 = scmp.eq.s32.totalorder %s26, 0
      %s29 = sadd.s32 %s28, 1
      %s30 = scalar_select %p27, %s28, %s29
      %p33 = pneg %p27
      %p34 = scmp.eq.s32.totalorder %s18, 1
      %p35 = por %p33, %p34
      %p36 = scmp.ne.s32.totalorder %s28, %s31
      %p37 = scmp.eq.s32.totalorder %s18, 0
      %p38 = por %p36, %p37
      %p39 = scmp.ne.s32.totalorder %s28, %s31
      %p40 = scmp.eq.s32.totalorder %s23, 1
      %p41 = por %p39, %p40
      %p42 = scmp.ne.s32.totalorder %s31, %s32
      %p43 = scmp.eq.s32.totalorder %s23, 0
      %p44 = por %p42, %p43
      %p45 = scmp.ne.s32.totalorder %s31, %s32
      %p46 = scmp.eq.s32.totalorder %s24, 1
      %p47 = por %p45, %p46
      %p49 = scmp.ne.s32.totalorder %s32, %s48
      %p50 = scmp.eq.s32.totalorder %s24, 0
      %p51 = por %p49, %p50
      %s53 = sadd.s32 %s52, 1
      %p56 = scmp.eq.s32.totalorder %s18, 1
      %p57 = scmp.ne.s32.totalorder %s52, %s54
      %p58 = scmp.eq.s32.totalorder %s18, 0
      %p59 = por %p57, %p58
      %p60 = scmp.ne.s32.totalorder %s52, %s54
      %p61 = scmp.eq.s32.totalorder %s23, 1
      %p62 = por %p60, %p61
      %p63 = scmp.ne.s32.totalorder %s54, %s55
      %p64 = scmp.eq.s32.totalorder %s23, 0
      %p65 = por %p63, %p64
      %p66 = scmp.ne.s32.totalorder %s54, %s55
      %p67 = scmp.eq.s32.totalorder %s24, 1
      %p68 = por %p66, %p67
      %p70 = scmp.ne.s32.totalorder %s55, %s69
      %p71 = scmp.eq.s32.totalorder %s24, 0
      %p72 = por %p70, %p71
      %s74 = sadd.s32 %s73, 1
      %p77 = scmp.eq.s32.totalorder %s18, 1
      %p78 = scmp.ne.s32.totalorder %s73, %s75
      %p79 = scmp.eq.s32.totalorder %s18, 0
      %p80 = por %p78, %p79
      %p81 = scmp.ne.s32.totalorder %s73, %s75
      %p82 = scmp.eq.s32.totalorder %s23, 1
      %p83 = por %p81, %p82
      %p84 = scmp.ne.s32.totalorder %s75, %s76
      %p85 = scmp.eq.s32.totalorder %s23, 0
      %p86 = por %p84, %p85
      %p87 = scmp.ne.s32.totalorder %s75, %s76
      %p88 = scmp.eq.s32.totalorder %s24, 1
      %p89 = por %p87, %p88
      %p91 = scmp.ne.s32.totalorder %s76, %s90
      %p92 = scmp.eq.s32.totalorder %s24, 0
      %p93 = por %p91, %p92
      %s95 = sadd.s32 %s94, 1
      %p98 = scmp.eq.s32.totalorder %s18, 1
      %p99 = scmp.ne.s32.totalorder %s94, %s96
      %p100 = scmp.eq.s32.totalorder %s18, 0
      %p101 = por %p99, %p100
      %p102 = scmp.ne.s32.totalorder %s94, %s96
      %p103 = scmp.eq.s32.totalorder %s23, 1
      %p104 = por %p102, %p103
      %p105 = scmp.ne.s32.totalorder %s96, %s97
      %p106 = scmp.eq.s32.totalorder %s23, 0
      %p107 = por %p105, %p106
      %p108 = scmp.ne.s32.totalorder %s96, %s97
      %p109 = scmp.eq.s32.totalorder %s24, 1
      %p110 = por %p108, %p109
      %p112 = scmp.ne.s32.totalorder %s97, %s111
      %p113 = scmp.eq.s32.totalorder %s24, 0
      %p114 = por %p112, %p113
      %s116 = sadd.s32 %s115, 1
      %p119 = scmp.eq.s32.totalorder %s18, 1
      %p120 = scmp.ne.s32.totalorder %s115, %s117
      %p121 = scmp.eq.s32.totalorder %s18, 0
      %p122 = por %p120, %p121
      %p123 = scmp.ne.s32.totalorder %s115, %s117
      %p124 = scmp.eq.s32.totalorder %s23, 1
      %p125 = por %p123, %p124
      %p126 = scmp.ne.s32.totalorder %s117, %s118
      %p127 = scmp.eq.s32.totalorder %s23, 0
      %p128 = por %p126, %p127
      %p129 = scmp.ne.s32.totalorder %s117, %s118
      %p130 = scmp.eq.s32.totalorder %s24, 1
      %p131 = por %p129, %p130
      %p133 = scmp.ne.s32.totalorder %s118, %s132
      %p134 = scmp.eq.s32.totalorder %s24, 0
      %p135 = por %p133, %p134
      %s137 = sadd.s32 %s136, 1
      %p140 = scmp.eq.s32.totalorder %s18, 1
      %p141 = scmp.ne.s32.totalorder %s136, %s138
      %p142 = scmp.eq.s32.totalorder %s18, 0
      %p143 = por %p141, %p142
      %p144 = scmp.ne.s32.totalorder %s136, %s138
      %p145 = scmp.eq.s32.totalorder %s23, 1
      %p146 = por %p144, %p145
      %p147 = scmp.ne.s32.totalorder %s138, %s139
      %p148 = scmp.eq.s32.totalorder %s23, 0
      %p149 = por %p147, %p148
      %p150 = scmp.ne.s32.totalorder %s138, %s139
      %p151 = scmp.eq.s32.totalorder %s24, 1
      %p152 = por %p150, %p151
      %p154 = scmp.ne.s32.totalorder %s139, %s153
      %p155 = scmp.eq.s32.totalorder %s24, 0
      %p156 = por %p154, %p155
      %s158 = sadd.s32 %s157, 1
      %p161 = scmp.eq.s32.totalorder %s18, 1
      %p162 = scmp.ne.s32.totalorder %s157, %s159
      %p163 = scmp.eq.s32.totalorder %s18, 0
      %p164 = por %p162, %p163
      %p165 = scmp.ne.s32.totalorder %s157, %s159
      %p166 = scmp.eq.s32.totalorder %s23, 1
      %p167 = por %p165, %p166
      %p168 = scmp.ne.s32.totalorder %s159, %s160
      %p169 = scmp.eq.s32.totalorder %s23, 0
      %p170 = por %p168, %p169
      %p171 = scmp.ne.s32.totalorder %s159, %s160
      %p172 = scmp.eq.s32.totalorder %s24, 1
      %p173 = por %p171, %p172
      %p175 = scmp.ne.s32.totalorder %s160, %s174
      %p176 = scmp.eq.s32.totalorder %s24, 0
      %p177 = por %p175, %p176
      %s179 = sadd.s32 %s178, 1
      %p182 = scmp.eq.s32.totalorder %s18, 1
      %p183 = scmp.ne.s32.totalorder %s178, %s180
      %p184 = scmp.eq.s32.totalorder %s18, 0
      %p185 = por %p183, %p184
      %p186 = scmp.ne.s32.totalorder %s178, %s180
      %p187 = scmp.eq.s32.totalorder %s23, 1
      %p188 = por %p186, %p187
      %p189 = scmp.ne.s32.totalorder %s180, %s181
      %p190 = scmp.eq.s32.totalorder %s23, 0
      %p191 = por %p189, %p190
      %p192 = scmp.ne.s32.totalorder %s180, %s181
      %p193 = scmp.eq.s32.totalorder %s24, 1
      %p194 = por %p192, %p193
      %p196 = scmp.ne.s32.totalorder %s181, %s195
      %p197 = scmp.eq.s32.totalorder %s24, 0
      %p198 = por %p196, %p197
      %s200 = sadd.s32 %s199, 1
      %p203 = scmp.eq.s32.totalorder %s18, 1
      %p204 = scmp.ne.s32.totalorder %s199, %s201
      %p205 = scmp.eq.s32.totalorder %s18, 0
      %p206 = por %p204, %p205
      %p207 = scmp.ne.s32.totalorder %s199, %s201
      %p208 = scmp.eq.s32.totalorder %s23, 1
      %p209 = por %p207, %p208
      %p210 = scmp.ne.s32.totalorder %s201, %s202
      %p211 = scmp.eq.s32.totalorder %s23, 0
      %p212 = por %p210, %p211
      %p213 = scmp.ne.s32.totalorder %s201, %s202
      %p214 = scmp.eq.s32.totalorder %s24, 1
      %p215 = por %p213, %p214
      %p217 = scmp.ne.s32.totalorder %s202, %s216
      %p218 = scmp.eq.s32.totalorder %s24, 0
      %p219 = por %p217, %p218
      %s221 = sadd.s32 %s220, 1
      %p224 = scmp.eq.s32.totalorder %s18, 1
      %p225 = scmp.ne.s32.totalorder %s220, %s222
      %p226 = scmp.eq.s32.totalorder %s18, 0
      %p227 = por %p225, %p226
      %p228 = scmp.ne.s32.totalorder %s220, %s222
      %p229 = scmp.eq.s32.totalorder %s23, 1
      %p230 = por %p228, %p229
      %p231 = scmp.ne.s32.totalorder %s222, %s223
      %p232 = scmp.eq.s32.totalorder %s23, 0
      %p233 = por %p231, %p232
      %p234 = scmp.ne.s32.totalorder %s222, %s223
      %p235 = scmp.eq.s32.totalorder %s24, 1
      %p236 = por %p234, %p235
      %p238 = scmp.ne.s32.totalorder %s223, %s237
      %p239 = scmp.eq.s32.totalorder %s24, 0
      %p240 = por %p238, %p239
      %s242 = sadd.s32 %s241, 1
      %p245 = scmp.eq.s32.totalorder %s18, 1
      %p246 = scmp.ne.s32.totalorder %s241, %s243
      %p247 = scmp.eq.s32.totalorder %s18, 0
      %p248 = por %p246, %p247
      %p249 = scmp.ne.s32.totalorder %s241, %s243
      %p250 = scmp.eq.s32.totalorder %s23, 1
      %p251 = por %p249, %p250
      %p252 = scmp.ne.s32.totalorder %s243, %s244
      %p253 = scmp.eq.s32.totalorder %s23, 0
      %p254 = por %p252, %p253
      %p255 = scmp.ne.s32.totalorder %s243, %s244
      %p256 = scmp.eq.s32.totalorder %s24, 1
      %p257 = por %p255, %p256
      %p259 = scmp.ne.s32.totalorder %s244, %s258
      %p260 = scmp.eq.s32.totalorder %s24, 0
      %p261 = por %p259, %p260
      %s263 = sadd.s32 %s262, 1
      %p266 = scmp.eq.s32.totalorder %s18, 1
      %p267 = scmp.ne.s32.totalorder %s262, %s264
      %p268 = scmp.eq.s32.totalorder %s18, 0
      %p269 = por %p267, %p268
      %p270 = scmp.ne.s32.totalorder %s262, %s264
      %p271 = scmp.eq.s32.totalorder %s23, 1
      %p272 = por %p270, %p271
      %p273 = scmp.ne.s32.totalorder %s264, %s265
      %p274 = scmp.eq.s32.totalorder %s23, 0
      %p275 = por %p273, %p274
      %p276 = scmp.ne.s32.totalorder %s264, %s265
      %p277 = scmp.eq.s32.totalorder %s24, 1
      %p278 = por %p276, %p277
      %p280 = scmp.ne.s32.totalorder %s265, %s279
      %p281 = scmp.eq.s32.totalorder %s24, 0
      %p282 = por %p280, %p281
      %s283 = ssub.s32 %s18, %s25
      %p284 = scmp.eq.s32.totalorder %s283, 0
      %s286 = sadd.s32 %s285, 1
      %s287 = scalar_select %p284, %s285, %s286
      %p290 = pneg %p284
      %p291 = scmp.eq.s32.totalorder %s18, 1
      %p292 = por %p290, %p291
      %p293 = scmp.ne.s32.totalorder %s285, %s288
      %p294 = scmp.eq.s32.totalorder %s18, 0
      %p295 = por %p293, %p294
      %p296 = scmp.ne.s32.totalorder %s285, %s288
      %p297 = scmp.eq.s32.totalorder %s23, 1
      %p298 = por %p296, %p297
      %p299 = scmp.ne.s32.totalorder %s288, %s289
      %p300 = scmp.eq.s32.totalorder %s23, 0
      %p301 = por %p299, %p300
      %p302 = scmp.ne.s32.totalorder %s288, %s289
      %p303 = scmp.eq.s32.totalorder %s24, 1
      %p304 = por %p302, %p303
      %p306 = scmp.ne.s32.totalorder %s289, %s305
      %p307 = scmp.eq.s32.totalorder %s24, 0
      %p308 = por %p306, %p307
      %p309 = scmp.le.s32.totalorder 1, %s18
      %p310 = scmp.lt.s32.totalorder %s18, 3
      %p311 = pnand %p309, %p310
      %p312 = pneg %p311
      // Predicated region
      $region9: #{vtm_image_backbone_forward.1} parent=5 // pred_check
        _
      $region10: #{vtm_image_backbone_forward.1} parent=5 // pred_check_branch
        %314 = sbr.rel (%p311) target = $region12
      $region11: #{vtm_image_backbone_forward.1} parent=5 // pred_region
        %s315 = ssub.s32 %s18, 1
        // Predicated region
        $region13: #{vtm_image_backbone_forward.1} parent=11 // pred_check
          %p316 = pneg %p65
        $region14: #{vtm_image_backbone_forward.1} parent=11 // pred_check_branch
          %318 = sbr.rel (%p316) target = $region16
        $region15: #{vtm_image_backbone_forward.1} parent=11 // pred_region
          _
        $region16: #{vtm_image_backbone_forward.1} parent=11 // pred_fallthru
          _
        // Predicated region
        $region17: #{vtm_image_backbone_forward.1} parent=11 // pred_check
          %p319 = pneg %p86
        $region18: #{vtm_image_backbone_forward.1} parent=11 // pred_check_branch
          %321 = sbr.rel (%p319) target = $region20
        $region19: #{vtm_image_backbone_forward.1} parent=11 // pred_region
          _
        $region20: #{vtm_image_backbone_forward.1} parent=11 // pred_fallthru
          _
        // Predicated region
        $region21: #{vtm_image_backbone_forward.1} parent=11 // pred_check
          %p322 = pneg %p107
        $region22: #{vtm_image_backbone_forward.1} parent=11 // pred_check_branch
          %324 = sbr.rel (%p322) target = $region24
        $region23: #{vtm_image_backbone_forward.1} parent=11 // pred_region
          _
        $region24: #{vtm_image_backbone_forward.1} parent=11 // pred_fallthru
          _
        // Predicated region
        $region25: #{vtm_image_backbone_forward.1} parent=11 // pred_check
          %p325 = pneg %p128
        $region26: #{vtm_image_backbone_forward.1} parent=11 // pred_check_branch
          %327 = sbr.rel (%p325) target = $region28
        $region27: #{vtm_image_backbone_forward.1} parent=11 // pred_region
          _
        $region28: #{vtm_image_backbone_forward.1} parent=11 // pred_fallthru
          _
        // Predicated region
        $region29: #{vtm_image_backbone_forward.1} parent=11 // pred_check
          %p328 = pneg %p149
        $region30: #{vtm_image_backbone_forward.1} parent=11 // pred_check_branch
          %330 = sbr.rel (%p328) target = $region32
        $region31: #{vtm_image_backbone_forward.1} parent=11 // pred_region
          _
        $region32: #{vtm_image_backbone_forward.1} parent=11 // pred_fallthru
          _
        // Predicated region
        $region33: #{vtm_image_backbone_forward.1} parent=11 // pred_check
          %p331 = pneg %p170
        $region34: #{vtm_image_backbone_forward.1} parent=11 // pred_check_branch
          %333 = sbr.rel (%p331) target = $region36
        $region35: #{vtm_image_backbone_forward.1} parent=11 // pred_region
          _
        $region36: #{vtm_image_backbone_forward.1} parent=11 // pred_fallthru
          _
        // Predicated region
        $region37: #{vtm_image_backbone_forward.1} parent=11 // pred_check
          %p334 = pneg %p191
        $region38: #{vtm_image_backbone_forward.1} parent=11 // pred_check_branch
          %336 = sbr.rel (%p334) target = $region40
        $region39: #{vtm_image_backbone_forward.1} parent=11 // pred_region
          _
        $region40: #{vtm_image_backbone_forward.1} parent=11 // pred_fallthru
          _
        // Predicated region
        $region41: #{vtm_image_backbone_forward.1} parent=11 // pred_check
          %p337 = pneg %p212
        $region42: #{vtm_image_backbone_forward.1} parent=11 // pred_check_branch
          %339 = sbr.rel (%p337) target = $region44
        $region43: #{vtm_image_backbone_forward.1} parent=11 // pred_region
          _
        $region44: #{vtm_image_backbone_forward.1} parent=11 // pred_fallthru
          _
        // Predicated region
        $region45: #{vtm_image_backbone_forward.1} parent=11 // pred_check
          %p340 = pneg %p233
        $region46: #{vtm_image_backbone_forward.1} parent=11 // pred_check_branch
          %342 = sbr.rel (%p340) target = $region48
        $region47: #{vtm_image_backbone_forward.1} parent=11 // pred_region
          _
        $region48: #{vtm_image_backbone_forward.1} parent=11 // pred_fallthru
          _
        // Predicated region
        $region49: #{vtm_image_backbone_forward.1} parent=11 // pred_check
          %p343 = pneg %p254
        $region50: #{vtm_image_backbone_forward.1} parent=11 // pred_check_branch
          %345 = sbr.rel (%p343) target = $region52
        $region51: #{vtm_image_backbone_forward.1} parent=11 // pred_region
          _
        $region52: #{vtm_image_backbone_forward.1} parent=11 // pred_fallthru
          _
        // Predicated region
        $region53: #{vtm_image_backbone_forward.1} parent=11 // pred_check
          %p346 = pneg %p275
        $region54: #{vtm_image_backbone_forward.1} parent=11 // pred_check_branch
          %348 = sbr.rel (%p346) target = $region56
        $region55: #{vtm_image_backbone_forward.1} parent=11 // pred_region
          _
        $region56: #{vtm_image_backbone_forward.1} parent=11 // pred_fallthru
          _
      $region12: #{vtm_image_backbone_forward.1} parent=5 // pred_fallthru
        _
      %p349 = scmp.lt.s32.totalorder %s18, 2
      // Predicated region
      $region57: #{vtm_image_backbone_forward.1} parent=5 // pred_check
        %p350 = pneg %p349
      $region58: #{vtm_image_backbone_forward.1} parent=5 // pred_check_branch
        %352 = sbr.rel (%p350) target = $region60
      $region59: #{vtm_image_backbone_forward.1} parent=5 // pred_region
        // Predicated region
        $region61: #{vtm_image_backbone_forward.1} parent=59 // pred_check
          %p353 = pneg %p38
        $region62: #{vtm_image_backbone_forward.1} parent=59 // pred_check_branch
          %355 = sbr.rel (%p353) target = $region64
        $region63: #{vtm_image_backbone_forward.1} parent=59 // pred_region
          %s356 = smul.u32 16, %s18
          %p357 = scmp.lt.s32.totalorder %s356, 31
          %s358 = scalar_select %p357, %s356, 31
          %s359 = smul.addr %s358, 2
          %s360 = smul.addr %s359, 4
          %s361 = scalar_lea.vmem %s0, %s360
          %s362 = smul.u32 16, %s18
        $region64: #{vtm_image_backbone_forward.1} parent=59 // pred_fallthru
          _
      $region60: #{vtm_image_backbone_forward.1} parent=5 // pred_fallthru
        _
      %p363 = scmp.le.s32.totalorder 1, %s18
      %p364 = scmp.lt.s32.totalorder %s18, 3
      %p365 = pnand %p363, %p364
      %p366 = pneg %p365
      // Predicated region
      $region65: #{vtm_image_backbone_forward.1} parent=5 // pred_check
        _
      $region66: #{vtm_image_backbone_forward.1} parent=5 // pred_check_branch
        %368 = sbr.rel (%p365) target = $region68
      $region67: #{vtm_image_backbone_forward.1} parent=5 // pred_region
        %s369 = ssub.s32 %s18, 1
        %s370 = smul.u32 16, %s23
        %p371 = scmp.lt.s32.totalorder %s370, 31
        %s372 = scalar_select %p371, %s370, 31
        %s373 = smul.addr %s372, 2
        %s374 = smul.addr %s373, 4
        %s375 = scalar_lea.vmem %s0, %s374
        %p376 = pneg %p44
        %p377 = pneg %p41
        %p378 = pneg %p65
        %p379 = pneg %p62
        %p380 = pneg %p86
        %p381 = pneg %p83
        %p382 = pneg %p107
        %p383 = pneg %p104
        %p384 = pneg %p128
        %p385 = pneg %p125
        %p386 = pneg %p149
        %p387 = pneg %p146
        %p388 = pneg %p170
        %p389 = pneg %p167
        %p390 = pneg %p191
        %p391 = pneg %p188
        %p392 = pneg %p212
        %p393 = pneg %p209
        %p394 = pneg %p233
        %p395 = pneg %p230
        %p396 = pneg %p254
        %p397 = pneg %p251
        %p398 = pneg %p275
        %p399 = pneg %p272
        %p400 = pneg %p301
        %p401 = pneg %p298
        %s402 = sand.u32 %s288, 1
        %s403 = sand.u32 %s288, 1
        %s404 = smul.addr %s403, 256
        %s405 = scalar_lea.vmem [#allocation2], %s404
        %s406 = smul.u32 16, %s23
        %p407 = scmp.lt.s32.totalorder %s406, 31
        %s408 = scalar_select %p407, %s406, 31
        %s409 = smul.addr %s408, 2
        %s410 = smul.addr %s409, 4
        %s411 = scalar_lea.vmem %s0, %s410
        %s412 = smul.u32 16, %s23
        %s413 = smul.u32 16, %s23
        %v415 = vld [vmem:[%s3] sm:$0xff]
        %v416 = vld [vmem:[%s3 + $0x8] sm:$0xff]
        %v417 = vld [vmem:[%s3 + $0x10] sm:$0xff]
        %v418 = vld [vmem:[%s3 + $0x18] sm:$0xff]
        %v419 = vld [vmem:[%s3 + $0x20] sm:$0xff]
        %v420 = vld [vmem:[%s3 + $0x28] sm:$0xff]
        %v421 = vld [vmem:[%s3 + $0x30] sm:$0xff]
        %v422 = vld [vmem:[%s3 + $0x38] sm:$0xff]
        %v423 = vld [vmem:[%s3 + $0x40] sm:$0xff]
        %v424 = vld [vmem:[%s3 + $0x48] sm:$0xff]
        %v425 = vld [vmem:[%s3 + $0x50] sm:$0xff]
        %v426 = vld [vmem:[%s3 + $0x58] sm:$0xff]
        %v427 = vld [vmem:[%s3 + $0x60] sm:$0xff]
        %v428 = vld [vmem:[%s3 + $0x68] sm:$0xff]
        %v429 = vld [vmem:[%s3 + $0x70] sm:$0xff]
        %v430 = vld [vmem:[%s3 + $0x78] sm:$0xff]
        %v431 = vld [vmem:[%s4] sm:$0x1]
        %432 = vset.pattern.permute.xlu0 0
        %433 = vperm.xlu0 %432, %v415
        %v434 = vpop.permute.xlu0 %433
        %435 = vset.pattern.permute.xlu0 0
        %436 = vperm.xlu0 %435, %v416
        %v437 = vpop.permute.xlu0 %436
        %438 = vset.pattern.permute.xlu0 0
        %439 = vperm.xlu0 %438, %v417
        %v440 = vpop.permute.xlu0 %439
        %441 = vset.pattern.permute.xlu0 0
        %442 = vperm.xlu0 %441, %v418
        %v443 = vpop.permute.xlu0 %442
        %444 = vset.pattern.permute.xlu0 0
        %445 = vperm.xlu0 %444, %v419
        %v446 = vpop.permute.xlu0 %445
        %447 = vset.pattern.permute.xlu0 0
        %448 = vperm.xlu0 %447, %v420
        %v449 = vpop.permute.xlu0 %448
        %450 = vset.pattern.permute.xlu0 0
        %451 = vperm.xlu0 %450, %v421
        %v452 = vpop.permute.xlu0 %451
        %453 = vset.pattern.permute.xlu0 0
        %454 = vperm.xlu0 %453, %v422
        %v455 = vpop.permute.xlu0 %454
        %456 = vset.pattern.permute.xlu0 0
        %457 = vperm.xlu0 %456, %v423
        %v458 = vpop.permute.xlu0 %457
        %459 = vset.pattern.permute.xlu0 0
        %460 = vperm.xlu0 %459, %v424
        %v461 = vpop.permute.xlu0 %460
        %462 = vset.pattern.permute.xlu0 0
        %463 = vperm.xlu0 %462, %v425
        %v464 = vpop.permute.xlu0 %463
        %465 = vset.pattern.permute.xlu0 0
        %466 = vperm.xlu0 %465, %v426
        %v467 = vpop.permute.xlu0 %466
        %468 = vset.pattern.permute.xlu0 0
        %469 = vperm.xlu0 %468, %v427
        %v470 = vpop.permute.xlu0 %469
        %471 = vset.pattern.permute.xlu0 0
        %472 = vperm.xlu0 %471, %v428
        %v473 = vpop.permute.xlu0 %472
        %474 = vset.pattern.permute.xlu0 0
        %475 = vperm.xlu0 %474, %v429
        %v476 = vpop.permute.xlu0 %475
        %477 = vset.pattern.permute.xlu0 0
        %478 = vperm.xlu0 %477, %v430
        %v479 = vpop.permute.xlu0 %478
        %v480 = vlaneseq
        %v481 = vshrl.u32 %v480, 7
        %v482 = vsub.s32 0, %v481
        %v483 = vrot.slane %v431, %v482
        %vm484 = vcmp.eq.s32.totalorder %v434, %v483
        %vm485 = vcmp.eq.s32.totalorder %v437, %v483
        %vm486 = vcmp.eq.s32.totalorder %v440, %v483
        %vm487 = vcmp.eq.s32.totalorder %v443, %v483
        %vm488 = vcmp.eq.s32.totalorder %v446, %v483
        %vm489 = vcmp.eq.s32.totalorder %v449, %v483
        %vm490 = vcmp.eq.s32.totalorder %v452, %v483
        %vm491 = vcmp.eq.s32.totalorder %v455, %v483
        %vm492 = vcmp.eq.s32.totalorder %v458, %v483
        %vm493 = vcmp.eq.s32.totalorder %v461, %v483
        %vm494 = vcmp.eq.s32.totalorder %v464, %v483
        %vm495 = vcmp.eq.s32.totalorder %v467, %v483
        %vm496 = vcmp.eq.s32.totalorder %v470, %v483
        %vm497 = vcmp.eq.s32.totalorder %v473, %v483
        %vm498 = vcmp.eq.s32.totalorder %v476, %v483
        %vm499 = vcmp.eq.s32.totalorder %v479, %v483
        %v500 = vsel %vm484, 0.0, -1e+30
        %v501 = vsel %vm485, 0.0, -1e+30
        %v502 = vsel %vm486, 0.0, -1e+30
        %v503 = vsel %vm487, 0.0, -1e+30
        %v504 = vsel %vm488, 0.0, -1e+30
        %v505 = vsel %vm489, 0.0, -1e+30
        %v506 = vsel %vm490, 0.0, -1e+30
        %v507 = vsel %vm491, 0.0, -1e+30
        %v508 = vsel %vm492, 0.0, -1e+30
        %v509 = vsel %vm493, 0.0, -1e+30
        %v510 = vsel %vm494, 0.0, -1e+30
        %v511 = vsel %vm495, 0.0, -1e+30
        %v512 = vsel %vm496, 0.0, -1e+30
        %v513 = vsel %vm497, 0.0, -1e+30
        %v514 = vsel %vm498, 0.0, -1e+30
        %v515 = vsel %vm499, 0.0, -1e+30
        %v516 = vld [vmem:[%s411] sm:$0xff]
        %v517 = vld [vmem:[%s411 + $0x8] sm:$0xff]
        %v518 = vld [vmem:[%s411 + $0x10] sm:$0xff]
        %v519 = vld [vmem:[%s411 + $0x18] sm:$0xff]
        %v520 = vld [vmem:[%s411 + $0x20] sm:$0xff]
        %v521 = vld [vmem:[%s411 + $0x28] sm:$0xff]
        %v522 = vld [vmem:[%s411 + $0x30] sm:$0xff]
        %v523 = vld [vmem:[%s411 + $0x38] sm:$0xff]
        %v524 = vld [vmem:[%s411 + $0x40] sm:$0xff]
        %v525 = vld [vmem:[%s411 + $0x48] sm:$0xff]
        %v526 = vld [vmem:[%s411 + $0x50] sm:$0xff]
        %v527 = vld [vmem:[%s411 + $0x58] sm:$0xff]
        %v528 = vld [vmem:[%s411 + $0x60] sm:$0xff]
        %v529 = vld [vmem:[%s411 + $0x68] sm:$0xff]
        %v530 = vld [vmem:[%s411 + $0x70] sm:$0xff]
        %v531 = vld [vmem:[%s411 + $0x78] sm:$0xff]
        %v532 = vld [vmem:[%s1] sm:$0xf]
        %v533 = vld [vmem:[%s1 + $0x4] sm:$0xf]
        %v534 = vld [vmem:[%s1 + $0x8] sm:$0xf]
        %v535 = vld [vmem:[%s1 + $0xc] sm:$0xf]
        %v536 = vld [vmem:[%s1 + $0x10] sm:$0xf]
        %v537 = vld [vmem:[%s1 + $0x14] sm:$0xf]
        %v538 = vld [vmem:[%s1 + $0x18] sm:$0xf]
        %v539 = vld [vmem:[%s1 + $0x1c] sm:$0xf]
        %v540 = vld [vmem:[%s1 + $0x20] sm:$0xf]
        %v541 = vld [vmem:[%s1 + $0x24] sm:$0xf]
        %v542 = vld [vmem:[%s1 + $0x28] sm:$0xf]
        %v543 = vld [vmem:[%s1 + $0x2c] sm:$0xf]
        %v544 = vld [vmem:[%s1 + $0x30] sm:$0xf]
        %v545 = vld [vmem:[%s1 + $0x34] sm:$0xf]
        %v546 = vld [vmem:[%s1 + $0x38] sm:$0xf]
        %v547 = vld [vmem:[%s1 + $0x3c] sm:$0xf]
        %v548 = vld [vmem:[%s1 + $0x40] sm:$0xf]
        %v549 = vld [vmem:[%s1 + $0x44] sm:$0xf]
        %v550 = vld [vmem:[%s1 + $0x48] sm:$0xf]
        %v551 = vld [vmem:[%s1 + $0x4c] sm:$0xf]
        %v552 = vld [vmem:[%s1 + $0x50] sm:$0xf]
        %v553 = vld [vmem:[%s1 + $0x54] sm:$0xf]
        %v554 = vld [vmem:[%s1 + $0x58] sm:$0xf]
        %v555 = vld [vmem:[%s1 + $0x5c] sm:$0xf]
        %v556 = vld [vmem:[%s2] sm:$0xff]
        %v557 = vld [vmem:[%s2 + $0x8] sm:$0xff]
        %v558 = vld [vmem:[%s2 + $0x10] sm:$0xff]
        %v559 = vld [vmem:[%s2 + $0x18] sm:$0xff]
        %v560 = vld [vmem:[%s2 + $0x20] sm:$0xff]
        %v561 = vld [vmem:[%s2 + $0x28] sm:$0xff]
        %v562 = vld [vmem:[%s2 + $0x30] sm:$0xff]
        %v563 = vld [vmem:[%s2 + $0x38] sm:$0xff]
        %v564 = vld [vmem:[%s2 + $0x40] sm:$0xff]
        %v565 = vld [vmem:[%s2 + $0x48] sm:$0xff]
        %v566 = vld [vmem:[%s2 + $0x50] sm:$0xff]
        %v567 = vld [vmem:[%s2 + $0x58] sm:$0xff]
        %v568 = vld [vmem:[%s2 + $0x60] sm:$0xff]
        %v569 = vld [vmem:[%s2 + $0x68] sm:$0xff]
        %v570 = vld [vmem:[%s2 + $0x70] sm:$0xff]
        %v571 = vld [vmem:[%s2 + $0x78] sm:$0xff]
        %v588 = vunpack.c.l.b16 %v516
        %v589 = vunpack.c.h.b16 %v516
        %v590 = vunpack.c.l.b16 %v517
        %v591 = vunpack.c.h.b16 %v517
        %v592 = vunpack.c.l.b16 %v518
        %v593 = vunpack.c.h.b16 %v518
        %v594 = vunpack.c.l.b16 %v519
        %v595 = vunpack.c.h.b16 %v519
        %v596 = vunpack.c.l.b16 %v520
        %v597 = vunpack.c.h.b16 %v520
        %v598 = vunpack.c.l.b16 %v521
        %v599 = vunpack.c.h.b16 %v521
        %v600 = vunpack.c.l.b16 %v522
        %v601 = vunpack.c.h.b16 %v522
        %v602 = vunpack.c.l.b16 %v523
        %v603 = vunpack.c.h.b16 %v523
        %v604 = vunpack.c.l.b16 %v524
        %v605 = vunpack.c.h.b16 %v524
        %v606 = vunpack.c.l.b16 %v525
        %v607 = vunpack.c.h.b16 %v525
        %v608 = vunpack.c.l.b16 %v526
        %v609 = vunpack.c.h.b16 %v526
        %v610 = vunpack.c.l.b16 %v527
        %v611 = vunpack.c.h.b16 %v527
        %v612 = vunpack.c.l.b16 %v528
        %v613 = vunpack.c.h.b16 %v528
        %v614 = vunpack.c.l.b16 %v529
        %v615 = vunpack.c.h.b16 %v529
        %v616 = vunpack.c.l.b16 %v530
        %v617 = vunpack.c.h.b16 %v530
        %v618 = vunpack.c.l.b16 %v531
        %v619 = vunpack.c.h.b16 %v531
        %v620 = vpack.c.b16 %v590, %v588
        %v621 = vpack.c.b16 %v591, %v589
        %v622 = vpack.c.b16 %v594, %v592
        %v623 = vpack.c.b16 %v595, %v593
        %v624 = vpack.c.b16 %v598, %v596
        %v625 = vpack.c.b16 %v599, %v597
        %v626 = vpack.c.b16 %v602, %v600
        %v627 = vpack.c.b16 %v603, %v601
        %v628 = vpack.c.b16 %v606, %v604
        %v629 = vpack.c.b16 %v607, %v605
        %v630 = vpack.c.b16 %v610, %v608
        %v631 = vpack.c.b16 %v611, %v609
        %v632 = vpack.c.b16 %v614, %v612
        %v633 = vpack.c.b16 %v615, %v613
        %v634 = vpack.c.b16 %v618, %v616
        %v635 = vpack.c.b16 %v619, %v617
        %v668 = vunpack.c.l.b16 %v532
        %v669 = vunpack.c.l.b16 %v533
        %v670 = vunpack.c.l.b16 %v534
        %v671 = vunpack.c.l.b16 %v535
        %v672 = vunpack.c.l.b16 %v536
        %v673 = vunpack.c.l.b16 %v537
        %v674 = vunpack.c.l.b16 %v538
        %v675 = vunpack.c.l.b16 %v539
        %v676 = vunpack.c.l.b16 %v540
        %v677 = vunpack.c.l.b16 %v541
        %v678 = vunpack.c.l.b16 %v542
        %v679 = vunpack.c.l.b16 %v543
        %v680 = vunpack.c.l.b16 %v544
        %v681 = vunpack.c.l.b16 %v545
        %v682 = vunpack.c.l.b16 %v546
        %v683 = vunpack.c.l.b16 %v547
        %v684 = vunpack.c.l.b16 %v548
        %v685 = vunpack.c.l.b16 %v549
        %v686 = vunpack.c.l.b16 %v550
        %v687 = vunpack.c.l.b16 %v551
        %v688 = vunpack.c.l.b16 %v552
        %v689 = vunpack.c.l.b16 %v553
        %v690 = vunpack.c.l.b16 %v554
        %v691 = vunpack.c.l.b16 %v555
        %v692 = vpack.c.b16 %v669, %v668
        %v693 = vpack.c.b16 %v671, %v670
        %v694 = vpack.c.b16 %v673, %v672
        %v695 = vpack.c.b16 %v675, %v674
        %v696 = vpack.c.b16 %v677, %v676
        %v697 = vpack.c.b16 %v679, %v678
        %v698 = vpack.c.b16 %v681, %v680
        %v699 = vpack.c.b16 %v683, %v682
        %v700 = vpack.c.b16 %v685, %v684
        %v701 = vpack.c.b16 %v687, %v686
        %v702 = vpack.c.b16 %v689, %v688
        %v703 = vpack.c.b16 %v691, %v690
        %vm716 = vcmask 523264
        %v718 = vsel %vm716, %v621, 0
        %v721 = vsel %vm716, %v623, 0
        %v724 = vsel %vm716, %v625, 0
        %v727 = vsel %vm716, %v627, 0
        %v730 = vsel %vm716, %v629, 0
        %v733 = vsel %vm716, %v631, 0
        %v736 = vsel %vm716, %v633, 0
        %v739 = vsel %vm716, %v635, 0
        %741 = vmatprep.subr.bf16.mxu0 0
        %742 = vmatpush1.bf16.msra.mxu0 %v692
        %743 = vmatprep.subr.bf16.mxu0 0
        %744 = vmatpush1.bf16.msra.mxu0 %v693
        %745 = vmatprep.subr.bf16.mxu0 0
        %746 = vmatpush1.bf16.msra.mxu0 %v694
        %747 = vmatprep.subr.bf16.mxu0 0
        %748 = vmatpush1.bf16.msra.mxu0 %v695
        %749 = vmatprep.subr.bf16.mxu0 0
        %750 = vmatpush1.bf16.msra.mxu0 %v696
        %751 = vmatprep.subr.bf16.mxu0 0
        %752 = vmatpush1.bf16.msra.mxu0 %v697
        %753 = vmatprep.subr.bf16.mxu0 0
        %754 = vmatpush1.bf16.msra.mxu0 %v698
        %755 = vmatprep.subr.bf16.mxu0 0
        %756 = vmatpush1.bf16.msra.mxu0 %v699
        %757 = vmatprep.subr.bf16.mxu0 0
        %758 = vmatpush1.bf16.msra.mxu0 %v700
        %759 = vmatprep.subr.bf16.mxu0 0
        %760 = vmatpush1.bf16.msra.mxu0 %v701
        %761 = vmatprep.subr.bf16.mxu0 0
        %762 = vmatpush1.bf16.msra.mxu0 %v702
        %763 = vmatprep.subr.bf16.mxu0 0
        %764 = vmatpush1.bf16.msra.mxu0 %v703
        %765 = vmatprep.subr.bf16.mxu0 0
        %766 = vmatpush1.bf16.msra.mxu0 0
        %767 = vmatprep.subr.bf16.mxu0 0
        %768 = vmatpush1.bf16.msra.mxu0 0
        %769 = vmatprep.subr.bf16.mxu0 0
        %770 = vmatpush1.bf16.msra.mxu0 0
        %771 = vmatprep.subr.bf16.mxu0 0
        %772 = vmatpush1.bf16.msra.mxu0 0
        %773 = vmatprep.mubr.bf16.mxu0 %v718
        %774 = vmatmul.mubr.bf16.gmra.mrb[0].mxu0 %v620
        %v775 = vpop.f32.mrb[0].mxu0
        %v776 = vadd.f32 %v556, %v775
        %v777 = vpop.f32.mrb[0].mxu0
        %v778 = vpop.f32.mrb[0].mxu0
        %v779 = vadd.f32 %v557, %v778
        %v780 = vpop.f32.mrb[0].mxu0
        %781 = vmatprep.mubr.bf16.mxu0 %v721
        %782 = vmatmul.mubr.bf16.gmra.mrb[0].mxu0 %v622
        %v783 = vpop.f32.mrb[0].mxu0
        %v784 = vadd.f32 %v558, %v783
        %v785 = vpop.f32.mrb[0].mxu0
        %v786 = vpop.f32.mrb[0].mxu0
        %v787 = vadd.f32 %v559, %v786
        %v788 = vpop.f32.mrb[0].mxu0
        %789 = vmatprep.mubr.bf16.mxu0 %v724
        %790 = vmatmul.mubr.bf16.gmra.mrb[0].mxu0 %v624
        %v791 = vpop.f32.mrb[0].mxu0
        %v792 = vadd.f32 %v560, %v791
        %v793 = vpop.f32.mrb[0].mxu0
        %v794 = vpop.f32.mrb[0].mxu0
        %v795 = vadd.f32 %v561, %v794
        %v796 = vpop.f32.mrb[0].mxu0
        %797 = vmatprep.mubr.bf16.mxu0 %v727
        %798 = vmatmul.mubr.bf16.gmra.mrb[0].mxu0 %v626
        %v799 = vpop.f32.mrb[0].mxu0
        %v800 = vadd.f32 %v562, %v799
        %v801 = vpop.f32.mrb[0].mxu0
        %v802 = vpop.f32.mrb[0].mxu0
        %v803 = vadd.f32 %v563, %v802
        %v804 = vpop.f32.mrb[0].mxu0
        %805 = vmatprep.mubr.bf16.mxu0 %v730
        %806 = vmatmul.mubr.bf16.gmra.mrb[0].mxu0 %v628
        %v807 = vpop.f32.mrb[0].mxu0
        %v808 = vadd.f32 %v564, %v807
        %v809 = vpop.f32.mrb[0].mxu0
        %v810 = vpop.f32.mrb[0].mxu0
        %v811 = vadd.f32 %v565, %v810
        %v812 = vpop.f32.mrb[0].mxu0
        %813 = vmatprep.mubr.bf16.mxu0 %v733
        %814 = vmatmul.mubr.bf16.gmra.mrb[0].mxu0 %v630
        %v815 = vpop.f32.mrb[0].mxu0
        %v816 = vadd.f32 %v566, %v815
        %v817 = vpop.f32.mrb[0].mxu0
        %v818 = vpop.f32.mrb[0].mxu0
        %v819 = vadd.f32 %v567, %v818
        %v820 = vpop.f32.mrb[0].mxu0
        %821 = vmatprep.mubr.bf16.mxu0 %v736
        %822 = vmatmul.mubr.bf16.gmra.mrb[0].mxu0 %v632
        %v823 = vpop.f32.mrb[0].mxu0
        %v824 = vadd.f32 %v568, %v823
        %v825 = vpop.f32.mrb[0].mxu0
        %v826 = vpop.f32.mrb[0].mxu0
        %v827 = vadd.f32 %v569, %v826
        %v828 = vpop.f32.mrb[0].mxu0
        %829 = vmatprep.mubr.bf16.mxu0 %v739
        %830 = vmatmul.mubr.bf16.gmra.mrb[0].mxu0 %v634
        %v831 = vpop.f32.mrb[0].mxu0
        %v832 = vadd.f32 %v570, %v831
        %v833 = vpop.f32.mrb[0].mxu0
        %v834 = vpop.f32.mrb[0].mxu0
        %v835 = vadd.f32 %v571, %v834
        %v836 = vpop.f32.mrb[0].mxu0
        %837 = vdwg.mxu0
        %v838 = vld [vmem:[%s5] sm:$0x3f]
        %839 = vadd.xlane.f32.xlu0 %v776
        %v840 = vpop.xlane.xlu0 %839
        %841 = vadd.xlane.f32.xlu0 %v779
        %v842 = vpop.xlane.xlu0 %841
        %843 = vadd.xlane.f32.xlu0 %v784
        %v844 = vpop.xlane.xlu0 %843
        %845 = vadd.xlane.f32.xlu0 %v787
        %v846 = vpop.xlane.xlu0 %845
        %847 = vadd.xlane.f32.xlu0 %v792
        %v848 = vpop.xlane.xlu0 %847
        %849 = vadd.xlane.f32.xlu0 %v795
        %v850 = vpop.xlane.xlu0 %849
        %851 = vadd.xlane.f32.xlu0 %v800
        %v852 = vpop.xlane.xlu0 %851
        %853 = vadd.xlane.f32.xlu0 %v803
        %v854 = vpop.xlane.xlu0 %853
        %855 = vadd.xlane.f32.xlu0 %v808
        %v856 = vpop.xlane.xlu0 %855
        %857 = vadd.xlane.f32.xlu0 %v811
        %v858 = vpop.xlane.xlu0 %857
        %859 = vadd.xlane.f32.xlu0 %v816
        %v860 = vpop.xlane.xlu0 %859
        %861 = vadd.xlane.f32.xlu0 %v819
        %v862 = vpop.xlane.xlu0 %861
        %863 = vadd.xlane.f32.xlu0 %v824
        %v864 = vpop.xlane.xlu0 %863
        %865 = vadd.xlane.f32.xlu0 %v827
        %v866 = vpop.xlane.xlu0 %865
        %867 = vadd.xlane.f32.xlu0 %v832
        %v868 = vpop.xlane.xlu0 %867
        %869 = vadd.xlane.f32.xlu0 %v835
        %v870 = vpop.xlane.xlu0 %869
        %v871 = vrcp.pop 128.0
        %v872 = vmul.f32 %v840, %v871
        %v873 = vmul.f32 %v842, %v871
        %v874 = vmul.f32 %v844, %v871
        %v875 = vmul.f32 %v846, %v871
        %v876 = vmul.f32 %v848, %v871
        %v877 = vmul.f32 %v850, %v871
        %v878 = vmul.f32 %v852, %v871
        %v879 = vmul.f32 %v854, %v871
        %v880 = vmul.f32 %v856, %v871
        %v881 = vmul.f32 %v858, %v871
        %v882 = vmul.f32 %v860, %v871
        %v883 = vmul.f32 %v862, %v871
        %v884 = vmul.f32 %v864, %v871
        %v885 = vmul.f32 %v866, %v871
        %v886 = vmul.f32 %v868, %v871
        %v887 = vmul.f32 %v870, %v871
        %v888 = vsub.f32 %v776, %v872
        %v889 = vsub.f32 %v779, %v873
        %v890 = vsub.f32 %v784, %v874
        %v891 = vsub.f32 %v787, %v875
        %v892 = vsub.f32 %v792, %v876
        %v893 = vsub.f32 %v795, %v877
        %v894 = vsub.f32 %v800, %v878
        %v895 = vsub.f32 %v803, %v879
        %v896 = vsub.f32 %v808, %v880
        %v897 = vsub.f32 %v811, %v881
        %v898 = vsub.f32 %v816, %v882
        %v899 = vsub.f32 %v819, %v883
        %v900 = vsub.f32 %v824, %v884
        %v901 = vsub.f32 %v827, %v885
        %v902 = vsub.f32 %v832, %v886
        %v903 = vsub.f32 %v835, %v887
        %v904 = vmul.f32 %v888, %v888
        %v905 = vmul.f32 %v889, %v889
        %v906 = vmul.f32 %v890, %v890
        %v907 = vmul.f32 %v891, %v891
        %v908 = vmul.f32 %v892, %v892
        %v909 = vmul.f32 %v893, %v893
        %v910 = vmul.f32 %v894, %v894
        %v911 = vmul.f32 %v895, %v895
        %v912 = vmul.f32 %v896, %v896
        %v913 = vmul.f32 %v897, %v897
        %v914 = vmul.f32 %v898, %v898
        %v915 = vmul.f32 %v899, %v899
        %v916 = vmul.f32 %v900, %v900
        %v917 = vmul.f32 %v901, %v901
        %v918 = vmul.f32 %v902, %v902
        %v919 = vmul.f32 %v903, %v903
        %920 = vadd.xlane.f32.xlu0 %v904
        %v921 = vpop.xlane.xlu0 %920
        %922 = vadd.xlane.f32.xlu0 %v905
        %v923 = vpop.xlane.xlu0 %922
        %924 = vadd.xlane.f32.xlu0 %v906
        %v925 = vpop.xlane.xlu0 %924
        %926 = vadd.xlane.f32.xlu0 %v907
        %v927 = vpop.xlane.xlu0 %926
        %928 = vadd.xlane.f32.xlu0 %v908
        %v929 = vpop.xlane.xlu0 %928
        %930 = vadd.xlane.f32.xlu0 %v909
        %v931 = vpop.xlane.xlu0 %930
        %932 = vadd.xlane.f32.xlu0 %v910
        %v933 = vpop.xlane.xlu0 %932
        %934 = vadd.xlane.f32.xlu0 %v911
        %v935 = vpop.xlane.xlu0 %934
        %936 = vadd.xlane.f32.xlu0 %v912
        %v937 = vpop.xlane.xlu0 %936
        %938 = vadd.xlane.f32.xlu0 %v913
        %v939 = vpop.xlane.xlu0 %938
        %940 = vadd.xlane.f32.xlu0 %v914
        %v941 = vpop.xlane.xlu0 %940
        %942 = vadd.xlane.f32.xlu0 %v915
        %v943 = vpop.xlane.xlu0 %942
        %944 = vadd.xlane.f32.xlu0 %v916
        %v945 = vpop.xlane.xlu0 %944
        %946 = vadd.xlane.f32.xlu0 %v917
        %v947 = vpop.xlane.xlu0 %946
        %948 = vadd.xlane.f32.xlu0 %v918
        %v949 = vpop.xlane.xlu0 %948
        %950 = vadd.xlane.f32.xlu0 %v919
        %v951 = vpop.xlane.xlu0 %950
        %v952 = vmul.f32 %v921, %v871
        %v953 = vmul.f32 %v923, %v871
        %v954 = vmul.f32 %v925, %v871
        %v955 = vmul.f32 %v927, %v871
        %v956 = vmul.f32 %v929, %v871
        %v957 = vmul.f32 %v931, %v871
        %v958 = vmul.f32 %v933, %v871
        %v959 = vmul.f32 %v935, %v871
        %v960 = vmul.f32 %v937, %v871
        %v961 = vmul.f32 %v939, %v871
        %v962 = vmul.f32 %v941, %v871
        %v963 = vmul.f32 %v943, %v871
        %v964 = vmul.f32 %v945, %v871
        %v965 = vmul.f32 %v947, %v871
        %v966 = vmul.f32 %v949, %v871
        %v967 = vmul.f32 %v951, %v871
        %v968 = vadd.f32 %v952, 1e-05
        %v969 = vadd.f32 %v953, 1e-05
        %v970 = vadd.f32 %v954, 1e-05
        %v971 = vadd.f32 %v955, 1e-05
        %v972 = vadd.f32 %v956, 1e-05
        %v973 = vadd.f32 %v957, 1e-05
        %v974 = vadd.f32 %v958, 1e-05
        %v975 = vadd.f32 %v959, 1e-05
        %v976 = vadd.f32 %v960, 1e-05
        %v977 = vadd.f32 %v961, 1e-05
        %v978 = vadd.f32 %v962, 1e-05
        %v979 = vadd.f32 %v963, 1e-05
        %v980 = vadd.f32 %v964, 1e-05
        %v981 = vadd.f32 %v965, 1e-05
        %v982 = vadd.f32 %v966, 1e-05
        %v983 = vadd.f32 %v967, 1e-05
        %v984 = vrsqrt.pop %v968
        %v985 = vrsqrt.pop %v969
        %v986 = vrsqrt.pop %v970
        %v987 = vrsqrt.pop %v971
        %v988 = vrsqrt.pop %v972
        %v989 = vrsqrt.pop %v973
        %v990 = vrsqrt.pop %v974
        %v991 = vrsqrt.pop %v975
        %v992 = vrsqrt.pop %v976
        %v993 = vrsqrt.pop %v977
        %v994 = vrsqrt.pop %v978
        %v995 = vrsqrt.pop %v979
        %v996 = vrsqrt.pop %v980
        %v997 = vrsqrt.pop %v981
        %v998 = vrsqrt.pop %v982
        %v999 = vrsqrt.pop %v983
        %v1000 = vmul.f32 %v888, %v984
        %v1001 = vmul.f32 %v889, %v985
        %v1002 = vmul.f32 %v890, %v986
        %v1003 = vmul.f32 %v891, %v987
        %v1004 = vmul.f32 %v892, %v988
        %v1005 = vmul.f32 %v893, %v989
        %v1006 = vmul.f32 %v894, %v990
        %v1007 = vmul.f32 %v895, %v991
        %v1008 = vmul.f32 %v896, %v992
        %v1009 = vmul.f32 %v897, %v993
        %v1010 = vmul.f32 %v898, %v994
        %v1011 = vmul.f32 %v899, %v995
        %v1012 = vmul.f32 %v900, %v996
        %v1013 = vmul.f32 %v901, %v997
        %v1014 = vmul.f32 %v902, %v998
        %v1015 = vmul.f32 %v903, %v999
        %v1016 = vlaneseq
        %v1017 = vshrl.u32 %v1016, 7
        %v1018 = vsub.s32 0, %v1017
        %v1019 = vrot.slane %v838, %v1018
        %v1020 = vmul.f32 %v1000, %v1019
        %v1021 = vmul.f32 %v1001, %v1019
        %v1022 = vmul.f32 %v1002, %v1019
        %v1023 = vmul.f32 %v1003, %v1019
        %v1024 = vmul.f32 %v1004, %v1019
        %v1025 = vmul.f32 %v1005, %v1019
        %v1026 = vmul.f32 %v1006, %v1019
        %v1027 = vmul.f32 %v1007, %v1019
        %v1028 = vmul.f32 %v1008, %v1019
        %v1029 = vmul.f32 %v1009, %v1019
        %v1030 = vmul.f32 %v1010, %v1019
        %v1031 = vmul.f32 %v1011, %v1019
        %v1032 = vmul.f32 %v1012, %v1019
        %v1033 = vmul.f32 %v1013, %v1019
        %v1034 = vmul.f32 %v1014, %v1019
        %v1035 = vmul.f32 %v1015, %v1019
        %v1036 = vlaneseq
        %v1037 = vshrl.u32 %v1036, 7
        %v1038 = vsub.s32 1, %v1037
        %v1039 = vrot.slane %v838, %v1038
        %v1040 = vadd.f32 %v1020, %v1039
        %v1041 = vadd.f32 %v1021, %v1039
        %v1042 = vadd.f32 %v1022, %v1039
        %v1043 = vadd.f32 %v1023, %v1039
        %v1044 = vadd.f32 %v1024, %v1039
        %v1045 = vadd.f32 %v1025, %v1039
        %v1046 = vadd.f32 %v1026, %v1039
        %v1047 = vadd.f32 %v1027, %v1039
        %v1048 = vadd.f32 %v1028, %v1039
        %v1049 = vadd.f32 %v1029, %v1039
        %v1050 = vadd.f32 %v1030, %v1039
        %v1051 = vadd.f32 %v1031, %v1039
        %v1052 = vadd.f32 %v1032, %v1039
        %v1053 = vadd.f32 %v1033, %v1039
        %v1054 = vadd.f32 %v1034, %v1039
        %v1055 = vadd.f32 %v1035, %v1039
        %v1056 = vpack.c.bf16 %v1041, %v1040
        %v1057 = vpack.c.bf16 %v1043, %v1042
        %v1058 = vpack.c.bf16 %v1045, %v1044
        %v1059 = vpack.c.bf16 %v1047, %v1046
        %v1060 = vpack.c.bf16 %v1049, %v1048
        %v1061 = vpack.c.bf16 %v1051, %v1050
        %v1062 = vpack.c.bf16 %v1053, %v1052
        %v1063 = vpack.c.bf16 %v1055, %v1054
        %v1064 = vld [vmem:[%s6] sm:$0xff]
        %v1065 = vld [vmem:[%s6 + $0x8] sm:$0xf]
        %v1066 = vld [vmem:[%s6 + $0xc] sm:$0xff]
        %v1067 = vld [vmem:[%s6 + $0x14] sm:$0xf]
        %v1068 = vld [vmem:[%s6 + $0x18] sm:$0xff]
        %v1069 = vld [vmem:[%s6 + $0x20] sm:$0xf]
        %v1070 = vld [vmem:[%s6 + $0x24] sm:$0xff]
        %v1071 = vld [vmem:[%s6 + $0x2c] sm:$0xf]
        %v1072 = vld [vmem:[%s6 + $0x30] sm:$0xff]
        %v1073 = vld [vmem:[%s6 + $0x38] sm:$0xf]
        %v1074 = vld [vmem:[%s6 + $0x3c] sm:$0xff]
        %v1075 = vld [vmem:[%s6 + $0x44] sm:$0xf]
        %v1076 = vld [vmem:[%s6 + $0x48] sm:$0xff]
        %v1077 = vld [vmem:[%s6 + $0x50] sm:$0xf]
        %v1078 = vld [vmem:[%s6 + $0x54] sm:$0xff]
        %v1079 = vld [vmem:[%s6 + $0x5c] sm:$0xf]
        %v1080 = vld [vmem:[%s6 + $0x60] sm:$0xff]
        %v1081 = vld [vmem:[%s6 + $0x68] sm:$0xf]
        %v1082 = vld [vmem:[%s6 + $0x6c] sm:$0xff]
        %v1083 = vld [vmem:[%s6 + $0x74] sm:$0xf]
        %v1084 = vld [vmem:[%s6 + $0x78] sm:$0xff]
        %v1085 = vld [vmem:[%s6 + $0x80] sm:$0xf]
        %v1086 = vld [vmem:[%s6 + $0x84] sm:$0xff]
        %v1087 = vld [vmem:[%s6 + $0x8c] sm:$0xf]
        %v1088 = vld [vmem:[%s6 + $0x90] sm:$0xff]
        %v1089 = vld [vmem:[%s6 + $0x98] sm:$0xf]
        %v1090 = vld [vmem:[%s6 + $0x9c] sm:$0xff]
        %v1091 = vld [vmem:[%s6 + $0xa4] sm:$0xf]
        %v1092 = vld [vmem:[%s6 + $0xa8] sm:$0xff]
        %v1093 = vld [vmem:[%s6 + $0xb0] sm:$0xf]
        %v1094 = vld [vmem:[%s6 + $0xb4] sm:$0xff]
        %v1095 = vld [vmem:[%s6 + $0xbc] sm:$0xf]
        %v1096 = vld [vmem:[%s7] sm:$0x7]
        %v1098 = vlaneseq
        %v1099 = vshrl.u32 %v1098, 7
        %v1100 = vsub.s32 0, %v1099
        %v1101 = vrot.slane %v1096, %v1100
        %v1102 = vlaneseq
        %v1103 = vshrl.u32 %v1102, 7
        %v1104 = vsub.s32 1, %v1103
        %v1105 = vrot.slane %v1096, %v1104
        %v1106 = vlaneseq
        %v1107 = vshrl.u32 %v1106, 7
        %v1108 = vsub.s32 2, %v1107
        %v1109 = vrot.slane %v1096, %v1108
        %v1145 = vunpack.c.l.b16 %v1064
        %v1146 = vunpack.c.h.b16 %v1064
        %v1147 = vunpack.c.l.b16 %v1065
        %v1148 = vunpack.c.l.b16 %v1066
        %v1149 = vunpack.c.h.b16 %v1066
        %v1150 = vunpack.c.l.b16 %v1067
        %v1151 = vunpack.c.l.b16 %v1068
        %v1152 = vunpack.c.h.b16 %v1068
        %v1153 = vunpack.c.l.b16 %v1069
        %v1154 = vunpack.c.l.b16 %v1070
        %v1155 = vunpack.c.h.b16 %v1070
        %v1156 = vunpack.c.l.b16 %v1071
        %v1157 = vunpack.c.l.b16 %v1072
        %v1158 = vunpack.c.h.b16 %v1072
        %v1159 = vunpack.c.l.b16 %v1073
        %v1160 = vunpack.c.l.b16 %v1074
        %v1161 = vunpack.c.h.b16 %v1074
        %v1162 = vunpack.c.l.b16 %v1075
        %v1163 = vunpack.c.l.b16 %v1076
        %v1164 = vunpack.c.h.b16 %v1076
        %v1165 = vunpack.c.l.b16 %v1077
        %v1166 = vunpack.c.l.b16 %v1078
        %v1167 = vunpack.c.h.b16 %v1078
        %v1168 = vunpack.c.l.b16 %v1079
        %v1169 = vunpack.c.l.b16 %v1080
        %v1170 = vunpack.c.h.b16 %v1080
        %v1171 = vunpack.c.l.b16 %v1081
        %v1172 = vunpack.c.l.b16 %v1082
        %v1173 = vunpack.c.h.b16 %v1082
        %v1174 = vunpack.c.l.b16 %v1083
        %v1175 = vunpack.c.l.b16 %v1084
        %v1176 = vunpack.c.h.b16 %v1084
        %v1177 = vunpack.c.l.b16 %v1085
        %v1178 = vunpack.c.l.b16 %v1086
        %v1179 = vunpack.c.h.b16 %v1086
        %v1180 = vunpack.c.l.b16 %v1087
        %v1181 = vunpack.c.l.b16 %v1088
        %v1182 = vunpack.c.h.b16 %v1088
        %v1183 = vunpack.c.l.b16 %v1089
        %v1184 = vunpack.c.l.b16 %v1090
        %v1185 = vunpack.c.h.b16 %v1090
        %v1186 = vunpack.c.l.b16 %v1091
        %v1187 = vunpack.c.l.b16 %v1092
        %v1188 = vunpack.c.h.b16 %v1092
        %v1189 = vunpack.c.l.b16 %v1093
        %v1190 = vunpack.c.l.b16 %v1094
        %v1191 = vunpack.c.h.b16 %v1094
        %v1192 = vunpack.c.l.b16 %v1095
        %v1193 = vpack.c.b16 %v1148, %v1145
        %v1194 = vpack.c.b16 %v1149, %v1146
        %v1195 = vpack.c.b16 %v1150, %v1147
        %v1196 = vpack.c.b16 %v1154, %v1151
        %v1197 = vpack.c.b16 %v1155, %v1152
        %v1198 = vpack.c.b16 %v1156, %v1153
        %v1199 = vpack.c.b16 %v1160, %v1157
        %v1200 = vpack.c.b16 %v1161, %v1158
        %v1201 = vpack.c.b16 %v1162, %v1159
        %v1202 = vpack.c.b16 %v1166, %v1163
        %v1203 = vpack.c.b16 %v1167, %v1164
        %v1204 = vpack.c.b16 %v1168, %v1165
        %v1205 = vpack.c.b16 %v1172, %v1169
        %v1206 = vpack.c.b16 %v1173, %v1170
        %v1207 = vpack.c.b16 %v1174, %v1171
        %v1208 = vpack.c.b16 %v1178, %v1175
        %v1209 = vpack.c.b16 %v1179, %v1176
        %v1210 = vpack.c.b16 %v1180, %v1177
        %v1211 = vpack.c.b16 %v1184, %v1181
        %v1212 = vpack.c.b16 %v1185, %v1182
        %v1213 = vpack.c.b16 %v1186, %v1183
        %v1214 = vpack.c.b16 %v1190, %v1187
        %v1215 = vpack.c.b16 %v1191, %v1188
        %v1216 = vpack.c.b16 %v1192, %v1189
        %1241 = vmatprep.subr.bf16.mxu0 %v1194
        %1242 = vmatpush1.bf16.msra.mxu0 %v1193
        %1243 = vmatprep.subr.bf16.mxu0 %v1197
        %1244 = vmatpush1.bf16.msra.mxu0 %v1196
        %1245 = vmatprep.subr.bf16.mxu0 %v1200
        %1246 = vmatpush1.bf16.msra.mxu0 %v1199
        %1247 = vmatprep.subr.bf16.mxu0 %v1203
        %1248 = vmatpush1.bf16.msra.mxu0 %v1202
        %1249 = vmatprep.subr.bf16.mxu0 %v1206
        %1250 = vmatpush1.bf16.msra.mxu0 %v1205
        %1251 = vmatprep.subr.bf16.mxu0 %v1209
        %1252 = vmatpush1.bf16.msra.mxu0 %v1208
        %1253 = vmatprep.subr.bf16.mxu0 %v1212
        %1254 = vmatpush1.bf16.msra.mxu0 %v1211
        %1255 = vmatprep.subr.bf16.mxu0 %v1215
        %1256 = vmatpush1.bf16.msra.mxu0 %v1214
        %1257 = vmatprep.subr.bf16.mxu0 0
        %1258 = vmatpush1.bf16.msra.mxu0 0
        %1259 = vmatprep.subr.bf16.mxu0 0
        %1260 = vmatpush1.bf16.msra.mxu0 0
        %1261 = vmatprep.subr.bf16.mxu0 0
        %1262 = vmatpush1.bf16.msra.mxu0 0
        %1263 = vmatprep.subr.bf16.mxu0 0
        %1264 = vmatpush1.bf16.msra.mxu0 0
        %1265 = vmatprep.subr.bf16.mxu0 0
        %1266 = vmatpush1.bf16.msra.mxu0 0
        %1267 = vmatprep.subr.bf16.mxu0 0
        %1268 = vmatpush1.bf16.msra.mxu0 0
        %1269 = vmatprep.subr.bf16.mxu0 0
        %1270 = vmatpush1.bf16.msra.mxu0 0
        %1271 = vmatprep.subr.bf16.mxu0 0
        %1272 = vmatpush1.bf16.msra.mxu0 0
        %1273 = vmatprep.mubr.bf16.mxu0 0
        %1274 = vmatmul.mubr.bf16.gmra.mrb[0].mxu0 %v1056
        %v1275 = vpop.f32.mrb[0].mxu0
        %v1276 = vadd.f32 %v1101, %v1275
        %v1277 = vpop.f32.mrb[0].mxu0
        %v1278 = vadd.f32 %v1105, %v1277
        %v1279 = vpop.f32.mrb[0].mxu0
        %v1280 = vadd.f32 %v1101, %v1279
        %v1281 = vpop.f32.mrb[0].mxu0
        %v1282 = vadd.f32 %v1105, %v1281
        %1283 = vmatprep.mubr.bf16.mxu0 0
        %1284 = vmatmul.mubr.bf16.gmra.mrb[0].mxu0 %v1057
        %v1285 = vpop.f32.mrb[0].mxu0
        %v1286 = vadd.f32 %v1101, %v1285
        %v1287 = vpop.f32.mrb[0].mxu0
        %v1288 = vadd.f32 %v1105, %v1287
        %v1289 = vpop.f32.mrb[0].mxu0
        %v1290 = vadd.f32 %v1101, %v1289
        %v1291 = vpop.f32.mrb[0].mxu0
        %v1292 = vadd.f32 %v1105, %v1291
        %1293 = vmatprep.mubr.bf16.mxu0 0
        %1294 = vmatmul.mubr.bf16.gmra.mrb[0].mxu0 %v1058
        %v1295 = vpop.f32.mrb[0].mxu0
        %v1296 = vadd.f32 %v1101, %v1295
        %v1297 = vpop.f32.mrb[0].mxu0
        %v1298 = vadd.f32 %v1105, %v1297
        %v1299 = vpop.f32.mrb[0].mxu0
        %v1300 = vadd.f32 %v1101, %v1299
        %v1301 = vpop.f32.mrb[0].mxu0
        %v1302 = vadd.f32 %v1105, %v1301
        %1303 = vmatprep.mubr.bf16.mxu0 0
        %1304 = vmatmul.mubr.bf16.gmra.mrb[0].mxu0 %v1059
        %v1305 = vpop.f32.mrb[0].mxu0
        %v1306 = vadd.f32 %v1101, %v1305
        %v1307 = vpop.f32.mrb[0].mxu0
        %v1308 = vadd.f32 %v1105, %v1307
        %v1309 = vpop.f32.mrb[0].mxu0
        %v1310 = vadd.f32 %v1101, %v1309
        %v1311 = vpop.f32.mrb[0].mxu0
        %v1312 = vadd.f32 %v1105, %v1311
        %1313 = vmatprep.mubr.bf16.mxu0 0
        %1314 = vmatmul.mubr.bf16.gmra.mrb[0].mxu0 %v1060
        %v1315 = vpop.f32.mrb[0].mxu0
        %v1316 = vadd.f32 %v1101, %v1315
        %v1317 = vpop.f32.mrb[0].mxu0
        %v1318 = vadd.f32 %v1105, %v1317
        %v1319 = vpop.f32.mrb[0].mxu0
        %v1320 = vadd.f32 %v1101, %v1319
        %v1321 = vpop.f32.mrb[0].mxu0
        %v1322 = vadd.f32 %v1105, %v1321
        %1323 = vmatprep.mubr.bf16.mxu0 0
        %1324 = vmatmul.mubr.bf16.gmra.mrb[0].mxu0 %v1061
        %v1325 = vpop.f32.mrb[0].mxu0
        %v1326 = vadd.f32 %v1101, %v1325
        %v1327 = vpop.f32.mrb[0].mxu0
        %v1328 = vadd.f32 %v1105, %v1327
        %v1329 = vpop.f32.mrb[0].mxu0
        %v1330 = vadd.f32 %v1101, %v1329
        %v1331 = vpop.f32.mrb[0].mxu0
        %v1332 = vadd.f32 %v1105, %v1331
        %1333 = vmatprep.mubr.bf16.mxu0 0
        %1334 = vmatmul.mubr.bf16.gmra.mrb[0].mxu0 %v1062
        %v1335 = vpop.f32.mrb[0].mxu0
        %v1336 = vadd.f32 %v1101, %v1335
        %v1337 = vpop.f32.mrb[0].mxu0
        %v1338 = vadd.f32 %v1105, %v1337
        %v1339 = vpop.f32.mrb[0].mxu0
        %v1340 = vadd.f32 %v1101, %v1339
        %v1341 = vpop.f32.mrb[0].mxu0
        %v1342 = vadd.f32 %v1105, %v1341
        %1343 = vmatprep.mubr.bf16.mxu0 0
        %1344 = vmatmul.mubr.bf16.gmra.mrb[0].mxu0 %v1063
        %v1345 = vpop.f32.mrb[0].mxu0
        %v1346 = vadd.f32 %v1101, %v1345
        %v1347 = vpop.f32.mrb[0].mxu0
        %v1348 = vadd.f32 %v1105, %v1347
        %v1349 = vpop.f32.mrb[0].mxu0
        %v1350 = vadd.f32 %v1101, %v1349
        %v1351 = vpop.f32.mrb[0].mxu0
        %v1352 = vadd.f32 %v1105, %v1351
        %1353 = vdwg.mxu0
        %1354 = vmatprep.subr.bf16.mxu0 0
        %1355 = vmatpush1.bf16.msra.mxu0 %v1195
        %1356 = vmatprep.subr.bf16.mxu0 0
        %1357 = vmatpush1.bf16.msra.mxu0 %v1198
        %1358 = vmatprep.subr.bf16.mxu0 0
        %1359 = vmatpush1.bf16.msra.mxu0 %v1201
        %1360 = vmatprep.subr.bf16.mxu0 0
        %1361 = vmatpush1.bf16.msra.mxu0 %v1204
        %1362 = vmatprep.subr.bf16.mxu0 0
        %1363 = vmatpush1.bf16.msra.mxu0 %v1207
        %1364 = vmatprep.subr.bf16.mxu0 0
        %1365 = vmatpush1.bf16.msra.mxu0 %v1210
        %1366 = vmatprep.subr.bf16.mxu0 0
        %1367 = vmatpush1.bf16.msra.mxu0 %v1213
        %1368 = vmatprep.subr.bf16.mxu0 0
        %1369 = vmatpush1.bf16.msra.mxu0 %v1216
        %1370 = vmatprep.subr.bf16.mxu0 0
        %1371 = vmatpush1.bf16.msra.mxu0 0
        %1372 = vmatprep.subr.bf16.mxu0 0
        %1373 = vmatpush1.bf16.msra.mxu0 0
        %1374 = vmatprep.subr.bf16.mxu0 0
        %1375 = vmatpush1.bf16.msra.mxu0 0
        %1376 = vmatprep.subr.bf16.mxu0 0
        %1377 = vmatpush1.bf16.msra.mxu0 0
        %1378 = vmatprep.subr.bf16.mxu0 0
        %1379 = vmatpush1.bf16.msra.mxu0 0
        %1380 = vmatprep.subr.bf16.mxu0 0
        %1381 = vmatpush1.bf16.msra.mxu0 0
        %1382 = vmatprep.subr.bf16.mxu0 0
        %1383 = vmatpush1.bf16.msra.mxu0 0
        %1384 = vmatprep.subr.bf16.mxu0 0
        %1385 = vmatpush1.bf16.msra.mxu0 0
        %1386 = vmatprep.mubr.bf16.mxu0 0
        %1387 = vmatmul.mubr.bf16.gmra.mrb[0].mxu0 %v1056
        %v1388 = vpop.f32.mrb[0].mxu0
        %v1389 = vadd.f32 %v1109, %v1388
        %v1390 = vpop.f32.mrb[0].mxu0
        %v1391 = vpop.f32.mrb[0].mxu0
        %v1392 = vadd.f32 %v1109, %v1391
        %v1393 = vpop.f32.mrb[0].mxu0
        %1394 = vmatprep.mubr.bf16.mxu0 0
        %1395 = vmatmul.mubr.bf16.gmra.mrb[0].mxu0 %v1057
        %v1396 = vpop.f32.mrb[0].mxu0
        %v1397 = vadd.f32 %v1109, %v1396
        %v1398 = vpop.f32.mrb[0].mxu0
        %v1399 = vpop.f32.mrb[0].mxu0
        %v1400 = vadd.f32 %v1109, %v1399
        %v1401 = vpop.f32.mrb[0].mxu0
        %1402 = vmatprep.mubr.bf16.mxu0 0
        %1403 = vmatmul.mubr.bf16.gmra.mrb[0].mxu0 %v1058
        %v1404 = vpop.f32.mrb[0].mxu0
        %v1405 = vadd.f32 %v1109, %v1404
        %v1406 = vpop.f32.mrb[0].mxu0
        %v1407 = vpop.f32.mrb[0].mxu0
        %v1408 = vadd.f32 %v1109, %v1407
        %v1409 = vpop.f32.mrb[0].mxu0
        %1410 = vmatprep.mubr.bf16.mxu0 0
        %1411 = vmatmul.mubr.bf16.gmra.mrb[0].mxu0 %v1059
        %v1412 = vpop.f32.mrb[0].mxu0
        %v1413 = vadd.f32 %v1109, %v1412
        %v1414 = vpop.f32.mrb[0].mxu0
        %v1415 = vpop.f32.mrb[0].mxu0
        %v1416 = vadd.f32 %v1109, %v1415
        %v1417 = vpop.f32.mrb[0].mxu0
        %1418 = vmatprep.mubr.bf16.mxu0 0
        %1419 = vmatmul.mubr.bf16.gmra.mrb[0].mxu0 %v1060
        %v1420 = vpop.f32.mrb[0].mxu0
        %v1421 = vadd.f32 %v1109, %v1420
        %v1422 = vpop.f32.mrb[0].mxu0
        %v1423 = vpop.f32.mrb[0].mxu0
        %v1424 = vadd.f32 %v1109, %v1423
        %v1425 = vpop.f32.mrb[0].mxu0
        %1426 = vmatprep.mubr.bf16.mxu0 0
        %1427 = vmatmul.mubr.bf16.gmra.mrb[0].mxu0 %v1061
        %v1428 = vpop.f32.mrb[0].mxu0
        %v1429 = vadd.f32 %v1109, %v1428
        %v1430 = vpop.f32.mrb[0].mxu0
        %v1431 = vpop.f32.mrb[0].mxu0
        %v1432 = vadd.f32 %v1109, %v1431
        %v1433 = vpop.f32.mrb[0].mxu0
        %1434 = vmatprep.mubr.bf16.mxu0 0
        %1435 = vmatmul.mubr.bf16.gmra.mrb[0].mxu0 %v1062
        %v1436 = vpop.f32.mrb[0].mxu0
        %v1437 = vadd.f32 %v1109, %v1436
        %v1438 = vpop.f32.mrb[0].mxu0
        %v1439 = vpop.f32.mrb[0].mxu0
        %v1440 = vadd.f32 %v1109, %v1439
        %v1441 = vpop.f32.mrb[0].mxu0
        %1442 = vmatprep.mubr.bf16.mxu0 0
        %1443 = vmatmul.mubr.bf16.gmra.mrb[0].mxu0 %v1063
        %v1444 = vpop.f32.mrb[0].mxu0
        %v1445 = vadd.f32 %v1109, %v1444
        %v1446 = vpop.f32.mrb[0].mxu0
        %v1447 = vpop.f32.mrb[0].mxu0
        %v1448 = vadd.f32 %v1109, %v1447
        %v1449 = vpop.f32.mrb[0].mxu0
        %1450 = vdwg.mxu0
        %v1451 = vmul.f32 %v1276, 0.125
        %v1452 = vmul.f32 %v1280, 0.125
        %v1453 = vmul.f32 %v1286, 0.125
        %v1454 = vmul.f32 %v1290, 0.125
        %v1455 = vmul.f32 %v1296, 0.125
        %v1456 = vmul.f32 %v1300, 0.125
        %v1457 = vmul.f32 %v1306, 0.125
        %v1458 = vmul.f32 %v1310, 0.125
        %v1459 = vmul.f32 %v1316, 0.125
        %v1460 = vmul.f32 %v1320, 0.125
        %v1461 = vmul.f32 %v1326, 0.125
        %v1462 = vmul.f32 %v1330, 0.125
        %v1463 = vmul.f32 %v1336, 0.125
        %v1464 = vmul.f32 %v1340, 0.125
        %v1465 = vmul.f32 %v1346, 0.125
        %v1466 = vmul.f32 %v1350, 0.125
        %v1467 = vpack.c.bf16 %v1452, %v1451
        %v1468 = vpack.c.bf16 %v1454, %v1453
        %v1469 = vpack.c.bf16 %v1456, %v1455
        %v1470 = vpack.c.bf16 %v1458, %v1457
        %v1471 = vpack.c.bf16 %v1460, %v1459
        %v1472 = vpack.c.bf16 %v1462, %v1461
        %v1473 = vpack.c.bf16 %v1464, %v1463
        %v1474 = vpack.c.bf16 %v1466, %v1465
        %v1475 = vpack.c.bf16 %v1282, %v1278
        %v1476 = vpack.c.bf16 %v1292, %v1288
        %v1477 = vpack.c.bf16 %v1302, %v1298
        %v1478 = vpack.c.bf16 %v1312, %v1308
        %v1479 = vpack.c.bf16 %v1322, %v1318
        %v1480 = vpack.c.bf16 %v1332, %v1328
        %v1481 = vpack.c.bf16 %v1342, %v1338
        %v1482 = vpack.c.bf16 %v1352, %v1348
        %v1483 = vpack.c.bf16 %v1392, %v1389
        %v1484 = vpack.c.bf16 %v1400, %v1397
        %v1485 = vpack.c.bf16 %v1408, %v1405
        %v1486 = vpack.c.bf16 %v1416, %v1413
        %v1487 = vpack.c.bf16 %v1424, %v1421
        %v1488 = vpack.c.bf16 %v1432, %v1429
        %v1489 = vpack.c.bf16 %v1440, %v1437
        %v1490 = vpack.c.bf16 %v1448, %v1445
        %v1492 = vsel %vm716, %v1467, 0
        %v1495 = vsel %vm716, %v1468, 0
        %v1498 = vsel %vm716, %v1469, 0
        %v1501 = vsel %vm716, %v1470, 0
        %v1504 = vsel %vm716, %v1471, 0
        %v1507 = vsel %vm716, %v1472, 0
        %v1510 = vsel %vm716, %v1473, 0
        %v1513 = vsel %vm716, %v1474, 0
        %v1516 = vsel %vm716, %v1475, 0
        %v1519 = vsel %vm716, %v1476, 0
        %v1522 = vsel %vm716, %v1477, 0
        %v1525 = vsel %vm716, %v1478, 0
        %v1528 = vsel %vm716, %v1479, 0
        %v1531 = vsel %vm716, %v1480, 0
        %v1534 = vsel %vm716, %v1481, 0
        %v1537 = vsel %vm716, %v1482, 0
        %1539 = vmatprep.subr.bf16.mxu0 0
        %1540 = vmatpush1.bf16.xpose.msra.mxu0 %v1516
        %1541 = vmatprep.subr.bf16.mxu0 0
        %1542 = vmatpush1.bf16.xpose.msra.mxu0 %v1519
        %1543 = vmatprep.subr.bf16.mxu0 0
        %1544 = vmatpush1.bf16.xpose.msra.mxu0 %v1522
        %1545 = vmatprep.subr.bf16.mxu0 0
        %1546 = vmatpush1.bf16.xpose.msra.mxu0 %v1525
        %1547 = vmatprep.subr.bf16.mxu0 0
        %1548 = vmatpush1.bf16.xpose.msra.mxu0 %v1528
        %1549 = vmatprep.subr.bf16.mxu0 0
        %1550 = vmatpush1.bf16.xpose.msra.mxu0 %v1531
        %1551 = vmatprep.subr.bf16.mxu0 0
        %1552 = vmatpush1.bf16.xpose.msra.mxu0 %v1534
        %1553 = vmatprep.subr.bf16.mxu0 0
        %1554 = vmatpush1.bf16.xpose.msra.mxu0 %v1537
        %1555 = vmatprep.subr.bf16.mxu0 0
        %1556 = vmatpush1.bf16.xpose.msra.mxu0 0
        %1557 = vmatprep.subr.bf16.mxu0 0
        %1558 = vmatpush1.bf16.xpose.msra.mxu0 0
        %1559 = vmatprep.subr.bf16.mxu0 0
        %1560 = vmatpush1.bf16.xpose.msra.mxu0 0
        %1561 = vmatprep.subr.bf16.mxu0 0
        %1562 = vmatpush1.bf16.xpose.msra.mxu0 0
        %1563 = vmatprep.subr.bf16.mxu0 0
        %1564 = vmatpush1.bf16.xpose.msra.mxu0 0
        %1565 = vmatprep.subr.bf16.mxu0 0
        %1566 = vmatpush1.bf16.xpose.msra.mxu0 0
        %1567 = vmatprep.subr.bf16.mxu0 0
        %1568 = vmatpush1.bf16.xpose.msra.mxu0 0
        %1569 = vmatprep.subr.bf16.mxu0 0
        %1570 = vmatpush1.bf16.xpose.msra.mxu0 0
        %1571 = vmatprep.mubr.bf16.mxu0 0
        %1572 = vmatmul.mubr.bf16.gmra.mrb[0].mxu0 %v1492
        %v1573 = vpop.f32.mrb[0].mxu0
        %v1574 = vadd.f32 %v500, %v1573
        %v1575 = vpop.f32.mrb[0].mxu0
        %v1576 = vpop.f32.mrb[0].mxu0
        %v1577 = vadd.f32 %v501, %v1576
        %v1578 = vpop.f32.mrb[0].mxu0
        %1579 = vmatprep.mubr.bf16.mxu0 0
        %1580 = vmatmul.mubr.bf16.gmra.mrb[0].mxu0 %v1495
        %v1581 = vpop.f32.mrb[0].mxu0
        %v1582 = vadd.f32 %v502, %v1581
        %v1583 = vpop.f32.mrb[0].mxu0
        %v1584 = vpop.f32.mrb[0].mxu0
        %v1585 = vadd.f32 %v503, %v1584
        %v1586 = vpop.f32.mrb[0].mxu0
        %1587 = vmatprep.mubr.bf16.mxu0 0
        %1588 = vmatmul.mubr.bf16.gmra.mrb[0].mxu0 %v1498
        %v1589 = vpop.f32.mrb[0].mxu0
        %v1590 = vadd.f32 %v504, %v1589
        %v1591 = vpop.f32.mrb[0].mxu0
        %v1592 = vpop.f32.mrb[0].mxu0
        %v1593 = vadd.f32 %v505, %v1592
        %v1594 = vpop.f32.mrb[0].mxu0
        %1595 = vmatprep.mubr.bf16.mxu0 0
        %1596 = vmatmul.mubr.bf16.gmra.mrb[0].mxu0 %v1501
        %v1597 = vpop.f32.mrb[0].mxu0
        %v1598 = vadd.f32 %v506, %v1597
        %v1599 = vpop.f32.mrb[0].mxu0
        %v1600 = vpop.f32.mrb[0].mxu0
        %v1601 = vadd.f32 %v507, %v1600
        %v1602 = vpop.f32.mrb[0].mxu0
        %1603 = vmatprep.mubr.bf16.mxu0 0
        %1604 = vmatmul.mubr.bf16.gmra.mrb[0].mxu0 %v1504
        %v1605 = vpop.f32.mrb[0].mxu0
        %v1606 = vadd.f32 %v508, %v1605
        %v1607 = vpop.f32.mrb[0].mxu0
        %v1608 = vpop.f32.mrb[0].mxu0
        %v1609 = vadd.f32 %v509, %v1608
        %v1610 = vpop.f32.mrb[0].mxu0
        %1611 = vmatprep.mubr.bf16.mxu0 0
        %1612 = vmatmul.mubr.bf16.gmra.mrb[0].mxu0 %v1507
        %v1613 = vpop.f32.mrb[0].mxu0
        %v1614 = vadd.f32 %v510, %v1613
        %v1615 = vpop.f32.mrb[0].mxu0
        %v1616 = vpop.f32.mrb[0].mxu0
        %v1617 = vadd.f32 %v511, %v1616
        %v1618 = vpop.f32.mrb[0].mxu0
        %1619 = vmatprep.mubr.bf16.mxu0 0
        %1620 = vmatmul.mubr.bf16.gmra.mrb[0].mxu0 %v1510
        %v1621 = vpop.f32.mrb[0].mxu0
        %v1622 = vadd.f32 %v512, %v1621
        %v1623 = vpop.f32.mrb[0].mxu0
        %v1624 = vpop.f32.mrb[0].mxu0
        %v1625 = vadd.f32 %v513, %v1624
        %v1626 = vpop.f32.mrb[0].mxu0
        %1627 = vmatprep.mubr.bf16.mxu0 0
        %1628 = vmatmul.mubr.bf16.gmra.mrb[0].mxu0 %v1513
        %v1629 = vpop.f32.mrb[0].mxu0
        %v1630 = vadd.f32 %v514, %v1629
        %v1631 = vpop.f32.mrb[0].mxu0
        %v1632 = vpop.f32.mrb[0].mxu0
        %v1633 = vadd.f32 %v515, %v1632
        %v1634 = vpop.f32.mrb[0].mxu0
        %1635 = vdwg.mxu0
        %1644 = vrot.lane.b32.xlu0 %v1467, 64
        %v1645 = vpop.permute.xlu0 %1644
        %1646 = vrot.lane.b32.xlu0 %v1468, 64
        %v1647 = vpop.permute.xlu0 %1646
        %1648 = vrot.lane.b32.xlu0 %v1469, 64
        %v1649 = vpop.permute.xlu0 %1648
        %1650 = vrot.lane.b32.xlu0 %v1470, 64
        %v1651 = vpop.permute.xlu0 %1650
        %1652 = vrot.lane.b32.xlu0 %v1471, 64
        %v1653 = vpop.permute.xlu0 %1652
        %1654 = vrot.lane.b32.xlu0 %v1472, 64
        %v1655 = vpop.permute.xlu0 %1654
        %1656 = vrot.lane.b32.xlu0 %v1473, 64
        %v1657 = vpop.permute.xlu0 %1656
        %1658 = vrot.lane.b32.xlu0 %v1474, 64
        %v1659 = vpop.permute.xlu0 %1658
        %1668 = vrot.lane.b32.xlu0 %v1475, 64
        %v1669 = vpop.permute.xlu0 %1668
        %1670 = vrot.lane.b32.xlu0 %v1476, 64
        %v1671 = vpop.permute.xlu0 %1670
        %1672 = vrot.lane.b32.xlu0 %v1477, 64
        %v1673 = vpop.permute.xlu0 %1672
        %1674 = vrot.lane.b32.xlu0 %v1478, 64
        %v1675 = vpop.permute.xlu0 %1674
        %1676 = vrot.lane.b32.xlu0 %v1479, 64
        %v1677 = vpop.permute.xlu0 %1676
        %1678 = vrot.lane.b32.xlu0 %v1480, 64
        %v1679 = vpop.permute.xlu0 %1678
        %1680 = vrot.lane.b32.xlu0 %v1481, 64
        %v1681 = vpop.permute.xlu0 %1680
        %1682 = vrot.lane.b32.xlu0 %v1482, 64
        %v1683 = vpop.permute.xlu0 %1682
        %v1685 = vsel %vm716, %v1645, 0
        %v1688 = vsel %vm716, %v1647, 0
        %v1691 = vsel %vm716, %v1649, 0
        %v1694 = vsel %vm716, %v1651, 0
        %v1697 = vsel %vm716, %v1653, 0
        %v1700 = vsel %vm716, %v1655, 0
        %v1703 = vsel %vm716, %v1657, 0
        %v1706 = vsel %vm716, %v1659, 0
        %v1709 = vsel %vm716, %v1669, 0
        %v1712 = vsel %vm716, %v1671, 0
        %v1715 = vsel %vm716, %v1673, 0
        %v1718 = vsel %vm716, %v1675, 0
        %v1721 = vsel %vm716, %v1677, 0
        %v1724 = vsel %vm716, %v1679, 0
        %v1727 = vsel %vm716, %v1681, 0
        %v1730 = vsel %vm716, %v1683, 0
        %1732 = vmatprep.subr.bf16.mxu0 0
        %1733 = vmatpush1.bf16.xpose.msra.mxu0 %v1709
        %1734 = vmatprep.subr.bf16.mxu0 0
        %1735 = vmatpush1.bf16.xpose.msra.mxu0 %v1712
        %1736 = vmatprep.subr.bf16.mxu0 0
        %1737 = vmatpush1.bf16.xpose.msra.mxu0 %v1715
        %1738 = vmatprep.subr.bf16.mxu0 0
        %1739 = vmatpush1.bf16.xpose.msra.mxu0 %v1718
        %1740 = vmatprep.subr.bf16.mxu0 0
        %1741 = vmatpush1.bf16.xpose.msra.mxu0 %v1721
        %1742 = vmatprep.subr.bf16.mxu0 0
        %1743 = vmatpush1.bf16.xpose.msra.mxu0 %v1724
        %1744 = vmatprep.subr.bf16.mxu0 0
        %1745 = vmatpush1.bf16.xpose.msra.mxu0 %v1727
        %1746 = vmatprep.subr.bf16.mxu0 0
        %1747 = vmatpush1.bf16.xpose.msra.mxu0 %v1730
        %1748 = vmatprep.subr.bf16.mxu0 0
        %1749 = vmatpush1.bf16.xpose.msra.mxu0 0
        %1750 = vmatprep.subr.bf16.mxu0 0
        %1751 = vmatpush1.bf16.xpose.msra.mxu0 0
        %1752 = vmatprep.subr.bf16.mxu0 0
        %1753 = vmatpush1.bf16.xpose.msra.mxu0 0
        %1754 = vmatprep.subr.bf16.mxu0 0
        %1755 = vmatpush1.bf16.xpose.msra.mxu0 0
        %1756 = vmatprep.subr.bf16.mxu0 0
        %1757 = vmatpush1.bf16.xpose.msra.mxu0 0
        %1758 = vmatprep.subr.bf16.mxu0 0
        %1759 = vmatpush1.bf16.xpose.msra.mxu0 0
        %1760 = vmatprep.subr.bf16.mxu0 0
        %1761 = vmatpush1.bf16.xpose.msra.mxu0 0
        %1762 = vmatprep.subr.bf16.mxu0 0
        %1763 = vmatpush1.bf16.xpose.msra.mxu0 0
        %1764 = vmatprep.mubr.bf16.mxu0 0
        %1765 = vmatmul.mubr.bf16.gmra.mrb[0].mxu0 %v1685
        %v1766 = vpop.f32.mrb[0].mxu0
        %v1767 = vadd.f32 %v500, %v1766
        %v1768 = vpop.f32.mrb[0].mxu0
        %v1769 = vpop.f32.mrb[0].mxu0
        %v1770 = vadd.f32 %v501, %v1769
        %v1771 = vpop.f32.mrb[0].mxu0
        %1772 = vmatprep.mubr.bf16.mxu0 0
        %1773 = vmatmul.mubr.bf16.gmra.mrb[0].mxu0 %v1688
        %v1774 = vpop.f32.mrb[0].mxu0
        %v1775 = vadd.f32 %v502, %v1774
        %v1776 = vpop.f32.mrb[0].mxu0
        %v1777 = vpop.f32.mrb[0].mxu0
        %v1778 = vadd.f32 %v503, %v1777
        %v1779 = vpop.f32.mrb[0].mxu0
        %1780 = vmatprep.mubr.bf16.mxu0 0
        %1781 = vmatmul.mubr.bf16.gmra.mrb[0].mxu0 %v1691
        %v1782 = vpop.f32.mrb[0].mxu0
        %v1783 = vadd.f32 %v504, %v1782
        %v1784 = vpop.f32.mrb[0].mxu0
        %v1785 = vpop.f32.mrb[0].mxu0
        %v1786 = vadd.f32 %v505, %v1785
        %v1787 = vpop.f32.mrb[0].mxu0
        %1788 = vmatprep.mubr.bf16.mxu0 0
        %1789 = vmatmul.mubr.bf16.gmra.mrb[0].mxu0 %v1694
        %v1790 = vpop.f32.mrb[0].mxu0
        %v1791 = vadd.f32 %v506, %v1790
        %v1792 = vpop.f32.mrb[0].mxu0
        %v1793 = vpop.f32.mrb[0].mxu0
        %v1794 = vadd.f32 %v507, %v1793
        %v1795 = vpop.f32.mrb[0].mxu0
        %1796 = vmatprep.mubr.bf16.mxu0 0
        %1797 = vmatmul.mubr.bf16.gmra.mrb[0].mxu0 %v1697
        %v1798 = vpop.f32.mrb[0].mxu0
        %v1799 = vadd.f32 %v508, %v1798
        %v1800 = vpop.f32.mrb[0].mxu0
        %v1801 = vpop.f32.mrb[0].mxu0
        %v1802 = vadd.f32 %v509, %v1801
        %v1803 = vpop.f32.mrb[0].mxu0
        %1804 = vmatprep.mubr.bf16.mxu0 0
        %1805 = vmatmul.mubr.bf16.gmra.mrb[0].mxu0 %v1700
        %v1806 = vpop.f32.mrb[0].mxu0
        %v1807 = vadd.f32 %v510, %v1806
        %v1808 = vpop.f32.mrb[0].mxu0
        %v1809 = vpop.f32.mrb[0].mxu0
        %v1810 = vadd.f32 %v511, %v1809
        %v1811 = vpop.f32.mrb[0].mxu0
        %1812 = vmatprep.mubr.bf16.mxu0 0
        %1813 = vmatmul.mubr.bf16.gmra.mrb[0].mxu0 %v1703
        %v1814 = vpop.f32.mrb[0].mxu0
        %v1815 = vadd.f32 %v512, %v1814
        %v1816 = vpop.f32.mrb[0].mxu0
        %v1817 = vpop.f32.mrb[0].mxu0
        %v1818 = vadd.f32 %v513, %v1817
        %v1819 = vpop.f32.mrb[0].mxu0
        %1820 = vmatprep.mubr.bf16.mxu0 0
        %1821 = vmatmul.mubr.bf16.gmra.mrb[0].mxu0 %v1706
        %v1822 = vpop.f32.mrb[0].mxu0
        %v1823 = vadd.f32 %v514, %v1822
        %v1824 = vpop.f32.mrb[0].mxu0
        %v1825 = vpop.f32.mrb[0].mxu0
        %v1826 = vadd.f32 %v515, %v1825
        %v1827 = vpop.f32.mrb[0].mxu0
        %1828 = vdwg.mxu0
        %1829 = vmax.xlane.f32.xlu0 %v1574
        %v1830 = vpop.xlane.xlu0 %1829
        %1831 = vmax.xlane.f32.xlu0 %v1577
        %v1832 = vpop.xlane.xlu0 %1831
        %1833 = vmax.xlane.f32.xlu0 %v1582
        %v1834 = vpop.xlane.xlu0 %1833
        %1835 = vmax.xlane.f32.xlu0 %v1585
        %v1836 = vpop.xlane.xlu0 %1835
        %1837 = vmax.xlane.f32.xlu0 %v1590
        %v1838 = vpop.xlane.xlu0 %1837
        %1839 = vmax.xlane.f32.xlu0 %v1593
        %v1840 = vpop.xlane.xlu0 %1839
        %1841 = vmax.xlane.f32.xlu0 %v1598
        %v1842 = vpop.xlane.xlu0 %1841
        %1843 = vmax.xlane.f32.xlu0 %v1601
        %v1844 = vpop.xlane.xlu0 %1843
        %1845 = vmax.xlane.f32.xlu0 %v1606
        %v1846 = vpop.xlane.xlu0 %1845
        %1847 = vmax.xlane.f32.xlu0 %v1609
        %v1848 = vpop.xlane.xlu0 %1847
        %1849 = vmax.xlane.f32.xlu0 %v1614
        %v1850 = vpop.xlane.xlu0 %1849
        %1851 = vmax.xlane.f32.xlu0 %v1617
        %v1852 = vpop.xlane.xlu0 %1851
        %1853 = vmax.xlane.f32.xlu0 %v1622
        %v1854 = vpop.xlane.xlu0 %1853
        %1855 = vmax.xlane.f32.xlu0 %v1625
        %v1856 = vpop.xlane.xlu0 %1855
        %1857 = vmax.xlane.f32.xlu0 %v1630
        %v1858 = vpop.xlane.xlu0 %1857
        %1859 = vmax.xlane.f32.xlu0 %v1633
        %v1860 = vpop.xlane.xlu0 %1859
        %1861 = vmax.xlane.f32.xlu0 %v1767
        %v1862 = vpop.xlane.xlu0 %1861
        %1863 = vmax.xlane.f32.xlu0 %v1770
        %v1864 = vpop.xlane.xlu0 %1863
        %1865 = vmax.xlane.f32.xlu0 %v1775
        %v1866 = vpop.xlane.xlu0 %1865
        %1867 = vmax.xlane.f32.xlu0 %v1778
        %v1868 = vpop.xlane.xlu0 %1867
        %1869 = vmax.xlane.f32.xlu0 %v1783
        %v1870 = vpop.xlane.xlu0 %1869
        %1871 = vmax.xlane.f32.xlu0 %v1786
        %v1872 = vpop.xlane.xlu0 %1871
        %1873 = vmax.xlane.f32.xlu0 %v1791
        %v1874 = vpop.xlane.xlu0 %1873
        %1875 = vmax.xlane.f32.xlu0 %v1794
        %v1876 = vpop.xlane.xlu0 %1875
        %1877 = vmax.xlane.f32.xlu0 %v1799
        %v1878 = vpop.xlane.xlu0 %1877
        %1879 = vmax.xlane.f32.xlu0 %v1802
        %v1880 = vpop.xlane.xlu0 %1879
        %1881 = vmax.xlane.f32.xlu0 %v1807
        %v1882 = vpop.xlane.xlu0 %1881
        %1883 = vmax.xlane.f32.xlu0 %v1810
        %v1884 = vpop.xlane.xlu0 %1883
        %1885 = vmax.xlane.f32.xlu0 %v1815
        %v1886 = vpop.xlane.xlu0 %1885
        %1887 = vmax.xlane.f32.xlu0 %v1818
        %v1888 = vpop.xlane.xlu0 %1887
        %1889 = vmax.xlane.f32.xlu0 %v1823
        %v1890 = vpop.xlane.xlu0 %1889
        %1891 = vmax.xlane.f32.xlu0 %v1826
        %v1892 = vpop.xlane.xlu0 %1891
        %v1893 = vsub.f32 %v1574, %v1830
        %v1894 = vsub.f32 %v1577, %v1832
        %v1895 = vsub.f32 %v1582, %v1834
        %v1896 = vsub.f32 %v1585, %v1836
        %v1897 = vsub.f32 %v1590, %v1838
        %v1898 = vsub.f32 %v1593, %v1840
        %v1899 = vsub.f32 %v1598, %v1842
        %v1900 = vsub.f32 %v1601, %v1844
        %v1901 = vsub.f32 %v1606, %v1846
        %v1902 = vsub.f32 %v1609, %v1848
        %v1903 = vsub.f32 %v1614, %v1850
        %v1904 = vsub.f32 %v1617, %v1852
        %v1905 = vsub.f32 %v1622, %v1854
        %v1906 = vsub.f32 %v1625, %v1856
        %v1907 = vsub.f32 %v1630, %v1858
        %v1908 = vsub.f32 %v1633, %v1860
        %v1909 = vsub.f32 %v1767, %v1862
        %v1910 = vsub.f32 %v1770, %v1864
        %v1911 = vsub.f32 %v1775, %v1866
        %v1912 = vsub.f32 %v1778, %v1868
        %v1913 = vsub.f32 %v1783, %v1870
        %v1914 = vsub.f32 %v1786, %v1872
        %v1915 = vsub.f32 %v1791, %v1874
        %v1916 = vsub.f32 %v1794, %v1876
        %v1917 = vsub.f32 %v1799, %v1878
        %v1918 = vsub.f32 %v1802, %v1880
        %v1919 = vsub.f32 %v1807, %v1882
        %v1920 = vsub.f32 %v1810, %v1884
        %v1921 = vsub.f32 %v1815, %v1886
        %v1922 = vsub.f32 %v1818, %v1888
        %v1923 = vsub.f32 %v1823, %v1890
        %v1924 = vsub.f32 %v1826, %v1892
        %v1925 = vmul.f32 %v1893, 1.442695
        %v1926 = vpow.pop %v1925
        %v1927 = vmul.f32 %v1894, 1.442695
        %v1928 = vpow.pop %v1927
        %v1929 = vmul.f32 %v1895, 1.442695
        %v1930 = vpow.pop %v1929
        %v1931 = vmul.f32 %v1896, 1.442695
        %v1932 = vpow.pop %v1931
        %v1933 = vmul.f32 %v1897, 1.442695
        %v1934 = vpow.pop %v1933
        %v1935 = vmul.f32 %v1898, 1.442695
        %v1936 = vpow.pop %v1935
        %v1937 = vmul.f32 %v1899, 1.442695
        %v1938 = vpow.pop %v1937
        %v1939 = vmul.f32 %v1900, 1.442695
        %v1940 = vpow.pop %v1939
        %v1941 = vmul.f32 %v1901, 1.442695
        %v1942 = vpow.pop %v1941
        %v1943 = vmul.f32 %v1902, 1.442695
        %v1944 = vpow.pop %v1943
        %v1945 = vmul.f32 %v1903, 1.442695
        %v1946 = vpow.pop %v1945
        %v1947 = vmul.f32 %v1904, 1.442695
        %v1948 = vpow.pop %v1947
        %v1949 = vmul.f32 %v1905, 1.442695
        %v1950 = vpow.pop %v1949
        %v1951 = vmul.f32 %v1906, 1.442695
        %v1952 = vpow.pop %v1951
        %v1953 = vmul.f32 %v1907, 1.442695
        %v1954 = vpow.pop %v1953
        %v1955 = vmul.f32 %v1908, 1.442695
        %v1956 = vpow.pop %v1955
        %v1957 = vmul.f32 %v1909, 1.442695
        %v1958 = vpow.pop %v1957
        %v1959 = vmul.f32 %v1910, 1.442695
        %v1960 = vpow.pop %v1959
        %v1961 = vmul.f32 %v1911, 1.442695
        %v1962 = vpow.pop %v1961
        %v1963 = vmul.f32 %v1912, 1.442695
        %v1964 = vpow.pop %v1963
        %v1965 = vmul.f32 %v1913, 1.442695
        %v1966 = vpow.pop %v1965
        %v1967 = vmul.f32 %v1914, 1.442695
        %v1968 = vpow.pop %v1967
        %v1969 = vmul.f32 %v1915, 1.442695
        %v1970 = vpow.pop %v1969
        %v1971 = vmul.f32 %v1916, 1.442695
        %v1972 = vpow.pop %v1971
        %v1973 = vmul.f32 %v1917, 1.442695
        %v1974 = vpow.pop %v1973
        %v1975 = vmul.f32 %v1918, 1.442695
        %v1976 = vpow.pop %v1975
        %v1977 = vmul.f32 %v1919, 1.442695
        %v1978 = vpow.pop %v1977
        %v1979 = vmul.f32 %v1920, 1.442695
        %v1980 = vpow.pop %v1979
        %v1981 = vmul.f32 %v1921, 1.442695
        %v1982 = vpow.pop %v1981
        %v1983 = vmul.f32 %v1922, 1.442695
        %v1984 = vpow.pop %v1983
        %v1985 = vmul.f32 %v1923, 1.442695
        %v1986 = vpow.pop %v1985
        %v1987 = vmul.f32 %v1924, 1.442695
        %v1988 = vpow.pop %v1987
        %1989 = vadd.xlane.f32.xlu0 %v1926
        %v1990 = vpop.xlane.xlu0 %1989
        %1991 = vadd.xlane.f32.xlu0 %v1928
        %v1992 = vpop.xlane.xlu0 %1991
        %1993 = vadd.xlane.f32.xlu0 %v1930
        %v1994 = vpop.xlane.xlu0 %1993
        %1995 = vadd.xlane.f32.xlu0 %v1932
        %v1996 = vpop.xlane.xlu0 %1995
        %1997 = vadd.xlane.f32.xlu0 %v1934
        %v1998 = vpop.xlane.xlu0 %1997
        %1999 = vadd.xlane.f32.xlu0 %v1936
        %v2000 = vpop.xlane.xlu0 %1999
        %2001 = vadd.xlane.f32.xlu0 %v1938
        %v2002 = vpop.xlane.xlu0 %2001
        %2003 = vadd.xlane.f32.xlu0 %v1940
        %v2004 = vpop.xlane.xlu0 %2003
        %2005 = vadd.xlane.f32.xlu0 %v1942
        %v2006 = vpop.xlane.xlu0 %2005
        %2007 = vadd.xlane.f32.xlu0 %v1944
        %v2008 = vpop.xlane.xlu0 %2007
        %2009 = vadd.xlane.f32.xlu0 %v1946
        %v2010 = vpop.xlane.xlu0 %2009
        %2011 = vadd.xlane.f32.xlu0 %v1948
        %v2012 = vpop.xlane.xlu0 %2011
        %2013 = vadd.xlane.f32.xlu0 %v1950
        %v2014 = vpop.xlane.xlu0 %2013
        %2015 = vadd.xlane.f32.xlu0 %v1952
        %v2016 = vpop.xlane.xlu0 %2015
        %2017 = vadd.xlane.f32.xlu0 %v1954
        %v2018 = vpop.xlane.xlu0 %2017
        %2019 = vadd.xlane.f32.xlu0 %v1956
        %v2020 = vpop.xlane.xlu0 %2019
        %2021 = vadd.xlane.f32.xlu0 %v1958
        %v2022 = vpop.xlane.xlu0 %2021
        %2023 = vadd.xlane.f32.xlu0 %v1960
        %v2024 = vpop.xlane.xlu0 %2023
        %2025 = vadd.xlane.f32.xlu0 %v1962
        %v2026 = vpop.xlane.xlu0 %2025
        %2027 = vadd.xlane.f32.xlu0 %v1964
        %v2028 = vpop.xlane.xlu0 %2027
        %2029 = vadd.xlane.f32.xlu0 %v1966
        %v2030 = vpop.xlane.xlu0 %2029
        %2031 = vadd.xlane.f32.xlu0 %v1968
        %v2032 = vpop.xlane.xlu0 %2031
        %2033 = vadd.xlane.f32.xlu0 %v1970
        %v2034 = vpop.xlane.xlu0 %2033
        %2035 = vadd.xlane.f32.xlu0 %v1972
        %v2036 = vpop.xlane.xlu0 %2035
        %2037 = vadd.xlane.f32.xlu0 %v1974
        %v2038 = vpop.xlane.xlu0 %2037
        %2039 = vadd.xlane.f32.xlu0 %v1976
        %v2040 = vpop.xlane.xlu0 %2039
        %2041 = vadd.xlane.f32.xlu0 %v1978
        %v2042 = vpop.xlane.xlu0 %2041
        %2043 = vadd.xlane.f32.xlu0 %v1980
        %v2044 = vpop.xlane.xlu0 %2043
        %2045 = vadd.xlane.f32.xlu0 %v1982
        %v2046 = vpop.xlane.xlu0 %2045
        %2047 = vadd.xlane.f32.xlu0 %v1984
        %v2048 = vpop.xlane.xlu0 %2047
        %2049 = vadd.xlane.f32.xlu0 %v1986
        %v2050 = vpop.xlane.xlu0 %2049
        %2051 = vadd.xlane.f32.xlu0 %v1988
        %v2052 = vpop.xlane.xlu0 %2051
        %v2053 = vrcp.pop %v1990
        %v2054 = vrcp.pop %v1992
        %v2055 = vrcp.pop %v1994
        %v2056 = vrcp.pop %v1996
        %v2057 = vrcp.pop %v1998
        %v2058 = vrcp.pop %v2000
        %v2059 = vrcp.pop %v2002
        %v2060 = vrcp.pop %v2004
        %v2061 = vrcp.pop %v2006
        %v2062 = vrcp.pop %v2008
        %v2063 = vrcp.pop %v2010
        %v2064 = vrcp.pop %v2012
        %v2065 = vrcp.pop %v2014
        %v2066 = vrcp.pop %v2016
        %v2067 = vrcp.pop %v2018
        %v2068 = vrcp.pop %v2020
        %v2069 = vrcp.pop %v2022
        %v2070 = vrcp.pop %v2024
        %v2071 = vrcp.pop %v2026
        %v2072 = vrcp.pop %v2028
        %v2073 = vrcp.pop %v2030
        %v2074 = vrcp.pop %v2032
        %v2075 = vrcp.pop %v2034
        %v2076 = vrcp.pop %v2036
        %v2077 = vrcp.pop %v2038
        %v2078 = vrcp.pop %v2040
        %v2079 = vrcp.pop %v2042
        %v2080 = vrcp.pop %v2044
        %v2081 = vrcp.pop %v2046
        %v2082 = vrcp.pop %v2048
        %v2083 = vrcp.pop %v2050
        %v2084 = vrcp.pop %v2052
        %v2085 = vmul.f32 %v1926, %v2053
        %v2086 = vmul.f32 %v1928, %v2054
        %v2087 = vmul.f32 %v1930, %v2055
        %v2088 = vmul.f32 %v1932, %v2056
        %v2089 = vmul.f32 %v1934, %v2057
        %v2090 = vmul.f32 %v1936, %v2058
        %v2091 = vmul.f32 %v1938, %v2059
        %v2092 = vmul.f32 %v1940, %v2060
        %v2093 = vmul.f32 %v1942, %v2061
        %v2094 = vmul.f32 %v1944, %v2062
        %v2095 = vmul.f32 %v1946, %v2063
        %v2096 = vmul.f32 %v1948, %v2064
        %v2097 = vmul.f32 %v1950, %v2065
        %v2098 = vmul.f32 %v1952, %v2066
        %v2099 = vmul.f32 %v1954, %v2067
        %v2100 = vmul.f32 %v1956, %v2068
        %v2101 = vmul.f32 %v1958, %v2069
        %v2102 = vmul.f32 %v1960, %v2070
        %v2103 = vmul.f32 %v1962, %v2071
        %v2104 = vmul.f32 %v1964, %v2072
        %v2105 = vmul.f32 %v1966, %v2073
        %v2106 = vmul.f32 %v1968, %v2074
        %v2107 = vmul.f32 %v1970, %v2075
        %v2108 = vmul.f32 %v1972, %v2076
        %v2109 = vmul.f32 %v1974, %v2077
        %v2110 = vmul.f32 %v1976, %v2078
        %v2111 = vmul.f32 %v1978, %v2079
        %v2112 = vmul.f32 %v1980, %v2080
        %v2113 = vmul.f32 %v1982, %v2081
        %v2114 = vmul.f32 %v1984, %v2082
        %v2115 = vmul.f32 %v1986, %v2083
        %v2116 = vmul.f32 %v1988, %v2084
        %v2117 = vpack.c.bf16 %v2086, %v2085
        %v2118 = vpack.c.bf16 %v2088, %v2087
        %v2119 = vpack.c.bf16 %v2090, %v2089
        %v2120 = vpack.c.bf16 %v2092, %v2091
        %v2121 = vpack.c.bf16 %v2094, %v2093
        %v2122 = vpack.c.bf16 %v2096, %v2095
        %v2123 = vpack.c.bf16 %v2098, %v2097
        %v2124 = vpack.c.bf16 %v2100, %v2099
        %v2125 = vpack.c.bf16 %v2102, %v2101
        %v2126 = vpack.c.bf16 %v2104, %v2103
        %v2127 = vpack.c.bf16 %v2106, %v2105
        %v2128 = vpack.c.bf16 %v2108, %v2107
        %v2129 = vpack.c.bf16 %v2110, %v2109
        %v2130 = vpack.c.bf16 %v2112, %v2111
        %v2131 = vpack.c.bf16 %v2114, %v2113
        %v2132 = vpack.c.bf16 %v2116, %v2115
        %2133 = vmatprep.subr.bf16.mxu0 0
        %2134 = vmatpush1.bf16.msra.mxu0 %v1483
        %2135 = vmatprep.subr.bf16.mxu0 0
        %2136 = vmatpush1.bf16.msra.mxu0 %v1484
        %2137 = vmatprep.subr.bf16.mxu0 0
        %2138 = vmatpush1.bf16.msra.mxu0 %v1485
        %2139 = vmatprep.subr.bf16.mxu0 0
        %2140 = vmatpush1.bf16.msra.mxu0 %v1486
        %2141 = vmatprep.subr.bf16.mxu0 0
        %2142 = vmatpush1.bf16.msra.mxu0 %v1487
        %2143 = vmatprep.subr.bf16.mxu0 0
        %2144 = vmatpush1.bf16.msra.mxu0 %v1488
        %2145 = vmatprep.subr.bf16.mxu0 0
        %2146 = vmatpush1.bf16.msra.mxu0 %v1489
        %2147 = vmatprep.subr.bf16.mxu0 0
        %2148 = vmatpush1.bf16.msra.mxu0 %v1490
        %2149 = vmatprep.subr.bf16.mxu0 0
        %2150 = vmatpush1.bf16.msra.mxu0 0
        %2151 = vmatprep.subr.bf16.mxu0 0
        %2152 = vmatpush1.bf16.msra.mxu0 0
        %2153 = vmatprep.subr.bf16.mxu0 0
        %2154 = vmatpush1.bf16.msra.mxu0 0
        %2155 = vmatprep.subr.bf16.mxu0 0
        %2156 = vmatpush1.bf16.msra.mxu0 0
        %2157 = vmatprep.subr.bf16.mxu0 0
        %2158 = vmatpush1.bf16.msra.mxu0 0
        %2159 = vmatprep.subr.bf16.mxu0 0
        %2160 = vmatpush1.bf16.msra.mxu0 0
        %2161 = vmatprep.subr.bf16.mxu0 0
        %2162 = vmatpush1.bf16.msra.mxu0 0
        %2163 = vmatprep.subr.bf16.mxu0 0
        %2164 = vmatpush1.bf16.msra.mxu0 0
        %2165 = vmatprep.mubr.bf16.mxu0 0
        %2166 = vmatmul.mubr.bf16.gmra.mrb[0].mxu0 %v2117
        %v2167 = vpop.f32.mrb[0].mxu0
        %v2168 = vadd.f32 0.0, %v2167
        %v2169 = vpop.f32.mrb[0].mxu0
        %v2170 = vpop.f32.mrb[0].mxu0
        %v2171 = vadd.f32 0.0, %v2170
        %v2172 = vpop.f32.mrb[0].mxu0
        %2173 = vmatprep.mubr.bf16.mxu0 0
        %2174 = vmatmul.mubr.bf16.gmra.mrb[0].mxu0 %v2118
        %v2175 = vpop.f32.mrb[0].mxu0
        %v2176 = vadd.f32 0.0, %v2175
        %v2177 = vpop.f32.mrb[0].mxu0
        %v2178 = vpop.f32.mrb[0].mxu0
        %v2179 = vadd.f32 0.0, %v2178
        %v2180 = vpop.f32.mrb[0].mxu0
        %2181 = vmatprep.mubr.bf16.mxu0 0
        %2182 = vmatmul.mubr.bf16.gmra.mrb[0].mxu0 %v2119
        %v2183 = vpop.f32.mrb[0].mxu0
        %v2184 = vadd.f32 0.0, %v2183
        %v2185 = vpop.f32.mrb[0].mxu0
        %v2186 = vpop.f32.mrb[0].mxu0
        %v2187 = vadd.f32 0.0, %v2186
        %v2188 = vpop.f32.mrb[0].mxu0
        %2189 = vmatprep.mubr.bf16.mxu0 0
        %2190 = vmatmul.mubr.bf16.gmra.mrb[0].mxu0 %v2120
        %v2191 = vpop.f32.mrb[0].mxu0
        %v2192 = vadd.f32 0.0, %v2191
        %v2193 = vpop.f32.mrb[0].mxu0
        %v2194 = vpop.f32.mrb[0].mxu0
        %v2195 = vadd.f32 0.0, %v2194
        %v2196 = vpop.f32.mrb[0].mxu0
        %2197 = vmatprep.mubr.bf16.mxu0 0
        %2198 = vmatmul.mubr.bf16.gmra.mrb[0].mxu0 %v2121
        %v2199 = vpop.f32.mrb[0].mxu0
        %v2200 = vadd.f32 0.0, %v2199
        %v2201 = vpop.f32.mrb[0].mxu0
        %v2202 = vpop.f32.mrb[0].mxu0
        %v2203 = vadd.f32 0.0, %v2202
        %v2204 = vpop.f32.mrb[0].mxu0
        %2205 = vmatprep.mubr.bf16.mxu0 0
        %2206 = vmatmul.mubr.bf16.gmra.mrb[0].mxu0 %v2122
        %v2207 = vpop.f32.mrb[0].mxu0
        %v2208 = vadd.f32 0.0, %v2207
        %v2209 = vpop.f32.mrb[0].mxu0
        %v2210 = vpop.f32.mrb[0].mxu0
        %v2211 = vadd.f32 0.0, %v2210
        %v2212 = vpop.f32.mrb[0].mxu0
        %2213 = vmatprep.mubr.bf16.mxu0 0
        %2214 = vmatmul.mubr.bf16.gmra.mrb[0].mxu0 %v2123
        %v2215 = vpop.f32.mrb[0].mxu0
        %v2216 = vadd.f32 0.0, %v2215
        %v2217 = vpop.f32.mrb[0].mxu0
        %v2218 = vpop.f32.mrb[0].mxu0
        %v2219 = vadd.f32 0.0, %v2218
        %v2220 = vpop.f32.mrb[0].mxu0
        %2221 = vmatprep.mubr.bf16.mxu0 0
        %2222 = vmatmul.mubr.bf16.gmra.mrb[0].mxu0 %v2124
        %v2223 = vpop.f32.mrb[0].mxu0
        %v2224 = vadd.f32 0.0, %v2223
        %v2225 = vpop.f32.mrb[0].mxu0
        %v2226 = vpop.f32.mrb[0].mxu0
        %v2227 = vadd.f32 0.0, %v2226
        %v2228 = vpop.f32.mrb[0].mxu0
        %2229 = vdwg.mxu0
        %2238 = vrot.lane.b32.xlu0 %v1483, 64
        %v2239 = vpop.permute.xlu0 %2238
        %2240 = vrot.lane.b32.xlu0 %v1484, 64
        %v2241 = vpop.permute.xlu0 %2240
        %2242 = vrot.lane.b32.xlu0 %v1485, 64
        %v2243 = vpop.permute.xlu0 %2242
        %2244 = vrot.lane.b32.xlu0 %v1486, 64
        %v2245 = vpop.permute.xlu0 %2244
        %2246 = vrot.lane.b32.xlu0 %v1487, 64
        %v2247 = vpop.permute.xlu0 %2246
        %2248 = vrot.lane.b32.xlu0 %v1488, 64
        %v2249 = vpop.permute.xlu0 %2248
        %2250 = vrot.lane.b32.xlu0 %v1489, 64
        %v2251 = vpop.permute.xlu0 %2250
        %2252 = vrot.lane.b32.xlu0 %v1490, 64
        %v2253 = vpop.permute.xlu0 %2252
        %2262 = vmatprep.subr.bf16.mxu0 0
        %2263 = vmatpush1.bf16.msra.mxu0 %v2239
        %2264 = vmatprep.subr.bf16.mxu0 0
        %2265 = vmatpush1.bf16.msra.mxu0 %v2241
        %2266 = vmatprep.subr.bf16.mxu0 0
        %2267 = vmatpush1.bf16.msra.mxu0 %v2243
        %2268 = vmatprep.subr.bf16.mxu0 0
        %2269 = vmatpush1.bf16.msra.mxu0 %v2245
        %2270 = vmatprep.subr.bf16.mxu0 0
        %2271 = vmatpush1.bf16.msra.mxu0 %v2247
        %2272 = vmatprep.subr.bf16.mxu0 0
        %2273 = vmatpush1.bf16.msra.mxu0 %v2249
        %2274 = vmatprep.subr.bf16.mxu0 0
        %2275 = vmatpush1.bf16.msra.mxu0 %v2251
        %2276 = vmatprep.subr.bf16.mxu0 0
        %2277 = vmatpush1.bf16.msra.mxu0 %v2253
        %2278 = vmatprep.subr.bf16.mxu0 0
        %2279 = vmatpush1.bf16.msra.mxu0 0
        %2280 = vmatprep.subr.bf16.mxu0 0
        %2281 = vmatpush1.bf16.msra.mxu0 0
        %2282 = vmatprep.subr.bf16.mxu0 0
        %2283 = vmatpush1.bf16.msra.mxu0 0
        %2284 = vmatprep.subr.bf16.mxu0 0
        %2285 = vmatpush1.bf16.msra.mxu0 0
        %2286 = vmatprep.subr.bf16.mxu0 0
        %2287 = vmatpush1.bf16.msra.mxu0 0
        %2288 = vmatprep.subr.bf16.mxu0 0
        %2289 = vmatpush1.bf16.msra.mxu0 0
        %2290 = vmatprep.subr.bf16.mxu0 0
        %2291 = vmatpush1.bf16.msra.mxu0 0
        %2292 = vmatprep.subr.bf16.mxu0 0
        %2293 = vmatpush1.bf16.msra.mxu0 0
        %2294 = vmatprep.mubr.bf16.mxu0 0
        %2295 = vmatmul.mubr.bf16.gmra.mrb[0].mxu0 %v2125
        %v2296 = vpop.f32.mrb[0].mxu0
        %v2297 = vadd.f32 0.0, %v2296
        %v2298 = vpop.f32.mrb[0].mxu0
        %v2299 = vpop.f32.mrb[0].mxu0
        %v2300 = vadd.f32 0.0, %v2299
        %v2301 = vpop.f32.mrb[0].mxu0
        %2302 = vmatprep.mubr.bf16.mxu0 0
        %2303 = vmatmul.mubr.bf16.gmra.mrb[0].mxu0 %v2126
        %v2304 = vpop.f32.mrb[0].mxu0
        %v2305 = vadd.f32 0.0, %v2304
        %v2306 = vpop.f32.mrb[0].mxu0
        %v2307 = vpop.f32.mrb[0].mxu0
        %v2308 = vadd.f32 0.0, %v2307
        %v2309 = vpop.f32.mrb[0].mxu0
        %2310 = vmatprep.mubr.bf16.mxu0 0
        %2311 = vmatmul.mubr.bf16.gmra.mrb[0].mxu0 %v2127
        %v2312 = vpop.f32.mrb[0].mxu0
        %v2313 = vadd.f32 0.0, %v2312
        %v2314 = vpop.f32.mrb[0].mxu0
        %v2315 = vpop.f32.mrb[0].mxu0
        %v2316 = vadd.f32 0.0, %v2315
        %v2317 = vpop.f32.mrb[0].mxu0
        %2318 = vmatprep.mubr.bf16.mxu0 0
        %2319 = vmatmul.mubr.bf16.gmra.mrb[0].mxu0 %v2128
        %v2320 = vpop.f32.mrb[0].mxu0
        %v2321 = vadd.f32 0.0, %v2320
        %v2322 = vpop.f32.mrb[0].mxu0
        %v2323 = vpop.f32.mrb[0].mxu0
        %v2324 = vadd.f32 0.0, %v2323
        %v2325 = vpop.f32.mrb[0].mxu0
        %2326 = vmatprep.mubr.bf16.mxu0 0
        %2327 = vmatmul.mubr.bf16.gmra.mrb[0].mxu0 %v2129
        %v2328 = vpop.f32.mrb[0].mxu0
        %v2329 = vadd.f32 0.0, %v2328
        %v2330 = vpop.f32.mrb[0].mxu0
        %v2331 = vpop.f32.mrb[0].mxu0
        %v2332 = vadd.f32 0.0, %v2331
        %v2333 = vpop.f32.mrb[0].mxu0
        %2334 = vmatprep.mubr.bf16.mxu0 0
        %2335 = vmatmul.mubr.bf16.gmra.mrb[0].mxu0 %v2130
        %v2336 = vpop.f32.mrb[0].mxu0
        %v2337 = vadd.f32 0.0, %v2336
        %v2338 = vpop.f32.mrb[0].mxu0
        %v2339 = vpop.f32.mrb[0].mxu0
        %v2340 = vadd.f32 0.0, %v2339
        %v2341 = vpop.f32.mrb[0].mxu0
        %2342 = vmatprep.mubr.bf16.mxu0 0
        %2343 = vmatmul.mubr.bf16.gmra.mrb[0].mxu0 %v2131
        %v2344 = vpop.f32.mrb[0].mxu0
        %v2345 = vadd.f32 0.0, %v2344
        %v2346 = vpop.f32.mrb[0].mxu0
        %v2347 = vpop.f32.mrb[0].mxu0
        %v2348 = vadd.f32 0.0, %v2347
        %v2349 = vpop.f32.mrb[0].mxu0
        %2350 = vmatprep.mubr.bf16.mxu0 0
        %2351 = vmatmul.mubr.bf16.gmra.mrb[0].mxu0 %v2132
        %v2352 = vpop.f32.mrb[0].mxu0
        %v2353 = vadd.f32 0.0, %v2352
        %v2354 = vpop.f32.mrb[0].mxu0
        %v2355 = vpop.f32.mrb[0].mxu0
        %v2356 = vadd.f32 0.0, %v2355
        %v2357 = vpop.f32.mrb[0].mxu0
        %2358 = vdwg.mxu0
        %2375 = vrot.lane.b32.xlu0 %v2297, 64
        %v2376 = vpop.permute.xlu0 %2375
        %2377 = vrot.lane.b32.xlu0 %v2300, 64
        %v2378 = vpop.permute.xlu0 %2377
        %2379 = vrot.lane.b32.xlu0 %v2305, 64
        %v2380 = vpop.permute.xlu0 %2379
        %2381 = vrot.lane.b32.xlu0 %v2308, 64
        %v2382 = vpop.permute.xlu0 %2381
        %2383 = vrot.lane.b32.xlu0 %v2313, 64
        %v2384 = vpop.permute.xlu0 %2383
        %2385 = vrot.lane.b32.xlu0 %v2316, 64
        %v2386 = vpop.permute.xlu0 %2385
        %2387 = vrot.lane.b32.xlu0 %v2321, 64
        %v2388 = vpop.permute.xlu0 %2387
        %2389 = vrot.lane.b32.xlu0 %v2324, 64
        %v2390 = vpop.permute.xlu0 %2389
        %2391 = vrot.lane.b32.xlu0 %v2329, 64
        %v2392 = vpop.permute.xlu0 %2391
        %2393 = vrot.lane.b32.xlu0 %v2332, 64
        %v2394 = vpop.permute.xlu0 %2393
        %2395 = vrot.lane.b32.xlu0 %v2337, 64
        %v2396 = vpop.permute.xlu0 %2395
        %2397 = vrot.lane.b32.xlu0 %v2340, 64
        %v2398 = vpop.permute.xlu0 %2397
        %2399 = vrot.lane.b32.xlu0 %v2345, 64
        %v2400 = vpop.permute.xlu0 %2399
        %2401 = vrot.lane.b32.xlu0 %v2348, 64
        %v2402 = vpop.permute.xlu0 %2401
        %2403 = vrot.lane.b32.xlu0 %v2353, 64
        %v2404 = vpop.permute.xlu0 %2403
        %2405 = vrot.lane.b32.xlu0 %v2356, 64
        %v2406 = vpop.permute.xlu0 %2405
        %v2423 = vsel %vm716, %v2168, %v2376
        %v2424 = vsel %vm716, %v2171, %v2378
        %v2425 = vsel %vm716, %v2176, %v2380
        %v2426 = vsel %vm716, %v2179, %v2382
        %v2427 = vsel %vm716, %v2184, %v2384
        %v2428 = vsel %vm716, %v2187, %v2386
        %v2429 = vsel %vm716, %v2192, %v2388
        %v2430 = vsel %vm716, %v2195, %v2390
        %v2431 = vsel %vm716, %v2200, %v2392
        %v2432 = vsel %vm716, %v2203, %v2394
        %v2433 = vsel %vm716, %v2208, %v2396
        %v2434 = vsel %vm716, %v2211, %v2398
        %v2435 = vsel %vm716, %v2216, %v2400
        %v2436 = vsel %vm716, %v2219, %v2402
        %v2437 = vsel %vm716, %v2224, %v2404
        %v2438 = vsel %vm716, %v2227, %v2406
        %v2439 = vpack.c.bf16 %v2424, %v2423
        %v2440 = vpack.c.bf16 %v2426, %v2425
        %v2441 = vpack.c.bf16 %v2428, %v2427
        %v2442 = vpack.c.bf16 %v2430, %v2429
        %v2443 = vpack.c.bf16 %v2432, %v2431
        %v2444 = vpack.c.bf16 %v2434, %v2433
        %v2445 = vpack.c.bf16 %v2436, %v2435
        %v2446 = vpack.c.bf16 %v2438, %v2437
        %v2447 = vld [vmem:[%s8] sm:$0xf]
        %v2448 = vld [vmem:[%s8 + $0x4] sm:$0xf]
        %v2449 = vld [vmem:[%s8 + $0x8] sm:$0xf]
        %v2450 = vld [vmem:[%s8 + $0xc] sm:$0xf]
        %v2451 = vld [vmem:[%s8 + $0x10] sm:$0xf]
        %v2452 = vld [vmem:[%s8 + $0x14] sm:$0xf]
        %v2453 = vld [vmem:[%s8 + $0x18] sm:$0xf]
        %v2454 = vld [vmem:[%s8 + $0x1c] sm:$0xf]
        %v2455 = vld [vmem:[%s8 + $0x20] sm:$0xf]
        %v2456 = vld [vmem:[%s8 + $0x24] sm:$0xf]
        %v2457 = vld [vmem:[%s8 + $0x28] sm:$0xf]
        %v2458 = vld [vmem:[%s8 + $0x2c] sm:$0xf]
        %v2459 = vld [vmem:[%s8 + $0x30] sm:$0xf]
        %v2460 = vld [vmem:[%s8 + $0x34] sm:$0xf]
        %v2461 = vld [vmem:[%s8 + $0x38] sm:$0xf]
        %v2462 = vld [vmem:[%s8 + $0x3c] sm:$0xf]
        %v2479 = vunpack.c.l.b16 %v2447
        %v2480 = vunpack.c.l.b16 %v2448
        %v2481 = vunpack.c.l.b16 %v2449
        %v2482 = vunpack.c.l.b16 %v2450
        %v2483 = vunpack.c.l.b16 %v2451
        %v2484 = vunpack.c.l.b16 %v2452
        %v2485 = vunpack.c.l.b16 %v2453
        %v2486 = vunpack.c.l.b16 %v2454
        %v2487 = vunpack.c.l.b16 %v2455
        %v2488 = vunpack.c.l.b16 %v2456
        %v2489 = vunpack.c.l.b16 %v2457
        %v2490 = vunpack.c.l.b16 %v2458
        %v2491 = vunpack.c.l.b16 %v2459
        %v2492 = vunpack.c.l.b16 %v2460
        %v2493 = vunpack.c.l.b16 %v2461
        %v2494 = vunpack.c.l.b16 %v2462
        %v2495 = vpack.c.b16 %v2480, %v2479
        %v2496 = vpack.c.b16 %v2482, %v2481
        %v2497 = vpack.c.b16 %v2484, %v2483
        %v2498 = vpack.c.b16 %v2486, %v2485
        %v2499 = vpack.c.b16 %v2488, %v2487
        %v2500 = vpack.c.b16 %v2490, %v2489
        %v2501 = vpack.c.b16 %v2492, %v2491
        %v2502 = vpack.c.b16 %v2494, %v2493
        %2511 = vmatprep.subr.bf16.mxu0 0
        %2512 = vmatpush1.bf16.msra.mxu0 %v2495
        %2513 = vmatprep.subr.bf16.mxu0 0
        %2514 = vmatpush1.bf16.msra.mxu0 %v2496
        %2515 = vmatprep.subr.bf16.mxu0 0
        %2516 = vmatpush1.bf16.msra.mxu0 %v2497
        %2517 = vmatprep.subr.bf16.mxu0 0
        %2518 = vmatpush1.bf16.msra.mxu0 %v2498
        %2519 = vmatprep.subr.bf16.mxu0 0
        %2520 = vmatpush1.bf16.msra.mxu0 %v2499
        %2521 = vmatprep.subr.bf16.mxu0 0
        %2522 = vmatpush1.bf16.msra.mxu0 %v2500
        %2523 = vmatprep.subr.bf16.mxu0 0
        %2524 = vmatpush1.bf16.msra.mxu0 %v2501
        %2525 = vmatprep.subr.bf16.mxu0 0
        %2526 = vmatpush1.bf16.msra.mxu0 %v2502
        %2527 = vmatprep.subr.bf16.mxu0 0
        %2528 = vmatpush1.bf16.msra.mxu0 0
        %2529 = vmatprep.subr.bf16.mxu0 0
        %2530 = vmatpush1.bf16.msra.mxu0 0
        %2531 = vmatprep.subr.bf16.mxu0 0
        %2532 = vmatpush1.bf16.msra.mxu0 0
        %2533 = vmatprep.subr.bf16.mxu0 0
        %2534 = vmatpush1.bf16.msra.mxu0 0
        %2535 = vmatprep.subr.bf16.mxu0 0
        %2536 = vmatpush1.bf16.msra.mxu0 0
        %2537 = vmatprep.subr.bf16.mxu0 0
        %2538 = vmatpush1.bf16.msra.mxu0 0
        %2539 = vmatprep.subr.bf16.mxu0 0
        %2540 = vmatpush1.bf16.msra.mxu0 0
        %2541 = vmatprep.subr.bf16.mxu0 0
        %2542 = vmatpush1.bf16.msra.mxu0 0
        %2543 = vmatprep.mubr.bf16.mxu0 0
        %2544 = vmatmul.mubr.bf16.gmra.mrb[0].mxu0 %v2439
        %v2545 = vpop.f32.mrb[0].mxu0
        %v2546 = vadd.f32 0.0, %v2545
        %v2547 = vpop.f32.mrb[0].mxu0
        %v2548 = vpop.f32.mrb[0].mxu0
        %v2549 = vadd.f32 0.0, %v2548
        %v2550 = vpop.f32.mrb[0].mxu0
        %2551 = vmatprep.mubr.bf16.mxu0 0
        %2552 = vmatmul.mubr.bf16.gmra.mrb[0].mxu0 %v2440
        %v2553 = vpop.f32.mrb[0].mxu0
        %v2554 = vadd.f32 0.0, %v2553
        %v2555 = vpop.f32.mrb[0].mxu0
        %v2556 = vpop.f32.mrb[0].mxu0
        %v2557 = vadd.f32 0.0, %v2556
        %v2558 = vpop.f32.mrb[0].mxu0
        %2559 = vmatprep.mubr.bf16.mxu0 0
        %2560 = vmatmul.mubr.bf16.gmra.mrb[0].mxu0 %v2441
        %v2561 = vpop.f32.mrb[0].mxu0
        %v2562 = vadd.f32 0.0, %v2561
        %v2563 = vpop.f32.mrb[0].mxu0
        %v2564 = vpop.f32.mrb[0].mxu0
        %v2565 = vadd.f32 0.0, %v2564
        %v2566 = vpop.f32.mrb[0].mxu0
        %2567 = vmatprep.mubr.bf16.mxu0 0
        %2568 = vmatmul.mubr.bf16.gmra.mrb[0].mxu0 %v2442
        %v2569 = vpop.f32.mrb[0].mxu0
        %v2570 = vadd.f32 0.0, %v2569
        %v2571 = vpop.f32.mrb[0].mxu0
        %v2572 = vpop.f32.mrb[0].mxu0
        %v2573 = vadd.f32 0.0, %v2572
        %v2574 = vpop.f32.mrb[0].mxu0
        %2575 = vmatprep.mubr.bf16.mxu0 0
        %2576 = vmatmul.mubr.bf16.gmra.mrb[0].mxu0 %v2443
        %v2577 = vpop.f32.mrb[0].mxu0
        %v2578 = vadd.f32 0.0, %v2577
        %v2579 = vpop.f32.mrb[0].mxu0
        %v2580 = vpop.f32.mrb[0].mxu0
        %v2581 = vadd.f32 0.0, %v2580
        %v2582 = vpop.f32.mrb[0].mxu0
        %2583 = vmatprep.mubr.bf16.mxu0 0
        %2584 = vmatmul.mubr.bf16.gmra.mrb[0].mxu0 %v2444
        %v2585 = vpop.f32.mrb[0].mxu0
        %v2586 = vadd.f32 0.0, %v2585
        %v2587 = vpop.f32.mrb[0].mxu0
        %v2588 = vpop.f32.mrb[0].mxu0
        %v2589 = vadd.f32 0.0, %v2588
        %v2590 = vpop.f32.mrb[0].mxu0
        %2591 = vmatprep.mubr.bf16.mxu0 0
        %2592 = vmatmul.mubr.bf16.gmra.mrb[0].mxu0 %v2445
        %v2593 = vpop.f32.mrb[0].mxu0
        %v2594 = vadd.f32 0.0, %v2593
        %v2595 = vpop.f32.mrb[0].mxu0
        %v2596 = vpop.f32.mrb[0].mxu0
        %v2597 = vadd.f32 0.0, %v2596
        %v2598 = vpop.f32.mrb[0].mxu0
        %2599 = vmatprep.mubr.bf16.mxu0 0
        %2600 = vmatmul.mubr.bf16.gmra.mrb[0].mxu0 %v2446
        %v2601 = vpop.f32.mrb[0].mxu0
        %v2602 = vadd.f32 0.0, %v2601
        %v2603 = vpop.f32.mrb[0].mxu0
        %v2604 = vpop.f32.mrb[0].mxu0
        %v2605 = vadd.f32 0.0, %v2604
        %v2606 = vpop.f32.mrb[0].mxu0
        %2607 = vdwg.mxu0
        %v2608 = vadd.f32 %v776, %v2546
        %v2609 = vadd.f32 %v779, %v2549
        %v2610 = vadd.f32 %v784, %v2554
        %v2611 = vadd.f32 %v787, %v2557
        %v2612 = vadd.f32 %v792, %v2562
        %v2613 = vadd.f32 %v795, %v2565
        %v2614 = vadd.f32 %v800, %v2570
        %v2615 = vadd.f32 %v803, %v2573
        %v2616 = vadd.f32 %v808, %v2578
        %v2617 = vadd.f32 %v811, %v2581
        %v2618 = vadd.f32 %v816, %v2586
        %v2619 = vadd.f32 %v819, %v2589
        %v2620 = vadd.f32 %v824, %v2594
        %v2621 = vadd.f32 %v827, %v2597
        %v2622 = vadd.f32 %v832, %v2602
        %v2623 = vadd.f32 %v835, %v2605
        %v2624 = vlaneseq
        %v2625 = vshrl.u32 %v2624, 7
        %v2626 = vsub.s32 4, %v2625
        %v2627 = vrot.slane %v838, %v2626
        %v2628 = vadd.f32 %v2608, %v2627
        %v2629 = vadd.f32 %v2609, %v2627
        %v2630 = vadd.f32 %v2610, %v2627
        %v2631 = vadd.f32 %v2611, %v2627
        %v2632 = vadd.f32 %v2612, %v2627
        %v2633 = vadd.f32 %v2613, %v2627
        %v2634 = vadd.f32 %v2614, %v2627
        %v2635 = vadd.f32 %v2615, %v2627
        %v2636 = vadd.f32 %v2616, %v2627
        %v2637 = vadd.f32 %v2617, %v2627
        %v2638 = vadd.f32 %v2618, %v2627
        %v2639 = vadd.f32 %v2619, %v2627
        %v2640 = vadd.f32 %v2620, %v2627
        %v2641 = vadd.f32 %v2621, %v2627
        %v2642 = vadd.f32 %v2622, %v2627
        %v2643 = vadd.f32 %v2623, %v2627
        %2644 = vadd.xlane.f32.xlu0 %v2628
        %v2645 = vpop.xlane.xlu0 %2644
        %2646 = vadd.xlane.f32.xlu0 %v2629
        %v2647 = vpop.xlane.xlu0 %2646
        %2648 = vadd.xlane.f32.xlu0 %v2630
        %v2649 = vpop.xlane.xlu0 %2648
        %2650 = vadd.xlane.f32.xlu0 %v2631
        %v2651 = vpop.xlane.xlu0 %2650
        %2652 = vadd.xlane.f32.xlu0 %v2632
        %v2653 = vpop.xlane.xlu0 %2652
        %2654 = vadd.xlane.f32.xlu0 %v2633
        %v2655 = vpop.xlane.xlu0 %2654
        %2656 = vadd.xlane.f32.xlu0 %v2634
        %v2657 = vpop.xlane.xlu0 %2656
        %2658 = vadd.xlane.f32.xlu0 %v2635
        %v2659 = vpop.xlane.xlu0 %2658
        %2660 = vadd.xlane.f32.xlu0 %v2636
        %v2661 = vpop.xlane.xlu0 %2660
        %2662 = vadd.xlane.f32.xlu0 %v2637
        %v2663 = vpop.xlane.xlu0 %2662
        %2664 = vadd.xlane.f32.xlu0 %v2638
        %v2665 = vpop.xlane.xlu0 %2664
        %2666 = vadd.xlane.f32.xlu0 %v2639
        %v2667 = vpop.xlane.xlu0 %2666
        %2668 = vadd.xlane.f32.xlu0 %v2640
        %v2669 = vpop.xlane.xlu0 %2668
        %2670 = vadd.xlane.f32.xlu0 %v2641
        %v2671 = vpop.xlane.xlu0 %2670
        %2672 = vadd.xlane.f32.xlu0 %v2642
        %v2673 = vpop.xlane.xlu0 %2672
        %2674 = vadd.xlane.f32.xlu0 %v2643
        %v2675 = vpop.xlane.xlu0 %2674
        %v2676 = vmul.f32 %v2645, %v871
        %v2677 = vmul.f32 %v2647, %v871
        %v2678 = vmul.f32 %v2649, %v871
        %v2679 = vmul.f32 %v2651, %v871
        %v2680 = vmul.f32 %v2653, %v871
        %v2681 = vmul.f32 %v2655, %v871
        %v2682 = vmul.f32 %v2657, %v871
        %v2683 = vmul.f32 %v2659, %v871
        %v2684 = vmul.f32 %v2661, %v871
        %v2685 = vmul.f32 %v2663, %v871
        %v2686 = vmul.f32 %v2665, %v871
        %v2687 = vmul.f32 %v2667, %v871
        %v2688 = vmul.f32 %v2669, %v871
        %v2689 = vmul.f32 %v2671, %v871
        %v2690 = vmul.f32 %v2673, %v871
        %v2691 = vmul.f32 %v2675, %v871
        %v2692 = vsub.f32 %v2628, %v2676
        %v2693 = vsub.f32 %v2629, %v2677
        %v2694 = vsub.f32 %v2630, %v2678
        %v2695 = vsub.f32 %v2631, %v2679
        %v2696 = vsub.f32 %v2632, %v2680
        %v2697 = vsub.f32 %v2633, %v2681
        %v2698 = vsub.f32 %v2634, %v2682
        %v2699 = vsub.f32 %v2635, %v2683
        %v2700 = vsub.f32 %v2636, %v2684
        %v2701 = vsub.f32 %v2637, %v2685
        %v2702 = vsub.f32 %v2638, %v2686
        %v2703 = vsub.f32 %v2639, %v2687
        %v2704 = vsub.f32 %v2640, %v2688
        %v2705 = vsub.f32 %v2641, %v2689
        %v2706 = vsub.f32 %v2642, %v2690
        %v2707 = vsub.f32 %v2643, %v2691
        %v2708 = vmul.f32 %v2692, %v2692
        %v2709 = vmul.f32 %v2693, %v2693
        %v2710 = vmul.f32 %v2694, %v2694
        %v2711 = vmul.f32 %v2695, %v2695
        %v2712 = vmul.f32 %v2696, %v2696
        %v2713 = vmul.f32 %v2697, %v2697
        %v2714 = vmul.f32 %v2698, %v2698
        %v2715 = vmul.f32 %v2699, %v2699
        %v2716 = vmul.f32 %v2700, %v2700
        %v2717 = vmul.f32 %v2701, %v2701
        %v2718 = vmul.f32 %v2702, %v2702
        %v2719 = vmul.f32 %v2703, %v2703
        %v2720 = vmul.f32 %v2704, %v2704
        %v2721 = vmul.f32 %v2705, %v2705
        %v2722 = vmul.f32 %v2706, %v2706
        %v2723 = vmul.f32 %v2707, %v2707
        %2724 = vadd.xlane.f32.xlu0 %v2708
        %v2725 = vpop.xlane.xlu0 %2724
        %2726 = vadd.xlane.f32.xlu0 %v2709
        %v2727 = vpop.xlane.xlu0 %2726
        %2728 = vadd.xlane.f32.xlu0 %v2710
        %v2729 = vpop.xlane.xlu0 %2728
        %2730 = vadd.xlane.f32.xlu0 %v2711
        %v2731 = vpop.xlane.xlu0 %2730
        %2732 = vadd.xlane.f32.xlu0 %v2712
        %v2733 = vpop.xlane.xlu0 %2732
        %2734 = vadd.xlane.f32.xlu0 %v2713
        %v2735 = vpop.xlane.xlu0 %2734
        %2736 = vadd.xlane.f32.xlu0 %v2714
        %v2737 = vpop.xlane.xlu0 %2736
        %2738 = vadd.xlane.f32.xlu0 %v2715
        %v2739 = vpop.xlane.xlu0 %2738
        %2740 = vadd.xlane.f32.xlu0 %v2716
        %v2741 = vpop.xlane.xlu0 %2740
        %2742 = vadd.xlane.f32.xlu0 %v2717
        %v2743 = vpop.xlane.xlu0 %2742
        %2744 = vadd.xlane.f32.xlu0 %v2718
        %v2745 = vpop.xlane.xlu0 %2744
        %2746 = vadd.xlane.f32.xlu0 %v2719
        %v2747 = vpop.xlane.xlu0 %2746
        %2748 = vadd.xlane.f32.xlu0 %v2720
        %v2749 = vpop.xlane.xlu0 %2748
        %2750 = vadd.xlane.f32.xlu0 %v2721
        %v2751 = vpop.xlane.xlu0 %2750
        %2752 = vadd.xlane.f32.xlu0 %v2722
        %v2753 = vpop.xlane.xlu0 %2752
        %2754 = vadd.xlane.f32.xlu0 %v2723
        %v2755 = vpop.xlane.xlu0 %2754
        %v2756 = vmul.f32 %v2725, %v871
        %v2757 = vmul.f32 %v2727, %v871
        %v2758 = vmul.f32 %v2729, %v871
        %v2759 = vmul.f32 %v2731, %v871
        %v2760 = vmul.f32 %v2733, %v871
        %v2761 = vmul.f32 %v2735, %v871
        %v2762 = vmul.f32 %v2737, %v871
        %v2763 = vmul.f32 %v2739, %v871
        %v2764 = vmul.f32 %v2741, %v871
        %v2765 = vmul.f32 %v2743, %v871
        %v2766 = vmul.f32 %v2745, %v871
        %v2767 = vmul.f32 %v2747, %v871
        %v2768 = vmul.f32 %v2749, %v871
        %v2769 = vmul.f32 %v2751, %v871
        %v2770 = vmul.f32 %v2753, %v871
        %v2771 = vmul.f32 %v2755, %v871
        %v2772 = vadd.f32 %v2756, 1e-05
        %v2773 = vadd.f32 %v2757, 1e-05
        %v2774 = vadd.f32 %v2758, 1e-05
        %v2775 = vadd.f32 %v2759, 1e-05
        %v2776 = vadd.f32 %v2760, 1e-05
        %v2777 = vadd.f32 %v2761, 1e-05
        %v2778 = vadd.f32 %v2762, 1e-05
        %v2779 = vadd.f32 %v2763, 1e-05
        %v2780 = vadd.f32 %v2764, 1e-05
        %v2781 = vadd.f32 %v2765, 1e-05
        %v2782 = vadd.f32 %v2766, 1e-05
        %v2783 = vadd.f32 %v2767, 1e-05
        %v2784 = vadd.f32 %v2768, 1e-05
        %v2785 = vadd.f32 %v2769, 1e-05
        %v2786 = vadd.f32 %v2770, 1e-05
        %v2787 = vadd.f32 %v2771, 1e-05
        %v2788 = vrsqrt.pop %v2772
        %v2789 = vrsqrt.pop %v2773
        %v2790 = vrsqrt.pop %v2774
        %v2791 = vrsqrt.pop %v2775
        %v2792 = vrsqrt.pop %v2776
        %v2793 = vrsqrt.pop %v2777
        %v2794 = vrsqrt.pop %v2778
        %v2795 = vrsqrt.pop %v2779
        %v2796 = vrsqrt.pop %v2780
        %v2797 = vrsqrt.pop %v2781
        %v2798 = vrsqrt.pop %v2782
        %v2799 = vrsqrt.pop %v2783
        %v2800 = vrsqrt.pop %v2784
        %v2801 = vrsqrt.pop %v2785
        %v2802 = vrsqrt.pop %v2786
        %v2803 = vrsqrt.pop %v2787
        %v2804 = vmul.f32 %v2692, %v2788
        %v2805 = vmul.f32 %v2693, %v2789
        %v2806 = vmul.f32 %v2694, %v2790
        %v2807 = vmul.f32 %v2695, %v2791
        %v2808 = vmul.f32 %v2696, %v2792
        %v2809 = vmul.f32 %v2697, %v2793
        %v2810 = vmul.f32 %v2698, %v2794
        %v2811 = vmul.f32 %v2699, %v2795
        %v2812 = vmul.f32 %v2700, %v2796
        %v2813 = vmul.f32 %v2701, %v2797
        %v2814 = vmul.f32 %v2702, %v2798
        %v2815 = vmul.f32 %v2703, %v2799
        %v2816 = vmul.f32 %v2704, %v2800
        %v2817 = vmul.f32 %v2705, %v2801
        %v2818 = vmul.f32 %v2706, %v2802
        %v2819 = vmul.f32 %v2707, %v2803
        %v2820 = vlaneseq
        %v2821 = vshrl.u32 %v2820, 7
        %v2822 = vsub.s32 2, %v2821
        %v2823 = vrot.slane %v838, %v2822
        %v2824 = vmul.f32 %v2804, %v2823
        %v2825 = vmul.f32 %v2805, %v2823
        %v2826 = vmul.f32 %v2806, %v2823
        %v2827 = vmul.f32 %v2807, %v2823
        %v2828 = vmul.f32 %v2808, %v2823
        %v2829 = vmul.f32 %v2809, %v2823
        %v2830 = vmul.f32 %v2810, %v2823
        %v2831 = vmul.f32 %v2811, %v2823
        %v2832 = vmul.f32 %v2812, %v2823
        %v2833 = vmul.f32 %v2813, %v2823
        %v2834 = vmul.f32 %v2814, %v2823
        %v2835 = vmul.f32 %v2815, %v2823
        %v2836 = vmul.f32 %v2816, %v2823
        %v2837 = vmul.f32 %v2817, %v2823
        %v2838 = vmul.f32 %v2818, %v2823
        %v2839 = vmul.f32 %v2819, %v2823
        %v2840 = vlaneseq
        %v2841 = vshrl.u32 %v2840, 7
        %v2842 = vsub.s32 3, %v2841
        %v2843 = vrot.slane %v838, %v2842
        %v2844 = vadd.f32 %v2824, %v2843
        %v2845 = vadd.f32 %v2825, %v2843
        %v2846 = vadd.f32 %v2826, %v2843
        %v2847 = vadd.f32 %v2827, %v2843
        %v2848 = vadd.f32 %v2828, %v2843
        %v2849 = vadd.f32 %v2829, %v2843
        %v2850 = vadd.f32 %v2830, %v2843
        %v2851 = vadd.f32 %v2831, %v2843
        %v2852 = vadd.f32 %v2832, %v2843
        %v2853 = vadd.f32 %v2833, %v2843
        %v2854 = vadd.f32 %v2834, %v2843
        %v2855 = vadd.f32 %v2835, %v2843
        %v2856 = vadd.f32 %v2836, %v2843
        %v2857 = vadd.f32 %v2837, %v2843
        %v2858 = vadd.f32 %v2838, %v2843
        %v2859 = vadd.f32 %v2839, %v2843
        %v2860 = vpack.c.bf16 %v2845, %v2844
        %v2861 = vpack.c.bf16 %v2847, %v2846
        %v2862 = vpack.c.bf16 %v2849, %v2848
        %v2863 = vpack.c.bf16 %v2851, %v2850
        %v2864 = vpack.c.bf16 %v2853, %v2852
        %v2865 = vpack.c.bf16 %v2855, %v2854
        %v2866 = vpack.c.bf16 %v2857, %v2856
        %v2867 = vpack.c.bf16 %v2859, %v2858
        %v2868 = vld [vmem:[%s9] sm:$0xff]
        %v2869 = vld [vmem:[%s9 + $0x8] sm:$0xff]
        %v2870 = vld [vmem:[%s9 + $0x10] sm:$0xff]
        %v2871 = vld [vmem:[%s9 + $0x18] sm:$0xff]
        %v2872 = vld [vmem:[%s9 + $0x20] sm:$0xff]
        %v2873 = vld [vmem:[%s9 + $0x28] sm:$0xff]
        %v2874 = vld [vmem:[%s9 + $0x30] sm:$0xff]
        %v2875 = vld [vmem:[%s9 + $0x38] sm:$0xff]
        %v2876 = vld [vmem:[%s9 + $0x40] sm:$0xff]
        %v2877 = vld [vmem:[%s9 + $0x48] sm:$0xff]
        %v2878 = vld [vmem:[%s9 + $0x50] sm:$0xff]
        %v2879 = vld [vmem:[%s9 + $0x58] sm:$0xff]
        %v2880 = vld [vmem:[%s9 + $0x60] sm:$0xff]
        %v2881 = vld [vmem:[%s9 + $0x68] sm:$0xff]
        %v2882 = vld [vmem:[%s9 + $0x70] sm:$0xff]
        %v2883 = vld [vmem:[%s9 + $0x78] sm:$0xff]
        %v2884 = vld [vmem:[%s10] sm:$0x3]
        %v2886 = vlaneseq
        %v2887 = vshrl.u32 %v2886, 7
        %v2888 = vsub.s32 0, %v2887
        %v2889 = vrot.slane %v2884, %v2888
        %v2890 = vlaneseq
        %v2891 = vshrl.u32 %v2890, 7
        %v2892 = vsub.s32 1, %v2891
        %v2893 = vrot.slane %v2884, %v2892
        %v2912 = vunpack.c.l.b16 %v2868
        %v2913 = vunpack.c.h.b16 %v2868
        %v2914 = vunpack.c.l.b16 %v2869
        %v2915 = vunpack.c.h.b16 %v2869
        %v2916 = vunpack.c.l.b16 %v2870
        %v2917 = vunpack.c.h.b16 %v2870
        %v2918 = vunpack.c.l.b16 %v2871
        %v2919 = vunpack.c.h.b16 %v2871
        %v2920 = vunpack.c.l.b16 %v2872
        %v2921 = vunpack.c.h.b16 %v2872
        %v2922 = vunpack.c.l.b16 %v2873
        %v2923 = vunpack.c.h.b16 %v2873
        %v2924 = vunpack.c.l.b16 %v2874
        %v2925 = vunpack.c.h.b16 %v2874
        %v2926 = vunpack.c.l.b16 %v2875
        %v2927 = vunpack.c.h.b16 %v2875
        %v2928 = vunpack.c.l.b16 %v2876
        %v2929 = vunpack.c.h.b16 %v2876
        %v2930 = vunpack.c.l.b16 %v2877
        %v2931 = vunpack.c.h.b16 %v2877
        %v2932 = vunpack.c.l.b16 %v2878
        %v2933 = vunpack.c.h.b16 %v2878
        %v2934 = vunpack.c.l.b16 %v2879
        %v2935 = vunpack.c.h.b16 %v2879
        %v2936 = vunpack.c.l.b16 %v2880
        %v2937 = vunpack.c.h.b16 %v2880
        %v2938 = vunpack.c.l.b16 %v2881
        %v2939 = vunpack.c.h.b16 %v2881
        %v2940 = vunpack.c.l.b16 %v2882
        %v2941 = vunpack.c.h.b16 %v2882
        %v2942 = vunpack.c.l.b16 %v2883
        %v2943 = vunpack.c.h.b16 %v2883
        %v2944 = vpack.c.b16 %v2914, %v2912
        %v2945 = vpack.c.b16 %v2915, %v2913
        %v2946 = vpack.c.b16 %v2918, %v2916
        %v2947 = vpack.c.b16 %v2919, %v2917
        %v2948 = vpack.c.b16 %v2922, %v2920
        %v2949 = vpack.c.b16 %v2923, %v2921
        %v2950 = vpack.c.b16 %v2926, %v2924
        %v2951 = vpack.c.b16 %v2927, %v2925
        %v2952 = vpack.c.b16 %v2930, %v2928
        %v2953 = vpack.c.b16 %v2931, %v2929
        %v2954 = vpack.c.b16 %v2934, %v2932
        %v2955 = vpack.c.b16 %v2935, %v2933
        %v2956 = vpack.c.b16 %v2938, %v2936
        %v2957 = vpack.c.b16 %v2939, %v2937
        %v2958 = vpack.c.b16 %v2942, %v2940
        %v2959 = vpack.c.b16 %v2943, %v2941
        %2976 = vmatprep.subr.bf16.mxu0 %v2945
        %2977 = vmatpush1.bf16.msra.mxu0 %v2944
        %2978 = vmatprep.subr.bf16.mxu0 %v2947
        %2979 = vmatpush1.bf16.msra.mxu0 %v2946
        %2980 = vmatprep.subr.bf16.mxu0 %v2949
        %2981 = vmatpush1.bf16.msra.mxu0 %v2948
        %2982 = vmatprep.subr.bf16.mxu0 %v2951
        %2983 = vmatpush1.bf16.msra.mxu0 %v2950
        %2984 = vmatprep.subr.bf16.mxu0 %v2953
        %2985 = vmatpush1.bf16.msra.mxu0 %v2952
        %2986 = vmatprep.subr.bf16.mxu0 %v2955
        %2987 = vmatpush1.bf16.msra.mxu0 %v2954
        %2988 = vmatprep.subr.bf16.mxu0 %v2957
        %2989 = vmatpush1.bf16.msra.mxu0 %v2956
        %2990 = vmatprep.subr.bf16.mxu0 %v2959
        %2991 = vmatpush1.bf16.msra.mxu0 %v2958
        %2992 = vmatprep.subr.bf16.mxu0 0
        %2993 = vmatpush1.bf16.msra.mxu0 0
        %2994 = vmatprep.subr.bf16.mxu0 0
        %2995 = vmatpush1.bf16.msra.mxu0 0
        %2996 = vmatprep.subr.bf16.mxu0 0
        %2997 = vmatpush1.bf16.msra.mxu0 0
        %2998 = vmatprep.subr.bf16.mxu0 0
        %2999 = vmatpush1.bf16.msra.mxu0 0
        %3000 = vmatprep.subr.bf16.mxu0 0
        %3001 = vmatpush1.bf16.msra.mxu0 0
        %3002 = vmatprep.subr.bf16.mxu0 0
        %3003 = vmatpush1.bf16.msra.mxu0 0
        %3004 = vmatprep.subr.bf16.mxu0 0
        %3005 = vmatpush1.bf16.msra.mxu0 0
        %3006 = vmatprep.subr.bf16.mxu0 0
        %3007 = vmatpush1.bf16.msra.mxu0 0
        %3008 = vmatprep.mubr.bf16.mxu0 0
        %3009 = vmatmul.mubr.bf16.gmra.mrb[0].mxu0 %v2860
        %v3010 = vpop.f32.mrb[0].mxu0
        %v3011 = vadd.f32 %v2889, %v3010
        %v3012 = vpop.f32.mrb[0].mxu0
        %v3013 = vadd.f32 %v2893, %v3012
        %v3014 = vpop.f32.mrb[0].mxu0
        %v3015 = vadd.f32 %v2889, %v3014
        %v3016 = vpop.f32.mrb[0].mxu0
        %v3017 = vadd.f32 %v2893, %v3016
        %3018 = vmatprep.mubr.bf16.mxu0 0
        %3019 = vmatmul.mubr.bf16.gmra.mrb[0].mxu0 %v2861
        %v3020 = vpop.f32.mrb[0].mxu0
        %v3021 = vadd.f32 %v2889, %v3020
        %v3022 = vpop.f32.mrb[0].mxu0
        %v3023 = vadd.f32 %v2893, %v3022
        %v3024 = vpop.f32.mrb[0].mxu0
        %v3025 = vadd.f32 %v2889, %v3024
        %v3026 = vpop.f32.mrb[0].mxu0
        %v3027 = vadd.f32 %v2893, %v3026
        %3028 = vmatprep.mubr.bf16.mxu0 0
        %3029 = vmatmul.mubr.bf16.gmra.mrb[0].mxu0 %v2862
        %v3030 = vpop.f32.mrb[0].mxu0
        %v3031 = vadd.f32 %v2889, %v3030
        %v3032 = vpop.f32.mrb[0].mxu0
        %v3033 = vadd.f32 %v2893, %v3032
        %v3034 = vpop.f32.mrb[0].mxu0
        %v3035 = vadd.f32 %v2889, %v3034
        %v3036 = vpop.f32.mrb[0].mxu0
        %v3037 = vadd.f32 %v2893, %v3036
        %3038 = vmatprep.mubr.bf16.mxu0 0
        %3039 = vmatmul.mubr.bf16.gmra.mrb[0].mxu0 %v2863
        %v3040 = vpop.f32.mrb[0].mxu0
        %v3041 = vadd.f32 %v2889, %v3040
        %v3042 = vpop.f32.mrb[0].mxu0
        %v3043 = vadd.f32 %v2893, %v3042
        %v3044 = vpop.f32.mrb[0].mxu0
        %v3045 = vadd.f32 %v2889, %v3044
        %v3046 = vpop.f32.mrb[0].mxu0
        %v3047 = vadd.f32 %v2893, %v3046
        %3048 = vmatprep.mubr.bf16.mxu0 0
        %3049 = vmatmul.mubr.bf16.gmra.mrb[0].mxu0 %v2864
        %v3050 = vpop.f32.mrb[0].mxu0
        %v3051 = vadd.f32 %v2889, %v3050
        %v3052 = vpop.f32.mrb[0].mxu0
        %v3053 = vadd.f32 %v2893, %v3052
        %v3054 = vpop.f32.mrb[0].mxu0
        %v3055 = vadd.f32 %v2889, %v3054
        %v3056 = vpop.f32.mrb[0].mxu0
        %v3057 = vadd.f32 %v2893, %v3056
        %3058 = vmatprep.mubr.bf16.mxu0 0
        %3059 = vmatmul.mubr.bf16.gmra.mrb[0].mxu0 %v2865
        %v3060 = vpop.f32.mrb[0].mxu0
        %v3061 = vadd.f32 %v2889, %v3060
        %v3062 = vpop.f32.mrb[0].mxu0
        %v3063 = vadd.f32 %v2893, %v3062
        %v3064 = vpop.f32.mrb[0].mxu0
        %v3065 = vadd.f32 %v2889, %v3064
        %v3066 = vpop.f32.mrb[0].mxu0
        %v3067 = vadd.f32 %v2893, %v3066
        %3068 = vmatprep.mubr.bf16.mxu0 0
        %3069 = vmatmul.mubr.bf16.gmra.mrb[0].mxu0 %v2866
        %v3070 = vpop.f32.mrb[0].mxu0
        %v3071 = vadd.f32 %v2889, %v3070
        %v3072 = vpop.f32.mrb[0].mxu0
        %v3073 = vadd.f32 %v2893, %v3072
        %v3074 = vpop.f32.mrb[0].mxu0
        %v3075 = vadd.f32 %v2889, %v3074
        %v3076 = vpop.f32.mrb[0].mxu0
        %v3077 = vadd.f32 %v2893, %v3076
        %3078 = vmatprep.mubr.bf16.mxu0 0
        %3079 = vmatmul.mubr.bf16.gmra.mrb[0].mxu0 %v2867
        %v3080 = vpop.f32.mrb[0].mxu0
        %v3081 = vadd.f32 %v2889, %v3080
        %v3082 = vpop.f32.mrb[0].mxu0
        %v3083 = vadd.f32 %v2893, %v3082
        %v3084 = vpop.f32.mrb[0].mxu0
        %v3085 = vadd.f32 %v2889, %v3084
        %v3086 = vpop.f32.mrb[0].mxu0
        %v3087 = vadd.f32 %v2893, %v3086
        %3088 = vdwg.mxu0
        %v3089 = vmul.f32 %v3011, %v3011
        %v3090 = vmul.f32 %v3013, %v3013
        %v3091 = vmul.f32 %v3015, %v3015
        %v3092 = vmul.f32 %v3017, %v3017
        %v3093 = vmul.f32 %v3021, %v3021
        %v3094 = vmul.f32 %v3023, %v3023
        %v3095 = vmul.f32 %v3025, %v3025
        %v3096 = vmul.f32 %v3027, %v3027
        %v3097 = vmul.f32 %v3031, %v3031
        %v3098 = vmul.f32 %v3033, %v3033
        %v3099 = vmul.f32 %v3035, %v3035
        %v3100 = vmul.f32 %v3037, %v3037
        %v3101 = vmul.f32 %v3041, %v3041
        %v3102 = vmul.f32 %v3043, %v3043
        %v3103 = vmul.f32 %v3045, %v3045
        %v3104 = vmul.f32 %v3047, %v3047
        %v3105 = vmul.f32 %v3051, %v3051
        %v3106 = vmul.f32 %v3053, %v3053
        %v3107 = vmul.f32 %v3055, %v3055
        %v3108 = vmul.f32 %v3057, %v3057
        %v3109 = vmul.f32 %v3061, %v3061
        %v3110 = vmul.f32 %v3063, %v3063
        %v3111 = vmul.f32 %v3065, %v3065
        %v3112 = vmul.f32 %v3067, %v3067
        %v3113 = vmul.f32 %v3071, %v3071
        %v3114 = vmul.f32 %v3073, %v3073
        %v3115 = vmul.f32 %v3075, %v3075
        %v3116 = vmul.f32 %v3077, %v3077
        %v3117 = vmul.f32 %v3081, %v3081
        %v3118 = vmul.f32 %v3083, %v3083
        %v3119 = vmul.f32 %v3085, %v3085
        %v3120 = vmul.f32 %v3087, %v3087
        %v3121 = vmul.f32 %v3011, %v3089
        %v3122 = vmul.f32 %v3013, %v3090
        %v3123 = vmul.f32 %v3015, %v3091
        %v3124 = vmul.f32 %v3017, %v3092
        %v3125 = vmul.f32 %v3021, %v3093
        %v3126 = vmul.f32 %v3023, %v3094
        %v3127 = vmul.f32 %v3025, %v3095
        %v3128 = vmul.f32 %v3027, %v3096
        %v3129 = vmul.f32 %v3031, %v3097
        %v3130 = vmul.f32 %v3033, %v3098
        %v3131 = vmul.f32 %v3035, %v3099
        %v3132 = vmul.f32 %v3037, %v3100
        %v3133 = vmul.f32 %v3041, %v3101
        %v3134 = vmul.f32 %v3043, %v3102
        %v3135 = vmul.f32 %v3045, %v3103
        %v3136 = vmul.f32 %v3047, %v3104
        %v3137 = vmul.f32 %v3051, %v3105
        %v3138 = vmul.f32 %v3053, %v3106
        %v3139 = vmul.f32 %v3055, %v3107
        %v3140 = vmul.f32 %v3057, %v3108
        %v3141 = vmul.f32 %v3061, %v3109
        %v3142 = vmul.f32 %v3063, %v3110
        %v3143 = vmul.f32 %v3065, %v3111
        %v3144 = vmul.f32 %v3067, %v3112
        %v3145 = vmul.f32 %v3071, %v3113
        %v3146 = vmul.f32 %v3073, %v3114
        %v3147 = vmul.f32 %v3075, %v3115
        %v3148 = vmul.f32 %v3077, %v3116
        %v3149 = vmul.f32 %v3081, %v3117
        %v3150 = vmul.f32 %v3083, %v3118
        %v3151 = vmul.f32 %v3085, %v3119
        %v3152 = vmul.f32 %v3087, %v3120
        %v3153 = vmul.f32 %v3121, 0.044715
        %v3154 = vmul.f32 %v3122, 0.044715
        %v3155 = vmul.f32 %v3123, 0.044715
        %v3156 = vmul.f32 %v3124, 0.044715
        %v3157 = vmul.f32 %v3125, 0.044715
        %v3158 = vmul.f32 %v3126, 0.044715
        %v3159 = vmul.f32 %v3127, 0.044715
        %v3160 = vmul.f32 %v3128, 0.044715
        %v3161 = vmul.f32 %v3129, 0.044715
        %v3162 = vmul.f32 %v3130, 0.044715
        %v3163 = vmul.f32 %v3131, 0.044715
        %v3164 = vmul.f32 %v3132, 0.044715
        %v3165 = vmul.f32 %v3133, 0.044715
        %v3166 = vmul.f32 %v3134, 0.044715
        %v3167 = vmul.f32 %v3135, 0.044715
        %v3168 = vmul.f32 %v3136, 0.044715
        %v3169 = vmul.f32 %v3137, 0.044715
        %v3170 = vmul.f32 %v3138, 0.044715
        %v3171 = vmul.f32 %v3139, 0.044715
        %v3172 = vmul.f32 %v3140, 0.044715
        %v3173 = vmul.f32 %v3141, 0.044715
        %v3174 = vmul.f32 %v3142, 0.044715
        %v3175 = vmul.f32 %v3143, 0.044715
        %v3176 = vmul.f32 %v3144, 0.044715
        %v3177 = vmul.f32 %v3145, 0.044715
        %v3178 = vmul.f32 %v3146, 0.044715
        %v3179 = vmul.f32 %v3147, 0.044715
        %v3180 = vmul.f32 %v3148, 0.044715
        %v3181 = vmul.f32 %v3149, 0.044715
        %v3182 = vmul.f32 %v3150, 0.044715
        %v3183 = vmul.f32 %v3151, 0.044715
        %v3184 = vmul.f32 %v3152, 0.044715
        %v3185 = vadd.f32 %v3011, %v3153
        %v3186 = vadd.f32 %v3013, %v3154
        %v3187 = vadd.f32 %v3015, %v3155
        %v3188 = vadd.f32 %v3017, %v3156
        %v3189 = vadd.f32 %v3021, %v3157
        %v3190 = vadd.f32 %v3023, %v3158
        %v3191 = vadd.f32 %v3025, %v3159
        %v3192 = vadd.f32 %v3027, %v3160
        %v3193 = vadd.f32 %v3031, %v3161
        %v3194 = vadd.f32 %v3033, %v3162
        %v3195 = vadd.f32 %v3035, %v3163
        %v3196 = vadd.f32 %v3037, %v3164
        %v3197 = vadd.f32 %v3041, %v3165
        %v3198 = vadd.f32 %v3043, %v3166
        %v3199 = vadd.f32 %v3045, %v3167
        %v3200 = vadd.f32 %v3047, %v3168
        %v3201 = vadd.f32 %v3051, %v3169
        %v3202 = vadd.f32 %v3053, %v3170
        %v3203 = vadd.f32 %v3055, %v3171
        %v3204 = vadd.f32 %v3057, %v3172
        %v3205 = vadd.f32 %v3061, %v3173
        %v3206 = vadd.f32 %v3063, %v3174
        %v3207 = vadd.f32 %v3065, %v3175
        %v3208 = vadd.f32 %v3067, %v3176
        %v3209 = vadd.f32 %v3071, %v3177
        %v3210 = vadd.f32 %v3073, %v3178
        %v3211 = vadd.f32 %v3075, %v3179
        %v3212 = vadd.f32 %v3077, %v3180
        %v3213 = vadd.f32 %v3081, %v3181
        %v3214 = vadd.f32 %v3083, %v3182
        %v3215 = vadd.f32 %v3085, %v3183
        %v3216 = vadd.f32 %v3087, %v3184
        %v3217 = vmul.f32 %v3185, 0.7978846
        %v3218 = vmul.f32 %v3186, 0.7978846
        %v3219 = vmul.f32 %v3187, 0.7978846
        %v3220 = vmul.f32 %v3188, 0.7978846
        %v3221 = vmul.f32 %v3189, 0.7978846
        %v3222 = vmul.f32 %v3190, 0.7978846
        %v3223 = vmul.f32 %v3191, 0.7978846
        %v3224 = vmul.f32 %v3192, 0.7978846
        %v3225 = vmul.f32 %v3193, 0.7978846
        %v3226 = vmul.f32 %v3194, 0.7978846
        %v3227 = vmul.f32 %v3195, 0.7978846
        %v3228 = vmul.f32 %v3196, 0.7978846
        %v3229 = vmul.f32 %v3197, 0.7978846
        %v3230 = vmul.f32 %v3198, 0.7978846
        %v3231 = vmul.f32 %v3199, 0.7978846
        %v3232 = vmul.f32 %v3200, 0.7978846
        %v3233 = vmul.f32 %v3201, 0.7978846
        %v3234 = vmul.f32 %v3202, 0.7978846
        %v3235 = vmul.f32 %v3203, 0.7978846
        %v3236 = vmul.f32 %v3204, 0.7978846
        %v3237 = vmul.f32 %v3205, 0.7978846
        %v3238 = vmul.f32 %v3206, 0.7978846
        %v3239 = vmul.f32 %v3207, 0.7978846
        %v3240 = vmul.f32 %v3208, 0.7978846
        %v3241 = vmul.f32 %v3209, 0.7978846
        %v3242 = vmul.f32 %v3210, 0.7978846
        %v3243 = vmul.f32 %v3211, 0.7978846
        %v3244 = vmul.f32 %v3212, 0.7978846
        %v3245 = vmul.f32 %v3213, 0.7978846
        %v3246 = vmul.f32 %v3214, 0.7978846
        %v3247 = vmul.f32 %v3215, 0.7978846
        %v3248 = vmul.f32 %v3216, 0.7978846
        %v3249 = vtanh.pop %v3217
        %v3250 = vtanh.pop %v3218
        %v3251 = vtanh.pop %v3219
        %v3252 = vtanh.pop %v3220
        %v3253 = vtanh.pop %v3221
        %v3254 = vtanh.pop %v3222
        %v3255 = vtanh.pop %v3223
        %v3256 = vtanh.pop %v3224
        %v3257 = vtanh.pop %v3225
        %v3258 = vtanh.pop %v3226
        %v3259 = vtanh.pop %v3227
        %v3260 = vtanh.pop %v3228
        %v3261 = vtanh.pop %v3229
        %v3262 = vtanh.pop %v3230
        %v3263 = vtanh.pop %v3231
        %v3264 = vtanh.pop %v3232
        %v3265 = vtanh.pop %v3233
        %v3266 = vtanh.pop %v3234
        %v3267 = vtanh.pop %v3235
        %v3268 = vtanh.pop %v3236
        %v3269 = vtanh.pop %v3237
        %v3270 = vtanh.pop %v3238
        %v3271 = vtanh.pop %v3239
        %v3272 = vtanh.pop %v3240
        %v3273 = vtanh.pop %v3241
        %v3274 = vtanh.pop %v3242
        %v3275 = vtanh.pop %v3243
        %v3276 = vtanh.pop %v3244
        %v3277 = vtanh.pop %v3245
        %v3278 = vtanh.pop %v3246
        %v3279 = vtanh.pop %v3247
        %v3280 = vtanh.pop %v3248
        %v3281 = vadd.f32 %v3249, 1.0
        %v3282 = vadd.f32 %v3250, 1.0
        %v3283 = vadd.f32 %v3251, 1.0
        %v3284 = vadd.f32 %v3252, 1.0
        %v3285 = vadd.f32 %v3253, 1.0
        %v3286 = vadd.f32 %v3254, 1.0
        %v3287 = vadd.f32 %v3255, 1.0
        %v3288 = vadd.f32 %v3256, 1.0
        %v3289 = vadd.f32 %v3257, 1.0
        %v3290 = vadd.f32 %v3258, 1.0
        %v3291 = vadd.f32 %v3259, 1.0
        %v3292 = vadd.f32 %v3260, 1.0
        %v3293 = vadd.f32 %v3261, 1.0
        %v3294 = vadd.f32 %v3262, 1.0
        %v3295 = vadd.f32 %v3263, 1.0
        %v3296 = vadd.f32 %v3264, 1.0
        %v3297 = vadd.f32 %v3265, 1.0
        %v3298 = vadd.f32 %v3266, 1.0
        %v3299 = vadd.f32 %v3267, 1.0
        %v3300 = vadd.f32 %v3268, 1.0
        %v3301 = vadd.f32 %v3269, 1.0
        %v3302 = vadd.f32 %v3270, 1.0
        %v3303 = vadd.f32 %v3271, 1.0
        %v3304 = vadd.f32 %v3272, 1.0
        %v3305 = vadd.f32 %v3273, 1.0
        %v3306 = vadd.f32 %v3274, 1.0
        %v3307 = vadd.f32 %v3275, 1.0
        %v3308 = vadd.f32 %v3276, 1.0
        %v3309 = vadd.f32 %v3277, 1.0
        %v3310 = vadd.f32 %v3278, 1.0
        %v3311 = vadd.f32 %v3279, 1.0
        %v3312 = vadd.f32 %v3280, 1.0
        %v3313 = vmul.f32 %v3281, 0.5
        %v3314 = vmul.f32 %v3282, 0.5
        %v3315 = vmul.f32 %v3283, 0.5
        %v3316 = vmul.f32 %v3284, 0.5
        %v3317 = vmul.f32 %v3285, 0.5
        %v3318 = vmul.f32 %v3286, 0.5
        %v3319 = vmul.f32 %v3287, 0.5
        %v3320 = vmul.f32 %v3288, 0.5
        %v3321 = vmul.f32 %v3289, 0.5
        %v3322 = vmul.f32 %v3290, 0.5
        %v3323 = vmul.f32 %v3291, 0.5
        %v3324 = vmul.f32 %v3292, 0.5
        %v3325 = vmul.f32 %v3293, 0.5
        %v3326 = vmul.f32 %v3294, 0.5
        %v3327 = vmul.f32 %v3295, 0.5
        %v3328 = vmul.f32 %v3296, 0.5
        %v3329 = vmul.f32 %v3297, 0.5
        %v3330 = vmul.f32 %v3298, 0.5
        %v3331 = vmul.f32 %v3299, 0.5
        %v3332 = vmul.f32 %v3300, 0.5
        %v3333 = vmul.f32 %v3301, 0.5
        %v3334 = vmul.f32 %v3302, 0.5
        %v3335 = vmul.f32 %v3303, 0.5
        %v3336 = vmul.f32 %v3304, 0.5
        %v3337 = vmul.f32 %v3305, 0.5
        %v3338 = vmul.f32 %v3306, 0.5
        %v3339 = vmul.f32 %v3307, 0.5
        %v3340 = vmul.f32 %v3308, 0.5
        %v3341 = vmul.f32 %v3309, 0.5
        %v3342 = vmul.f32 %v3310, 0.5
        %v3343 = vmul.f32 %v3311, 0.5
        %v3344 = vmul.f32 %v3312, 0.5
        %v3345 = vmul.f32 %v3011, %v3313
        %v3346 = vmul.f32 %v3013, %v3314
        %v3347 = vmul.f32 %v3015, %v3315
        %v3348 = vmul.f32 %v3017, %v3316
        %v3349 = vmul.f32 %v3021, %v3317
        %v3350 = vmul.f32 %v3023, %v3318
        %v3351 = vmul.f32 %v3025, %v3319
        %v3352 = vmul.f32 %v3027, %v3320
        %v3353 = vmul.f32 %v3031, %v3321
        %v3354 = vmul.f32 %v3033, %v3322
        %v3355 = vmul.f32 %v3035, %v3323
        %v3356 = vmul.f32 %v3037, %v3324
        %v3357 = vmul.f32 %v3041, %v3325
        %v3358 = vmul.f32 %v3043, %v3326
        %v3359 = vmul.f32 %v3045, %v3327
        %v3360 = vmul.f32 %v3047, %v3328
        %v3361 = vmul.f32 %v3051, %v3329
        %v3362 = vmul.f32 %v3053, %v3330
        %v3363 = vmul.f32 %v3055, %v3331
        %v3364 = vmul.f32 %v3057, %v3332
        %v3365 = vmul.f32 %v3061, %v3333
        %v3366 = vmul.f32 %v3063, %v3334
        %v3367 = vmul.f32 %v3065, %v3335
        %v3368 = vmul.f32 %v3067, %v3336
        %v3369 = vmul.f32 %v3071, %v3337
        %v3370 = vmul.f32 %v3073, %v3338
        %v3371 = vmul.f32 %v3075, %v3339
        %v3372 = vmul.f32 %v3077, %v3340
        %v3373 = vmul.f32 %v3081, %v3341
        %v3374 = vmul.f32 %v3083, %v3342
        %v3375 = vmul.f32 %v3085, %v3343
        %v3376 = vmul.f32 %v3087, %v3344
        %v3377 = vpack.c.bf16 %v3347, %v3345
        %v3378 = vpack.c.bf16 %v3348, %v3346
        %v3379 = vpack.c.bf16 %v3351, %v3349
        %v3380 = vpack.c.bf16 %v3352, %v3350
        %v3381 = vpack.c.bf16 %v3355, %v3353
        %v3382 = vpack.c.bf16 %v3356, %v3354
        %v3383 = vpack.c.bf16 %v3359, %v3357
        %v3384 = vpack.c.bf16 %v3360, %v3358
        %v3385 = vpack.c.bf16 %v3363, %v3361
        %v3386 = vpack.c.bf16 %v3364, %v3362
        %v3387 = vpack.c.bf16 %v3367, %v3365
        %v3388 = vpack.c.bf16 %v3368, %v3366
        %v3389 = vpack.c.bf16 %v3371, %v3369
        %v3390 = vpack.c.bf16 %v3372, %v3370
        %v3391 = vpack.c.bf16 %v3375, %v3373
        %v3392 = vpack.c.bf16 %v3376, %v3374
        %v3393 = vld [vmem:[%s11] sm:$0xf]
        %v3394 = vld [vmem:[%s11 + $0x4] sm:$0xf]
        %v3395 = vld [vmem:[%s11 + $0x8] sm:$0xf]
        %v3396 = vld [vmem:[%s11 + $0xc] sm:$0xf]
        %v3397 = vld [vmem:[%s11 + $0x10] sm:$0xf]
        %v3398 = vld [vmem:[%s11 + $0x14] sm:$0xf]
        %v3399 = vld [vmem:[%s11 + $0x18] sm:$0xf]
        %v3400 = vld [vmem:[%s11 + $0x1c] sm:$0xf]
        %v3401 = vld [vmem:[%s11 + $0x20] sm:$0xf]
        %v3402 = vld [vmem:[%s11 + $0x24] sm:$0xf]
        %v3403 = vld [vmem:[%s11 + $0x28] sm:$0xf]
        %v3404 = vld [vmem:[%s11 + $0x2c] sm:$0xf]
        %v3405 = vld [vmem:[%s11 + $0x30] sm:$0xf]
        %v3406 = vld [vmem:[%s11 + $0x34] sm:$0xf]
        %v3407 = vld [vmem:[%s11 + $0x38] sm:$0xf]
        %v3408 = vld [vmem:[%s11 + $0x3c] sm:$0xf]
        %v3409 = vld [vmem:[%s11 + $0x40] sm:$0xf]
        %v3410 = vld [vmem:[%s11 + $0x44] sm:$0xf]
        %v3411 = vld [vmem:[%s11 + $0x48] sm:$0xf]
        %v3412 = vld [vmem:[%s11 + $0x4c] sm:$0xf]
        %v3413 = vld [vmem:[%s11 + $0x50] sm:$0xf]
        %v3414 = vld [vmem:[%s11 + $0x54] sm:$0xf]
        %v3415 = vld [vmem:[%s11 + $0x58] sm:$0xf]
        %v3416 = vld [vmem:[%s11 + $0x5c] sm:$0xf]
        %v3417 = vld [vmem:[%s11 + $0x60] sm:$0xf]
        %v3418 = vld [vmem:[%s11 + $0x64] sm:$0xf]
        %v3419 = vld [vmem:[%s11 + $0x68] sm:$0xf]
        %v3420 = vld [vmem:[%s11 + $0x6c] sm:$0xf]
        %v3421 = vld [vmem:[%s11 + $0x70] sm:$0xf]
        %v3422 = vld [vmem:[%s11 + $0x74] sm:$0xf]
        %v3423 = vld [vmem:[%s11 + $0x78] sm:$0xf]
        %v3424 = vld [vmem:[%s11 + $0x7c] sm:$0xf]
        %v3457 = vunpack.c.l.b16 %v3393
        %v3458 = vunpack.c.l.b16 %v3394
        %v3459 = vunpack.c.l.b16 %v3395
        %v3460 = vunpack.c.l.b16 %v3396
        %v3461 = vunpack.c.l.b16 %v3397
        %v3462 = vunpack.c.l.b16 %v3398
        %v3463 = vunpack.c.l.b16 %v3399
        %v3464 = vunpack.c.l.b16 %v3400
        %v3465 = vunpack.c.l.b16 %v3401
        %v3466 = vunpack.c.l.b16 %v3402
        %v3467 = vunpack.c.l.b16 %v3403
        %v3468 = vunpack.c.l.b16 %v3404
        %v3469 = vunpack.c.l.b16 %v3405
        %v3470 = vunpack.c.l.b16 %v3406
        %v3471 = vunpack.c.l.b16 %v3407
        %v3472 = vunpack.c.l.b16 %v3408
        %v3473 = vunpack.c.l.b16 %v3409
        %v3474 = vunpack.c.l.b16 %v3410
        %v3475 = vunpack.c.l.b16 %v3411
        %v3476 = vunpack.c.l.b16 %v3412
        %v3477 = vunpack.c.l.b16 %v3413
        %v3478 = vunpack.c.l.b16 %v3414
        %v3479 = vunpack.c.l.b16 %v3415
        %v3480 = vunpack.c.l.b16 %v3416
        %v3481 = vunpack.c.l.b16 %v3417
        %v3482 = vunpack.c.l.b16 %v3418
        %v3483 = vunpack.c.l.b16 %v3419
        %v3484 = vunpack.c.l.b16 %v3420
        %v3485 = vunpack.c.l.b16 %v3421
        %v3486 = vunpack.c.l.b16 %v3422
        %v3487 = vunpack.c.l.b16 %v3423
        %v3488 = vunpack.c.l.b16 %v3424
        %v3489 = vpack.c.b16 %v3458, %v3457
        %v3490 = vpack.c.b16 %v3460, %v3459
        %v3491 = vpack.c.b16 %v3462, %v3461
        %v3492 = vpack.c.b16 %v3464, %v3463
        %v3493 = vpack.c.b16 %v3466, %v3465
        %v3494 = vpack.c.b16 %v3468, %v3467
        %v3495 = vpack.c.b16 %v3470, %v3469
        %v3496 = vpack.c.b16 %v3472, %v3471
        %v3497 = vpack.c.b16 %v3474, %v3473
        %v3498 = vpack.c.b16 %v3476, %v3475
        %v3499 = vpack.c.b16 %v3478, %v3477
        %v3500 = vpack.c.b16 %v3480, %v3479
        %v3501 = vpack.c.b16 %v3482, %v3481
        %v3502 = vpack.c.b16 %v3484, %v3483
        %v3503 = vpack.c.b16 %v3486, %v3485
        %v3504 = vpack.c.b16 %v3488, %v3487
        %3521 = vmatprep.subr.bf16.mxu0 0
        %3522 = vmatpush1.bf16.msra.mxu0 %v3489
        %3523 = vmatprep.subr.bf16.mxu0 0
        %3524 = vmatpush1.bf16.msra.mxu0 %v3490
        %3525 = vmatprep.subr.bf16.mxu0 0
        %3526 = vmatpush1.bf16.msra.mxu0 %v3491
        %3527 = vmatprep.subr.bf16.mxu0 0
        %3528 = vmatpush1.bf16.msra.mxu0 %v3492
        %3529 = vmatprep.subr.bf16.mxu0 0
        %3530 = vmatpush1.bf16.msra.mxu0 %v3493
        %3531 = vmatprep.subr.bf16.mxu0 0
        %3532 = vmatpush1.bf16.msra.mxu0 %v3494
        %3533 = vmatprep.subr.bf16.mxu0 0
        %3534 = vmatpush1.bf16.msra.mxu0 %v3495
        %3535 = vmatprep.subr.bf16.mxu0 0
        %3536 = vmatpush1.bf16.msra.mxu0 %v3496
        %3537 = vmatprep.subr.bf16.mxu0 0
        %3538 = vmatpush1.bf16.msra.mxu0 %v3497
        %3539 = vmatprep.subr.bf16.mxu0 0
        %3540 = vmatpush1.bf16.msra.mxu0 %v3498
        %3541 = vmatprep.subr.bf16.mxu0 0
        %3542 = vmatpush1.bf16.msra.mxu0 %v3499
        %3543 = vmatprep.subr.bf16.mxu0 0
        %3544 = vmatpush1.bf16.msra.mxu0 %v3500
        %3545 = vmatprep.subr.bf16.mxu0 0
        %3546 = vmatpush1.bf16.msra.mxu0 %v3501
        %3547 = vmatprep.subr.bf16.mxu0 0
        %3548 = vmatpush1.bf16.msra.mxu0 %v3502
        %3549 = vmatprep.subr.bf16.mxu0 0
        %3550 = vmatpush1.bf16.msra.mxu0 %v3503
        %3551 = vmatprep.subr.bf16.mxu0 0
        %3552 = vmatpush1.bf16.msra.mxu0 %v3504
        %3553 = vmatprep.mubr.bf16.mxu0 %v3378
        %3554 = vmatmul.mubr.bf16.gmra.mrb[0].mxu0 %v3377
        %v3555 = vpop.f32.mrb[0].mxu0
        %v3556 = vadd.f32 0.0, %v3555
        %v3557 = vpop.f32.mrb[0].mxu0
        %v3558 = vpop.f32.mrb[0].mxu0
        %v3559 = vadd.f32 0.0, %v3558
        %v3560 = vpop.f32.mrb[0].mxu0
        %3561 = vmatprep.mubr.bf16.mxu0 %v3380
        %3562 = vmatmul.mubr.bf16.gmra.mrb[0].mxu0 %v3379
        %v3563 = vpop.f32.mrb[0].mxu0
        %v3564 = vadd.f32 0.0, %v3563
        %v3565 = vpop.f32.mrb[0].mxu0
        %v3566 = vpop.f32.mrb[0].mxu0
        %v3567 = vadd.f32 0.0, %v3566
        %v3568 = vpop.f32.mrb[0].mxu0
        %3569 = vmatprep.mubr.bf16.mxu0 %v3382
        %3570 = vmatmul.mubr.bf16.gmra.mrb[0].mxu0 %v3381
        %v3571 = vpop.f32.mrb[0].mxu0
        %v3572 = vadd.f32 0.0, %v3571
        %v3573 = vpop.f32.mrb[0].mxu0
        %v3574 = vpop.f32.mrb[0].mxu0
        %v3575 = vadd.f32 0.0, %v3574
        %v3576 = vpop.f32.mrb[0].mxu0
        %3577 = vmatprep.mubr.bf16.mxu0 %v3384
        %3578 = vmatmul.mubr.bf16.gmra.mrb[0].mxu0 %v3383
        %v3579 = vpop.f32.mrb[0].mxu0
        %v3580 = vadd.f32 0.0, %v3579
        %v3581 = vpop.f32.mrb[0].mxu0
        %v3582 = vpop.f32.mrb[0].mxu0
        %v3583 = vadd.f32 0.0, %v3582
        %v3584 = vpop.f32.mrb[0].mxu0
        %3585 = vmatprep.mubr.bf16.mxu0 %v3386
        %3586 = vmatmul.mubr.bf16.gmra.mrb[0].mxu0 %v3385
        %v3587 = vpop.f32.mrb[0].mxu0
        %v3588 = vadd.f32 0.0, %v3587
        %v3589 = vpop.f32.mrb[0].mxu0
        %v3590 = vpop.f32.mrb[0].mxu0
        %v3591 = vadd.f32 0.0, %v3590
        %v3592 = vpop.f32.mrb[0].mxu0
        %3593 = vmatprep.mubr.bf16.mxu0 %v3388
        %3594 = vmatmul.mubr.bf16.gmra.mrb[0].mxu0 %v3387
        %v3595 = vpop.f32.mrb[0].mxu0
        %v3596 = vadd.f32 0.0, %v3595
        %v3597 = vpop.f32.mrb[0].mxu0
        %v3598 = vpop.f32.mrb[0].mxu0
        %v3599 = vadd.f32 0.0, %v3598
        %v3600 = vpop.f32.mrb[0].mxu0
        %3601 = vmatprep.mubr.bf16.mxu0 %v3390
        %3602 = vmatmul.mubr.bf16.gmra.mrb[0].mxu0 %v3389
        %v3603 = vpop.f32.mrb[0].mxu0
        %v3604 = vadd.f32 0.0, %v3603
        %v3605 = vpop.f32.mrb[0].mxu0
        %v3606 = vpop.f32.mrb[0].mxu0
        %v3607 = vadd.f32 0.0, %v3606
        %v3608 = vpop.f32.mrb[0].mxu0
        %3609 = vmatprep.mubr.bf16.mxu0 %v3392
        %3610 = vmatmul.mubr.bf16.gmra.mrb[0].mxu0 %v3391
        %v3611 = vpop.f32.mrb[0].mxu0
        %v3612 = vadd.f32 0.0, %v3611
        %v3613 = vpop.f32.mrb[0].mxu0
        %v3614 = vpop.f32.mrb[0].mxu0
        %v3615 = vadd.f32 0.0, %v3614
        %v3616 = vpop.f32.mrb[0].mxu0
        %3617 = vdwg.mxu0
        %v3618 = vadd.f32 %v2628, %v3556
        %v3619 = vadd.f32 %v2629, %v3559
        %v3620 = vadd.f32 %v2630, %v3564
        %v3621 = vadd.f32 %v2631, %v3567
        %v3622 = vadd.f32 %v2632, %v3572
        %v3623 = vadd.f32 %v2633, %v3575
        %v3624 = vadd.f32 %v2634, %v3580
        %v3625 = vadd.f32 %v2635, %v3583
        %v3626 = vadd.f32 %v2636, %v3588
        %v3627 = vadd.f32 %v2637, %v3591
        %v3628 = vadd.f32 %v2638, %v3596
        %v3629 = vadd.f32 %v2639, %v3599
        %v3630 = vadd.f32 %v2640, %v3604
        %v3631 = vadd.f32 %v2641, %v3607
        %v3632 = vadd.f32 %v2642, %v3612
        %v3633 = vadd.f32 %v2643, %v3615
        %v3634 = vlaneseq
        %v3635 = vshrl.u32 %v3634, 7
        %v3636 = vsub.s32 5, %v3635
        %v3637 = vrot.slane %v838, %v3636
        %v3638 = vadd.f32 %v3618, %v3637
        %v3639 = vadd.f32 %v3619, %v3637
        %v3640 = vadd.f32 %v3620, %v3637
        %v3641 = vadd.f32 %v3621, %v3637
        %v3642 = vadd.f32 %v3622, %v3637
        %v3643 = vadd.f32 %v3623, %v3637
        %v3644 = vadd.f32 %v3624, %v3637
        %v3645 = vadd.f32 %v3625, %v3637
        %v3646 = vadd.f32 %v3626, %v3637
        %v3647 = vadd.f32 %v3627, %v3637
        %v3648 = vadd.f32 %v3628, %v3637
        %v3649 = vadd.f32 %v3629, %v3637
        %v3650 = vadd.f32 %v3630, %v3637
        %v3651 = vadd.f32 %v3631, %v3637
        %v3652 = vadd.f32 %v3632, %v3637
        %v3653 = vadd.f32 %v3633, %v3637
        %3654 = vst [vmem:[%s405] sm:$0xff] %v3638
        %3655 = vst [vmem:[%s405 + $0x8] sm:$0xff] %v3639
        %3656 = vst [vmem:[%s405 + $0x10] sm:$0xff] %v3640
        %3657 = vst [vmem:[%s405 + $0x18] sm:$0xff] %v3641
        %3658 = vst [vmem:[%s405 + $0x20] sm:$0xff] %v3642
        %3659 = vst [vmem:[%s405 + $0x28] sm:$0xff] %v3643
        %3660 = vst [vmem:[%s405 + $0x30] sm:$0xff] %v3644
        %3661 = vst [vmem:[%s405 + $0x38] sm:$0xff] %v3645
        %3662 = vst [vmem:[%s405 + $0x40] sm:$0xff] %v3646
        %3663 = vst [vmem:[%s405 + $0x48] sm:$0xff] %v3647
        %3664 = vst [vmem:[%s405 + $0x50] sm:$0xff] %v3648
        %3665 = vst [vmem:[%s405 + $0x58] sm:$0xff] %v3649
        %3666 = vst [vmem:[%s405 + $0x60] sm:$0xff] %v3650
        %3667 = vst [vmem:[%s405 + $0x68] sm:$0xff] %v3651
        %3668 = vst [vmem:[%s405 + $0x70] sm:$0xff] %v3652
        %3669 = vst [vmem:[%s405 + $0x78] sm:$0xff] %v3653
        %s3670 = scalar_lea.vmem %s5, 8
        %v3671 = vld [vmem:[%s3670] sm:$0x3f]
        %3672 = vadd.xlane.f32.xlu0 %v3638
        %v3673 = vpop.xlane.xlu0 %3672
        %3674 = vadd.xlane.f32.xlu0 %v3639
        %v3675 = vpop.xlane.xlu0 %3674
        %3676 = vadd.xlane.f32.xlu0 %v3640
        %v3677 = vpop.xlane.xlu0 %3676
        %3678 = vadd.xlane.f32.xlu0 %v3641
        %v3679 = vpop.xlane.xlu0 %3678
        %3680 = vadd.xlane.f32.xlu0 %v3642
        %v3681 = vpop.xlane.xlu0 %3680
        %3682 = vadd.xlane.f32.xlu0 %v3643
        %v3683 = vpop.xlane.xlu0 %3682
        %3684 = vadd.xlane.f32.xlu0 %v3644
        %v3685 = vpop.xlane.xlu0 %3684
        %3686 = vadd.xlane.f32.xlu0 %v3645
        %v3687 = vpop.xlane.xlu0 %3686
        %3688 = vadd.xlane.f32.xlu0 %v3646
        %v3689 = vpop.xlane.xlu0 %3688
        %3690 = vadd.xlane.f32.xlu0 %v3647
        %v3691 = vpop.xlane.xlu0 %3690
        %3692 = vadd.xlane.f32.xlu0 %v3648
        %v3693 = vpop.xlane.xlu0 %3692
        %3694 = vadd.xlane.f32.xlu0 %v3649
        %v3695 = vpop.xlane.xlu0 %3694
        %3696 = vadd.xlane.f32.xlu0 %v3650
        %v3697 = vpop.xlane.xlu0 %3696
        %3698 = vadd.xlane.f32.xlu0 %v3651
        %v3699 = vpop.xlane.xlu0 %3698
        %3700 = vadd.xlane.f32.xlu0 %v3652
        %v3701 = vpop.xlane.xlu0 %3700
        %3702 = vadd.xlane.f32.xlu0 %v3653
        %v3703 = vpop.xlane.xlu0 %3702
        %v3704 = vmul.f32 %v3673, %v871
        %v3705 = vmul.f32 %v3675, %v871
        %v3706 = vmul.f32 %v3677, %v871
        %v3707 = vmul.f32 %v3679, %v871
        %v3708 = vmul.f32 %v3681, %v871
        %v3709 = vmul.f32 %v3683, %v871
        %v3710 = vmul.f32 %v3685, %v871
        %v3711 = vmul.f32 %v3687, %v871
        %v3712 = vmul.f32 %v3689, %v871
        %v3713 = vmul.f32 %v3691, %v871
        %v3714 = vmul.f32 %v3693, %v871
        %v3715 = vmul.f32 %v3695, %v871
        %v3716 = vmul.f32 %v3697, %v871
        %v3717 = vmul.f32 %v3699, %v871
        %v3718 = vmul.f32 %v3701, %v871
        %v3719 = vmul.f32 %v3703, %v871
        %v3720 = vsub.f32 %v3638, %v3704
        %v3721 = vsub.f32 %v3639, %v3705
        %v3722 = vsub.f32 %v3640, %v3706
        %v3723 = vsub.f32 %v3641, %v3707
        %v3724 = vsub.f32 %v3642, %v3708
        %v3725 = vsub.f32 %v3643, %v3709
        %v3726 = vsub.f32 %v3644, %v3710
        %v3727 = vsub.f32 %v3645, %v3711
        %v3728 = vsub.f32 %v3646, %v3712
        %v3729 = vsub.f32 %v3647, %v3713
        %v3730 = vsub.f32 %v3648, %v3714
        %v3731 = vsub.f32 %v3649, %v3715
        %v3732 = vsub.f32 %v3650, %v3716
        %v3733 = vsub.f32 %v3651, %v3717
        %v3734 = vsub.f32 %v3652, %v3718
        %v3735 = vsub.f32 %v3653, %v3719
        %v3736 = vmul.f32 %v3720, %v3720
        %v3737 = vmul.f32 %v3721, %v3721
        %v3738 = vmul.f32 %v3722, %v3722
        %v3739 = vmul.f32 %v3723, %v3723
        %v3740 = vmul.f32 %v3724, %v3724
        %v3741 = vmul.f32 %v3725, %v3725
        %v3742 = vmul.f32 %v3726, %v3726
        %v3743 = vmul.f32 %v3727, %v3727
        %v3744 = vmul.f32 %v3728, %v3728
        %v3745 = vmul.f32 %v3729, %v3729
        %v3746 = vmul.f32 %v3730, %v3730
        %v3747 = vmul.f32 %v3731, %v3731
        %v3748 = vmul.f32 %v3732, %v3732
        %v3749 = vmul.f32 %v3733, %v3733
        %v3750 = vmul.f32 %v3734, %v3734
        %v3751 = vmul.f32 %v3735, %v3735
        %3752 = vadd.xlane.f32.xlu0 %v3736
        %v3753 = vpop.xlane.xlu0 %3752
        %3754 = vadd.xlane.f32.xlu0 %v3737
        %v3755 = vpop.xlane.xlu0 %3754
        %3756 = vadd.xlane.f32.xlu0 %v3738
        %v3757 = vpop.xlane.xlu0 %3756
        %3758 = vadd.xlane.f32.xlu0 %v3739
        %v3759 = vpop.xlane.xlu0 %3758
        %3760 = vadd.xlane.f32.xlu0 %v3740
        %v3761 = vpop.xlane.xlu0 %3760
        %3762 = vadd.xlane.f32.xlu0 %v3741
        %v3763 = vpop.xlane.xlu0 %3762
        %3764 = vadd.xlane.f32.xlu0 %v3742
        %v3765 = vpop.xlane.xlu0 %3764
        %3766 = vadd.xlane.f32.xlu0 %v3743
        %v3767 = vpop.xlane.xlu0 %3766
        %3768 = vadd.xlane.f32.xlu0 %v3744
        %v3769 = vpop.xlane.xlu0 %3768
        %3770 = vadd.xlane.f32.xlu0 %v3745
        %v3771 = vpop.xlane.xlu0 %3770
        %3772 = vadd.xlane.f32.xlu0 %v3746
        %v3773 = vpop.xlane.xlu0 %3772
        %3774 = vadd.xlane.f32.xlu0 %v3747
        %v3775 = vpop.xlane.xlu0 %3774
        %3776 = vadd.xlane.f32.xlu0 %v3748
        %v3777 = vpop.xlane.xlu0 %3776
        %3778 = vadd.xlane.f32.xlu0 %v3749
        %v3779 = vpop.xlane.xlu0 %3778
        %3780 = vadd.xlane.f32.xlu0 %v3750
        %v3781 = vpop.xlane.xlu0 %3780
        %3782 = vadd.xlane.f32.xlu0 %v3751
        %v3783 = vpop.xlane.xlu0 %3782
        %v3784 = vmul.f32 %v3753, %v871
        %v3785 = vmul.f32 %v3755, %v871
        %v3786 = vmul.f32 %v3757, %v871
        %v3787 = vmul.f32 %v3759, %v871
        %v3788 = vmul.f32 %v3761, %v871
        %v3789 = vmul.f32 %v3763, %v871
        %v3790 = vmul.f32 %v3765, %v871
        %v3791 = vmul.f32 %v3767, %v871
        %v3792 = vmul.f32 %v3769, %v871
        %v3793 = vmul.f32 %v3771, %v871
        %v3794 = vmul.f32 %v3773, %v871
        %v3795 = vmul.f32 %v3775, %v871
        %v3796 = vmul.f32 %v3777, %v871
        %v3797 = vmul.f32 %v3779, %v871
        %v3798 = vmul.f32 %v3781, %v871
        %v3799 = vmul.f32 %v3783, %v871
        %v3800 = vadd.f32 %v3784, 1e-05
        %v3801 = vadd.f32 %v3785, 1e-05
        %v3802 = vadd.f32 %v3786, 1e-05
        %v3803 = vadd.f32 %v3787, 1e-05
        %v3804 = vadd.f32 %v3788, 1e-05
        %v3805 = vadd.f32 %v3789, 1e-05
        %v3806 = vadd.f32 %v3790, 1e-05
        %v3807 = vadd.f32 %v3791, 1e-05
        %v3808 = vadd.f32 %v3792, 1e-05
        %v3809 = vadd.f32 %v3793, 1e-05
        %v3810 = vadd.f32 %v3794, 1e-05
        %v3811 = vadd.f32 %v3795, 1e-05
        %v3812 = vadd.f32 %v3796, 1e-05
        %v3813 = vadd.f32 %v3797, 1e-05
        %v3814 = vadd.f32 %v3798, 1e-05
        %v3815 = vadd.f32 %v3799, 1e-05
        %v3816 = vrsqrt.pop %v3800
        %v3817 = vrsqrt.pop %v3801
        %v3818 = vrsqrt.pop %v3802
        %v3819 = vrsqrt.pop %v3803
        %v3820 = vrsqrt.pop %v3804
        %v3821 = vrsqrt.pop %v3805
        %v3822 = vrsqrt.pop %v3806
        %v3823 = vrsqrt.pop %v3807
        %v3824 = vrsqrt.pop %v3808
        %v3825 = vrsqrt.pop %v3809
        %v3826 = vrsqrt.pop %v3810
        %v3827 = vrsqrt.pop %v3811
        %v3828 = vrsqrt.pop %v3812
        %v3829 = vrsqrt.pop %v3813
        %v3830 = vrsqrt.pop %v3814
        %v3831 = vrsqrt.pop %v3815
        %v3832 = vmul.f32 %v3720, %v3816
        %v3833 = vmul.f32 %v3721, %v3817
        %v3834 = vmul.f32 %v3722, %v3818
        %v3835 = vmul.f32 %v3723, %v3819
        %v3836 = vmul.f32 %v3724, %v3820
        %v3837 = vmul.f32 %v3725, %v3821
        %v3838 = vmul.f32 %v3726, %v3822
        %v3839 = vmul.f32 %v3727, %v3823
        %v3840 = vmul.f32 %v3728, %v3824
        %v3841 = vmul.f32 %v3729, %v3825
        %v3842 = vmul.f32 %v3730, %v3826
        %v3843 = vmul.f32 %v3731, %v3827
        %v3844 = vmul.f32 %v3732, %v3828
        %v3845 = vmul.f32 %v3733, %v3829
        %v3846 = vmul.f32 %v3734, %v3830
        %v3847 = vmul.f32 %v3735, %v3831
        %v3848 = vlaneseq
        %v3849 = vshrl.u32 %v3848, 7
        %v3850 = vsub.s32 0, %v3849
        %v3851 = vrot.slane %v3671, %v3850
        %v3852 = vmul.f32 %v3832, %v3851
        %v3853 = vmul.f32 %v3833, %v3851
        %v3854 = vmul.f32 %v3834, %v3851
        %v3855 = vmul.f32 %v3835, %v3851
        %v3856 = vmul.f32 %v3836, %v3851
        %v3857 = vmul.f32 %v3837, %v3851
        %v3858 = vmul.f32 %v3838, %v3851
        %v3859 = vmul.f32 %v3839, %v3851
        %v3860 = vmul.f32 %v3840, %v3851
        %v3861 = vmul.f32 %v3841, %v3851
        %v3862 = vmul.f32 %v3842, %v3851
        %v3863 = vmul.f32 %v3843, %v3851
        %v3864 = vmul.f32 %v3844, %v3851
        %v3865 = vmul.f32 %v3845, %v3851
        %v3866 = vmul.f32 %v3846, %v3851
        %v3867 = vmul.f32 %v3847, %v3851
        %v3868 = vlaneseq
        %v3869 = vshrl.u32 %v3868, 7
        %v3870 = vsub.s32 1, %v3869
        %v3871 = vrot.slane %v3671, %v3870
        %v3872 = vadd.f32 %v3852, %v3871
        %v3873 = vadd.f32 %v3853, %v3871
        %v3874 = vadd.f32 %v3854, %v3871
        %v3875 = vadd.f32 %v3855, %v3871
        %v3876 = vadd.f32 %v3856, %v3871
        %v3877 = vadd.f32 %v3857, %v3871
        %v3878 = vadd.f32 %v3858, %v3871
        %v3879 = vadd.f32 %v3859, %v3871
        %v3880 = vadd.f32 %v3860, %v3871
        %v3881 = vadd.f32 %v3861, %v3871
        %v3882 = vadd.f32 %v3862, %v3871
        %v3883 = vadd.f32 %v3863, %v3871
        %v3884 = vadd.f32 %v3864, %v3871
        %v3885 = vadd.f32 %v3865, %v3871
        %v3886 = vadd.f32 %v3866, %v3871
        %v3887 = vadd.f32 %v3867, %v3871
        %v3888 = vpack.c.bf16 %v3873, %v3872
        %v3889 = vpack.c.bf16 %v3875, %v3874
        %v3890 = vpack.c.bf16 %v3877, %v3876
        %v3891 = vpack.c.bf16 %v3879, %v3878
        %v3892 = vpack.c.bf16 %v3881, %v3880
        %v3893 = vpack.c.bf16 %v3883, %v3882
        %v3894 = vpack.c.bf16 %v3885, %v3884
        %v3895 = vpack.c.bf16 %v3887, %v3886
        %s3896 = scalar_lea.vmem %s6, 192
        %v3897 = vld [vmem:[%s3896] sm:$0xff]
        %v3898 = vld [vmem:[%s3896 + $0x8] sm:$0xf]
        %v3899 = vld [vmem:[%s3896 + $0xc] sm:$0xff]
        %v3900 = vld [vmem:[%s3896 + $0x14] sm:$0xf]
        %v3901 = vld [vmem:[%s3896 + $0x18] sm:$0xff]
        %v3902 = vld [vmem:[%s3896 + $0x20] sm:$0xf]
        %v3903 = vld [vmem:[%s3896 + $0x24] sm:$0xff]
        %v3904 = vld [vmem:[%s3896 + $0x2c] sm:$0xf]
        %v3905 = vld [vmem:[%s3896 + $0x30] sm:$0xff]
        %v3906 = vld [vmem:[%s3896 + $0x38] sm:$0xf]
        %v3907 = vld [vmem:[%s3896 + $0x3c] sm:$0xff]
        %v3908 = vld [vmem:[%s3896 + $0x44] sm:$0xf]
        %v3909 = vld [vmem:[%s3896 + $0x48] sm:$0xff]
        %v3910 = vld [vmem:[%s3896 + $0x50] sm:$0xf]
        %v3911 = vld [vmem:[%s3896 + $0x54] sm:$0xff]
        %v3912 = vld [vmem:[%s3896 + $0x5c] sm:$0xf]
        %v3913 = vld [vmem:[%s3896 + $0x60] sm:$0xff]
        %v3914 = vld [vmem:[%s3896 + $0x68] sm:$0xf]
        %v3915 = vld [vmem:[%s3896 + $0x6c] sm:$0xff]
        %v3916 = vld [vmem:[%s3896 + $0x74] sm:$0xf]
        %v3917 = vld [vmem:[%s3896 + $0x78] sm:$0xff]
        %v3918 = vld [vmem:[%s3896 + $0x80] sm:$0xf]
        %v3919 = vld [vmem:[%s3896 + $0x84] sm:$0xff]
        %v3920 = vld [vmem:[%s3896 + $0x8c] sm:$0xf]
        %v3921 = vld [vmem:[%s3896 + $0x90] sm:$0xff]
        %v3922 = vld [vmem:[%s3896 + $0x98] sm:$0xf]
        %v3923 = vld [vmem:[%s3896 + $0x9c] sm:$0xff]
        %v3924 = vld [vmem:[%s3896 + $0xa4] sm:$0xf]
        %v3925 = vld [vmem:[%s3896 + $0xa8] sm:$0xff]
        %v3926 = vld [vmem:[%s3896 + $0xb0] sm:$0xf]
        %v3927 = vld [vmem:[%s3896 + $0xb4] sm:$0xff]
        %v3928 = vld [vmem:[%s3896 + $0xbc] sm:$0xf]
        %s3929 = scalar_lea.vmem %s7, 3
        %v3930 = vld [vmem:[%s3929] sm:$0x7]
        %v3932 = vlaneseq
        %v3933 = vshrl.u32 %v3932, 7
        %v3934 = vsub.s32 0, %v3933
        %v3935 = vrot.slane %v3930, %v3934
        %v3936 = vlaneseq
        %v3937 = vshrl.u32 %v3936, 7
        %v3938 = vsub.s32 1, %v3937
        %v3939 = vrot.slane %v3930, %v3938
        %v3940 = vlaneseq
        %v3941 = vshrl.u32 %v3940, 7
        %v3942 = vsub.s32 2, %v3941
        %v3943 = vrot.slane %v3930, %v3942
        %v3979 = vunpack.c.l.b16 %v3897
        %v3980 = vunpack.c.h.b16 %v3897
        %v3981 = vunpack.c.l.b16 %v3898
        %v3982 = vunpack.c.l.b16 %v3899
        %v3983 = vunpack.c.h.b16 %v3899
        %v3984 = vunpack.c.l.b16 %v3900
        %v3985 = vunpack.c.l.b16 %v3901
        %v3986 = vunpack.c.h.b16 %v3901
        %v3987 = vunpack.c.l.b16 %v3902
        %v3988 = vunpack.c.l.b16 %v3903
        %v3989 = vunpack.c.h.b16 %v3903
        %v3990 = vunpack.c.l.b16 %v3904
        %v3991 = vunpack.c.l.b16 %v3905
        %v3992 = vunpack.c.h.b16 %v3905
        %v3993 = vunpack.c.l.b16 %v3906
        %v3994 = vunpack.c.l.b16 %v3907
        %v3995 = vunpack.c.h.b16 %v3907
        %v3996 = vunpack.c.l.b16 %v3908
        %v3997 = vunpack.c.l.b16 %v3909
        %v3998 = vunpack.c.h.b16 %v3909
        %v3999 = vunpack.c.l.b16 %v3910
        %v4000 = vunpack.c.l.b16 %v3911
        %v4001 = vunpack.c.h.b16 %v3911
        %v4002 = vunpack.c.l.b16 %v3912
        %v4003 = vunpack.c.l.b16 %v3913
        %v4004 = vunpack.c.h.b16 %v3913
        %v4005 = vunpack.c.l.b16 %v3914
        %v4006 = vunpack.c.l.b16 %v3915
        %v4007 = vunpack.c.h.b16 %v3915
        %v4008 = vunpack.c.l.b16 %v3916
        %v4009 = vunpack.c.l.b16 %v3917
        %v4010 = vunpack.c.h.b16 %v3917
        %v4011 = vunpack.c.l.b16 %v3918
        %v4012 = vunpack.c.l.b16 %v3919
        %v4013 = vunpack.c.h.b16 %v3919
        %v4014 = vunpack.c.l.b16 %v3920
        %v4015 = vunpack.c.l.b16 %v3921
        %v4016 = vunpack.c.h.b16 %v3921
        %v4017 = vunpack.c.l.b16 %v3922
        %v4018 = vunpack.c.l.b16 %v3923
        %v4019 = vunpack.c.h.b16 %v3923
        %v4020 = vunpack.c.l.b16 %v3924
        %v4021 = vunpack.c.l.b16 %v3925
        %v4022 = vunpack.c.h.b16 %v3925
        %v4023 = vunpack.c.l.b16 %v3926
        %v4024 = vunpack.c.l.b16 %v3927
        %v4025 = vunpack.c.h.b16 %v3927
        %v4026 = vunpack.c.l.b16 %v3928
        %v4027 = vpack.c.b16 %v3982, %v3979
        %v4028 = vpack.c.b16 %v3983, %v3980
        %v4029 = vpack.c.b16 %v3984, %v3981
        %v4030 = vpack.c.b16 %v3988, %v3985
        %v4031 = vpack.c.b16 %v3989, %v3986
        %v4032 = vpack.c.b16 %v3990, %v3987
        %v4033 = vpack.c.b16 %v3994, %v3991
        %v4034 = vpack.c.b16 %v3995, %v3992
        %v4035 = vpack.c.b16 %v3996, %v3993
        %v4036 = vpack.c.b16 %v4000, %v3997
        %v4037 = vpack.c.b16 %v4001, %v3998
        %v4038 = vpack.c.b16 %v4002, %v3999
        %v4039 = vpack.c.b16 %v4006, %v4003
        %v4040 = vpack.c.b16 %v4007, %v4004
        %v4041 = vpack.c.b16 %v4008, %v4005
        %v4042 = vpack.c.b16 %v4012, %v4009
        %v4043 = vpack.c.b16 %v4013, %v4010
        %v4044 = vpack.c.b16 %v4014, %v4011
        %v4045 = vpack.c.b16 %v4018, %v4015
        %v4046 = vpack.c.b16 %v4019, %v4016
        %v4047 = vpack.c.b16 %v4020, %v4017
        %v4048 = vpack.c.b16 %v4024, %v4021
        %v4049 = vpack.c.b16 %v4025, %v4022
        %v4050 = vpack.c.b16 %v4026, %v4023
        %4075 = vmatprep.subr.bf16.mxu0 %v4028
        %4076 = vmatpush1.bf16.msra.mxu0 %v4027
        %4077 = vmatprep.subr.bf16.mxu0 %v4031
        %4078 = vmatpush1.bf16.msra.mxu0 %v4030
        %4079 = vmatprep.subr.bf16.mxu0 %v4034
        %4080 = vmatpush1.bf16.msra.mxu0 %v4033
        %4081 = vmatprep.subr.bf16.mxu0 %v4037
        %4082 = vmatpush1.bf16.msra.mxu0 %v4036
        %4083 = vmatprep.subr.bf16.mxu0 %v4040
        %4084 = vmatpush1.bf16.msra.mxu0 %v4039
        %4085 = vmatprep.subr.bf16.mxu0 %v4043
        %4086 = vmatpush1.bf16.msra.mxu0 %v4042
        %4087 = vmatprep.subr.bf16.mxu0 %v4046
        %4088 = vmatpush1.bf16.msra.mxu0 %v4045
        %4089 = vmatprep.subr.bf16.mxu0 %v4049
        %4090 = vmatpush1.bf16.msra.mxu0 %v4048
        %4091 = vmatprep.subr.bf16.mxu0 0
        %4092 = vmatpush1.bf16.msra.mxu0 0
        %4093 = vmatprep.subr.bf16.mxu0 0
        %4094 = vmatpush1.bf16.msra.mxu0 0
        %4095 = vmatprep.subr.bf16.mxu0 0
        %4096 = vmatpush1.bf16.msra.mxu0 0
        %4097 = vmatprep.subr.bf16.mxu0 0
        %4098 = vmatpush1.bf16.msra.mxu0 0
        %4099 = vmatprep.subr.bf16.mxu0 0
        %4100 = vmatpush1.bf16.msra.mxu0 0
        %4101 = vmatprep.subr.bf16.mxu0 0
        %4102 = vmatpush1.bf16.msra.mxu0 0
        %4103 = vmatprep.subr.bf16.mxu0 0
        %4104 = vmatpush1.bf16.msra.mxu0 0
        %4105 = vmatprep.subr.bf16.mxu0 0
        %4106 = vmatpush1.bf16.msra.mxu0 0
        %4107 = vmatprep.mubr.bf16.mxu0 0
        %4108 = vmatmul.mubr.bf16.gmra.mrb[0].mxu0 %v3888
        %v4109 = vpop.f32.mrb[0].mxu0
        %v4110 = vadd.f32 %v3935, %v4109
        %v4111 = vpop.f32.mrb[0].mxu0
        %v4112 = vadd.f32 %v3939, %v4111
        %v4113 = vpop.f32.mrb[0].mxu0
        %v4114 = vadd.f32 %v3935, %v4113
        %v4115 = vpop.f32.mrb[0].mxu0
        %v4116 = vadd.f32 %v3939, %v4115
        %4117 = vmatprep.mubr.bf16.mxu0 0
        %4118 = vmatmul.mubr.bf16.gmra.mrb[0].mxu0 %v3889
        %v4119 = vpop.f32.mrb[0].mxu0
        %v4120 = vadd.f32 %v3935, %v4119
        %v4121 = vpop.f32.mrb[0].mxu0
        %v4122 = vadd.f32 %v3939, %v4121
        %v4123 = vpop.f32.mrb[0].mxu0
        %v4124 = vadd.f32 %v3935, %v4123
        %v4125 = vpop.f32.mrb[0].mxu0
        %v4126 = vadd.f32 %v3939, %v4125
        %4127 = vmatprep.mubr.bf16.mxu0 0
        %4128 = vmatmul.mubr.bf16.gmra.mrb[0].mxu0 %v3890
        %v4129 = vpop.f32.mrb[0].mxu0
        %v4130 = vadd.f32 %v3935, %v4129
        %v4131 = vpop.f32.mrb[0].mxu0
        %v4132 = vadd.f32 %v3939, %v4131
        %v4133 = vpop.f32.mrb[0].mxu0
        %v4134 = vadd.f32 %v3935, %v4133
        %v4135 = vpop.f32.mrb[0].mxu0
        %v4136 = vadd.f32 %v3939, %v4135
        %4137 = vmatprep.mubr.bf16.mxu0 0
        %4138 = vmatmul.mubr.bf16.gmra.mrb[0].mxu0 %v3891
        %v4139 = vpop.f32.mrb[0].mxu0
        %v4140 = vadd.f32 %v3935, %v4139
        %v4141 = vpop.f32.mrb[0].mxu0
        %v4142 = vadd.f32 %v3939, %v4141
        %v4143 = vpop.f32.mrb[0].mxu0
        %v4144 = vadd.f32 %v3935, %v4143
        %v4145 = vpop.f32.mrb[0].mxu0
        %v4146 = vadd.f32 %v3939, %v4145
        %4147 = vmatprep.mubr.bf16.mxu0 0
        %4148 = vmatmul.mubr.bf16.gmra.mrb[0].mxu0 %v3892
        %v4149 = vpop.f32.mrb[0].mxu0
        %v4150 = vadd.f32 %v3935, %v4149
        %v4151 = vpop.f32.mrb[0].mxu0
        %v4152 = vadd.f32 %v3939, %v4151
        %v4153 = vpop.f32.mrb[0].mxu0
        %v4154 = vadd.f32 %v3935, %v4153
        %v4155 = vpop.f32.mrb[0].mxu0
        %v4156 = vadd.f32 %v3939, %v4155
        %4157 = vmatprep.mubr.bf16.mxu0 0
        %4158 = vmatmul.mubr.bf16.gmra.mrb[0].mxu0 %v3893
        %v4159 = vpop.f32.mrb[0].mxu0
        %v4160 = vadd.f32 %v3935, %v4159
        %v4161 = vpop.f32.mrb[0].mxu0
        %v4162 = vadd.f32 %v3939, %v4161
        %v4163 = vpop.f32.mrb[0].mxu0
        %v4164 = vadd.f32 %v3935, %v4163
        %v4165 = vpop.f32.mrb[0].mxu0
        %v4166 = vadd.f32 %v3939, %v4165
        %4167 = vmatprep.mubr.bf16.mxu0 0
        %4168 = vmatmul.mubr.bf16.gmra.mrb[0].mxu0 %v3894
        %v4169 = vpop.f32.mrb[0].mxu0
        %v4170 = vadd.f32 %v3935, %v4169
        %v4171 = vpop.f32.mrb[0].mxu0
        %v4172 = vadd.f32 %v3939, %v4171
        %v4173 = vpop.f32.mrb[0].mxu0
        %v4174 = vadd.f32 %v3935, %v4173
        %v4175 = vpop.f32.mrb[0].mxu0
        %v4176 = vadd.f32 %v3939, %v4175
        %4177 = vmatprep.mubr.bf16.mxu0 0
        %4178 = vmatmul.mubr.bf16.gmra.mrb[0].mxu0 %v3895
        %v4179 = vpop.f32.mrb[0].mxu0
        %v4180 = vadd.f32 %v3935, %v4179
        %v4181 = vpop.f32.mrb[0].mxu0
        %v4182 = vadd.f32 %v3939, %v4181
        %v4183 = vpop.f32.mrb[0].mxu0
        %v4184 = vadd.f32 %v3935, %v4183
        %v4185 = vpop.f32.mrb[0].mxu0
        %v4186 = vadd.f32 %v3939, %v4185
        %4187 = vdwg.mxu0
        %4188 = vmatprep.subr.bf16.mxu0 0
        %4189 = vmatpush1.bf16.msra.mxu0 %v4029
        %4190 = vmatprep.subr.bf16.mxu0 0
        %4191 = vmatpush1.bf16.msra.mxu0 %v4032
        %4192 = vmatprep.subr.bf16.mxu0 0
        %4193 = vmatpush1.bf16.msra.mxu0 %v4035
        %4194 = vmatprep.subr.bf16.mxu0 0
        %4195 = vmatpush1.bf16.msra.mxu0 %v4038
        %4196 = vmatprep.subr.bf16.mxu0 0
        %4197 = vmatpush1.bf16.msra.mxu0 %v4041
        %4198 = vmatprep.subr.bf16.mxu0 0
        %4199 = vmatpush1.bf16.msra.mxu0 %v4044
        %4200 = vmatprep.subr.bf16.mxu0 0
        %4201 = vmatpush1.bf16.msra.mxu0 %v4047
        %4202 = vmatprep.subr.bf16.mxu0 0
        %4203 = vmatpush1.bf16.msra.mxu0 %v4050
        %4204 = vmatprep.subr.bf16.mxu0 0
        %4205 = vmatpush1.bf16.msra.mxu0 0
        %4206 = vmatprep.subr.bf16.mxu0 0
        %4207 = vmatpush1.bf16.msra.mxu0 0
        %4208 = vmatprep.subr.bf16.mxu0 0
        %4209 = vmatpush1.bf16.msra.mxu0 0
        %4210 = vmatprep.subr.bf16.mxu0 0
        %4211 = vmatpush1.bf16.msra.mxu0 0
        %4212 = vmatprep.subr.bf16.mxu0 0
        %4213 = vmatpush1.bf16.msra.mxu0 0
        %4214 = vmatprep.subr.bf16.mxu0 0
        %4215 = vmatpush1.bf16.msra.mxu0 0
        %4216 = vmatprep.subr.bf16.mxu0 0
        %4217 = vmatpush1.bf16.msra.mxu0 0
        %4218 = vmatprep.subr.bf16.mxu0 0
        %4219 = vmatpush1.bf16.msra.mxu0 0
        %4220 = vmatprep.mubr.bf16.mxu0 0
        %4221 = vmatmul.mubr.bf16.gmra.mrb[0].mxu0 %v3888
        %v4222 = vpop.f32.mrb[0].mxu0
        %v4223 = vadd.f32 %v3943, %v4222
        %v4224 = vpop.f32.mrb[0].mxu0
        %v4225 = vpop.f32.mrb[0].mxu0
        %v4226 = vadd.f32 %v3943, %v4225
        %v4227 = vpop.f32.mrb[0].mxu0
        %4228 = vmatprep.mubr.bf16.mxu0 0
        %4229 = vmatmul.mubr.bf16.gmra.mrb[0].mxu0 %v3889
        %v4230 = vpop.f32.mrb[0].mxu0
        %v4231 = vadd.f32 %v3943, %v4230
        %v4232 = vpop.f32.mrb[0].mxu0
        %v4233 = vpop.f32.mrb[0].mxu0
        %v4234 = vadd.f32 %v3943, %v4233
        %v4235 = vpop.f32.mrb[0].mxu0
        %4236 = vmatprep.mubr.bf16.mxu0 0
        %4237 = vmatmul.mubr.bf16.gmra.mrb[0].mxu0 %v3890
        %v4238 = vpop.f32.mrb[0].mxu0
        %v4239 = vadd.f32 %v3943, %v4238
        %v4240 = vpop.f32.mrb[0].mxu0
        %v4241 = vpop.f32.mrb[0].mxu0
        %v4242 = vadd.f32 %v3943, %v4241
        %v4243 = vpop.f32.mrb[0].mxu0
        %4244 = vmatprep.mubr.bf16.mxu0 0
        %4245 = vmatmul.mubr.bf16.gmra.mrb[0].mxu0 %v3891
        %v4246 = vpop.f32.mrb[0].mxu0
        %v4247 = vadd.f32 %v3943, %v4246
        %v4248 = vpop.f32.mrb[0].mxu0
        %v4249 = vpop.f32.mrb[0].mxu0
        %v4250 = vadd.f32 %v3943, %v4249
        %v4251 = vpop.f32.mrb[0].mxu0
        %4252 = vmatprep.mubr.bf16.mxu0 0
        %4253 = vmatmul.mubr.bf16.gmra.mrb[0].mxu0 %v3892
        %v4254 = vpop.f32.mrb[0].mxu0
        %v4255 = vadd.f32 %v3943, %v4254
        %v4256 = vpop.f32.mrb[0].mxu0
        %v4257 = vpop.f32.mrb[0].mxu0
        %v4258 = vadd.f32 %v3943, %v4257
        %v4259 = vpop.f32.mrb[0].mxu0
        %4260 = vmatprep.mubr.bf16.mxu0 0
        %4261 = vmatmul.mubr.bf16.gmra.mrb[0].mxu0 %v3893
        %v4262 = vpop.f32.mrb[0].mxu0
        %v4263 = vadd.f32 %v3943, %v4262
        %v4264 = vpop.f32.mrb[0].mxu0
        %v4265 = vpop.f32.mrb[0].mxu0
        %v4266 = vadd.f32 %v3943, %v4265
        %v4267 = vpop.f32.mrb[0].mxu0
        %4268 = vmatprep.mubr.bf16.mxu0 0
        %4269 = vmatmul.mubr.bf16.gmra.mrb[0].mxu0 %v3894
        %v4270 = vpop.f32.mrb[0].mxu0
        %v4271 = vadd.f32 %v3943, %v4270
        %v4272 = vpop.f32.mrb[0].mxu0
        %v4273 = vpop.f32.mrb[0].mxu0
        %v4274 = vadd.f32 %v3943, %v4273
        %v4275 = vpop.f32.mrb[0].mxu0
        %4276 = vmatprep.mubr.bf16.mxu0 0
        %4277 = vmatmul.mubr.bf16.gmra.mrb[0].mxu0 %v3895
        %v4278 = vpop.f32.mrb[0].mxu0
        %v4279 = vadd.f32 %v3943, %v4278
        %v4280 = vpop.f32.mrb[0].mxu0
        %v4281 = vpop.f32.mrb[0].mxu0
        %v4282 = vadd.f32 %v3943, %v4281
        %v4283 = vpop.f32.mrb[0].mxu0
        %4284 = vdwg.mxu0
        %v4285 = vmul.f32 %v4110, 0.125
        %v4286 = vmul.f32 %v4114, 0.125
        %v4287 = vmul.f32 %v4120, 0.125
        %v4288 = vmul.f32 %v4124, 0.125
        %v4289 = vmul.f32 %v4130, 0.125
        %v4290 = vmul.f32 %v4134, 0.125
        %v4291 = vmul.f32 %v4140, 0.125
        %v4292 = vmul.f32 %v4144, 0.125
        %v4293 = vmul.f32 %v4150, 0.125
        %v4294 = vmul.f32 %v4154, 0.125
        %v4295 = vmul.f32 %v4160, 0.125
        %v4296 = vmul.f32 %v4164, 0.125
        %v4297 = vmul.f32 %v4170, 0.125
        %v4298 = vmul.f32 %v4174, 0.125
        %v4299 = vmul.f32 %v4180, 0.125
        %v4300 = vmul.f32 %v4184, 0.125
        %v4301 = vpack.c.bf16 %v4286, %v4285
        %v4302 = vpack.c.bf16 %v4288, %v4287
        %v4303 = vpack.c.bf16 %v4290, %v4289
        %v4304 = vpack.c.bf16 %v4292, %v4291
        %v4305 = vpack.c.bf16 %v4294, %v4293
        %v4306 = vpack.c.bf16 %v4296, %v4295
        %v4307 = vpack.c.bf16 %v4298, %v4297
        %v4308 = vpack.c.bf16 %v4300, %v4299
        %v4309 = vpack.c.bf16 %v4116, %v4112
        %v4310 = vpack.c.bf16 %v4126, %v4122
        %v4311 = vpack.c.bf16 %v4136, %v4132
        %v4312 = vpack.c.bf16 %v4146, %v4142
        %v4313 = vpack.c.bf16 %v4156, %v4152
        %v4314 = vpack.c.bf16 %v4166, %v4162
        %v4315 = vpack.c.bf16 %v4176, %v4172
        %v4316 = vpack.c.bf16 %v4186, %v4182
        %v4317 = vpack.c.bf16 %v4226, %v4223
        %v4318 = vpack.c.bf16 %v4234, %v4231
        %v4319 = vpack.c.bf16 %v4242, %v4239
        %v4320 = vpack.c.bf16 %v4250, %v4247
        %v4321 = vpack.c.bf16 %v4258, %v4255
        %v4322 = vpack.c.bf16 %v4266, %v4263
        %v4323 = vpack.c.bf16 %v4274, %v4271
        %v4324 = vpack.c.bf16 %v4282, %v4279
        %v4326 = vsel %vm716, %v4301, 0
        %v4329 = vsel %vm716, %v4302, 0
        %v4332 = vsel %vm716, %v4303, 0
        %v4335 = vsel %vm716, %v4304, 0
        %v4338 = vsel %vm716, %v4305, 0
        %v4341 = vsel %vm716, %v4306, 0
        %v4344 = vsel %vm716, %v4307, 0
        %v4347 = vsel %vm716, %v4308, 0
        %v4350 = vsel %vm716, %v4309, 0
        %v4353 = vsel %vm716, %v4310, 0
        %v4356 = vsel %vm716, %v4311, 0
        %v4359 = vsel %vm716, %v4312, 0
        %v4362 = vsel %vm716, %v4313, 0
        %v4365 = vsel %vm716, %v4314, 0
        %v4368 = vsel %vm716, %v4315, 0
        %v4371 = vsel %vm716, %v4316, 0
        %4373 = vmatprep.subr.bf16.mxu0 0
        %4374 = vmatpush1.bf16.xpose.msra.mxu0 %v4350
        %4375 = vmatprep.subr.bf16.mxu0 0
        %4376 = vmatpush1.bf16.xpose.msra.mxu0 %v4353
        %4377 = vmatprep.subr.bf16.mxu0 0
        %4378 = vmatpush1.bf16.xpose.msra.mxu0 %v4356
        %4379 = vmatprep.subr.bf16.mxu0 0
        %4380 = vmatpush1.bf16.xpose.msra.mxu0 %v4359
        %4381 = vmatprep.subr.bf16.mxu0 0
        %4382 = vmatpush1.bf16.xpose.msra.mxu0 %v4362
        %4383 = vmatprep.subr.bf16.mxu0 0
        %4384 = vmatpush1.bf16.xpose.msra.mxu0 %v4365
        %4385 = vmatprep.subr.bf16.mxu0 0
        %4386 = vmatpush1.bf16.xpose.msra.mxu0 %v4368
        %4387 = vmatprep.subr.bf16.mxu0 0
        %4388 = vmatpush1.bf16.xpose.msra.mxu0 %v4371
        %4389 = vmatprep.subr.bf16.mxu0 0
        %4390 = vmatpush1.bf16.xpose.msra.mxu0 0
        %4391 = vmatprep.subr.bf16.mxu0 0
        %4392 = vmatpush1.bf16.xpose.msra.mxu0 0
        %4393 = vmatprep.subr.bf16.mxu0 0
        %4394 = vmatpush1.bf16.xpose.msra.mxu0 0
        %4395 = vmatprep.subr.bf16.mxu0 0
        %4396 = vmatpush1.bf16.xpose.msra.mxu0 0
        %4397 = vmatprep.subr.bf16.mxu0 0
        %4398 = vmatpush1.bf16.xpose.msra.mxu0 0
        %4399 = vmatprep.subr.bf16.mxu0 0
        %4400 = vmatpush1.bf16.xpose.msra.mxu0 0
        %4401 = vmatprep.subr.bf16.mxu0 0
        %4402 = vmatpush1.bf16.xpose.msra.mxu0 0
        %4403 = vmatprep.subr.bf16.mxu0 0
        %4404 = vmatpush1.bf16.xpose.msra.mxu0 0
        %4405 = vmatprep.mubr.bf16.mxu0 0
        %4406 = vmatmul.mubr.bf16.gmra.mrb[0].mxu0 %v4326
        %v4407 = vpop.f32.mrb[0].mxu0
        %v4408 = vadd.f32 %v500, %v4407
        %v4409 = vpop.f32.mrb[0].mxu0
        %v4410 = vpop.f32.mrb[0].mxu0
        %v4411 = vadd.f32 %v501, %v4410
        %v4412 = vpop.f32.mrb[0].mxu0
        %4413 = vmatprep.mubr.bf16.mxu0 0
        %4414 = vmatmul.mubr.bf16.gmra.mrb[0].mxu0 %v4329
        %v4415 = vpop.f32.mrb[0].mxu0
        %v4416 = vadd.f32 %v502, %v4415
        %v4417 = vpop.f32.mrb[0].mxu0
        %v4418 = vpop.f32.mrb[0].mxu0
        %v4419 = vadd.f32 %v503, %v4418
        %v4420 = vpop.f32.mrb[0].mxu0
        %4421 = vmatprep.mubr.bf16.mxu0 0
        %4422 = vmatmul.mubr.bf16.gmra.mrb[0].mxu0 %v4332
        %v4423 = vpop.f32.mrb[0].mxu0
        %v4424 = vadd.f32 %v504, %v4423
        %v4425 = vpop.f32.mrb[0].mxu0
        %v4426 = vpop.f32.mrb[0].mxu0
        %v4427 = vadd.f32 %v505, %v4426
        %v4428 = vpop.f32.mrb[0].mxu0
        %4429 = vmatprep.mubr.bf16.mxu0 0
        %4430 = vmatmul.mubr.bf16.gmra.mrb[0].mxu0 %v4335
        %v4431 = vpop.f32.mrb[0].mxu0
        %v4432 = vadd.f32 %v506, %v4431
        %v4433 = vpop.f32.mrb[0].mxu0
        %v4434 = vpop.f32.mrb[0].mxu0
        %v4435 = vadd.f32 %v507, %v4434
        %v4436 = vpop.f32.mrb[0].mxu0
        %4437 = vmatprep.mubr.bf16.mxu0 0
        %4438 = vmatmul.mubr.bf16.gmra.mrb[0].mxu0 %v4338
        %v4439 = vpop.f32.mrb[0].mxu0
        %v4440 = vadd.f32 %v508, %v4439
        %v4441 = vpop.f32.mrb[0].mxu0
        %v4442 = vpop.f32.mrb[0].mxu0
        %v4443 = vadd.f32 %v509, %v4442
        %v4444 = vpop.f32.mrb[0].mxu0
        %4445 = vmatprep.mubr.bf16.mxu0 0
        %4446 = vmatmul.mubr.bf16.gmra.mrb[0].mxu0 %v4341
        %v4447 = vpop.f32.mrb[0].mxu0
        %v4448 = vadd.f32 %v510, %v4447
        %v4449 = vpop.f32.mrb[0].mxu0
        %v4450 = vpop.f32.mrb[0].mxu0
        %v4451 = vadd.f32 %v511, %v4450
        %v4452 = vpop.f32.mrb[0].mxu0
        %4453 = vmatprep.mubr.bf16.mxu0 0
        %4454 = vmatmul.mubr.bf16.gmra.mrb[0].mxu0 %v4344
        %v4455 = vpop.f32.mrb[0].mxu0
        %v4456 = vadd.f32 %v512, %v4455
        %v4457 = vpop.f32.mrb[0].mxu0
        %v4458 = vpop.f32.mrb[0].mxu0
        %v4459 = vadd.f32 %v513, %v4458
        %v4460 = vpop.f32.mrb[0].mxu0
        %4461 = vmatprep.mubr.bf16.mxu0 0
        %4462 = vmatmul.mubr.bf16.gmra.mrb[0].mxu0 %v4347
        %v4463 = vpop.f32.mrb[0].mxu0
        %v4464 = vadd.f32 %v514, %v4463
        %v4465 = vpop.f32.mrb[0].mxu0
        %v4466 = vpop.f32.mrb[0].mxu0
        %v4467 = vadd.f32 %v515, %v4466
        %v4468 = vpop.f32.mrb[0].mxu0
        %4469 = vdwg.mxu0
        %4478 = vrot.lane.b32.xlu0 %v4301, 64
        %v4479 = vpop.permute.xlu0 %4478
        %4480 = vrot.lane.b32.xlu0 %v4302, 64
        %v4481 = vpop.permute.xlu0 %4480
        %4482 = vrot.lane.b32.xlu0 %v4303, 64
        %v4483 = vpop.permute.xlu0 %4482
        %4484 = vrot.lane.b32.xlu0 %v4304, 64
        %v4485 = vpop.permute.xlu0 %4484
        %4486 = vrot.lane.b32.xlu0 %v4305, 64
        %v4487 = vpop.permute.xlu0 %4486
        %4488 = vrot.lane.b32.xlu0 %v4306, 64
        %v4489 = vpop.permute.xlu0 %4488
        %4490 = vrot.lane.b32.xlu0 %v4307, 64
        %v4491 = vpop.permute.xlu0 %4490
        %4492 = vrot.lane.b32.xlu0 %v4308, 64
        %v4493 = vpop.permute.xlu0 %4492
        %4502 = vrot.lane.b32.xlu0 %v4309, 64
        %v4503 = vpop.permute.xlu0 %4502
        %4504 = vrot.lane.b32.xlu0 %v4310, 64
        %v4505 = vpop.permute.xlu0 %4504
        %4506 = vrot.lane.b32.xlu0 %v4311, 64
        %v4507 = vpop.permute.xlu0 %4506
        %4508 = vrot.lane.b32.xlu0 %v4312, 64
        %v4509 = vpop.permute.xlu0 %4508
        %4510 = vrot.lane.b32.xlu0 %v4313, 64
        %v4511 = vpop.permute.xlu0 %4510
        %4512 = vrot.lane.b32.xlu0 %v4314, 64
        %v4513 = vpop.permute.xlu0 %4512
        %4514 = vrot.lane.b32.xlu0 %v4315, 64
        %v4515 = vpop.permute.xlu0 %4514
        %4516 = vrot.lane.b32.xlu0 %v4316, 64
        %v4517 = vpop.permute.xlu0 %4516
        %v4519 = vsel %vm716, %v4479, 0
        %v4522 = vsel %vm716, %v4481, 0
        %v4525 = vsel %vm716, %v4483, 0
        %v4528 = vsel %vm716, %v4485, 0
        %v4531 = vsel %vm716, %v4487, 0
        %v4534 = vsel %vm716, %v4489, 0
        %v4537 = vsel %vm716, %v4491, 0
        %v4540 = vsel %vm716, %v4493, 0
        %v4543 = vsel %vm716, %v4503, 0
        %v4546 = vsel %vm716, %v4505, 0
        %v4549 = vsel %vm716, %v4507, 0
        %v4552 = vsel %vm716, %v4509, 0
        %v4555 = vsel %vm716, %v4511, 0
        %v4558 = vsel %vm716, %v4513, 0
        %v4561 = vsel %vm716, %v4515, 0
        %v4564 = vsel %vm716, %v4517, 0
        %4566 = vmatprep.subr.bf16.mxu0 0
        %4567 = vmatpush1.bf16.xpose.msra.mxu0 %v4543
        %4568 = vmatprep.subr.bf16.mxu0 0
        %4569 = vmatpush1.bf16.xpose.msra.mxu0 %v4546
        %4570 = vmatprep.subr.bf16.mxu0 0
        %4571 = vmatpush1.bf16.xpose.msra.mxu0 %v4549
        %4572 = vmatprep.subr.bf16.mxu0 0
        %4573 = vmatpush1.bf16.xpose.msra.mxu0 %v4552
        %4574 = vmatprep.subr.bf16.mxu0 0
        %4575 = vmatpush1.bf16.xpose.msra.mxu0 %v4555
        %4576 = vmatprep.subr.bf16.mxu0 0
        %4577 = vmatpush1.bf16.xpose.msra.mxu0 %v4558
        %4578 = vmatprep.subr.bf16.mxu0 0
        %4579 = vmatpush1.bf16.xpose.msra.mxu0 %v4561
        %4580 = vmatprep.subr.bf16.mxu0 0
        %4581 = vmatpush1.bf16.xpose.msra.mxu0 %v4564
        %4582 = vmatprep.subr.bf16.mxu0 0
        %4583 = vmatpush1.bf16.xpose.msra.mxu0 0
        %4584 = vmatprep.subr.bf16.mxu0 0
        %4585 = vmatpush1.bf16.xpose.msra.mxu0 0
        %4586 = vmatprep.subr.bf16.mxu0 0
        %4587 = vmatpush1.bf16.xpose.msra.mxu0 0
        %4588 = vmatprep.subr.bf16.mxu0 0
        %4589 = vmatpush1.bf16.xpose.msra.mxu0 0
        %4590 = vmatprep.subr.bf16.mxu0 0
        %4591 = vmatpush1.bf16.xpose.msra.mxu0 0
        %4592 = vmatprep.subr.bf16.mxu0 0
        %4593 = vmatpush1.bf16.xpose.msra.mxu0 0
        %4594 = vmatprep.subr.bf16.mxu0 0
        %4595 = vmatpush1.bf16.xpose.msra.mxu0 0
        %4596 = vmatprep.subr.bf16.mxu0 0
        %4597 = vmatpush1.bf16.xpose.msra.mxu0 0
        %4598 = vmatprep.mubr.bf16.mxu0 0
        %4599 = vmatmul.mubr.bf16.gmra.mrb[0].mxu0 %v4519
        %v4600 = vpop.f32.mrb[0].mxu0
        %v4601 = vadd.f32 %v500, %v4600
        %v4602 = vpop.f32.mrb[0].mxu0
        %v4603 = vpop.f32.mrb[0].mxu0
        %v4604 = vadd.f32 %v501, %v4603
        %v4605 = vpop.f32.mrb[0].mxu0
        %4606 = vmatprep.mubr.bf16.mxu0 0
        %4607 = vmatmul.mubr.bf16.gmra.mrb[0].mxu0 %v4522
        %v4608 = vpop.f32.mrb[0].mxu0
        %v4609 = vadd.f32 %v502, %v4608
        %v4610 = vpop.f32.mrb[0].mxu0
        %v4611 = vpop.f32.mrb[0].mxu0
        %v4612 = vadd.f32 %v503, %v4611
        %v4613 = vpop.f32.mrb[0].mxu0
        %4614 = vmatprep.mubr.bf16.mxu0 0
        %4615 = vmatmul.mubr.bf16.gmra.mrb[0].mxu0 %v4525
        %v4616 = vpop.f32.mrb[0].mxu0
        %v4617 = vadd.f32 %v504, %v4616
        %v4618 = vpop.f32.mrb[0].mxu0
        %v4619 = vpop.f32.mrb[0].mxu0
        %v4620 = vadd.f32 %v505, %v4619
        %v4621 = vpop.f32.mrb[0].mxu0
        %4622 = vmatprep.mubr.bf16.mxu0 0
        %4623 = vmatmul.mubr.bf16.gmra.mrb[0].mxu0 %v4528
        %v4624 = vpop.f32.mrb[0].mxu0
        %v4625 = vadd.f32 %v506, %v4624
        %v4626 = vpop.f32.mrb[0].mxu0
        %v4627 = vpop.f32.mrb[0].mxu0
        %v4628 = vadd.f32 %v507, %v4627
        %v4629 = vpop.f32.mrb[0].mxu0
        %4630 = vmatprep.mubr.bf16.mxu0 0
        %4631 = vmatmul.mubr.bf16.gmra.mrb[0].mxu0 %v4531
        %v4632 = vpop.f32.mrb[0].mxu0
        %v4633 = vadd.f32 %v508, %v4632
        %v4634 = vpop.f32.mrb[0].mxu0
        %v4635 = vpop.f32.mrb[0].mxu0
        %v4636 = vadd.f32 %v509, %v4635
        %v4637 = vpop.f32.mrb[0].mxu0
        %4638 = vmatprep.mubr.bf16.mxu0 0
        %4639 = vmatmul.mubr.bf16.gmra.mrb[0].mxu0 %v4534
        %v4640 = vpop.f32.mrb[0].mxu0
        %v4641 = vadd.f32 %v510, %v4640
        %v4642 = vpop.f32.mrb[0].mxu0
        %v4643 = vpop.f32.mrb[0].mxu0
        %v4644 = vadd.f32 %v511, %v4643
        %v4645 = vpop.f32.mrb[0].mxu0
        %4646 = vmatprep.mubr.bf16.mxu0 0
        %4647 = vmatmul.mubr.bf16.gmra.mrb[0].mxu0 %v4537
        %v4648 = vpop.f32.mrb[0].mxu0
        %v4649 = vadd.f32 %v512, %v4648
        %v4650 = vpop.f32.mrb[0].mxu0
        %v4651 = vpop.f32.mrb[0].mxu0
        %v4652 = vadd.f32 %v513, %v4651
        %v4653 = vpop.f32.mrb[0].mxu0
        %4654 = vmatprep.mubr.bf16.mxu0 0
        %4655 = vmatmul.mubr.bf16.gmra.mrb[0].mxu0 %v4540
        %v4656 = vpop.f32.mrb[0].mxu0
        %v4657 = vadd.f32 %v514, %v4656
        %v4658 = vpop.f32.mrb[0].mxu0
        %v4659 = vpop.f32.mrb[0].mxu0
        %v4660 = vadd.f32 %v515, %v4659
        %v4661 = vpop.f32.mrb[0].mxu0
        %4662 = vdwg.mxu0
        %4663 = vmax.xlane.f32.xlu0 %v4408
        %v4664 = vpop.xlane.xlu0 %4663
        %4665 = vmax.xlane.f32.xlu0 %v4411
        %v4666 = vpop.xlane.xlu0 %4665
        %4667 = vmax.xlane.f32.xlu0 %v4416
        %v4668 = vpop.xlane.xlu0 %4667
        %4669 = vmax.xlane.f32.xlu0 %v4419
        %v4670 = vpop.xlane.xlu0 %4669
        %4671 = vmax.xlane.f32.xlu0 %v4424
        %v4672 = vpop.xlane.xlu0 %4671
        %4673 = vmax.xlane.f32.xlu0 %v4427
        %v4674 = vpop.xlane.xlu0 %4673
        %4675 = vmax.xlane.f32.xlu0 %v4432
        %v4676 = vpop.xlane.xlu0 %4675
        %4677 = vmax.xlane.f32.xlu0 %v4435
        %v4678 = vpop.xlane.xlu0 %4677
        %4679 = vmax.xlane.f32.xlu0 %v4440
        %v4680 = vpop.xlane.xlu0 %4679
        %4681 = vmax.xlane.f32.xlu0 %v4443
        %v4682 = vpop.xlane.xlu0 %4681
        %4683 = vmax.xlane.f32.xlu0 %v4448
        %v4684 = vpop.xlane.xlu0 %4683
        %4685 = vmax.xlane.f32.xlu0 %v4451
        %v4686 = vpop.xlane.xlu0 %4685
        %4687 = vmax.xlane.f32.xlu0 %v4456
        %v4688 = vpop.xlane.xlu0 %4687
        %4689 = vmax.xlane.f32.xlu0 %v4459
        %v4690 = vpop.xlane.xlu0 %4689
        %4691 = vmax.xlane.f32.xlu0 %v4464
        %v4692 = vpop.xlane.xlu0 %4691
        %4693 = vmax.xlane.f32.xlu0 %v4467
        %v4694 = vpop.xlane.xlu0 %4693
        %4695 = vmax.xlane.f32.xlu0 %v4601
        %v4696 = vpop.xlane.xlu0 %4695
        %4697 = vmax.xlane.f32.xlu0 %v4604
        %v4698 = vpop.xlane.xlu0 %4697
        %4699 = vmax.xlane.f32.xlu0 %v4609
        %v4700 = vpop.xlane.xlu0 %4699
        %4701 = vmax.xlane.f32.xlu0 %v4612
        %v4702 = vpop.xlane.xlu0 %4701
        %4703 = vmax.xlane.f32.xlu0 %v4617
        %v4704 = vpop.xlane.xlu0 %4703
        %4705 = vmax.xlane.f32.xlu0 %v4620
        %v4706 = vpop.xlane.xlu0 %4705
        %4707 = vmax.xlane.f32.xlu0 %v4625
        %v4708 = vpop.xlane.xlu0 %4707
        %4709 = vmax.xlane.f32.xlu0 %v4628
        %v4710 = vpop.xlane.xlu0 %4709
        %4711 = vmax.xlane.f32.xlu0 %v4633
        %v4712 = vpop.xlane.xlu0 %4711
        %4713 = vmax.xlane.f32.xlu0 %v4636
        %v4714 = vpop.xlane.xlu0 %4713
        %4715 = vmax.xlane.f32.xlu0 %v4641
        %v4716 = vpop.xlane.xlu0 %4715
        %4717 = vmax.xlane.f32.xlu0 %v4644
        %v4718 = vpop.xlane.xlu0 %4717
        %4719 = vmax.xlane.f32.xlu0 %v4649
        %v4720 = vpop.xlane.xlu0 %4719
        %4721 = vmax.xlane.f32.xlu0 %v4652
        %v4722 = vpop.xlane.xlu0 %4721
        %4723 = vmax.xlane.f32.xlu0 %v4657
        %v4724 = vpop.xlane.xlu0 %4723
        %4725 = vmax.xlane.f32.xlu0 %v4660
        %v4726 = vpop.xlane.xlu0 %4725
        %v4727 = vsub.f32 %v4408, %v4664
        %v4728 = vsub.f32 %v4411, %v4666
        %v4729 = vsub.f32 %v4416, %v4668
        %v4730 = vsub.f32 %v4419, %v4670
        %v4731 = vsub.f32 %v4424, %v4672
        %v4732 = vsub.f32 %v4427, %v4674
        %v4733 = vsub.f32 %v4432, %v4676
        %v4734 = vsub.f32 %v4435, %v4678
        %v4735 = vsub.f32 %v4440, %v4680
        %v4736 = vsub.f32 %v4443, %v4682
        %v4737 = vsub.f32 %v4448, %v4684
        %v4738 = vsub.f32 %v4451, %v4686
        %v4739 = vsub.f32 %v4456, %v4688
        %v4740 = vsub.f32 %v4459, %v4690
        %v4741 = vsub.f32 %v4464, %v4692
        %v4742 = vsub.f32 %v4467, %v4694
        %v4743 = vsub.f32 %v4601, %v4696
        %v4744 = vsub.f32 %v4604, %v4698
        %v4745 = vsub.f32 %v4609, %v4700
        %v4746 = vsub.f32 %v4612, %v4702
        %v4747 = vsub.f32 %v4617, %v4704
        %v4748 = vsub.f32 %v4620, %v4706
        %v4749 = vsub.f32 %v4625, %v4708
        %v4750 = vsub.f32 %v4628, %v4710
        %v4751 = vsub.f32 %v4633, %v4712
        %v4752 = vsub.f32 %v4636, %v4714
        %v4753 = vsub.f32 %v4641, %v4716
        %v4754 = vsub.f32 %v4644, %v4718
        %v4755 = vsub.f32 %v4649, %v4720
        %v4756 = vsub.f32 %v4652, %v4722
        %v4757 = vsub.f32 %v4657, %v4724
        %v4758 = vsub.f32 %v4660, %v4726
        %v4759 = vmul.f32 %v4727, 1.442695
        %v4760 = vpow.pop %v4759
        %v4761 = vmul.f32 %v4728, 1.442695
        %v4762 = vpow.pop %v4761
        %v4763 = vmul.f32 %v4729, 1.442695
        %v4764 = vpow.pop %v4763
        %v4765 = vmul.f32 %v4730, 1.442695
        %v4766 = vpow.pop %v4765
        %v4767 = vmul.f32 %v4731, 1.442695
        %v4768 = vpow.pop %v4767
        %v4769 = vmul.f32 %v4732, 1.442695
        %v4770 = vpow.pop %v4769
        %v4771 = vmul.f32 %v4733, 1.442695
        %v4772 = vpow.pop %v4771
        %v4773 = vmul.f32 %v4734, 1.442695
        %v4774 = vpow.pop %v4773
        %v4775 = vmul.f32 %v4735, 1.442695
        %v4776 = vpow.pop %v4775
        %v4777 = vmul.f32 %v4736, 1.442695
        %v4778 = vpow.pop %v4777
        %v4779 = vmul.f32 %v4737, 1.442695
        %v4780 = vpow.pop %v4779
        %v4781 = vmul.f32 %v4738, 1.442695
        %v4782 = vpow.pop %v4781
        %v4783 = vmul.f32 %v4739, 1.442695
        %v4784 = vpow.pop %v4783
        %v4785 = vmul.f32 %v4740, 1.442695
        %v4786 = vpow.pop %v4785
        %v4787 = vmul.f32 %v4741, 1.442695
        %v4788 = vpow.pop %v4787
        %v4789 = vmul.f32 %v4742, 1.442695
        %v4790 = vpow.pop %v4789
        %v4791 = vmul.f32 %v4743, 1.442695
        %v4792 = vpow.pop %v4791
        %v4793 = vmul.f32 %v4744, 1.442695
        %v4794 = vpow.pop %v4793
        %v4795 = vmul.f32 %v4745, 1.442695
        %v4796 = vpow.pop %v4795
        %v4797 = vmul.f32 %v4746, 1.442695
        %v4798 = vpow.pop %v4797
        %v4799 = vmul.f32 %v4747, 1.442695
        %v4800 = vpow.pop %v4799
        %v4801 = vmul.f32 %v4748, 1.442695
        %v4802 = vpow.pop %v4801
        %v4803 = vmul.f32 %v4749, 1.442695
        %v4804 = vpow.pop %v4803
        %v4805 = vmul.f32 %v4750, 1.442695
        %v4806 = vpow.pop %v4805
        %v4807 = vmul.f32 %v4751, 1.442695
        %v4808 = vpow.pop %v4807
        %v4809 = vmul.f32 %v4752, 1.442695
        %v4810 = vpow.pop %v4809
        %v4811 = vmul.f32 %v4753, 1.442695
        %v4812 = vpow.pop %v4811
        %v4813 = vmul.f32 %v4754, 1.442695
        %v4814 = vpow.pop %v4813
        %v4815 = vmul.f32 %v4755, 1.442695
        %v4816 = vpow.pop %v4815
        %v4817 = vmul.f32 %v4756, 1.442695
        %v4818 = vpow.pop %v4817
        %v4819 = vmul.f32 %v4757, 1.442695
        %v4820 = vpow.pop %v4819
        %v4821 = vmul.f32 %v4758, 1.442695
        %v4822 = vpow.pop %v4821
        %4823 = vadd.xlane.f32.xlu0 %v4760
        %v4824 = vpop.xlane.xlu0 %4823
        %4825 = vadd.xlane.f32.xlu0 %v4762
        %v4826 = vpop.xlane.xlu0 %4825
        %4827 = vadd.xlane.f32.xlu0 %v4764
        %v4828 = vpop.xlane.xlu0 %4827
        %4829 = vadd.xlane.f32.xlu0 %v4766
        %v4830 = vpop.xlane.xlu0 %4829
        %4831 = vadd.xlane.f32.xlu0 %v4768
        %v4832 = vpop.xlane.xlu0 %4831
        %4833 = vadd.xlane.f32.xlu0 %v4770
        %v4834 = vpop.xlane.xlu0 %4833
        %4835 = vadd.xlane.f32.xlu0 %v4772
        %v4836 = vpop.xlane.xlu0 %4835
        %4837 = vadd.xlane.f32.xlu0 %v4774
        %v4838 = vpop.xlane.xlu0 %4837
        %4839 = vadd.xlane.f32.xlu0 %v4776
        %v4840 = vpop.xlane.xlu0 %4839
        %4841 = vadd.xlane.f32.xlu0 %v4778
        %v4842 = vpop.xlane.xlu0 %4841
        %4843 = vadd.xlane.f32.xlu0 %v4780
        %v4844 = vpop.xlane.xlu0 %4843
        %4845 = vadd.xlane.f32.xlu0 %v4782
        %v4846 = vpop.xlane.xlu0 %4845
        %4847 = vadd.xlane.f32.xlu0 %v4784
        %v4848 = vpop.xlane.xlu0 %4847
        %4849 = vadd.xlane.f32.xlu0 %v4786
        %v4850 = vpop.xlane.xlu0 %4849
        %4851 = vadd.xlane.f32.xlu0 %v4788
        %v4852 = vpop.xlane.xlu0 %4851
        %4853 = vadd.xlane.f32.xlu0 %v4790
        %v4854 = vpop.xlane.xlu0 %4853
        %4855 = vadd.xlane.f32.xlu0 %v4792
        %v4856 = vpop.xlane.xlu0 %4855
        %4857 = vadd.xlane.f32.xlu0 %v4794
        %v4858 = vpop.xlane.xlu0 %4857
        %4859 = vadd.xlane.f32.xlu0 %v4796
        %v4860 = vpop.xlane.xlu0 %4859
        %4861 = vadd.xlane.f32.xlu0 %v4798
        %v4862 = vpop.xlane.xlu0 %4861
        %4863 = vadd.xlane.f32.xlu0 %v4800
        %v4864 = vpop.xlane.xlu0 %4863
        %4865 = vadd.xlane.f32.xlu0 %v4802
        %v4866 = vpop.xlane.xlu0 %4865
        %4867 = vadd.xlane.f32.xlu0 %v4804
        %v4868 = vpop.xlane.xlu0 %4867
        %4869 = vadd.xlane.f32.xlu0 %v4806
        %v4870 = vpop.xlane.xlu0 %4869
        %4871 = vadd.xlane.f32.xlu0 %v4808
        %v4872 = vpop.xlane.xlu0 %4871
        %4873 = vadd.xlane.f32.xlu0 %v4810
        %v4874 = vpop.xlane.xlu0 %4873
        %4875 = vadd.xlane.f32.xlu0 %v4812
        %v4876 = vpop.xlane.xlu0 %4875
        %4877 = vadd.xlane.f32.xlu0 %v4814
        %v4878 = vpop.xlane.xlu0 %4877
        %4879 = vadd.xlane.f32.xlu0 %v4816
        %v4880 = vpop.xlane.xlu0 %4879
        %4881 = vadd.xlane.f32.xlu0 %v4818
        %v4882 = vpop.xlane.xlu0 %4881
        %4883 = vadd.xlane.f32.xlu0 %v4820
        %v4884 = vpop.xlane.xlu0 %4883
        %4885 = vadd.xlane.f32.xlu0 %v4822
        %v4886 = vpop.xlane.xlu0 %4885
        %v4887 = vrcp.pop %v4824
        %v4888 = vrcp.pop %v4826
        %v4889 = vrcp.pop %v4828
        %v4890 = vrcp.pop %v4830
        %v4891 = vrcp.pop %v4832
        %v4892 = vrcp.pop %v4834
        %v4893 = vrcp.pop %v4836
        %v4894 = vrcp.pop %v4838
        %v4895 = vrcp.pop %v4840
        %v4896 = vrcp.pop %v4842
        %v4897 = vrcp.pop %v4844
        %v4898 = vrcp.pop %v4846
        %v4899 = vrcp.pop %v4848
        %v4900 = vrcp.pop %v4850
        %v4901 = vrcp.pop %v4852
        %v4902 = vrcp.pop %v4854
        %v4903 = vrcp.pop %v4856
        %v4904 = vrcp.pop %v4858
        %v4905 = vrcp.pop %v4860
        %v4906 = vrcp.pop %v4862
        %v4907 = vrcp.pop %v4864
        %v4908 = vrcp.pop %v4866
        %v4909 = vrcp.pop %v4868
        %v4910 = vrcp.pop %v4870
        %v4911 = vrcp.pop %v4872
        %v4912 = vrcp.pop %v4874
        %v4913 = vrcp.pop %v4876
        %v4914 = vrcp.pop %v4878
        %v4915 = vrcp.pop %v4880
        %v4916 = vrcp.pop %v4882
        %v4917 = vrcp.pop %v4884
        %v4918 = vrcp.pop %v4886
        %v4919 = vmul.f32 %v4760, %v4887
        %v4920 = vmul.f32 %v4762, %v4888
        %v4921 = vmul.f32 %v4764, %v4889
        %v4922 = vmul.f32 %v4766, %v4890
        %v4923 = vmul.f32 %v4768, %v4891
        %v4924 = vmul.f32 %v4770, %v4892
        %v4925 = vmul.f32 %v4772, %v4893
        %v4926 = vmul.f32 %v4774, %v4894
        %v4927 = vmul.f32 %v4776, %v4895
        %v4928 = vmul.f32 %v4778, %v4896
        %v4929 = vmul.f32 %v4780, %v4897
        %v4930 = vmul.f32 %v4782, %v4898
        %v4931 = vmul.f32 %v4784, %v4899
        %v4932 = vmul.f32 %v4786, %v4900
        %v4933 = vmul.f32 %v4788, %v4901
        %v4934 = vmul.f32 %v4790, %v4902
        %v4935 = vmul.f32 %v4792, %v4903
        %v4936 = vmul.f32 %v4794, %v4904
        %v4937 = vmul.f32 %v4796, %v4905
        %v4938 = vmul.f32 %v4798, %v4906
        %v4939 = vmul.f32 %v4800, %v4907
        %v4940 = vmul.f32 %v4802, %v4908
        %v4941 = vmul.f32 %v4804, %v4909
        %v4942 = vmul.f32 %v4806, %v4910
        %v4943 = vmul.f32 %v4808, %v4911
        %v4944 = vmul.f32 %v4810, %v4912
        %v4945 = vmul.f32 %v4812, %v4913
        %v4946 = vmul.f32 %v4814, %v4914
        %v4947 = vmul.f32 %v4816, %v4915
        %v4948 = vmul.f32 %v4818, %v4916
        %v4949 = vmul.f32 %v4820, %v4917
        %v4950 = vmul.f32 %v4822, %v4918
        %v4951 = vpack.c.bf16 %v4920, %v4919
        %v4952 = vpack.c.bf16 %v4922, %v4921
        %v4953 = vpack.c.bf16 %v4924, %v4923
        %v4954 = vpack.c.bf16 %v4926, %v4925
        %v4955 = vpack.c.bf16 %v4928, %v4927
        %v4956 = vpack.c.bf16 %v4930, %v4929
        %v4957 = vpack.c.bf16 %v4932, %v4931
        %v4958 = vpack.c.bf16 %v4934, %v4933
        %v4959 = vpack.c.bf16 %v4936, %v4935
        %v4960 = vpack.c.bf16 %v4938, %v4937
        %v4961 = vpack.c.bf16 %v4940, %v4939
        %v4962 = vpack.c.bf16 %v4942, %v4941
        %v4963 = vpack.c.bf16 %v4944, %v4943
        %v4964 = vpack.c.bf16 %v4946, %v4945
        %v4965 = vpack.c.bf16 %v4948, %v4947
        %v4966 = vpack.c.bf16 %v4950, %v4949
        %4967 = vmatprep.subr.bf16.mxu0 0
        %4968 = vmatpush1.bf16.msra.mxu0 %v4317
        %4969 = vmatprep.subr.bf16.mxu0 0
        %4970 = vmatpush1.bf16.msra.mxu0 %v4318
        %4971 = vmatprep.subr.bf16.mxu0 0
        %4972 = vmatpush1.bf16.msra.mxu0 %v4319
        %4973 = vmatprep.subr.bf16.mxu0 0
        %4974 = vmatpush1.bf16.msra.mxu0 %v4320
        %4975 = vmatprep.subr.bf16.mxu0 0
        %4976 = vmatpush1.bf16.msra.mxu0 %v4321
        %4977 = vmatprep.subr.bf16.mxu0 0
        %4978 = vmatpush1.bf16.msra.mxu0 %v4322
        %4979 = vmatprep.subr.bf16.mxu0 0
        %4980 = vmatpush1.bf16.msra.mxu0 %v4323
        %4981 = vmatprep.subr.bf16.mxu0 0
        %4982 = vmatpush1.bf16.msra.mxu0 %v4324
        %4983 = vmatprep.subr.bf16.mxu0 0
        %4984 = vmatpush1.bf16.msra.mxu0 0
        %4985 = vmatprep.subr.bf16.mxu0 0
        %4986 = vmatpush1.bf16.msra.mxu0 0
        %4987 = vmatprep.subr.bf16.mxu0 0
        %4988 = vmatpush1.bf16.msra.mxu0 0
        %4989 = vmatprep.subr.bf16.mxu0 0
        %4990 = vmatpush1.bf16.msra.mxu0 0
        %4991 = vmatprep.subr.bf16.mxu0 0
        %4992 = vmatpush1.bf16.msra.mxu0 0
        %4993 = vmatprep.subr.bf16.mxu0 0
        %4994 = vmatpush1.bf16.msra.mxu0 0
        %4995 = vmatprep.subr.bf16.mxu0 0
        %4996 = vmatpush1.bf16.msra.mxu0 0
        %4997 = vmatprep.subr.bf16.mxu0 0
        %4998 = vmatpush1.bf16.msra.mxu0 0
        %4999 = vmatprep.mubr.bf16.mxu0 0
        %5000 = vmatmul.mubr.bf16.gmra.mrb[0].mxu0 %v4951
        %v5001 = vpop.f32.mrb[0].mxu0
        %v5002 = vadd.f32 0.0, %v5001
        %v5003 = vpop.f32.mrb[0].mxu0
        %v5004 = vpop.f32.mrb[0].mxu0
        %v5005 = vadd.f32 0.0, %v5004
        %v5006 = vpop.f32.mrb[0].mxu0
        %5007 = vmatprep.mubr.bf16.mxu0 0
        %5008 = vmatmul.mubr.bf16.gmra.mrb[0].mxu0 %v4952
        %v5009 = vpop.f32.mrb[0].mxu0
        %v5010 = vadd.f32 0.0, %v5009
        %v5011 = vpop.f32.mrb[0].mxu0
        %v5012 = vpop.f32.mrb[0].mxu0
        %v5013 = vadd.f32 0.0, %v5012
        %v5014 = vpop.f32.mrb[0].mxu0
        %5015 = vmatprep.mubr.bf16.mxu0 0
        %5016 = vmatmul.mubr.bf16.gmra.mrb[0].mxu0 %v4953
        %v5017 = vpop.f32.mrb[0].mxu0
        %v5018 = vadd.f32 0.0, %v5017
        %v5019 = vpop.f32.mrb[0].mxu0
        %v5020 = vpop.f32.mrb[0].mxu0
        %v5021 = vadd.f32 0.0, %v5020
        %v5022 = vpop.f32.mrb[0].mxu0
        %5023 = vmatprep.mubr.bf16.mxu0 0
        %5024 = vmatmul.mubr.bf16.gmra.mrb[0].mxu0 %v4954
        %v5025 = vpop.f32.mrb[0].mxu0
        %v5026 = vadd.f32 0.0, %v5025
        %v5027 = vpop.f32.mrb[0].mxu0
        %v5028 = vpop.f32.mrb[0].mxu0
        %v5029 = vadd.f32 0.0, %v5028
        %v5030 = vpop.f32.mrb[0].mxu0
        %5031 = vmatprep.mubr.bf16.mxu0 0
        %5032 = vmatmul.mubr.bf16.gmra.mrb[0].mxu0 %v4955
        %v5033 = vpop.f32.mrb[0].mxu0
        %v5034 = vadd.f32 0.0, %v5033
        %v5035 = vpop.f32.mrb[0].mxu0
        %v5036 = vpop.f32.mrb[0].mxu0
        %v5037 = vadd.f32 0.0, %v5036
        %v5038 = vpop.f32.mrb[0].mxu0
        %5039 = vmatprep.mubr.bf16.mxu0 0
        %5040 = vmatmul.mubr.bf16.gmra.mrb[0].mxu0 %v4956
        %v5041 = vpop.f32.mrb[0].mxu0
        %v5042 = vadd.f32 0.0, %v5041
        %v5043 = vpop.f32.mrb[0].mxu0
        %v5044 = vpop.f32.mrb[0].mxu0
        %v5045 = vadd.f32 0.0, %v5044
        %v5046 = vpop.f32.mrb[0].mxu0
        %5047 = vmatprep.mubr.bf16.mxu0 0
        %5048 = vmatmul.mubr.bf16.gmra.mrb[0].mxu0 %v4957
        %v5049 = vpop.f32.mrb[0].mxu0
        %v5050 = vadd.f32 0.0, %v5049
        %v5051 = vpop.f32.mrb[0].mxu0
        %v5052 = vpop.f32.mrb[0].mxu0
        %v5053 = vadd.f32 0.0, %v5052
        %v5054 = vpop.f32.mrb[0].mxu0
        %5055 = vmatprep.mubr.bf16.mxu0 0
        %5056 = vmatmul.mubr.bf16.gmra.mrb[0].mxu0 %v4958
        %v5057 = vpop.f32.mrb[0].mxu0
        %v5058 = vadd.f32 0.0, %v5057
        %v5059 = vpop.f32.mrb[0].mxu0
        %v5060 = vpop.f32.mrb[0].mxu0
        %v5061 = vadd.f32 0.0, %v5060
        %v5062 = vpop.f32.mrb[0].mxu0
        %5063 = vdwg.mxu0
        %5072 = vrot.lane.b32.xlu0 %v4317, 64
        %v5073 = vpop.permute.xlu0 %5072
        %5074 = vrot.lane.b32.xlu0 %v4318, 64
        %v5075 = vpop.permute.xlu0 %5074
        %5076 = vrot.lane.b32.xlu0 %v4319, 64
        %v5077 = vpop.permute.xlu0 %5076
        %5078 = vrot.lane.b32.xlu0 %v4320, 64
        %v5079 = vpop.permute.xlu0 %5078
        %5080 = vrot.lane.b32.xlu0 %v4321, 64
        %v5081 = vpop.permute.xlu0 %5080
        %5082 = vrot.lane.b32.xlu0 %v4322, 64
        %v5083 = vpop.permute.xlu0 %5082
        %5084 = vrot.lane.b32.xlu0 %v4323, 64
        %v5085 = vpop.permute.xlu0 %5084
        %5086 = vrot.lane.b32.xlu0 %v4324, 64
        %v5087 = vpop.permute.xlu0 %5086
        %5096 = vmatprep.subr.bf16.mxu0 0
        %5097 = vmatpush1.bf16.msra.mxu0 %v5073
        %5098 = vmatprep.subr.bf16.mxu0 0
        %5099 = vmatpush1.bf16.msra.mxu0 %v5075
        %5100 = vmatprep.subr.bf16.mxu0 0
        %5101 = vmatpush1.bf16.msra.mxu0 %v5077
        %5102 = vmatprep.subr.bf16.mxu0 0
        %5103 = vmatpush1.bf16.msra.mxu0 %v5079
        %5104 = vmatprep.subr.bf16.mxu0 0
        %5105 = vmatpush1.bf16.msra.mxu0 %v5081
        %5106 = vmatprep.subr.bf16.mxu0 0
        %5107 = vmatpush1.bf16.msra.mxu0 %v5083
        %5108 = vmatprep.subr.bf16.mxu0 0
        %5109 = vmatpush1.bf16.msra.mxu0 %v5085
        %5110 = vmatprep.subr.bf16.mxu0 0
        %5111 = vmatpush1.bf16.msra.mxu0 %v5087
        %5112 = vmatprep.subr.bf16.mxu0 0
        %5113 = vmatpush1.bf16.msra.mxu0 0
        %5114 = vmatprep.subr.bf16.mxu0 0
        %5115 = vmatpush1.bf16.msra.mxu0 0
        %5116 = vmatprep.subr.bf16.mxu0 0
        %5117 = vmatpush1.bf16.msra.mxu0 0
        %5118 = vmatprep.subr.bf16.mxu0 0
        %5119 = vmatpush1.bf16.msra.mxu0 0
        %5120 = vmatprep.subr.bf16.mxu0 0
        %5121 = vmatpush1.bf16.msra.mxu0 0
        %5122 = vmatprep.subr.bf16.mxu0 0
        %5123 = vmatpush1.bf16.msra.mxu0 0
        %5124 = vmatprep.subr.bf16.mxu0 0
        %5125 = vmatpush1.bf16.msra.mxu0 0
        %5126 = vmatprep.subr.bf16.mxu0 0
        %5127 = vmatpush1.bf16.msra.mxu0 0
        %5128 = vmatprep.mubr.bf16.mxu0 0
        %5129 = vmatmul.mubr.bf16.gmra.mrb[0].mxu0 %v4959
        %v5130 = vpop.f32.mrb[0].mxu0
        %v5131 = vadd.f32 0.0, %v5130
        %v5132 = vpop.f32.mrb[0].mxu0
        %v5133 = vpop.f32.mrb[0].mxu0
        %v5134 = vadd.f32 0.0, %v5133
        %v5135 = vpop.f32.mrb[0].mxu0
        %5136 = vmatprep.mubr.bf16.mxu0 0
        %5137 = vmatmul.mubr.bf16.gmra.mrb[0].mxu0 %v4960
        %v5138 = vpop.f32.mrb[0].mxu0
        %v5139 = vadd.f32 0.0, %v5138
        %v5140 = vpop.f32.mrb[0].mxu0
        %v5141 = vpop.f32.mrb[0].mxu0
        %v5142 = vadd.f32 0.0, %v5141
        %v5143 = vpop.f32.mrb[0].mxu0
        %5144 = vmatprep.mubr.bf16.mxu0 0
        %5145 = vmatmul.mubr.bf16.gmra.mrb[0].mxu0 %v4961
        %v5146 = vpop.f32.mrb[0].mxu0
        %v5147 = vadd.f32 0.0, %v5146
        %v5148 = vpop.f32.mrb[0].mxu0
        %v5149 = vpop.f32.mrb[0].mxu0
        %v5150 = vadd.f32 0.0, %v5149
        %v5151 = vpop.f32.mrb[0].mxu0
        %5152 = vmatprep.mubr.bf16.mxu0 0
        %5153 = vmatmul.mubr.bf16.gmra.mrb[0].mxu0 %v4962
        %v5154 = vpop.f32.mrb[0].mxu0
        %v5155 = vadd.f32 0.0, %v5154
        %v5156 = vpop.f32.mrb[0].mxu0
        %v5157 = vpop.f32.mrb[0].mxu0
        %v5158 = vadd.f32 0.0, %v5157
        %v5159 = vpop.f32.mrb[0].mxu0
        %5160 = vmatprep.mubr.bf16.mxu0 0
        %5161 = vmatmul.mubr.bf16.gmra.mrb[0].mxu0 %v4963
        %v5162 = vpop.f32.mrb[0].mxu0
        %v5163 = vadd.f32 0.0, %v5162
        %v5164 = vpop.f32.mrb[0].mxu0
        %v5165 = vpop.f32.mrb[0].mxu0
        %v5166 = vadd.f32 0.0, %v5165
        %v5167 = vpop.f32.mrb[0].mxu0
        %5168 = vmatprep.mubr.bf16.mxu0 0
        %5169 = vmatmul.mubr.bf16.gmra.mrb[0].mxu0 %v4964
        %v5170 = vpop.f32.mrb[0].mxu0
        %v5171 = vadd.f32 0.0, %v5170
        %v5172 = vpop.f32.mrb[0].mxu0
        %v5173 = vpop.f32.mrb[0].mxu0
        %v5174 = vadd.f32 0.0, %v5173
        %v5175 = vpop.f32.mrb[0].mxu0
        %5176 = vmatprep.mubr.bf16.mxu0 0
        %5177 = vmatmul.mubr.bf16.gmra.mrb[0].mxu0 %v4965
        %v5178 = vpop.f32.mrb[0].mxu0
        %v5179 = vadd.f32 0.0, %v5178
        %v5180 = vpop.f32.mrb[0].mxu0
        %v5181 = vpop.f32.mrb[0].mxu0
        %v5182 = vadd.f32 0.0, %v5181
        %v5183 = vpop.f32.mrb[0].mxu0
        %5184 = vmatprep.mubr.bf16.mxu0 0
        %5185 = vmatmul.mubr.bf16.gmra.mrb[0].mxu0 %v4966
        %v5186 = vpop.f32.mrb[0].mxu0
        %v5187 = vadd.f32 0.0, %v5186
        %v5188 = vpop.f32.mrb[0].mxu0
        %v5189 = vpop.f32.mrb[0].mxu0
        %v5190 = vadd.f32 0.0, %v5189
        %v5191 = vpop.f32.mrb[0].mxu0
        %5192 = vdwg.mxu0
        %5209 = vrot.lane.b32.xlu0 %v5131, 64
        %v5210 = vpop.permute.xlu0 %5209
        %5211 = vrot.lane.b32.xlu0 %v5134, 64
        %v5212 = vpop.permute.xlu0 %5211
        %5213 = vrot.lane.b32.xlu0 %v5139, 64
        %v5214 = vpop.permute.xlu0 %5213
        %5215 = vrot.lane.b32.xlu0 %v5142, 64
        %v5216 = vpop.permute.xlu0 %5215
        %5217 = vrot.lane.b32.xlu0 %v5147, 64
        %v5218 = vpop.permute.xlu0 %5217
        %5219 = vrot.lane.b32.xlu0 %v5150, 64
        %v5220 = vpop.permute.xlu0 %5219
        %5221 = vrot.lane.b32.xlu0 %v5155, 64
        %v5222 = vpop.permute.xlu0 %5221
        %5223 = vrot.lane.b32.xlu0 %v5158, 64
        %v5224 = vpop.permute.xlu0 %5223
        %5225 = vrot.lane.b32.xlu0 %v5163, 64
        %v5226 = vpop.permute.xlu0 %5225
        %5227 = vrot.lane.b32.xlu0 %v5166, 64
        %v5228 = vpop.permute.xlu0 %5227
        %5229 = vrot.lane.b32.xlu0 %v5171, 64
        %v5230 = vpop.permute.xlu0 %5229
        %5231 = vrot.lane.b32.xlu0 %v5174, 64
        %v5232 = vpop.permute.xlu0 %5231
        %5233 = vrot.lane.b32.xlu0 %v5179, 64
        %v5234 = vpop.permute.xlu0 %5233
        %5235 = vrot.lane.b32.xlu0 %v5182, 64
        %v5236 = vpop.permute.xlu0 %5235
        %5237 = vrot.lane.b32.xlu0 %v5187, 64
        %v5238 = vpop.permute.xlu0 %5237
        %5239 = vrot.lane.b32.xlu0 %v5190, 64
        %v5240 = vpop.permute.xlu0 %5239
        %v5257 = vsel %vm716, %v5002, %v5210
        %v5258 = vsel %vm716, %v5005, %v5212
        %v5259 = vsel %vm716, %v5010, %v5214
        %v5260 = vsel %vm716, %v5013, %v5216
        %v5261 = vsel %vm716, %v5018, %v5218
        %v5262 = vsel %vm716, %v5021, %v5220
        %v5263 = vsel %vm716, %v5026, %v5222
        %v5264 = vsel %vm716, %v5029, %v5224
        %v5265 = vsel %vm716, %v5034, %v5226
        %v5266 = vsel %vm716, %v5037, %v5228
        %v5267 = vsel %vm716, %v5042, %v5230
        %v5268 = vsel %vm716, %v5045, %v5232
        %v5269 = vsel %vm716, %v5050, %v5234
        %v5270 = vsel %vm716, %v5053, %v5236
        %v5271 = vsel %vm716, %v5058, %v5238
        %v5272 = vsel %vm716, %v5061, %v5240
        %v5273 = vpack.c.bf16 %v5258, %v5257
        %v5274 = vpack.c.bf16 %v5260, %v5259
        %v5275 = vpack.c.bf16 %v5262, %v5261
        %v5276 = vpack.c.bf16 %v5264, %v5263
        %v5277 = vpack.c.bf16 %v5266, %v5265
        %v5278 = vpack.c.bf16 %v5268, %v5267
        %v5279 = vpack.c.bf16 %v5270, %v5269
        %v5280 = vpack.c.bf16 %v5272, %v5271
        %s5281 = scalar_lea.vmem %s8, 64
        %v5282 = vld [vmem:[%s5281] sm:$0xf]
        %v5283 = vld [vmem:[%s5281 + $0x4] sm:$0xf]
        %v5284 = vld [vmem:[%s5281 + $0x8] sm:$0xf]
        %v5285 = vld [vmem:[%s5281 + $0xc] sm:$0xf]
        %v5286 = vld [vmem:[%s5281 + $0x10] sm:$0xf]
        %v5287 = vld [vmem:[%s5281 + $0x14] sm:$0xf]
        %v5288 = vld [vmem:[%s5281 + $0x18] sm:$0xf]
        %v5289 = vld [vmem:[%s5281 + $0x1c] sm:$0xf]
        %v5290 = vld [vmem:[%s5281 + $0x20] sm:$0xf]
        %v5291 = vld [vmem:[%s5281 + $0x24] sm:$0xf]
        %v5292 = vld [vmem:[%s5281 + $0x28] sm:$0xf]
        %v5293 = vld [vmem:[%s5281 + $0x2c] sm:$0xf]
        %v5294 = vld [vmem:[%s5281 + $0x30] sm:$0xf]
        %v5295 = vld [vmem:[%s5281 + $0x34] sm:$0xf]
        %v5296 = vld [vmem:[%s5281 + $0x38] sm:$0xf]
        %v5297 = vld [vmem:[%s5281 + $0x3c] sm:$0xf]
        %v5314 = vunpack.c.l.b16 %v5282
        %v5315 = vunpack.c.l.b16 %v5283
        %v5316 = vunpack.c.l.b16 %v5284
        %v5317 = vunpack.c.l.b16 %v5285
        %v5318 = vunpack.c.l.b16 %v5286
        %v5319 = vunpack.c.l.b16 %v5287
        %v5320 = vunpack.c.l.b16 %v5288
        %v5321 = vunpack.c.l.b16 %v5289
        %v5322 = vunpack.c.l.b16 %v5290
        %v5323 = vunpack.c.l.b16 %v5291
        %v5324 = vunpack.c.l.b16 %v5292
        %v5325 = vunpack.c.l.b16 %v5293
        %v5326 = vunpack.c.l.b16 %v5294
        %v5327 = vunpack.c.l.b16 %v5295
        %v5328 = vunpack.c.l.b16 %v5296
        %v5329 = vunpack.c.l.b16 %v5297
        %v5330 = vpack.c.b16 %v5315, %v5314
        %v5331 = vpack.c.b16 %v5317, %v5316
        %v5332 = vpack.c.b16 %v5319, %v5318
        %v5333 = vpack.c.b16 %v5321, %v5320
        %v5334 = vpack.c.b16 %v5323, %v5322
        %v5335 = vpack.c.b16 %v5325, %v5324
        %v5336 = vpack.c.b16 %v5327, %v5326
        %v5337 = vpack.c.b16 %v5329, %v5328
        %5346 = vmatprep.subr.bf16.mxu0 0
        %5347 = vmatpush1.bf16.msra.mxu0 %v5330
        %5348 = vmatprep.subr.bf16.mxu0 0
        %5349 = vmatpush1.bf16.msra.mxu0 %v5331
        %5350 = vmatprep.subr.bf16.mxu0 0
        %5351 = vmatpush1.bf16.msra.mxu0 %v5332
        %5352 = vmatprep.subr.bf16.mxu0 0
        %5353 = vmatpush1.bf16.msra.mxu0 %v5333
        %5354 = vmatprep.subr.bf16.mxu0 0
        %5355 = vmatpush1.bf16.msra.mxu0 %v5334
        %5356 = vmatprep.subr.bf16.mxu0 0
        %5357 = vmatpush1.bf16.msra.mxu0 %v5335
        %5358 = vmatprep.subr.bf16.mxu0 0
        %5359 = vmatpush1.bf16.msra.mxu0 %v5336
        %5360 = vmatprep.subr.bf16.mxu0 0
        %5361 = vmatpush1.bf16.msra.mxu0 %v5337
        %5362 = vmatprep.subr.bf16.mxu0 0
        %5363 = vmatpush1.bf16.msra.mxu0 0
        %5364 = vmatprep.subr.bf16.mxu0 0
        %5365 = vmatpush1.bf16.msra.mxu0 0
        %5366 = vmatprep.subr.bf16.mxu0 0
        %5367 = vmatpush1.bf16.msra.mxu0 0
        %5368 = vmatprep.subr.bf16.mxu0 0
        %5369 = vmatpush1.bf16.msra.mxu0 0
        %5370 = vmatprep.subr.bf16.mxu0 0
        %5371 = vmatpush1.bf16.msra.mxu0 0
        %5372 = vmatprep.subr.bf16.mxu0 0
        %5373 = vmatpush1.bf16.msra.mxu0 0
        %5374 = vmatprep.subr.bf16.mxu0 0
        %5375 = vmatpush1.bf16.msra.mxu0 0
        %5376 = vmatprep.subr.bf16.mxu0 0
        %5377 = vmatpush1.bf16.msra.mxu0 0
        %5378 = vmatprep.mubr.bf16.mxu0 0
        %5379 = vmatmul.mubr.bf16.gmra.mrb[0].mxu0 %v5273
        %v5380 = vpop.f32.mrb[0].mxu0
        %v5381 = vadd.f32 0.0, %v5380
        %v5382 = vpop.f32.mrb[0].mxu0
        %v5383 = vpop.f32.mrb[0].mxu0
        %v5384 = vadd.f32 0.0, %v5383
        %v5385 = vpop.f32.mrb[0].mxu0
        %5386 = vmatprep.mubr.bf16.mxu0 0
        %5387 = vmatmul.mubr.bf16.gmra.mrb[0].mxu0 %v5274
        %v5388 = vpop.f32.mrb[0].mxu0
        %v5389 = vadd.f32 0.0, %v5388
        %v5390 = vpop.f32.mrb[0].mxu0
        %v5391 = vpop.f32.mrb[0].mxu0
        %v5392 = vadd.f32 0.0, %v5391
        %v5393 = vpop.f32.mrb[0].mxu0
        %5394 = vmatprep.mubr.bf16.mxu0 0
        %5395 = vmatmul.mubr.bf16.gmra.mrb[0].mxu0 %v5275
        %v5396 = vpop.f32.mrb[0].mxu0
        %v5397 = vadd.f32 0.0, %v5396
        %v5398 = vpop.f32.mrb[0].mxu0
        %v5399 = vpop.f32.mrb[0].mxu0
        %v5400 = vadd.f32 0.0, %v5399
        %v5401 = vpop.f32.mrb[0].mxu0
        %5402 = vmatprep.mubr.bf16.mxu0 0
        %5403 = vmatmul.mubr.bf16.gmra.mrb[0].mxu0 %v5276
        %v5404 = vpop.f32.mrb[0].mxu0
        %v5405 = vadd.f32 0.0, %v5404
        %v5406 = vpop.f32.mrb[0].mxu0
        %v5407 = vpop.f32.mrb[0].mxu0
        %v5408 = vadd.f32 0.0, %v5407
        %v5409 = vpop.f32.mrb[0].mxu0
        %5410 = vmatprep.mubr.bf16.mxu0 0
        %5411 = vmatmul.mubr.bf16.gmra.mrb[0].mxu0 %v5277
        %v5412 = vpop.f32.mrb[0].mxu0
        %v5413 = vadd.f32 0.0, %v5412
        %v5414 = vpop.f32.mrb[0].mxu0
        %v5415 = vpop.f32.mrb[0].mxu0
        %v5416 = vadd.f32 0.0, %v5415
        %v5417 = vpop.f32.mrb[0].mxu0
        %5418 = vmatprep.mubr.bf16.mxu0 0
        %5419 = vmatmul.mubr.bf16.gmra.mrb[0].mxu0 %v5278
        %v5420 = vpop.f32.mrb[0].mxu0
        %v5421 = vadd.f32 0.0, %v5420
        %v5422 = vpop.f32.mrb[0].mxu0
        %v5423 = vpop.f32.mrb[0].mxu0
        %v5424 = vadd.f32 0.0, %v5423
        %v5425 = vpop.f32.mrb[0].mxu0
        %5426 = vmatprep.mubr.bf16.mxu0 0
        %5427 = vmatmul.mubr.bf16.gmra.mrb[0].mxu0 %v5279
        %v5428 = vpop.f32.mrb[0].mxu0
        %v5429 = vadd.f32 0.0, %v5428
        %v5430 = vpop.f32.mrb[0].mxu0
        %v5431 = vpop.f32.mrb[0].mxu0
        %v5432 = vadd.f32 0.0, %v5431
        %v5433 = vpop.f32.mrb[0].mxu0
        %5434 = vmatprep.mubr.bf16.mxu0 0
        %5435 = vmatmul.mubr.bf16.gmra.mrb[0].mxu0 %v5280
        %v5436 = vpop.f32.mrb[0].mxu0
        %v5437 = vadd.f32 0.0, %v5436
        %v5438 = vpop.f32.mrb[0].mxu0
        %v5439 = vpop.f32.mrb[0].mxu0
        %v5440 = vadd.f32 0.0, %v5439
        %v5441 = vpop.f32.mrb[0].mxu0
        %5442 = vdwg.mxu0
        %v5443 = vadd.f32 %v3638, %v5381
        %v5444 = vadd.f32 %v3639, %v5384
        %v5445 = vadd.f32 %v3640, %v5389
        %v5446 = vadd.f32 %v3641, %v5392
        %v5447 = vadd.f32 %v3642, %v5397
        %v5448 = vadd.f32 %v3643, %v5400
        %v5449 = vadd.f32 %v3644, %v5405
        %v5450 = vadd.f32 %v3645, %v5408
        %v5451 = vadd.f32 %v3646, %v5413
        %v5452 = vadd.f32 %v3647, %v5416
        %v5453 = vadd.f32 %v3648, %v5421
        %v5454 = vadd.f32 %v3649, %v5424
        %v5455 = vadd.f32 %v3650, %v5429
        %v5456 = vadd.f32 %v3651, %v5432
        %v5457 = vadd.f32 %v3652, %v5437
        %v5458 = vadd.f32 %v3653, %v5440
        %v5459 = vlaneseq
        %v5460 = vshrl.u32 %v5459, 7
        %v5461 = vsub.s32 4, %v5460
        %v5462 = vrot.slane %v3671, %v5461
        %v5463 = vadd.f32 %v5443, %v5462
        %v5464 = vadd.f32 %v5444, %v5462
        %v5465 = vadd.f32 %v5445, %v5462
        %v5466 = vadd.f32 %v5446, %v5462
        %v5467 = vadd.f32 %v5447, %v5462
        %v5468 = vadd.f32 %v5448, %v5462
        %v5469 = vadd.f32 %v5449, %v5462
        %v5470 = vadd.f32 %v5450, %v5462
        %v5471 = vadd.f32 %v5451, %v5462
        %v5472 = vadd.f32 %v5452, %v5462
        %v5473 = vadd.f32 %v5453, %v5462
        %v5474 = vadd.f32 %v5454, %v5462
        %v5475 = vadd.f32 %v5455, %v5462
        %v5476 = vadd.f32 %v5456, %v5462
        %v5477 = vadd.f32 %v5457, %v5462
        %v5478 = vadd.f32 %v5458, %v5462
        %5479 = vadd.xlane.f32.xlu0 %v5463
        %v5480 = vpop.xlane.xlu0 %5479
        %5481 = vadd.xlane.f32.xlu0 %v5464
        %v5482 = vpop.xlane.xlu0 %5481
        %5483 = vadd.xlane.f32.xlu0 %v5465
        %v5484 = vpop.xlane.xlu0 %5483
        %5485 = vadd.xlane.f32.xlu0 %v5466
        %v5486 = vpop.xlane.xlu0 %5485
        %5487 = vadd.xlane.f32.xlu0 %v5467
        %v5488 = vpop.xlane.xlu0 %5487
        %5489 = vadd.xlane.f32.xlu0 %v5468
        %v5490 = vpop.xlane.xlu0 %5489
        %5491 = vadd.xlane.f32.xlu0 %v5469
        %v5492 = vpop.xlane.xlu0 %5491
        %5493 = vadd.xlane.f32.xlu0 %v5470
        %v5494 = vpop.xlane.xlu0 %5493
        %5495 = vadd.xlane.f32.xlu0 %v5471
        %v5496 = vpop.xlane.xlu0 %5495
        %5497 = vadd.xlane.f32.xlu0 %v5472
        %v5498 = vpop.xlane.xlu0 %5497
        %5499 = vadd.xlane.f32.xlu0 %v5473
        %v5500 = vpop.xlane.xlu0 %5499
        %5501 = vadd.xlane.f32.xlu0 %v5474
        %v5502 = vpop.xlane.xlu0 %5501
        %5503 = vadd.xlane.f32.xlu0 %v5475
        %v5504 = vpop.xlane.xlu0 %5503
        %5505 = vadd.xlane.f32.xlu0 %v5476
        %v5506 = vpop.xlane.xlu0 %5505
        %5507 = vadd.xlane.f32.xlu0 %v5477
        %v5508 = vpop.xlane.xlu0 %5507
        %5509 = vadd.xlane.f32.xlu0 %v5478
        %v5510 = vpop.xlane.xlu0 %5509
        %v5511 = vmul.f32 %v5480, %v871
        %v5512 = vmul.f32 %v5482, %v871
        %v5513 = vmul.f32 %v5484, %v871
        %v5514 = vmul.f32 %v5486, %v871
        %v5515 = vmul.f32 %v5488, %v871
        %v5516 = vmul.f32 %v5490, %v871
        %v5517 = vmul.f32 %v5492, %v871
        %v5518 = vmul.f32 %v5494, %v871
        %v5519 = vmul.f32 %v5496, %v871
        %v5520 = vmul.f32 %v5498, %v871
        %v5521 = vmul.f32 %v5500, %v871
        %v5522 = vmul.f32 %v5502, %v871
        %v5523 = vmul.f32 %v5504, %v871
        %v5524 = vmul.f32 %v5506, %v871
        %v5525 = vmul.f32 %v5508, %v871
        %v5526 = vmul.f32 %v5510, %v871
        %v5527 = vsub.f32 %v5463, %v5511
        %v5528 = vsub.f32 %v5464, %v5512
        %v5529 = vsub.f32 %v5465, %v5513
        %v5530 = vsub.f32 %v5466, %v5514
        %v5531 = vsub.f32 %v5467, %v5515
        %v5532 = vsub.f32 %v5468, %v5516
        %v5533 = vsub.f32 %v5469, %v5517
        %v5534 = vsub.f32 %v5470, %v5518
        %v5535 = vsub.f32 %v5471, %v5519
        %v5536 = vsub.f32 %v5472, %v5520
        %v5537 = vsub.f32 %v5473, %v5521
        %v5538 = vsub.f32 %v5474, %v5522
        %v5539 = vsub.f32 %v5475, %v5523
        %v5540 = vsub.f32 %v5476, %v5524
        %v5541 = vsub.f32 %v5477, %v5525
        %v5542 = vsub.f32 %v5478, %v5526
        %v5543 = vmul.f32 %v5527, %v5527
        %v5544 = vmul.f32 %v5528, %v5528
        %v5545 = vmul.f32 %v5529, %v5529
        %v5546 = vmul.f32 %v5530, %v5530
        %v5547 = vmul.f32 %v5531, %v5531
        %v5548 = vmul.f32 %v5532, %v5532
        %v5549 = vmul.f32 %v5533, %v5533
        %v5550 = vmul.f32 %v5534, %v5534
        %v5551 = vmul.f32 %v5535, %v5535
        %v5552 = vmul.f32 %v5536, %v5536
        %v5553 = vmul.f32 %v5537, %v5537
        %v5554 = vmul.f32 %v5538, %v5538
        %v5555 = vmul.f32 %v5539, %v5539
        %v5556 = vmul.f32 %v5540, %v5540
        %v5557 = vmul.f32 %v5541, %v5541
        %v5558 = vmul.f32 %v5542, %v5542
        %5559 = vadd.xlane.f32.xlu0 %v5543
        %v5560 = vpop.xlane.xlu0 %5559
        %5561 = vadd.xlane.f32.xlu0 %v5544
        %v5562 = vpop.xlane.xlu0 %5561
        %5563 = vadd.xlane.f32.xlu0 %v5545
        %v5564 = vpop.xlane.xlu0 %5563
        %5565 = vadd.xlane.f32.xlu0 %v5546
        %v5566 = vpop.xlane.xlu0 %5565
        %5567 = vadd.xlane.f32.xlu0 %v5547
        %v5568 = vpop.xlane.xlu0 %5567
        %5569 = vadd.xlane.f32.xlu0 %v5548
        %v5570 = vpop.xlane.xlu0 %5569
        %5571 = vadd.xlane.f32.xlu0 %v5549
        %v5572 = vpop.xlane.xlu0 %5571
        %5573 = vadd.xlane.f32.xlu0 %v5550
        %v5574 = vpop.xlane.xlu0 %5573
        %5575 = vadd.xlane.f32.xlu0 %v5551
        %v5576 = vpop.xlane.xlu0 %5575
        %5577 = vadd.xlane.f32.xlu0 %v5552
        %v5578 = vpop.xlane.xlu0 %5577
        %5579 = vadd.xlane.f32.xlu0 %v5553
        %v5580 = vpop.xlane.xlu0 %5579
        %5581 = vadd.xlane.f32.xlu0 %v5554
        %v5582 = vpop.xlane.xlu0 %5581
        %5583 = vadd.xlane.f32.xlu0 %v5555
        %v5584 = vpop.xlane.xlu0 %5583
        %5585 = vadd.xlane.f32.xlu0 %v5556
        %v5586 = vpop.xlane.xlu0 %5585
        %5587 = vadd.xlane.f32.xlu0 %v5557
        %v5588 = vpop.xlane.xlu0 %5587
        %5589 = vadd.xlane.f32.xlu0 %v5558
        %v5590 = vpop.xlane.xlu0 %5589
        %v5591 = vmul.f32 %v5560, %v871
        %v5592 = vmul.f32 %v5562, %v871
        %v5593 = vmul.f32 %v5564, %v871
        %v5594 = vmul.f32 %v5566, %v871
        %v5595 = vmul.f32 %v5568, %v871
        %v5596 = vmul.f32 %v5570, %v871
        %v5597 = vmul.f32 %v5572, %v871
        %v5598 = vmul.f32 %v5574, %v871
        %v5599 = vmul.f32 %v5576, %v871
        %v5600 = vmul.f32 %v5578, %v871
        %v5601 = vmul.f32 %v5580, %v871
        %v5602 = vmul.f32 %v5582, %v871
        %v5603 = vmul.f32 %v5584, %v871
        %v5604 = vmul.f32 %v5586, %v871
        %v5605 = vmul.f32 %v5588, %v871
        %v5606 = vmul.f32 %v5590, %v871
        %v5607 = vadd.f32 %v5591, 1e-05
        %v5608 = vadd.f32 %v5592, 1e-05
        %v5609 = vadd.f32 %v5593, 1e-05
        %v5610 = vadd.f32 %v5594, 1e-05
        %v5611 = vadd.f32 %v5595, 1e-05
        %v5612 = vadd.f32 %v5596, 1e-05
        %v5613 = vadd.f32 %v5597, 1e-05
        %v5614 = vadd.f32 %v5598, 1e-05
        %v5615 = vadd.f32 %v5599, 1e-05
        %v5616 = vadd.f32 %v5600, 1e-05
        %v5617 = vadd.f32 %v5601, 1e-05
        %v5618 = vadd.f32 %v5602, 1e-05
        %v5619 = vadd.f32 %v5603, 1e-05
        %v5620 = vadd.f32 %v5604, 1e-05
        %v5621 = vadd.f32 %v5605, 1e-05
        %v5622 = vadd.f32 %v5606, 1e-05
        %v5623 = vrsqrt.pop %v5607
        %v5624 = vrsqrt.pop %v5608
        %v5625 = vrsqrt.pop %v5609
        %v5626 = vrsqrt.pop %v5610
        %v5627 = vrsqrt.pop %v5611
        %v5628 = vrsqrt.pop %v5612
        %v5629 = vrsqrt.pop %v5613
        %v5630 = vrsqrt.pop %v5614
        %v5631 = vrsqrt.pop %v5615
        %v5632 = vrsqrt.pop %v5616
        %v5633 = vrsqrt.pop %v5617
        %v5634 = vrsqrt.pop %v5618
        %v5635 = vrsqrt.pop %v5619
        %v5636 = vrsqrt.pop %v5620
        %v5637 = vrsqrt.pop %v5621
        %v5638 = vrsqrt.pop %v5622
        %v5639 = vmul.f32 %v5527, %v5623
        %v5640 = vmul.f32 %v5528, %v5624
        %v5641 = vmul.f32 %v5529, %v5625
        %v5642 = vmul.f32 %v5530, %v5626
        %v5643 = vmul.f32 %v5531, %v5627
        %v5644 = vmul.f32 %v5532, %v5628
        %v5645 = vmul.f32 %v5533, %v5629
        %v5646 = vmul.f32 %v5534, %v5630
        %v5647 = vmul.f32 %v5535, %v5631
        %v5648 = vmul.f32 %v5536, %v5632
        %v5649 = vmul.f32 %v5537, %v5633
        %v5650 = vmul.f32 %v5538, %v5634
        %v5651 = vmul.f32 %v5539, %v5635
        %v5652 = vmul.f32 %v5540, %v5636
        %v5653 = vmul.f32 %v5541, %v5637
        %v5654 = vmul.f32 %v5542, %v5638
        %v5655 = vlaneseq
        %v5656 = vshrl.u32 %v5655, 7
        %v5657 = vsub.s32 2, %v5656
        %v5658 = vrot.slane %v3671, %v5657
        %v5659 = vmul.f32 %v5639, %v5658
        %v5660 = vmul.f32 %v5640, %v5658
        %v5661 = vmul.f32 %v5641, %v5658
        %v5662 = vmul.f32 %v5642, %v5658
        %v5663 = vmul.f32 %v5643, %v5658
        %v5664 = vmul.f32 %v5644, %v5658
        %v5665 = vmul.f32 %v5645, %v5658
        %v5666 = vmul.f32 %v5646, %v5658
        %v5667 = vmul.f32 %v5647, %v5658
        %v5668 = vmul.f32 %v5648, %v5658
        %v5669 = vmul.f32 %v5649, %v5658
        %v5670 = vmul.f32 %v5650, %v5658
        %v5671 = vmul.f32 %v5651, %v5658
        %v5672 = vmul.f32 %v5652, %v5658
        %v5673 = vmul.f32 %v5653, %v5658
        %v5674 = vmul.f32 %v5654, %v5658
        %v5675 = vlaneseq
        %v5676 = vshrl.u32 %v5675, 7
        %v5677 = vsub.s32 3, %v5676
        %v5678 = vrot.slane %v3671, %v5677
        %v5679 = vadd.f32 %v5659, %v5678
        %v5680 = vadd.f32 %v5660, %v5678
        %v5681 = vadd.f32 %v5661, %v5678
        %v5682 = vadd.f32 %v5662, %v5678
        %v5683 = vadd.f32 %v5663, %v5678
        %v5684 = vadd.f32 %v5664, %v5678
        %v5685 = vadd.f32 %v5665, %v5678
        %v5686 = vadd.f32 %v5666, %v5678
        %v5687 = vadd.f32 %v5667, %v5678
        %v5688 = vadd.f32 %v5668, %v5678
        %v5689 = vadd.f32 %v5669, %v5678
        %v5690 = vadd.f32 %v5670, %v5678
        %v5691 = vadd.f32 %v5671, %v5678
        %v5692 = vadd.f32 %v5672, %v5678
        %v5693 = vadd.f32 %v5673, %v5678
        %v5694 = vadd.f32 %v5674, %v5678
        %v5695 = vpack.c.bf16 %v5680, %v5679
        %v5696 = vpack.c.bf16 %v5682, %v5681
        %v5697 = vpack.c.bf16 %v5684, %v5683
        %v5698 = vpack.c.bf16 %v5686, %v5685
        %v5699 = vpack.c.bf16 %v5688, %v5687
        %v5700 = vpack.c.bf16 %v5690, %v5689
        %v5701 = vpack.c.bf16 %v5692, %v5691
        %v5702 = vpack.c.bf16 %v5694, %v5693
        %s5703 = scalar_lea.vmem %s9, 128
        %v5704 = vld [vmem:[%s5703] sm:$0xff]
        %v5705 = vld [vmem:[%s5703 + $0x8] sm:$0xff]
        %v5706 = vld [vmem:[%s5703 + $0x10] sm:$0xff]
        %v5707 = vld [vmem:[%s5703 + $0x18] sm:$0xff]
        %v5708 = vld [vmem:[%s5703 + $0x20] sm:$0xff]
        %v5709 = vld [vmem:[%s5703 + $0x28] sm:$0xff]
        %v5710 = vld [vmem:[%s5703 + $0x30] sm:$0xff]
        %v5711 = vld [vmem:[%s5703 + $0x38] sm:$0xff]
        %v5712 = vld [vmem:[%s5703 + $0x40] sm:$0xff]
        %v5713 = vld [vmem:[%s5703 + $0x48] sm:$0xff]
        %v5714 = vld [vmem:[%s5703 + $0x50] sm:$0xff]
        %v5715 = vld [vmem:[%s5703 + $0x58] sm:$0xff]
        %v5716 = vld [vmem:[%s5703 + $0x60] sm:$0xff]
        %v5717 = vld [vmem:[%s5703 + $0x68] sm:$0xff]
        %v5718 = vld [vmem:[%s5703 + $0x70] sm:$0xff]
        %v5719 = vld [vmem:[%s5703 + $0x78] sm:$0xff]
        %s5720 = scalar_lea.vmem %s10, 2
        %v5721 = vld [vmem:[%s5720] sm:$0x3]
        %v5723 = vlaneseq
        %v5724 = vshrl.u32 %v5723, 7
        %v5725 = vsub.s32 0, %v5724
        %v5726 = vrot.slane %v5721, %v5725
        %v5727 = vlaneseq
        %v5728 = vshrl.u32 %v5727, 7
        %v5729 = vsub.s32 1, %v5728
        %v5730 = vrot.slane %v5721, %v5729
        %v5749 = vunpack.c.l.b16 %v5704
        %v5750 = vunpack.c.h.b16 %v5704
        %v5751 = vunpack.c.l.b16 %v5705
        %v5752 = vunpack.c.h.b16 %v5705
        %v5753 = vunpack.c.l.b16 %v5706
        %v5754 = vunpack.c.h.b16 %v5706
        %v5755 = vunpack.c.l.b16 %v5707
        %v5756 = vunpack.c.h.b16 %v5707
        %v5757 = vunpack.c.l.b16 %v5708
        %v5758 = vunpack.c.h.b16 %v5708
        %v5759 = vunpack.c.l.b16 %v5709
        %v5760 = vunpack.c.h.b16 %v5709
        %v5761 = vunpack.c.l.b16 %v5710
        %v5762 = vunpack.c.h.b16 %v5710
        %v5763 = vunpack.c.l.b16 %v5711
        %v5764 = vunpack.c.h.b16 %v5711
        %v5765 = vunpack.c.l.b16 %v5712
        %v5766 = vunpack.c.h.b16 %v5712
        %v5767 = vunpack.c.l.b16 %v5713
        %v5768 = vunpack.c.h.b16 %v5713
        %v5769 = vunpack.c.l.b16 %v5714
        %v5770 = vunpack.c.h.b16 %v5714
        %v5771 = vunpack.c.l.b16 %v5715
        %v5772 = vunpack.c.h.b16 %v5715
        %v5773 = vunpack.c.l.b16 %v5716
        %v5774 = vunpack.c.h.b16 %v5716
        %v5775 = vunpack.c.l.b16 %v5717
        %v5776 = vunpack.c.h.b16 %v5717
        %v5777 = vunpack.c.l.b16 %v5718
        %v5778 = vunpack.c.h.b16 %v5718
        %v5779 = vunpack.c.l.b16 %v5719
        %v5780 = vunpack.c.h.b16 %v5719
        %v5781 = vpack.c.b16 %v5751, %v5749
        %v5782 = vpack.c.b16 %v5752, %v5750
        %v5783 = vpack.c.b16 %v5755, %v5753
        %v5784 = vpack.c.b16 %v5756, %v5754
        %v5785 = vpack.c.b16 %v5759, %v5757
        %v5786 = vpack.c.b16 %v5760, %v5758
        %v5787 = vpack.c.b16 %v5763, %v5761
        %v5788 = vpack.c.b16 %v5764, %v5762
        %v5789 = vpack.c.b16 %v5767, %v5765
        %v5790 = vpack.c.b16 %v5768, %v5766
        %v5791 = vpack.c.b16 %v5771, %v5769
        %v5792 = vpack.c.b16 %v5772, %v5770
        %v5793 = vpack.c.b16 %v5775, %v5773
        %v5794 = vpack.c.b16 %v5776, %v5774
        %v5795 = vpack.c.b16 %v5779, %v5777
        %v5796 = vpack.c.b16 %v5780, %v5778
        %5813 = vmatprep.subr.bf16.mxu0 %v5782
        %5814 = vmatpush1.bf16.msra.mxu0 %v5781
        %5815 = vmatprep.subr.bf16.mxu0 %v5784
        %5816 = vmatpush1.bf16.msra.mxu0 %v5783
        %5817 = vmatprep.subr.bf16.mxu0 %v5786
        %5818 = vmatpush1.bf16.msra.mxu0 %v5785
        %5819 = vmatprep.subr.bf16.mxu0 %v5788
        %5820 = vmatpush1.bf16.msra.mxu0 %v5787
        %5821 = vmatprep.subr.bf16.mxu0 %v5790
        %5822 = vmatpush1.bf16.msra.mxu0 %v5789
        %5823 = vmatprep.subr.bf16.mxu0 %v5792
        %5824 = vmatpush1.bf16.msra.mxu0 %v5791
        %5825 = vmatprep.subr.bf16.mxu0 %v5794
        %5826 = vmatpush1.bf16.msra.mxu0 %v5793
        %5827 = vmatprep.subr.bf16.mxu0 %v5796
        %5828 = vmatpush1.bf16.msra.mxu0 %v5795
        %5829 = vmatprep.subr.bf16.mxu0 0
        %5830 = vmatpush1.bf16.msra.mxu0 0
        %5831 = vmatprep.subr.bf16.mxu0 0
        %5832 = vmatpush1.bf16.msra.mxu0 0
        %5833 = vmatprep.subr.bf16.mxu0 0
        %5834 = vmatpush1.bf16.msra.mxu0 0
        %5835 = vmatprep.subr.bf16.mxu0 0
        %5836 = vmatpush1.bf16.msra.mxu0 0
        %5837 = vmatprep.subr.bf16.mxu0 0
        %5838 = vmatpush1.bf16.msra.mxu0 0
        %5839 = vmatprep.subr.bf16.mxu0 0
        %5840 = vmatpush1.bf16.msra.mxu0 0
        %5841 = vmatprep.subr.bf16.mxu0 0
        %5842 = vmatpush1.bf16.msra.mxu0 0
        %5843 = vmatprep.subr.bf16.mxu0 0
        %5844 = vmatpush1.bf16.msra.mxu0 0
        %5845 = vmatprep.mubr.bf16.mxu0 0
        %5846 = vmatmul.mubr.bf16.gmra.mrb[0].mxu0 %v5695
        %v5847 = vpop.f32.mrb[0].mxu0
        %v5848 = vadd.f32 %v5726, %v5847
        %v5849 = vpop.f32.mrb[0].mxu0
        %v5850 = vadd.f32 %v5730, %v5849
        %v5851 = vpop.f32.mrb[0].mxu0
        %v5852 = vadd.f32 %v5726, %v5851
        %v5853 = vpop.f32.mrb[0].mxu0
        %v5854 = vadd.f32 %v5730, %v5853
        %5855 = vmatprep.mubr.bf16.mxu0 0
        %5856 = vmatmul.mubr.bf16.gmra.mrb[0].mxu0 %v5696
        %v5857 = vpop.f32.mrb[0].mxu0
        %v5858 = vadd.f32 %v5726, %v5857
        %v5859 = vpop.f32.mrb[0].mxu0
        %v5860 = vadd.f32 %v5730, %v5859
        %v5861 = vpop.f32.mrb[0].mxu0
        %v5862 = vadd.f32 %v5726, %v5861
        %v5863 = vpop.f32.mrb[0].mxu0
        %v5864 = vadd.f32 %v5730, %v5863
        %5865 = vmatprep.mubr.bf16.mxu0 0
        %5866 = vmatmul.mubr.bf16.gmra.mrb[0].mxu0 %v5697
        %v5867 = vpop.f32.mrb[0].mxu0
        %v5868 = vadd.f32 %v5726, %v5867
        %v5869 = vpop.f32.mrb[0].mxu0
        %v5870 = vadd.f32 %v5730, %v5869
        %v5871 = vpop.f32.mrb[0].mxu0
        %v5872 = vadd.f32 %v5726, %v5871
        %v5873 = vpop.f32.mrb[0].mxu0
        %v5874 = vadd.f32 %v5730, %v5873
        %5875 = vmatprep.mubr.bf16.mxu0 0
        %5876 = vmatmul.mubr.bf16.gmra.mrb[0].mxu0 %v5698
        %v5877 = vpop.f32.mrb[0].mxu0
        %v5878 = vadd.f32 %v5726, %v5877
        %v5879 = vpop.f32.mrb[0].mxu0
        %v5880 = vadd.f32 %v5730, %v5879
        %v5881 = vpop.f32.mrb[0].mxu0
        %v5882 = vadd.f32 %v5726, %v5881
        %v5883 = vpop.f32.mrb[0].mxu0
        %v5884 = vadd.f32 %v5730, %v5883
        %5885 = vmatprep.mubr.bf16.mxu0 0
        %5886 = vmatmul.mubr.bf16.gmra.mrb[0].mxu0 %v5699
        %v5887 = vpop.f32.mrb[0].mxu0
        %v5888 = vadd.f32 %v5726, %v5887
        %v5889 = vpop.f32.mrb[0].mxu0
        %v5890 = vadd.f32 %v5730, %v5889
        %v5891 = vpop.f32.mrb[0].mxu0
        %v5892 = vadd.f32 %v5726, %v5891
        %v5893 = vpop.f32.mrb[0].mxu0
        %v5894 = vadd.f32 %v5730, %v5893
        %5895 = vmatprep.mubr.bf16.mxu0 0
        %5896 = vmatmul.mubr.bf16.gmra.mrb[0].mxu0 %v5700
        %v5897 = vpop.f32.mrb[0].mxu0
        %v5898 = vadd.f32 %v5726, %v5897
        %v5899 = vpop.f32.mrb[0].mxu0
        %v5900 = vadd.f32 %v5730, %v5899
        %v5901 = vpop.f32.mrb[0].mxu0
        %v5902 = vadd.f32 %v5726, %v5901
        %v5903 = vpop.f32.mrb[0].mxu0
        %v5904 = vadd.f32 %v5730, %v5903
        %5905 = vmatprep.mubr.bf16.mxu0 0
        %5906 = vmatmul.mubr.bf16.gmra.mrb[0].mxu0 %v5701
        %v5907 = vpop.f32.mrb[0].mxu0
        %v5908 = vadd.f32 %v5726, %v5907
        %v5909 = vpop.f32.mrb[0].mxu0
        %v5910 = vadd.f32 %v5730, %v5909
        %v5911 = vpop.f32.mrb[0].mxu0
        %v5912 = vadd.f32 %v5726, %v5911
        %v5913 = vpop.f32.mrb[0].mxu0
        %v5914 = vadd.f32 %v5730, %v5913
        %5915 = vmatprep.mubr.bf16.mxu0 0
        %5916 = vmatmul.mubr.bf16.gmra.mrb[0].mxu0 %v5702
        %v5917 = vpop.f32.mrb[0].mxu0
        %v5918 = vadd.f32 %v5726, %v5917
        %v5919 = vpop.f32.mrb[0].mxu0
        %v5920 = vadd.f32 %v5730, %v5919
        %v5921 = vpop.f32.mrb[0].mxu0
        %v5922 = vadd.f32 %v5726, %v5921
        %v5923 = vpop.f32.mrb[0].mxu0
        %v5924 = vadd.f32 %v5730, %v5923
        %5925 = vdwg.mxu0
        %v5926 = vmul.f32 %v5848, %v5848
        %v5927 = vmul.f32 %v5850, %v5850
        %v5928 = vmul.f32 %v5852, %v5852
        %v5929 = vmul.f32 %v5854, %v5854
        %v5930 = vmul.f32 %v5858, %v5858
        %v5931 = vmul.f32 %v5860, %v5860
        %v5932 = vmul.f32 %v5862, %v5862
        %v5933 = vmul.f32 %v5864, %v5864
        %v5934 = vmul.f32 %v5868, %v5868
        %v5935 = vmul.f32 %v5870, %v5870
        %v5936 = vmul.f32 %v5872, %v5872
        %v5937 = vmul.f32 %v5874, %v5874
        %v5938 = vmul.f32 %v5878, %v5878
        %v5939 = vmul.f32 %v5880, %v5880
        %v5940 = vmul.f32 %v5882, %v5882
        %v5941 = vmul.f32 %v5884, %v5884
        %v5942 = vmul.f32 %v5888, %v5888
        %v5943 = vmul.f32 %v5890, %v5890
        %v5944 = vmul.f32 %v5892, %v5892
        %v5945 = vmul.f32 %v5894, %v5894
        %v5946 = vmul.f32 %v5898, %v5898
        %v5947 = vmul.f32 %v5900, %v5900
        %v5948 = vmul.f32 %v5902, %v5902
        %v5949 = vmul.f32 %v5904, %v5904
        %v5950 = vmul.f32 %v5908, %v5908
        %v5951 = vmul.f32 %v5910, %v5910
        %v5952 = vmul.f32 %v5912, %v5912
        %v5953 = vmul.f32 %v5914, %v5914
        %v5954 = vmul.f32 %v5918, %v5918
        %v5955 = vmul.f32 %v5920, %v5920
        %v5956 = vmul.f32 %v5922, %v5922
        %v5957 = vmul.f32 %v5924, %v5924
        %v5958 = vmul.f32 %v5848, %v5926
        %v5959 = vmul.f32 %v5850, %v5927
        %v5960 = vmul.f32 %v5852, %v5928
        %v5961 = vmul.f32 %v5854, %v5929
        %v5962 = vmul.f32 %v5858, %v5930
        %v5963 = vmul.f32 %v5860, %v5931
        %v5964 = vmul.f32 %v5862, %v5932
        %v5965 = vmul.f32 %v5864, %v5933
        %v5966 = vmul.f32 %v5868, %v5934
        %v5967 = vmul.f32 %v5870, %v5935
        %v5968 = vmul.f32 %v5872, %v5936
        %v5969 = vmul.f32 %v5874, %v5937
        %v5970 = vmul.f32 %v5878, %v5938
        %v5971 = vmul.f32 %v5880, %v5939
        %v5972 = vmul.f32 %v5882, %v5940
        %v5973 = vmul.f32 %v5884, %v5941
        %v5974 = vmul.f32 %v5888, %v5942
        %v5975 = vmul.f32 %v5890, %v5943
        %v5976 = vmul.f32 %v5892, %v5944
        %v5977 = vmul.f32 %v5894, %v5945
        %v5978 = vmul.f32 %v5898, %v5946
        %v5979 = vmul.f32 %v5900, %v5947
        %v5980 = vmul.f32 %v5902, %v5948
        %v5981 = vmul.f32 %v5904, %v5949
        %v5982 = vmul.f32 %v5908, %v5950
        %v5983 = vmul.f32 %v5910, %v5951
        %v5984 = vmul.f32 %v5912, %v5952
        %v5985 = vmul.f32 %v5914, %v5953
        %v5986 = vmul.f32 %v5918, %v5954
        %v5987 = vmul.f32 %v5920, %v5955
        %v5988 = vmul.f32 %v5922, %v5956
        %v5989 = vmul.f32 %v5924, %v5957
        %v5990 = vmul.f32 %v5958, 0.044715
        %v5991 = vmul.f32 %v5959, 0.044715
        %v5992 = vmul.f32 %v5960, 0.044715
        %v5993 = vmul.f32 %v5961, 0.044715
        %v5994 = vmul.f32 %v5962, 0.044715
        %v5995 = vmul.f32 %v5963, 0.044715
        %v5996 = vmul.f32 %v5964, 0.044715
        %v5997 = vmul.f32 %v5965, 0.044715
        %v5998 = vmul.f32 %v5966, 0.044715
        %v5999 = vmul.f32 %v5967, 0.044715
        %v6000 = vmul.f32 %v5968, 0.044715
        %v6001 = vmul.f32 %v5969, 0.044715
        %v6002 = vmul.f32 %v5970, 0.044715
        %v6003 = vmul.f32 %v5971, 0.044715
        %v6004 = vmul.f32 %v5972, 0.044715
        %v6005 = vmul.f32 %v5973, 0.044715
        %v6006 = vmul.f32 %v5974, 0.044715
        %v6007 = vmul.f32 %v5975, 0.044715
        %v6008 = vmul.f32 %v5976, 0.044715
        %v6009 = vmul.f32 %v5977, 0.044715
        %v6010 = vmul.f32 %v5978, 0.044715
        %v6011 = vmul.f32 %v5979, 0.044715
        %v6012 = vmul.f32 %v5980, 0.044715
        %v6013 = vmul.f32 %v5981, 0.044715
        %v6014 = vmul.f32 %v5982, 0.044715
        %v6015 = vmul.f32 %v5983, 0.044715
        %v6016 = vmul.f32 %v5984, 0.044715
        %v6017 = vmul.f32 %v5985, 0.044715
        %v6018 = vmul.f32 %v5986, 0.044715
        %v6019 = vmul.f32 %v5987, 0.044715
        %v6020 = vmul.f32 %v5988, 0.044715
        %v6021 = vmul.f32 %v5989, 0.044715
        %v6022 = vadd.f32 %v5848, %v5990
        %v6023 = vadd.f32 %v5850, %v5991
        %v6024 = vadd.f32 %v5852, %v5992
        %v6025 = vadd.f32 %v5854, %v5993
        %v6026 = vadd.f32 %v5858, %v5994
        %v6027 = vadd.f32 %v5860, %v5995
        %v6028 = vadd.f32 %v5862, %v5996
        %v6029 = vadd.f32 %v5864, %v5997
        %v6030 = vadd.f32 %v5868, %v5998
        %v6031 = vadd.f32 %v5870, %v5999
        %v6032 = vadd.f32 %v5872, %v6000
        %v6033 = vadd.f32 %v5874, %v6001
        %v6034 = vadd.f32 %v5878, %v6002
        %v6035 = vadd.f32 %v5880, %v6003
        %v6036 = vadd.f32 %v5882, %v6004
        %v6037 = vadd.f32 %v5884, %v6005
        %v6038 = vadd.f32 %v5888, %v6006
        %v6039 = vadd.f32 %v5890, %v6007
        %v6040 = vadd.f32 %v5892, %v6008
        %v6041 = vadd.f32 %v5894, %v6009
        %v6042 = vadd.f32 %v5898, %v6010
        %v6043 = vadd.f32 %v5900, %v6011
        %v6044 = vadd.f32 %v5902, %v6012
        %v6045 = vadd.f32 %v5904, %v6013
        %v6046 = vadd.f32 %v5908, %v6014
        %v6047 = vadd.f32 %v5910, %v6015
        %v6048 = vadd.f32 %v5912, %v6016
        %v6049 = vadd.f32 %v5914, %v6017
        %v6050 = vadd.f32 %v5918, %v6018
        %v6051 = vadd.f32 %v5920, %v6019
        %v6052 = vadd.f32 %v5922, %v6020
        %v6053 = vadd.f32 %v5924, %v6021
        %v6054 = vmul.f32 %v6022, 0.7978846
        %v6055 = vmul.f32 %v6023, 0.7978846
        %v6056 = vmul.f32 %v6024, 0.7978846
        %v6057 = vmul.f32 %v6025, 0.7978846
        %v6058 = vmul.f32 %v6026, 0.7978846
        %v6059 = vmul.f32 %v6027, 0.7978846
        %v6060 = vmul.f32 %v6028, 0.7978846
        %v6061 = vmul.f32 %v6029, 0.7978846
        %v6062 = vmul.f32 %v6030, 0.7978846
        %v6063 = vmul.f32 %v6031, 0.7978846
        %v6064 = vmul.f32 %v6032, 0.7978846
        %v6065 = vmul.f32 %v6033, 0.7978846
        %v6066 = vmul.f32 %v6034, 0.7978846
        %v6067 = vmul.f32 %v6035, 0.7978846
        %v6068 = vmul.f32 %v6036, 0.7978846
        %v6069 = vmul.f32 %v6037, 0.7978846
        %v6070 = vmul.f32 %v6038, 0.7978846
        %v6071 = vmul.f32 %v6039, 0.7978846
        %v6072 = vmul.f32 %v6040, 0.7978846
        %v6073 = vmul.f32 %v6041, 0.7978846
        %v6074 = vmul.f32 %v6042, 0.7978846
        %v6075 = vmul.f32 %v6043, 0.7978846
        %v6076 = vmul.f32 %v6044, 0.7978846
        %v6077 = vmul.f32 %v6045, 0.7978846
        %v6078 = vmul.f32 %v6046, 0.7978846
        %v6079 = vmul.f32 %v6047, 0.7978846
        %v6080 = vmul.f32 %v6048, 0.7978846
        %v6081 = vmul.f32 %v6049, 0.7978846
        %v6082 = vmul.f32 %v6050, 0.7978846
        %v6083 = vmul.f32 %v6051, 0.7978846
        %v6084 = vmul.f32 %v6052, 0.7978846
        %v6085 = vmul.f32 %v6053, 0.7978846
        %v6086 = vtanh.pop %v6054
        %v6087 = vtanh.pop %v6055
        %v6088 = vtanh.pop %v6056
        %v6089 = vtanh.pop %v6057
        %v6090 = vtanh.pop %v6058
        %v6091 = vtanh.pop %v6059
        %v6092 = vtanh.pop %v6060
        %v6093 = vtanh.pop %v6061
        %v6094 = vtanh.pop %v6062
        %v6095 = vtanh.pop %v6063
        %v6096 = vtanh.pop %v6064
        %v6097 = vtanh.pop %v6065
        %v6098 = vtanh.pop %v6066
        %v6099 = vtanh.pop %v6067
        %v6100 = vtanh.pop %v6068
        %v6101 = vtanh.pop %v6069
        %v6102 = vtanh.pop %v6070
        %v6103 = vtanh.pop %v6071
        %v6104 = vtanh.pop %v6072
        %v6105 = vtanh.pop %v6073
        %v6106 = vtanh.pop %v6074
        %v6107 = vtanh.pop %v6075
        %v6108 = vtanh.pop %v6076
        %v6109 = vtanh.pop %v6077
        %v6110 = vtanh.pop %v6078
        %v6111 = vtanh.pop %v6079
        %v6112 = vtanh.pop %v6080
        %v6113 = vtanh.pop %v6081
        %v6114 = vtanh.pop %v6082
        %v6115 = vtanh.pop %v6083
        %v6116 = vtanh.pop %v6084
        %v6117 = vtanh.pop %v6085
        %v6118 = vadd.f32 %v6086, 1.0
        %v6119 = vadd.f32 %v6087, 1.0
        %v6120 = vadd.f32 %v6088, 1.0
        %v6121 = vadd.f32 %v6089, 1.0
        %v6122 = vadd.f32 %v6090, 1.0
        %v6123 = vadd.f32 %v6091, 1.0
        %v6124 = vadd.f32 %v6092, 1.0
        %v6125 = vadd.f32 %v6093, 1.0
        %v6126 = vadd.f32 %v6094, 1.0
        %v6127 = vadd.f32 %v6095, 1.0
        %v6128 = vadd.f32 %v6096, 1.0
        %v6129 = vadd.f32 %v6097, 1.0
        %v6130 = vadd.f32 %v6098, 1.0
        %v6131 = vadd.f32 %v6099, 1.0
        %v6132 = vadd.f32 %v6100, 1.0
        %v6133 = vadd.f32 %v6101, 1.0
        %v6134 = vadd.f32 %v6102, 1.0
        %v6135 = vadd.f32 %v6103, 1.0
        %v6136 = vadd.f32 %v6104, 1.0
        %v6137 = vadd.f32 %v6105, 1.0
        %v6138 = vadd.f32 %v6106, 1.0
        %v6139 = vadd.f32 %v6107, 1.0
        %v6140 = vadd.f32 %v6108, 1.0
        %v6141 = vadd.f32 %v6109, 1.0
        %v6142 = vadd.f32 %v6110, 1.0
        %v6143 = vadd.f32 %v6111, 1.0
        %v6144 = vadd.f32 %v6112, 1.0
        %v6145 = vadd.f32 %v6113, 1.0
        %v6146 = vadd.f32 %v6114, 1.0
        %v6147 = vadd.f32 %v6115, 1.0
        %v6148 = vadd.f32 %v6116, 1.0
        %v6149 = vadd.f32 %v6117, 1.0
        %v6150 = vmul.f32 %v6118, 0.5
        %v6151 = vmul.f32 %v6119, 0.5
        %v6152 = vmul.f32 %v6120, 0.5
        %v6153 = vmul.f32 %v6121, 0.5
        %v6154 = vmul.f32 %v6122, 0.5
        %v6155 = vmul.f32 %v6123, 0.5
        %v6156 = vmul.f32 %v6124, 0.5
        %v6157 = vmul.f32 %v6125, 0.5
        %v6158 = vmul.f32 %v6126, 0.5
        %v6159 = vmul.f32 %v6127, 0.5
        %v6160 = vmul.f32 %v6128, 0.5
        %v6161 = vmul.f32 %v6129, 0.5
        %v6162 = vmul.f32 %v6130, 0.5
        %v6163 = vmul.f32 %v6131, 0.5
        %v6164 = vmul.f32 %v6132, 0.5
        %v6165 = vmul.f32 %v6133, 0.5
        %v6166 = vmul.f32 %v6134, 0.5
        %v6167 = vmul.f32 %v6135, 0.5
        %v6168 = vmul.f32 %v6136, 0.5
        %v6169 = vmul.f32 %v6137, 0.5
        %v6170 = vmul.f32 %v6138, 0.5
        %v6171 = vmul.f32 %v6139, 0.5
        %v6172 = vmul.f32 %v6140, 0.5
        %v6173 = vmul.f32 %v6141, 0.5
        %v6174 = vmul.f32 %v6142, 0.5
        %v6175 = vmul.f32 %v6143, 0.5
        %v6176 = vmul.f32 %v6144, 0.5
        %v6177 = vmul.f32 %v6145, 0.5
        %v6178 = vmul.f32 %v6146, 0.5
        %v6179 = vmul.f32 %v6147, 0.5
        %v6180 = vmul.f32 %v6148, 0.5
        %v6181 = vmul.f32 %v6149, 0.5
        %v6182 = vmul.f32 %v5848, %v6150
        %v6183 = vmul.f32 %v5850, %v6151
        %v6184 = vmul.f32 %v5852, %v6152
        %v6185 = vmul.f32 %v5854, %v6153
        %v6186 = vmul.f32 %v5858, %v6154
        %v6187 = vmul.f32 %v5860, %v6155
        %v6188 = vmul.f32 %v5862, %v6156
        %v6189 = vmul.f32 %v5864, %v6157
        %v6190 = vmul.f32 %v5868, %v6158
        %v6191 = vmul.f32 %v5870, %v6159
        %v6192 = vmul.f32 %v5872, %v6160
        %v6193 = vmul.f32 %v5874, %v6161
        %v6194 = vmul.f32 %v5878, %v6162
        %v6195 = vmul.f32 %v5880, %v6163
        %v6196 = vmul.f32 %v5882, %v6164
        %v6197 = vmul.f32 %v5884, %v6165
        %v6198 = vmul.f32 %v5888, %v6166
        %v6199 = vmul.f32 %v5890, %v6167
        %v6200 = vmul.f32 %v5892, %v6168
        %v6201 = vmul.f32 %v5894, %v6169
        %v6202 = vmul.f32 %v5898, %v6170
        %v6203 = vmul.f32 %v5900, %v6171
        %v6204 = vmul.f32 %v5902, %v6172
        %v6205 = vmul.f32 %v5904, %v6173
        %v6206 = vmul.f32 %v5908, %v6174
        %v6207 = vmul.f32 %v5910, %v6175
        %v6208 = vmul.f32 %v5912, %v6176
        %v6209 = vmul.f32 %v5914, %v6177
        %v6210 = vmul.f32 %v5918, %v6178
        %v6211 = vmul.f32 %v5920, %v6179
        %v6212 = vmul.f32 %v5922, %v6180
        %v6213 = vmul.f32 %v5924, %v6181
        %v6214 = vpack.c.bf16 %v6184, %v6182
        %v6215 = vpack.c.bf16 %v6185, %v6183
        %v6216 = vpack.c.bf16 %v6188, %v6186
        %v6217 = vpack.c.bf16 %v6189, %v6187
        %v6218 = vpack.c.bf16 %v6192, %v6190
        %v6219 = vpack.c.bf16 %v6193, %v6191
        %v6220 = vpack.c.bf16 %v6196, %v6194
        %v6221 = vpack.c.bf16 %v6197, %v6195
        %v6222 = vpack.c.bf16 %v6200, %v6198
        %v6223 = vpack.c.bf16 %v6201, %v6199
        %v6224 = vpack.c.bf16 %v6204, %v6202
        %v6225 = vpack.c.bf16 %v6205, %v6203
        %v6226 = vpack.c.bf16 %v6208, %v6206
        %v6227 = vpack.c.bf16 %v6209, %v6207
        %v6228 = vpack.c.bf16 %v6212, %v6210
        %v6229 = vpack.c.bf16 %v6213, %v6211
        %s6230 = scalar_lea.vmem %s11, 128
        %v6231 = vld [vmem:[%s6230] sm:$0xf]
        %v6232 = vld [vmem:[%s6230 + $0x4] sm:$0xf]
        %v6233 = vld [vmem:[%s6230 + $0x8] sm:$0xf]
        %v6234 = vld [vmem:[%s6230 + $0xc] sm:$0xf]
        %v6235 = vld [vmem:[%s6230 + $0x10] sm:$0xf]
        %v6236 = vld [vmem:[%s6230 + $0x14] sm:$0xf]
        %v6237 = vld [vmem:[%s6230 + $0x18] sm:$0xf]
        %v6238 = vld [vmem:[%s6230 + $0x1c] sm:$0xf]
        %v6239 = vld [vmem:[%s6230 + $0x20] sm:$0xf]
        %v6240 = vld [vmem:[%s6230 + $0x24] sm:$0xf]
        %v6241 = vld [vmem:[%s6230 + $0x28] sm:$0xf]
        %v6242 = vld [vmem:[%s6230 + $0x2c] sm:$0xf]
        %v6243 = vld [vmem:[%s6230 + $0x30] sm:$0xf]
        %v6244 = vld [vmem:[%s6230 + $0x34] sm:$0xf]
        %v6245 = vld [vmem:[%s6230 + $0x38] sm:$0xf]
        %v6246 = vld [vmem:[%s6230 + $0x3c] sm:$0xf]
        %v6247 = vld [vmem:[%s6230 + $0x40] sm:$0xf]
        %v6248 = vld [vmem:[%s6230 + $0x44] sm:$0xf]
        %v6249 = vld [vmem:[%s6230 + $0x48] sm:$0xf]
        %v6250 = vld [vmem:[%s6230 + $0x4c] sm:$0xf]
        %v6251 = vld [vmem:[%s6230 + $0x50] sm:$0xf]
        %v6252 = vld [vmem:[%s6230 + $0x54] sm:$0xf]
        %v6253 = vld [vmem:[%s6230 + $0x58] sm:$0xf]
        %v6254 = vld [vmem:[%s6230 + $0x5c] sm:$0xf]
        %v6255 = vld [vmem:[%s6230 + $0x60] sm:$0xf]
        %v6256 = vld [vmem:[%s6230 + $0x64] sm:$0xf]
        %v6257 = vld [vmem:[%s6230 + $0x68] sm:$0xf]
        %v6258 = vld [vmem:[%s6230 + $0x6c] sm:$0xf]
        %v6259 = vld [vmem:[%s6230 + $0x70] sm:$0xf]
        %v6260 = vld [vmem:[%s6230 + $0x74] sm:$0xf]
        %v6261 = vld [vmem:[%s6230 + $0x78] sm:$0xf]
        %v6262 = vld [vmem:[%s6230 + $0x7c] sm:$0xf]
        %v6295 = vunpack.c.l.b16 %v6231
        %v6296 = vunpack.c.l.b16 %v6232
        %v6297 = vunpack.c.l.b16 %v6233
        %v6298 = vunpack.c.l.b16 %v6234
        %v6299 = vunpack.c.l.b16 %v6235
        %v6300 = vunpack.c.l.b16 %v6236
        %v6301 = vunpack.c.l.b16 %v6237
        %v6302 = vunpack.c.l.b16 %v6238
        %v6303 = vunpack.c.l.b16 %v6239
        %v6304 = vunpack.c.l.b16 %v6240
        %v6305 = vunpack.c.l.b16 %v6241
        %v6306 = vunpack.c.l.b16 %v6242
        %v6307 = vunpack.c.l.b16 %v6243
        %v6308 = vunpack.c.l.b16 %v6244
        %v6309 = vunpack.c.l.b16 %v6245
        %v6310 = vunpack.c.l.b16 %v6246
        %v6311 = vunpack.c.l.b16 %v6247
        %v6312 = vunpack.c.l.b16 %v6248
        %v6313 = vunpack.c.l.b16 %v6249
        %v6314 = vunpack.c.l.b16 %v6250
        %v6315 = vunpack.c.l.b16 %v6251
        %v6316 = vunpack.c.l.b16 %v6252
        %v6317 = vunpack.c.l.b16 %v6253
        %v6318 = vunpack.c.l.b16 %v6254
        %v6319 = vunpack.c.l.b16 %v6255
        %v6320 = vunpack.c.l.b16 %v6256
        %v6321 = vunpack.c.l.b16 %v6257
        %v6322 = vunpack.c.l.b16 %v6258
        %v6323 = vunpack.c.l.b16 %v6259
        %v6324 = vunpack.c.l.b16 %v6260
        %v6325 = vunpack.c.l.b16 %v6261
        %v6326 = vunpack.c.l.b16 %v6262
        %v6327 = vpack.c.b16 %v6296, %v6295
        %v6328 = vpack.c.b16 %v6298, %v6297
        %v6329 = vpack.c.b16 %v6300, %v6299
        %v6330 = vpack.c.b16 %v6302, %v6301
        %v6331 = vpack.c.b16 %v6304, %v6303
        %v6332 = vpack.c.b16 %v6306, %v6305
        %v6333 = vpack.c.b16 %v6308, %v6307
        %v6334 = vpack.c.b16 %v6310, %v6309
        %v6335 = vpack.c.b16 %v6312, %v6311
        %v6336 = vpack.c.b16 %v6314, %v6313
        %v6337 = vpack.c.b16 %v6316, %v6315
        %v6338 = vpack.c.b16 %v6318, %v6317
        %v6339 = vpack.c.b16 %v6320, %v6319
        %v6340 = vpack.c.b16 %v6322, %v6321
        %v6341 = vpack.c.b16 %v6324, %v6323
        %v6342 = vpack.c.b16 %v6326, %v6325
        %6359 = vmatprep.subr.bf16.mxu0 0
        %6360 = vmatpush1.bf16.msra.mxu0 %v6327
        %6361 = vmatprep.subr.bf16.mxu0 0
        %6362 = vmatpush1.bf16.msra.mxu0 %v6328
        %6363 = vmatprep.subr.bf16.mxu0 0
        %6364 = vmatpush1.bf16.msra.mxu0 %v6329
        %6365 = vmatprep.subr.bf16.mxu0 0
        %6366 = vmatpush1.bf16.msra.mxu0 %v6330
        %6367 = vmatprep.subr.bf16.mxu0 0
        %6368 = vmatpush1.bf16.msra.mxu0 %v6331
        %6369 = vmatprep.subr.bf16.mxu0 0
        %6370 = vmatpush1.bf16.msra.mxu0 %v6332
        %6371 = vmatprep.subr.bf16.mxu0 0
        %6372 = vmatpush1.bf16.msra.mxu0 %v6333
        %6373 = vmatprep.subr.bf16.mxu0 0
        %6374 = vmatpush1.bf16.msra.mxu0 %v6334
        %6375 = vmatprep.subr.bf16.mxu0 0
        %6376 = vmatpush1.bf16.msra.mxu0 %v6335
        %6377 = vmatprep.subr.bf16.mxu0 0
        %6378 = vmatpush1.bf16.msra.mxu0 %v6336
        %6379 = vmatprep.subr.bf16.mxu0 0
        %6380 = vmatpush1.bf16.msra.mxu0 %v6337
        %6381 = vmatprep.subr.bf16.mxu0 0
        %6382 = vmatpush1.bf16.msra.mxu0 %v6338
        %6383 = vmatprep.subr.bf16.mxu0 0
        %6384 = vmatpush1.bf16.msra.mxu0 %v6339
        %6385 = vmatprep.subr.bf16.mxu0 0
        %6386 = vmatpush1.bf16.msra.mxu0 %v6340
        %6387 = vmatprep.subr.bf16.mxu0 0
        %6388 = vmatpush1.bf16.msra.mxu0 %v6341
        %6389 = vmatprep.subr.bf16.mxu0 0
        %6390 = vmatpush1.bf16.msra.mxu0 %v6342
        %6391 = vmatprep.mubr.bf16.mxu0 %v6215
        %6392 = vmatmul.mubr.bf16.gmra.mrb[0].mxu0 %v6214
        %v6393 = vpop.f32.mrb[0].mxu0
        %v6394 = vadd.f32 0.0, %v6393
        %v6395 = vpop.f32.mrb[0].mxu0
        %v6396 = vpop.f32.mrb[0].mxu0
        %v6397 = vadd.f32 0.0, %v6396
        %v6398 = vpop.f32.mrb[0].mxu0
        %6399 = vmatprep.mubr.bf16.mxu0 %v6217
        %6400 = vmatmul.mubr.bf16.gmra.mrb[0].mxu0 %v6216
        %v6401 = vpop.f32.mrb[0].mxu0
        %v6402 = vadd.f32 0.0, %v6401
        %v6403 = vpop.f32.mrb[0].mxu0
        %v6404 = vpop.f32.mrb[0].mxu0
        %v6405 = vadd.f32 0.0, %v6404
        %v6406 = vpop.f32.mrb[0].mxu0
        %6407 = vmatprep.mubr.bf16.mxu0 %v6219
        %6408 = vmatmul.mubr.bf16.gmra.mrb[0].mxu0 %v6218
        %v6409 = vpop.f32.mrb[0].mxu0
        %v6410 = vadd.f32 0.0, %v6409
        %v6411 = vpop.f32.mrb[0].mxu0
        %v6412 = vpop.f32.mrb[0].mxu0
        %v6413 = vadd.f32 0.0, %v6412
        %v6414 = vpop.f32.mrb[0].mxu0
        %6415 = vmatprep.mubr.bf16.mxu0 %v6221
        %6416 = vmatmul.mubr.bf16.gmra.mrb[0].mxu0 %v6220
        %v6417 = vpop.f32.mrb[0].mxu0
        %v6418 = vadd.f32 0.0, %v6417
        %v6419 = vpop.f32.mrb[0].mxu0
        %v6420 = vpop.f32.mrb[0].mxu0
        %v6421 = vadd.f32 0.0, %v6420
        %v6422 = vpop.f32.mrb[0].mxu0
        %6423 = vmatprep.mubr.bf16.mxu0 %v6223
        %6424 = vmatmul.mubr.bf16.gmra.mrb[0].mxu0 %v6222
        %v6425 = vpop.f32.mrb[0].mxu0
        %v6426 = vadd.f32 0.0, %v6425
        %v6427 = vpop.f32.mrb[0].mxu0
        %v6428 = vpop.f32.mrb[0].mxu0
        %v6429 = vadd.f32 0.0, %v6428
        %v6430 = vpop.f32.mrb[0].mxu0
        %6431 = vmatprep.mubr.bf16.mxu0 %v6225
        %6432 = vmatmul.mubr.bf16.gmra.mrb[0].mxu0 %v6224
        %v6433 = vpop.f32.mrb[0].mxu0
        %v6434 = vadd.f32 0.0, %v6433
        %v6435 = vpop.f32.mrb[0].mxu0
        %v6436 = vpop.f32.mrb[0].mxu0
        %v6437 = vadd.f32 0.0, %v6436
        %v6438 = vpop.f32.mrb[0].mxu0
        %6439 = vmatprep.mubr.bf16.mxu0 %v6227
        %6440 = vmatmul.mubr.bf16.gmra.mrb[0].mxu0 %v6226
        %v6441 = vpop.f32.mrb[0].mxu0
        %v6442 = vadd.f32 0.0, %v6441
        %v6443 = vpop.f32.mrb[0].mxu0
        %v6444 = vpop.f32.mrb[0].mxu0
        %v6445 = vadd.f32 0.0, %v6444
        %v6446 = vpop.f32.mrb[0].mxu0
        %6447 = vmatprep.mubr.bf16.mxu0 %v6229
        %6448 = vmatmul.mubr.bf16.gmra.mrb[0].mxu0 %v6228
        %v6449 = vpop.f32.mrb[0].mxu0
        %v6450 = vadd.f32 0.0, %v6449
        %v6451 = vpop.f32.mrb[0].mxu0
        %v6452 = vpop.f32.mrb[0].mxu0
        %v6453 = vadd.f32 0.0, %v6452
        %v6454 = vpop.f32.mrb[0].mxu0
        %6455 = vdwg.mxu0
        %v6456 = vadd.f32 %v5463, %v6394
        %v6457 = vadd.f32 %v5464, %v6397
        %v6458 = vadd.f32 %v5465, %v6402
        %v6459 = vadd.f32 %v5466, %v6405
        %v6460 = vadd.f32 %v5467, %v6410
        %v6461 = vadd.f32 %v5468, %v6413
        %v6462 = vadd.f32 %v5469, %v6418
        %v6463 = vadd.f32 %v5470, %v6421
        %v6464 = vadd.f32 %v5471, %v6426
        %v6465 = vadd.f32 %v5472, %v6429
        %v6466 = vadd.f32 %v5473, %v6434
        %v6467 = vadd.f32 %v5474, %v6437
        %v6468 = vadd.f32 %v5475, %v6442
        %v6469 = vadd.f32 %v5476, %v6445
        %v6470 = vadd.f32 %v5477, %v6450
        %v6471 = vadd.f32 %v5478, %v6453
        %v6472 = vlaneseq
        %v6473 = vshrl.u32 %v6472, 7
        %v6474 = vsub.s32 5, %v6473
        %v6475 = vrot.slane %v3671, %v6474
        %v6476 = vadd.f32 %v6456, %v6475
        %v6477 = vadd.f32 %v6457, %v6475
        %v6478 = vadd.f32 %v6458, %v6475
        %v6479 = vadd.f32 %v6459, %v6475
        %v6480 = vadd.f32 %v6460, %v6475
        %v6481 = vadd.f32 %v6461, %v6475
        %v6482 = vadd.f32 %v6462, %v6475
        %v6483 = vadd.f32 %v6463, %v6475
        %v6484 = vadd.f32 %v6464, %v6475
        %v6485 = vadd.f32 %v6465, %v6475
        %v6486 = vadd.f32 %v6466, %v6475
        %v6487 = vadd.f32 %v6467, %v6475
        %v6488 = vadd.f32 %v6468, %v6475
        %v6489 = vadd.f32 %v6469, %v6475
        %v6490 = vadd.f32 %v6470, %v6475
        %v6491 = vadd.f32 %v6471, %v6475
        %s6492 = scalar_lea.vmem %s405, 128 [#allocation2]
        %6493 = vst [vmem:[%s6492] sm:$0xff] %v6476
        %6494 = vst [vmem:[%s6492 + $0x8] sm:$0xff] %v6477
        %6495 = vst [vmem:[%s6492 + $0x10] sm:$0xff] %v6478
        %6496 = vst [vmem:[%s6492 + $0x18] sm:$0xff] %v6479
        %6497 = vst [vmem:[%s6492 + $0x20] sm:$0xff] %v6480
        %6498 = vst [vmem:[%s6492 + $0x28] sm:$0xff] %v6481
        %6499 = vst [vmem:[%s6492 + $0x30] sm:$0xff] %v6482
        %6500 = vst [vmem:[%s6492 + $0x38] sm:$0xff] %v6483
        %6501 = vst [vmem:[%s6492 + $0x40] sm:$0xff] %v6484
        %6502 = vst [vmem:[%s6492 + $0x48] sm:$0xff] %v6485
        %6503 = vst [vmem:[%s6492 + $0x50] sm:$0xff] %v6486
        %6504 = vst [vmem:[%s6492 + $0x58] sm:$0xff] %v6487
        %6505 = vst [vmem:[%s6492 + $0x60] sm:$0xff] %v6488
        %6506 = vst [vmem:[%s6492 + $0x68] sm:$0xff] %v6489
        %6507 = vst [vmem:[%s6492 + $0x70] sm:$0xff] %v6490
        %6508 = vst [vmem:[%s6492 + $0x78] sm:$0xff] %v6491
        %s6509 = sand.u32 %s288, 1
        %s6510 = sand.u32 %s288, 1
        %s6511 = smul.addr %s6510, 256
        %s6512 = scalar_lea.vmem [#allocation2], %s6511
        // Predicated region
        $region69: #{vtm_image_backbone_forward.1} parent=67 // pred_check
          %p6513 = pneg %p298
        $region70: #{vtm_image_backbone_forward.1} parent=67 // pred_check_branch
          %6515 = sbr.rel (%p6513) target = $region72
        $region71: #{vtm_image_backbone_forward.1} parent=67 // pred_region
          %s6516 = smul.u32 16, %s23
          %s6517 = smul.addr %s6516, 8
          %s6518 = scalar_lea.vmem %s12, %s6517
          // Predicated region
          $region73: #{vtm_image_backbone_forward.1} parent=71 // pred_check
            _
          $region74: #{vtm_image_backbone_forward.1} parent=71 // pred_check_branch
            %6520 = sbr.rel (0) target = $region76
          $region75: #{vtm_image_backbone_forward.1} parent=71 // pred_region
            // Predicated region
            $region77: #{vtm_image_backbone_forward.1} parent=75 // pred_check
              _
            $region78: #{vtm_image_backbone_forward.1} parent=75 // pred_check_branch
              %6522 = sbr.rel (0) target = $region80
            $region79: #{vtm_image_backbone_forward.1} parent=75 // pred_region
              // Predicated region
              $region92: #{vtm_image_backbone_forward.1} parent=79 // pred_check
                _
              $region93: #{vtm_image_backbone_forward.1} parent=79 // pred_check_branch
                %6599 = sbr.rel (0) target = $region95
              $region94: #{vtm_image_backbone_forward.1} parent=79 // pred_region
                loop: start=0, step=1, limit=1
                $region96: #{vtm_image_backbone_forward.1} parent=94 // loop_pre_header
                  _
                $region97: #{vtm_image_backbone_forward.1} parent=94 // loop_header
                  %s6601 = sphi 0, %s6605
                  %p6602 = scmp.ge.s32.totalorder %s6601, 1
                  %s6606 = sphi %s6512, %s6512
                  %s6607 = sphi %s6518, %s6518
                $region98: #{vtm_image_backbone_forward.1} parent=94 // loop_header_branch
                  %6604 = sbr.rel (%p6602) target = $region102
                $region99: #{vtm_image_backbone_forward.1} parent=94 // loop_body
                  %v6608 = vld [vmem:[%s6606] sm:$0xff]
                  %6609 = vst [vmem:[%s6607] sm:$0xff] %v6608
                  %v6610 = vld [vmem:[%s6606 + $0x8] sm:$0xff]
                  %6611 = vst [vmem:[%s6607 + $0x8] sm:$0xff] %v6610
                  %v6612 = vld [vmem:[%s6606 + $0x10] sm:$0xff]
                  %6613 = vst [vmem:[%s6607 + $0x10] sm:$0xff] %v6612
                  %v6614 = vld [vmem:[%s6606 + $0x18] sm:$0xff]
                  %6615 = vst [vmem:[%s6607 + $0x18] sm:$0xff] %v6614
                  %v6616 = vld [vmem:[%s6606 + $0x20] sm:$0xff]
                  %6617 = vst [vmem:[%s6607 + $0x20] sm:$0xff] %v6616
                  %v6618 = vld [vmem:[%s6606 + $0x28] sm:$0xff]
                  %6619 = vst [vmem:[%s6607 + $0x28] sm:$0xff] %v6618
                  %v6620 = vld [vmem:[%s6606 + $0x30] sm:$0xff]
                  %6621 = vst [vmem:[%s6607 + $0x30] sm:$0xff] %v6620
                  %v6622 = vld [vmem:[%s6606 + $0x38] sm:$0xff]
                  %6623 = vst [vmem:[%s6607 + $0x38] sm:$0xff] %v6622
                  %v6624 = vld [vmem:[%s6606 + $0x40] sm:$0xff]
                  %6625 = vst [vmem:[%s6607 + $0x40] sm:$0xff] %v6624
                  %v6626 = vld [vmem:[%s6606 + $0x48] sm:$0xff]
                  %6627 = vst [vmem:[%s6607 + $0x48] sm:$0xff] %v6626
                  %v6628 = vld [vmem:[%s6606 + $0x50] sm:$0xff]
                  %6629 = vst [vmem:[%s6607 + $0x50] sm:$0xff] %v6628
                  %v6630 = vld [vmem:[%s6606 + $0x58] sm:$0xff]
                  %6631 = vst [vmem:[%s6607 + $0x58] sm:$0xff] %v6630
                  %v6632 = vld [vmem:[%s6606 + $0x60] sm:$0xff]
                  %6633 = vst [vmem:[%s6607 + $0x60] sm:$0xff] %v6632
                  %v6634 = vld [vmem:[%s6606 + $0x68] sm:$0xff]
                  %6635 = vst [vmem:[%s6607 + $0x68] sm:$0xff] %v6634
                  %v6636 = vld [vmem:[%s6606 + $0x70] sm:$0xff]
                  %6637 = vst [vmem:[%s6607 + $0x70] sm:$0xff] %v6636
                  %v6638 = vld [vmem:[%s6606 + $0x78] sm:$0xff]
                  %6639 = vst [vmem:[%s6607 + $0x78] sm:$0xff] %v6638
                  %v6640 = vld [vmem:[%s6606 + $0x80] sm:$0xff]
                  %6641 = vst [vmem:[%s6607 + $0x100] sm:$0xff] %v6640
                  %v6642 = vld [vmem:[%s6606 + $0x88] sm:$0xff]
                  %6643 = vst [vmem:[%s6607 + $0x108] sm:$0xff] %v6642
                  %v6644 = vld [vmem:[%s6606 + $0x90] sm:$0xff]
                  %6645 = vst [vmem:[%s6607 + $0x110] sm:$0xff] %v6644
                  %v6646 = vld [vmem:[%s6606 + $0x98] sm:$0xff]
                  %6647 = vst [vmem:[%s6607 + $0x118] sm:$0xff] %v6646
                  %v6648 = vld [vmem:[%s6606 + $0xa0] sm:$0xff]
                  %6649 = vst [vmem:[%s6607 + $0x120] sm:$0xff] %v6648
                  %v6650 = vld [vmem:[%s6606 + $0xa8] sm:$0xff]
                  %6651 = vst [vmem:[%s6607 + $0x128] sm:$0xff] %v6650
                  %v6652 = vld [vmem:[%s6606 + $0xb0] sm:$0xff]
                  %6653 = vst [vmem:[%s6607 + $0x130] sm:$0xff] %v6652
                  %v6654 = vld [vmem:[%s6606 + $0xb8] sm:$0xff]
                  %6655 = vst [vmem:[%s6607 + $0x138] sm:$0xff] %v6654
                  %v6656 = vld [vmem:[%s6606 + $0xc0] sm:$0xff]
                  %6657 = vst [vmem:[%s6607 + $0x140] sm:$0xff] %v6656
                  %v6658 = vld [vmem:[%s6606 + $0xc8] sm:$0xff]
                  %6659 = vst [vmem:[%s6607 + $0x148] sm:$0xff] %v6658
                  %v6660 = vld [vmem:[%s6606 + $0xd0] sm:$0xff]
                  %6661 = vst [vmem:[%s6607 + $0x150] sm:$0xff] %v6660
                  %v6662 = vld [vmem:[%s6606 + $0xd8] sm:$0xff]
                  %6663 = vst [vmem:[%s6607 + $0x158] sm:$0xff] %v6662
                  %v6664 = vld [vmem:[%s6606 + $0xe0] sm:$0xff]
                  %6665 = vst [vmem:[%s6607 + $0x160] sm:$0xff] %v6664
                  %v6666 = vld [vmem:[%s6606 + $0xe8] sm:$0xff]
                  %6667 = vst [vmem:[%s6607 + $0x168] sm:$0xff] %v6666
                  %v6668 = vld [vmem:[%s6606 + $0xf0] sm:$0xff]
                  %6669 = vst [vmem:[%s6607 + $0x170] sm:$0xff] %v6668
                  %v6670 = vld [vmem:[%s6606 + $0xf8] sm:$0xff]
                  %6671 = vst [vmem:[%s6607 + $0x178] sm:$0xff] %v6670
                $region100: #{vtm_image_backbone_forward.1} parent=94 // loop_footer
                  %s6605 = sadd.s32 1, %s6601
                $region101: #{vtm_image_backbone_forward.1} parent=94 // loop_footer_branch
                  %6600 = sbr.rel target = $region97
                $region102: #{vtm_image_backbone_forward.1} parent=94 // loop_exit
                  _
              $region95: #{vtm_image_backbone_forward.1} parent=79 // pred_fallthru
                _
              // Predicated region
              $region103: #{vtm_image_backbone_forward.1} parent=79 // pred_check
                _
              $region104: #{vtm_image_backbone_forward.1} parent=79 // pred_check_branch
                %6673 = sbr.rel target = $region106
              $region105: #{vtm_image_backbone_forward.1} parent=79 // pred_region
                _
              $region106: #{vtm_image_backbone_forward.1} parent=79 // pred_fallthru
                _
            $region80: #{vtm_image_backbone_forward.1} parent=75 // pred_fallthru
              _
            // Predicated region
            $region81: #{vtm_image_backbone_forward.1} parent=75 // pred_check
              _
            $region82: #{vtm_image_backbone_forward.1} parent=75 // pred_check_branch
              %6524 = sbr.rel target = $region84
            $region83: #{vtm_image_backbone_forward.1} parent=75 // pred_region
              loop: start=0, step=1, limit=1
              $region85: #{vtm_image_backbone_forward.1} parent=83 // loop_pre_header
                _
              $region86: #{vtm_image_backbone_forward.1} parent=83 // loop_header
                %s6527 = sphi 0, %s6531
                %p6528 = scmp.ge.s32.totalorder %s6527, 1
                %s6532 = sphi %s6512, %s6512
                %s6533 = sphi %s6518, %s6518
              $region87: #{vtm_image_backbone_forward.1} parent=83 // loop_header_branch
                %6530 = sbr.rel (%p6528) target = $region91
              $region88: #{vtm_image_backbone_forward.1} parent=83 // loop_body
                %v6534 = vld [vmem:[%s6532] sm:$0xff]
                %6535 = vst [vmem:[%s6533] sm:$0xff] %v6534
                %v6536 = vld [vmem:[%s6532 + $0x8] sm:$0xff]
                %6537 = vst [vmem:[%s6533 + $0x8] sm:$0xff] %v6536
                %v6538 = vld [vmem:[%s6532 + $0x10] sm:$0xff]
                %6539 = vst [vmem:[%s6533 + $0x10] sm:$0xff] %v6538
                %v6540 = vld [vmem:[%s6532 + $0x18] sm:$0xff]
                %6541 = vst [vmem:[%s6533 + $0x18] sm:$0xff] %v6540
                %v6542 = vld [vmem:[%s6532 + $0x20] sm:$0xff]
                %6543 = vst [vmem:[%s6533 + $0x20] sm:$0xff] %v6542
                %v6544 = vld [vmem:[%s6532 + $0x28] sm:$0xff]
                %6545 = vst [vmem:[%s6533 + $0x28] sm:$0xff] %v6544
                %v6546 = vld [vmem:[%s6532 + $0x30] sm:$0xff]
                %6547 = vst [vmem:[%s6533 + $0x30] sm:$0xff] %v6546
                %v6548 = vld [vmem:[%s6532 + $0x38] sm:$0xff]
                %6549 = vst [vmem:[%s6533 + $0x38] sm:$0xff] %v6548
                %v6550 = vld [vmem:[%s6532 + $0x40] sm:$0xff]
                %6551 = vst [vmem:[%s6533 + $0x40] sm:$0xff] %v6550
                %v6552 = vld [vmem:[%s6532 + $0x48] sm:$0xff]
                %6553 = vst [vmem:[%s6533 + $0x48] sm:$0xff] %v6552
                %v6554 = vld [vmem:[%s6532 + $0x50] sm:$0xff]
                %6555 = vst [vmem:[%s6533 + $0x50] sm:$0xff] %v6554
                %v6556 = vld [vmem:[%s6532 + $0x58] sm:$0xff]
                %6557 = vst [vmem:[%s6533 + $0x58] sm:$0xff] %v6556
                %v6558 = vld [vmem:[%s6532 + $0x60] sm:$0xff]
                %6559 = vst [vmem:[%s6533 + $0x60] sm:$0xff] %v6558
                %v6560 = vld [vmem:[%s6532 + $0x68] sm:$0xff]
                %6561 = vst [vmem:[%s6533 + $0x68] sm:$0xff] %v6560
                %v6562 = vld [vmem:[%s6532 + $0x70] sm:$0xff]
                %6563 = vst [vmem:[%s6533 + $0x70] sm:$0xff] %v6562
                %v6564 = vld [vmem:[%s6532 + $0x78] sm:$0xff]
                %6565 = vst [vmem:[%s6533 + $0x78] sm:$0xff] %v6564
                %v6566 = vld [vmem:[%s6532 + $0x80] sm:$0xff]
                %6567 = vst [vmem:[%s6533 + $0x100] sm:$0xff] %v6566
                %v6568 = vld [vmem:[%s6532 + $0x88] sm:$0xff]
                %6569 = vst [vmem:[%s6533 + $0x108] sm:$0xff] %v6568
                %v6570 = vld [vmem:[%s6532 + $0x90] sm:$0xff]
                %6571 = vst [vmem:[%s6533 + $0x110] sm:$0xff] %v6570
                %v6572 = vld [vmem:[%s6532 + $0x98] sm:$0xff]
                %6573 = vst [vmem:[%s6533 + $0x118] sm:$0xff] %v6572
                %v6574 = vld [vmem:[%s6532 + $0xa0] sm:$0xff]
                %6575 = vst [vmem:[%s6533 + $0x120] sm:$0xff] %v6574
                %v6576 = vld [vmem:[%s6532 + $0xa8] sm:$0xff]
                %6577 = vst [vmem:[%s6533 + $0x128] sm:$0xff] %v6576
                %v6578 = vld [vmem:[%s6532 + $0xb0] sm:$0xff]
                %6579 = vst [vmem:[%s6533 + $0x130] sm:$0xff] %v6578
                %v6580 = vld [vmem:[%s6532 + $0xb8] sm:$0xff]
                %6581 = vst [vmem:[%s6533 + $0x138] sm:$0xff] %v6580
                %v6582 = vld [vmem:[%s6532 + $0xc0] sm:$0xff]
                %6583 = vst [vmem:[%s6533 + $0x140] sm:$0xff] %v6582
                %v6584 = vld [vmem:[%s6532 + $0xc8] sm:$0xff]
                %6585 = vst [vmem:[%s6533 + $0x148] sm:$0xff] %v6584
                %v6586 = vld [vmem:[%s6532 + $0xd0] sm:$0xff]
                %6587 = vst [vmem:[%s6533 + $0x150] sm:$0xff] %v6586
                %v6588 = vld [vmem:[%s6532 + $0xd8] sm:$0xff]
                %6589 = vst [vmem:[%s6533 + $0x158] sm:$0xff] %v6588
                %v6590 = vld [vmem:[%s6532 + $0xe0] sm:$0xff]
                %6591 = vst [vmem:[%s6533 + $0x160] sm:$0xff] %v6590
                %v6592 = vld [vmem:[%s6532 + $0xe8] sm:$0xff]
                %6593 = vst [vmem:[%s6533 + $0x168] sm:$0xff] %v6592
                %v6594 = vld [vmem:[%s6532 + $0xf0] sm:$0xff]
                %6595 = vst [vmem:[%s6533 + $0x170] sm:$0xff] %v6594
                %v6596 = vld [vmem:[%s6532 + $0xf8] sm:$0xff]
                %6597 = vst [vmem:[%s6533 + $0x178] sm:$0xff] %v6596
              $region89: #{vtm_image_backbone_forward.1} parent=83 // loop_footer
                %s6531 = sadd.s32 1, %s6527
              $region90: #{vtm_image_backbone_forward.1} parent=83 // loop_footer_branch
                %6526 = sbr.rel target = $region86
              $region91: #{vtm_image_backbone_forward.1} parent=83 // loop_exit
                _
            $region84: #{vtm_image_backbone_forward.1} parent=75 // pred_fallthru
              _
          $region76: #{vtm_image_backbone_forward.1} parent=71 // pred_fallthru
            _
          %6674 = vnop
        $region72: #{vtm_image_backbone_forward.1} parent=67 // pred_fallthru
          _
      $region68: #{vtm_image_backbone_forward.1} parent=5 // pred_fallthru
        _
      %p6675 = scmp.le.s32.totalorder 2, %s18
      // Predicated region
      $region107: #{vtm_image_backbone_forward.1} parent=5 // pred_check
        %p6676 = pneg %p6675
      $region108: #{vtm_image_backbone_forward.1} parent=5 // pred_check_branch
        %6678 = sbr.rel (%p6676) target = $region110
      $region109: #{vtm_image_backbone_forward.1} parent=5 // pred_region
        %s6679 = ssub.s32 %s18, 2
        // Predicated region
        $region111: #{vtm_image_backbone_forward.1} parent=109 // pred_check
          %p6680 = pneg %p304
        $region112: #{vtm_image_backbone_forward.1} parent=109 // pred_check_branch
          %6682 = sbr.rel (%p6680) target = $region114
        $region113: #{vtm_image_backbone_forward.1} parent=109 // pred_region
          %s6683 = sand.u32 %s289, 1
          %s6684 = sand.u32 %s289, 1
          %s6685 = smul.addr %s6684, 256
          %s6686 = scalar_lea.vmem [#allocation2], %s6685
        $region114: #{vtm_image_backbone_forward.1} parent=109 // pred_fallthru
          _
      $region110: #{vtm_image_backbone_forward.1} parent=5 // pred_fallthru
        _
    $region6: #{vtm_image_backbone_forward.1} parent=1 // loop_footer
      %s22 = sadd.s32 1, %s18
    $region7: #{vtm_image_backbone_forward.1} parent=1 // loop_footer_branch
      %17 = sbr.rel target = $region3
    $region8: #{vtm_image_backbone_forward.1} parent=1 // loop_exit
      _

</llo_original>
